<compile_context>
chip_gen: v6e
topology: v6e:2x2x1
jax: 0.10.0
libtpu: 0.0.40
codegen_flags: <defaults>
</compile_context>

<pallas_src>
import numpy as np
import jax
import jax.numpy as jnp
from jax import lax
from jax.experimental import pallas as pl
from jax.experimental.pallas import tpu as pltpu

GRID = 6  # spatial size forced by linear_input_size = 2304 = 64 * 6 * 6


# ----------------------------- Pallas kernel -------------------------------

def _dqn_kernel(x_ref,
                m1_ref, cb1_ref, m2_ref, cb2_ref, m3_ref, cb3_ref,
                m4_hbm, cb4_ref, m5_hbm, cb5_ref, m6_hbm, cb6_ref,
                w1_hbm, fc1_b_ref, w2_ref, fc2_b_ref,
                out_ref,
                cat_buf, xflat_buf, m4_vmem, m5_vmem, m6_vmem, w1_vmem, sems):
    f32, bf16 = jnp.float32, jnp.bfloat16
    rows = cat_buf.shape[0]          # GRID * bpad
    bpad = out_ref.shape[0]          # padded batch rows (multiple of 8)
    nsh = rows - bpad                # number of rows moved by a +/-1 y-shift

    # Prefetch the large weights (3x 64-channel conv + fc1, ~3.4 MiB) so their
    # HBM->VMEM copies overlap the conv1 / res_block1 compute.
    cp4 = pltpu.make_async_copy(m4_hbm, m4_vmem, sems.at[0]); cp4.start()
    cp5 = pltpu.make_async_copy(m5_hbm, m5_vmem, sems.at[1]); cp5.start()
    cp6 = pltpu.make_async_copy(m6_hbm, m6_vmem, sems.at[2]); cp6.start()
    cpw = pltpu.make_async_copy(w1_hbm, w1_vmem, sems.at[3]); cpw.start()

    def conv_bn(a, m_ref, cb_ref):
        # 3x3 / pad=1 conv with eval-mode BN folded in, as ONE MXU matmul:
        #   out = [a_up | a | a_dn] @ [M_ky0; M_ky1; M_ky2] + bias
        # The y-shifted copies are built with aligned sublane copies through
        # the f32 staging buffer (VPU / load-store work only, no MXU passes).
        L = a.shape[1]
        cat_buf[:, L:2 * L] = a                                                   # ky = 1
        cat_buf[pl.ds(bpad, nsh), 0:L] = cat_buf[pl.ds(0, nsh), L:2 * L]          # ky = 0 (row y-1)
        cat_buf[pl.ds(0, nsh), 2 * L:3 * L] = cat_buf[pl.ds(bpad, nsh), L:2 * L]  # ky = 2 (row y+1)
        zb = jnp.zeros((bpad, L), f32)
        cat_buf[pl.ds(0, bpad), 0:L] = zb                                         # y = 0 border
        cat_buf[pl.ds(nsh, bpad), 2 * L:3 * L] = zb                               # y = GRID-1 border
        lhs = cat_buf[:, 0:3 * L].astype(bf16)
        return jnp.dot(lhs, m_ref[...], preferred_element_type=f32) + cb_ref[...]

    x = x_ref[...]
    x = jnp.maximum(conv_bn(x, m1_ref, cb1_ref), 0.0)         # conv1 + bn1
    h = jnp.maximum(conv_bn(x, m2_ref, cb2_ref), 0.0)         # res_block1.conv1 + bn1
    x = jnp.maximum(conv_bn(h, m3_ref, cb3_ref) + x, 0.0)     # res_block1.conv2 + bn2 + skip

    cp4.wait()
    x = jnp.maximum(conv_bn(x, m4_vmem, cb4_ref), 0.0)        # conv2 + bn2
    cp5.wait()
    h = jnp.maximum(conv_bn(x, m5_vmem, cb5_ref), 0.0)        # res_block2.conv1 + bn1
    cp6.wait()
    x = jnp.maximum(conv_bn(h, m6_vmem, cb6_ref) + x, 0.0)    # res_block2.conv2 + bn2 + skip

    # NCHW flatten: the (c,h,w) permutation is baked into fc1's weight rows, so
    # here we only gather the bpad batch rows of each spatial row y with
    # aligned copies:  xflat[b, y*L + lane] = x[y*bpad + b, lane].
    L = x.shape[1]                                   # GRID * 64 = 384
    cat_buf[:, 0:L] = x                              # stage so rows can be ref-sliced
    for y in range(rows // bpad):                    # GRID static iterations
        xflat_buf[:, y * L:(y + 1) * L] = cat_buf[pl.ds(y * bpad, bpad), 0:L]

    cpw.wait()
    h1 = jnp.dot(xflat_buf[...].astype(bf16), w1_vmem[...],
                 preferred_element_type=f32) + fc1_b_ref[...]
    h1 = jnp.maximum(h1, 0.0)                                                    # fc1 + ReLU
    out_ref[...] = (jnp.dot(h1.astype(bf16), w2_ref[...],
                            preferred_element_type=f32) + fc2_b_ref[...])        # fc2


# ------------------------ host-side weight prep ----------------------------

def _fused_band_weight(w_oihw, scale, width):
    """(Cout,Cin,3,3) conv weight with BN scale folded -> (3*W*Cin, W*Cout).

    Row block [ky*W*Cin:(ky+1)*W*Cin] multiplies the activation shifted by
    ky-1 spatial rows; the kx taps / x-borders are banded into the columns.
    """
    cout, cin, kh, kw = w_oihw.shape
    w = w_oihw * scale[:, None, None, None]
    m = np.zeros((kh, width * cin, width * cout), np.float32)
    for ky in range(kh):
        for xo in range(width):
            for kx in range(kw):
                xi = xo + kx - 1
                if 0 <= xi < width:
                    m[ky, xi * cin:(xi + 1) * cin,
                          xo * cout:(xo + 1) * cout] = w[:, :, ky, kx].T
    return m.reshape(kh * width * cin, width * cout)


def make_kernel_params(p, n_actions_pad=128, eps=1e-5):
    """Fold eval-mode BN into the banded conv weights, permute fc1 rows, and
    store all matrix weights in bf16 (biases stay f32)."""
    kp = {}
    order = [('conv1', 'bn1'), ('rb1_conv1', 'rb1_bn1'), ('rb1_conv2', 'rb1_bn2'),
             ('conv2', 'bn2'), ('rb2_conv1', 'rb2_bn1'), ('rb2_conv2', 'rb2_bn2')]
    for idx, (cname, bname) in enumerate(order, start=1):
        w, b = (np.asarray(t, np.float32) for t in p[cname])
        gamma, beta, mean, var = (np.asarray(t, np.float32) for t in p[bname])
        scale = gamma / np.sqrt(var + eps)
        bias = beta + (b - mean) * scale
        cout, cin = w.shape[:2]
        if cin % 8:                       # conv1: pad 5 input channels -> 8
            cin_p = -(-cin // 8) * 8
            wp = np.zeros((cout, cin_p, 3, 3), np.float32)
            wp[:, :cin] = w
            w = wp
        kp[f'm{idx}'] = jnp.asarray(_fused_band_weight(w, scale, GRID),
                                    dtype=jnp.bfloat16)
        kp[f'cb{idx}'] = jnp.asarray(np.tile(bias, GRID)[None, :], dtype=jnp.float32)

    # fc1: rows are in PyTorch NCHW flatten order (c, y, x); permute offline to
    # the kernel's (y, x, c) lane order -> (2304, 256).
    w1 = np.asarray(p['fc1_w'], np.float32)              # (256, 2304)
    nh = w1.shape[0]
    c_last = w1.shape[1] // (GRID * GRID)                # 64
    w1 = w1.reshape(nh, c_last, GRID, GRID)              # (n, c, y, x)
    w1 = np.transpose(w1, (2, 3, 1, 0)).reshape(GRID * GRID * c_last, nh)
    kp['fc1_w'] = jnp.asarray(w1, dtype=jnp.bfloat16)
    kp['fc1_b'] = jnp.asarray(np.asarray(p['fc1_b'], np.float32)[None, :])

    # fc2: transpose and pad the output dim to 128 lanes (unmasked store).
    w2 = np.asarray(p['fc2_w'], np.float32)              # (n_actions, 256)
    n_act = w2.shape[0]
    w2p = np.zeros((w2.shape[1], n_actions_pad), np.float32)
    w2p[:, :n_act] = w2.T
    b2p = np.zeros((1, n_actions_pad), np.float32)
    b2p[0, :n_act] = np.asarray(p['fc2_b'], np.float32)
    kp['fc2_w'] = jnp.asarray(w2p, dtype=jnp.bfloat16)
    kp['fc2_b'] = jnp.asarray(b2p)
    return kp


def to_kernel_layout(x_nchw, bpad, cpad):
    """NCHW (B,C,6,6) -> (6*bpad, 6*cpad): rows=(y,b), lanes=(x,c), zero-padded."""
    b, c, h, w = x_nchw.shape
    x = jnp.pad(x_nchw, ((0, bpad - b), (0, cpad - c), (0, 0), (0, 0)))
    x = jnp.transpose(x, (2, 0, 3, 1))                   # (h, b, w, c)
    return x.reshape(h * bpad, w * cpad)


# ------------------------------ forward ------------------------------------

def deep_q_forward(x_nchw, kp, n_actions):
    b = x_nchw.shape[0]
    assert x_nchw.shape[2] == GRID and x_nchw.shape[3] == GRID
    bpad = max(8, -(-b // 8) * 8)                        # batch rows padded to x8
    rows = GRID * bpad
    cin_pad = kp['m1'].shape[0] // (3 * GRID)            # 8
    c_out2 = kp['m5'].shape[1] // GRID                   # 64
    n_act_pad = kp['fc2_w'].shape[1]                     # 128

    x0 = to_kernel_layout(x_nchw.astype(jnp.float32), bpad, cin_pad)

    vmem = pl.BlockSpec(memory_space=pltpu.MemorySpace.VMEM)
    hbm = pl.BlockSpec(memory_space=pl.ANY)              # big weights: manual prefetch
    in_specs = [vmem,                                    # x0
                vmem, vmem, vmem, vmem, vmem, vmem,      # m1,cb1,m2,cb2,m3,cb3
                hbm, vmem, hbm, vmem, hbm, vmem,         # m4(HBM),cb4,m5(HBM),cb5,m6(HBM),cb6
                hbm, vmem, vmem, vmem]                   # fc1_w(HBM),fc1_b,fc2_w,fc2_b

    out = pl.pallas_call(
        _dqn_kernel,
        out_shape=jax.ShapeDtypeStruct((bpad, n_act_pad), jnp.float32),
        in_specs=in_specs,
        out_specs=pl.BlockSpec(memory_space=pltpu.MemorySpace.VMEM),
        scratch_shapes=[
            pltpu.VMEM((rows, 3 * GRID * c_out2), jnp.float32),     # band staging
            pltpu.VMEM((bpad, GRID * GRID * c_out2), jnp.float32),  # flatten staging
            pltpu.VMEM(kp['m4'].shape, jnp.bfloat16),               # prefetch buffers
            pltpu.VMEM(kp['m5'].shape, jnp.bfloat16),
            pltpu.VMEM(kp['m6'].shape, jnp.bfloat16),
            pltpu.VMEM(kp['fc1_w'].shape, jnp.bfloat16),
            pltpu.SemaphoreType.DMA((4,)),
        ],
        compiler_params=pltpu.CompilerParams(vmem_limit_bytes=32 * 1024 * 1024),
        cost_estimate=pl.CostEstimate(flops=140_000_000, transcendentals=0,
                                      bytes_accessed=5_000_000),
    )(x0,
      kp['m1'], kp['cb1'], kp['m2'], kp['cb2'], kp['m3'], kp['cb3'],
      kp['m4'], kp['cb4'], kp['m5'], kp['cb5'], kp['m6'], kp['cb6'],
      kp['fc1_w'], kp['fc1_b'], kp['fc2_w'], kp['fc2_b'])
    return out[:b, :n_actions]


# --------------------------- parameter setup -------------------------------

def init_raw_params(key, n_actions=5):
    it = iter(jax.random.split(key, 64))

    def conv(cin, cout):
        w = jax.random.normal(next(it), (cout, cin, 3, 3), jnp.float32) / jnp.sqrt(9.0 * cin)
        b = 0.01 * jax.random.normal(next(it), (cout,), jnp.float32)
        return w, b

    def bn(c):
        gamma = 1.0 + 0.1 * jax.random.normal(next(it), (c,), jnp.float32)
        beta = 0.1 * jax.random.normal(next(it), (c,), jnp.float32)
        mean = 0.05 * jax.random.normal(next(it), (c,), jnp.float32)
        var = jax.random.uniform(next(it), (c,), jnp.float32, minval=0.5, maxval=1.5)
        return gamma, beta, mean, var

    p = {}
    p['conv1'] = conv(5, 32);       p['bn1'] = bn(32)
    p['rb1_conv1'] = conv(32, 32);  p['rb1_bn1'] = bn(32)
    p['rb1_conv2'] = conv(32, 32);  p['rb1_bn2'] = bn(32)
    p['conv2'] = conv(32, 64);      p['bn2'] = bn(64)
    p['rb2_conv1'] = conv(64, 64);  p['rb2_bn1'] = bn(64)
    p['rb2_conv2'] = conv(64, 64);  p['rb2_bn2'] = bn(64)
    p['fc1_w'] = jax.random.normal(next(it), (256, 2304), jnp.float32) / jnp.sqrt(2304.0)
    p['fc1_b'] = 0.01 * jax.random.normal(next(it), (256,), jnp.float32)
    p['fc2_w'] = jax.random.normal(next(it), (n_actions, 256), jnp.float32) / jnp.sqrt(256.0)
    p['fc2_b'] = 0.01 * jax.random.normal(next(it), (n_actions,), jnp.float32)
    return p


# ------------------------- pure-JAX references ------------------------------

def _conv_nchw(x, w, precision=lax.Precision.HIGHEST):
    return lax.conv_general_dilated(
        x, w, window_strides=(1, 1), padding=((1, 1), (1, 1)),
        dimension_numbers=('NCHW', 'OIHW', 'NCHW'), precision=precision)


def ref_forward(x, p, eps=1e-5):
    """Exact f32 PyTorch-semantics (eval-mode BN) reference."""
    def conv(x, wb):
        w, b = wb
        return _conv_nchw(x, w) + b[None, :, None, None]

    def bn(x, g):
        gamma, beta, mean, var = g
        s = (gamma / jnp.sqrt(var + eps))[None, :, None, None]
        return (x - mean[None, :, None, None]) * s + beta[None, :, None, None]

    x = jax.nn.relu(bn(conv(x, p['conv1']), p['bn1']))
    r = x
    h = jax.nn.relu(bn(conv(x, p['rb1_conv1']), p['rb1_bn1']))
    x = jax.nn.relu(bn(conv(h, p['rb1_conv2']), p['rb1_bn2']) + r)
    x = jax.nn.relu(bn(conv(x, p['conv2']), p['bn2']))
    r = x
    h = jax.nn.relu(bn(conv(x, p['rb2_conv1']), p['rb2_bn1']))
    x = jax.nn.relu(bn(conv(h, p['rb2_conv2']), p['rb2_bn2']) + r)
    x = x.reshape(x.shape[0], -1)
    h = jax.nn.relu(x @ p['fc1_w'].T + p['fc1_b'])
    return h @ p['fc2_w'].T + p['fc2_b']


def ref_forward_quantized(x, p, eps=1e-5):
    """Reference with BN folded and weights/activations rounded to bf16 at the
    same points as the Pallas kernel (f32 accumulation everywhere), used for a
    tight structural-correctness check of the kernel."""
    def q(a):
        return a.astype(jnp.bfloat16).astype(jnp.float32)

    def conv_bn_q(x, wb, g):
        w, b = wb
        gamma, beta, mean, var = g
        scale = gamma / jnp.sqrt(var + eps)
        wf = w * scale[:, None, None, None]
        bias = beta + (b - mean) * scale
        return _conv_nchw(q(x), q(wf)) + bias[None, :, None, None]

    x = jax.nn.relu(conv_bn_q(x, p['conv1'], p['bn1']))
    r = x
    h = jax.nn.relu(conv_bn_q(x, p['rb1_conv1'], p['rb1_bn1']))
    x = jax.nn.relu(conv_bn_q(h, p['rb1_conv2'], p['rb1_bn2']) + r)
    x = jax.nn.relu(conv_bn_q(x, p['conv2'], p['bn2']))
    r = x
    h = jax.nn.relu(conv_bn_q(x, p['rb2_conv1'], p['rb2_bn1']))
    x = jax.nn.relu(conv_bn_q(h, p['rb2_conv2'], p['rb2_bn2']) + r)
    x = x.reshape(x.shape[0], -1)
    h = jax.nn.relu(q(x) @ q(p['fc1_w'].T) + p['fc1_b'])
    return q(h) @ q(p['fc2_w'].T) + p['fc2_b']


# --------------------------------- main -------------------------------------

if __name__ == "__main__":
    key = jax.random.PRNGKey(0)
    pkey, xkey = jax.random.split(key)

    raw = init_raw_params(pkey, n_actions=5)
    kp = make_kernel_params(raw)

    # grid_size must be 6 (linear_input_size hardcoded to 2304 = 64 * 6 * 6)
    x = jax.random.normal(xkey, (2, 5, 6, 6), jnp.float32)   # NCHW

    fwd = jax.jit(deep_q_forward, static_argnames=("n_actions",))
    out = jax.block_until_ready(fwd(x, kp, n_actions=5))
    assert out.shape == (2, 5), out.shape

    # Tight check vs. a reference that applies the same bf16 weight/activation
    # rounding (validates the fused band-matmul / shift / flatten structure).
    ref_q = ref_forward_quantized(x, raw)
    dq = float(jnp.max(jnp.abs(out - ref_q)))
    assert jnp.allclose(out, ref_q, atol=2e-3, rtol=2e-3), f"vs bf16-matched ref: {dq}"

    # Loose sanity check vs. the exact f32 module semantics (difference is the
    # intentional bf16 weight/activation quantization).
    ref = ref_forward(x, raw)
    df = float(jnp.max(jnp.abs(out - ref)))
    assert jnp.allclose(out, ref, atol=1e-1, rtol=1e-1), f"vs exact f32 ref: {df}"

    # TODO(synk): BatchNorm training-mode (batch-statistics) path not implemented;
    # eval-mode running-stats semantics are folded into the conv weights/bias.
    print("KERNEL_OK")
</pallas_src>

<mosaic_0001>
module attributes {stable_mosaic.version = 11 : i64} {
  func.func @_dqn_kernel(%arg0: memref<48x48xf32, #tpu.memory_space<vmem>>, %arg1: memref<144x192xbf16, #tpu.memory_space<vmem>>, %arg2: memref<1x192xf32, #tpu.memory_space<vmem>>, %arg3: memref<576x192xbf16, #tpu.memory_space<vmem>>, %arg4: memref<1x192xf32, #tpu.memory_space<vmem>>, %arg5: memref<576x192xbf16, #tpu.memory_space<vmem>>, %arg6: memref<1x192xf32, #tpu.memory_space<vmem>>, %arg7: memref<576x384xbf16, #tpu.memory_space<any>>, %arg8: memref<1x384xf32, #tpu.memory_space<vmem>>, %arg9: memref<1152x384xbf16, #tpu.memory_space<any>>, %arg10: memref<1x384xf32, #tpu.memory_space<vmem>>, %arg11: memref<1152x384xbf16, #tpu.memory_space<any>>, %arg12: memref<1x384xf32, #tpu.memory_space<vmem>>, %arg13: memref<2304x256xbf16, #tpu.memory_space<any>>, %arg14: memref<1x256xf32, #tpu.memory_space<vmem>>, %arg15: memref<256x128xbf16, #tpu.memory_space<vmem>>, %arg16: memref<1x128xf32, #tpu.memory_space<vmem>>, %arg17: memref<8x128xf32, #tpu.memory_space<vmem>>, %arg18: memref<48x1152xf32, #tpu.memory_space<vmem>>, %arg19: memref<8x2304xf32, #tpu.memory_space<vmem>>, %arg20: memref<576x384xbf16, #tpu.memory_space<vmem>>, %arg21: memref<1152x384xbf16, #tpu.memory_space<vmem>>, %arg22: memref<1152x384xbf16, #tpu.memory_space<vmem>>, %arg23: memref<2304x256xbf16, #tpu.memory_space<vmem>>, %arg24: memref<4x!tpu.dma_semaphore, #tpu.memory_space<semaphore_mem>>) attributes {dimension_semantics = [], scalar_prefetch = 0 : i64, scratch_operands = 7 : i64, tpu.core_type = #tpu.core_type<tc>} {
    %c0_i32 = arith.constant 0 : i32
    %0 = tpu.memref_slice %arg24[%c0_i32] : memref<4x!tpu.dma_semaphore, #tpu.memory_space<semaphore_mem>> -> memref<1x!tpu.dma_semaphore, #tpu.memory_space<semaphore_mem>>
    %1 = tpu.memref_squeeze %0 : memref<1x!tpu.dma_semaphore, #tpu.memory_space<semaphore_mem>> -> memref<!tpu.dma_semaphore, #tpu.memory_space<semaphore_mem>>
    tpu.enqueue_dma source(%arg7 : memref<576x384xbf16, #tpu.memory_space<any>>) target(%arg20 : memref<576x384xbf16, #tpu.memory_space<vmem>>) target_semaphore(%1 : memref<!tpu.dma_semaphore, #tpu.memory_space<semaphore_mem>>)
    %c1_i32 = arith.constant 1 : i32
    %2 = tpu.memref_slice %arg24[%c1_i32] : memref<4x!tpu.dma_semaphore, #tpu.memory_space<semaphore_mem>> -> memref<1x!tpu.dma_semaphore, #tpu.memory_space<semaphore_mem>>
    %3 = tpu.memref_squeeze %2 : memref<1x!tpu.dma_semaphore, #tpu.memory_space<semaphore_mem>> -> memref<!tpu.dma_semaphore, #tpu.memory_space<semaphore_mem>>
    tpu.enqueue_dma source(%arg9 : memref<1152x384xbf16, #tpu.memory_space<any>>) target(%arg21 : memref<1152x384xbf16, #tpu.memory_space<vmem>>) target_semaphore(%3 : memref<!tpu.dma_semaphore, #tpu.memory_space<semaphore_mem>>)
    %c2_i32 = arith.constant 2 : i32
    %4 = tpu.memref_slice %arg24[%c2_i32] : memref<4x!tpu.dma_semaphore, #tpu.memory_space<semaphore_mem>> -> memref<1x!tpu.dma_semaphore, #tpu.memory_space<semaphore_mem>>
    %5 = tpu.memref_squeeze %4 : memref<1x!tpu.dma_semaphore, #tpu.memory_space<semaphore_mem>> -> memref<!tpu.dma_semaphore, #tpu.memory_space<semaphore_mem>>
    tpu.enqueue_dma source(%arg11 : memref<1152x384xbf16, #tpu.memory_space<any>>) target(%arg22 : memref<1152x384xbf16, #tpu.memory_space<vmem>>) target_semaphore(%5 : memref<!tpu.dma_semaphore, #tpu.memory_space<semaphore_mem>>)
    %c3_i32 = arith.constant 3 : i32
    %6 = tpu.memref_slice %arg24[%c3_i32] : memref<4x!tpu.dma_semaphore, #tpu.memory_space<semaphore_mem>> -> memref<1x!tpu.dma_semaphore, #tpu.memory_space<semaphore_mem>>
    %7 = tpu.memref_squeeze %6 : memref<1x!tpu.dma_semaphore, #tpu.memory_space<semaphore_mem>> -> memref<!tpu.dma_semaphore, #tpu.memory_space<semaphore_mem>>
    tpu.enqueue_dma source(%arg13 : memref<2304x256xbf16, #tpu.memory_space<any>>) target(%arg23 : memref<2304x256xbf16, #tpu.memory_space<vmem>>) target_semaphore(%7 : memref<!tpu.dma_semaphore, #tpu.memory_space<semaphore_mem>>)
    %c0 = arith.constant 0 : index
    %c0_0 = arith.constant 0 : index
    %8 = vector.load %arg0[%c0, %c0_0] : memref<48x48xf32, #tpu.memory_space<vmem>>, vector<48x48xf32>
    %c0_1 = arith.constant 0 : index
    %c48 = arith.constant 48 : index
    %9 = vector.load %arg18[%c0_1, %c48] : memref<48x1152xf32, #tpu.memory_space<vmem>>, vector<48x48xf32>
    tpu.vector_store %arg18[%c0_1, %c48], %8 {strides = array<i32>} : memref<48x1152xf32, #tpu.memory_space<vmem>>, vector<48x48xf32>,
    %c0_2 = arith.constant 0 : index
    %c48_3 = arith.constant 48 : index
    %10 = vector.load %arg18[%c0_2, %c48_3] : memref<48x1152xf32, #tpu.memory_space<vmem>>, vector<40x48xf32>
    %c8 = arith.constant 8 : index
    %c0_4 = arith.constant 0 : index
    %11 = vector.load %arg18[%c8, %c0_4] : memref<48x1152xf32, #tpu.memory_space<vmem>>, vector<40x48xf32>
    tpu.vector_store %arg18[%c8, %c0_4], %10 {strides = array<i32>} : memref<48x1152xf32, #tpu.memory_space<vmem>>, vector<40x48xf32>,
    %c8_5 = arith.constant 8 : index
    %c48_6 = arith.constant 48 : index
    %12 = vector.load %arg18[%c8_5, %c48_6] : memref<48x1152xf32, #tpu.memory_space<vmem>>, vector<40x48xf32>
    %c0_7 = arith.constant 0 : index
    %c96 = arith.constant 96 : index
    %13 = vector.load %arg18[%c0_7, %c96] : memref<48x1152xf32, #tpu.memory_space<vmem>>, vector<40x48xf32>
    tpu.vector_store %arg18[%c0_7, %c96], %12 {strides = array<i32>} : memref<48x1152xf32, #tpu.memory_space<vmem>>, vector<40x48xf32>,
    %cst = arith.constant 0.000000e+00 : f32
    %14 = vector.broadcast %cst : f32 to vector<8x48xf32>
    %c0_8 = arith.constant 0 : index
    %c0_9 = arith.constant 0 : index
    %15 = vector.load %arg18[%c0_8, %c0_9] : memref<48x1152xf32, #tpu.memory_space<vmem>>, vector<8x48xf32>
    tpu.vector_store %arg18[%c0_8, %c0_9], %14 {strides = array<i32>} : memref<48x1152xf32, #tpu.memory_space<vmem>>, vector<8x48xf32>,
    %c40 = arith.constant 40 : index
    %c96_10 = arith.constant 96 : index
    %16 = vector.load %arg18[%c40, %c96_10] : memref<48x1152xf32, #tpu.memory_space<vmem>>, vector<8x48xf32>
    tpu.vector_store %arg18[%c40, %c96_10], %14 {strides = array<i32>} : memref<48x1152xf32, #tpu.memory_space<vmem>>, vector<8x48xf32>,
    %c0_11 = arith.constant 0 : index
    %c0_12 = arith.constant 0 : index
    %17 = vector.load %arg18[%c0_11, %c0_12] : memref<48x1152xf32, #tpu.memory_space<vmem>>, vector<48x144xf32>
    %18 = arith.truncf %17 : vector<48x144xf32> to vector<48x144xbf16>
    %c0_13 = arith.constant 0 : index
    %c0_14 = arith.constant 0 : index
    %19 = vector.load %arg1[%c0_13, %c0_14] : memref<144x192xbf16, #tpu.memory_space<vmem>>, vector<144x192xbf16>
    %cst_15 = arith.constant dense<0.000000e+00> : vector<48x192xf32>
    %20 = tpu.matmul %18, %19, %cst_15 {dimension_numbers = #tpu.dot_dimension_numbers<[1], [0], [0], [1], [0, 0, 1, 1], [], []>} : vector<48x144xbf16>, vector<144x192xbf16>, vector<48x192xf32> -> vector<48x192xf32>
    %c0_16 = arith.constant 0 : index
    %c0_17 = arith.constant 0 : index
    %21 = vector.load %arg2[%c0_16, %c0_17] : memref<1x192xf32, #tpu.memory_space<vmem>>, vector<1x192xf32>
    %22 = vector.broadcast %21 : vector<1x192xf32> to vector<48x192xf32>
    %23 = arith.addf %20, %22 : vector<48x192xf32>
    %cst_18 = arith.constant 0.000000e+00 : f32
    %24 = vector.broadcast %cst_18 : f32 to vector<48x192xf32>
    %25 = arith.maximumf %23, %24 : vector<48x192xf32>
    %c0_19 = arith.constant 0 : index
    %c192 = arith.constant 192 : index
    %26 = vector.load %arg18[%c0_19, %c192] : memref<48x1152xf32, #tpu.memory_space<vmem>>, vector<48x192xf32>
    tpu.vector_store %arg18[%c0_19, %c192], %25 {strides = array<i32>} : memref<48x1152xf32, #tpu.memory_space<vmem>>, vector<48x192xf32>,
    %c0_20 = arith.constant 0 : index
    %c192_21 = arith.constant 192 : index
    %27 = vector.load %arg18[%c0_20, %c192_21] : memref<48x1152xf32, #tpu.memory_space<vmem>>, vector<40x192xf32>
    %c8_22 = arith.constant 8 : index
    %c0_23 = arith.constant 0 : index
    %28 = vector.load %arg18[%c8_22, %c0_23] : memref<48x1152xf32, #tpu.memory_space<vmem>>, vector<40x192xf32>
    tpu.vector_store %arg18[%c8_22, %c0_23], %27 {strides = array<i32>} : memref<48x1152xf32, #tpu.memory_space<vmem>>, vector<40x192xf32>,
    %c8_24 = arith.constant 8 : index
    %c192_25 = arith.constant 192 : index
    %29 = vector.load %arg18[%c8_24, %c192_25] : memref<48x1152xf32, #tpu.memory_space<vmem>>, vector<40x192xf32>
    %c0_26 = arith.constant 0 : index
    %c384 = arith.constant 384 : index
    %30 = vector.load %arg18[%c0_26, %c384] : memref<48x1152xf32, #tpu.memory_space<vmem>>, vector<40x192xf32>
    tpu.vector_store %arg18[%c0_26, %c384], %29 {strides = array<i32>} : memref<48x1152xf32, #tpu.memory_space<vmem>>, vector<40x192xf32>,
    %cst_27 = arith.constant 0.000000e+00 : f32
    %31 = vector.broadcast %cst_27 : f32 to vector<8x192xf32>
    %c0_28 = arith.constant 0 : index
    %c0_29 = arith.constant 0 : index
    %32 = vector.load %arg18[%c0_28, %c0_29] : memref<48x1152xf32, #tpu.memory_space<vmem>>, vector<8x192xf32>
    tpu.vector_store %arg18[%c0_28, %c0_29], %31 {strides = array<i32>} : memref<48x1152xf32, #tpu.memory_space<vmem>>, vector<8x192xf32>,
    %c40_30 = arith.constant 40 : index
    %c384_31 = arith.constant 384 : index
    %33 = vector.load %arg18[%c40_30, %c384_31] : memref<48x1152xf32, #tpu.memory_space<vmem>>, vector<8x192xf32>
    tpu.vector_store %arg18[%c40_30, %c384_31], %31 {strides = array<i32>} : memref<48x1152xf32, #tpu.memory_space<vmem>>, vector<8x192xf32>,
    %c0_32 = arith.constant 0 : index
    %c0_33 = arith.constant 0 : index
    %34 = vector.load %arg18[%c0_32, %c0_33] : memref<48x1152xf32, #tpu.memory_space<vmem>>, vector<48x576xf32>
    %35 = arith.truncf %34 : vector<48x576xf32> to vector<48x576xbf16>
    %c0_34 = arith.constant 0 : index
    %c0_35 = arith.constant 0 : index
    %36 = vector.load %arg3[%c0_34, %c0_35] : memref<576x192xbf16, #tpu.memory_space<vmem>>, vector<576x192xbf16>
    %cst_36 = arith.constant dense<0.000000e+00> : vector<48x192xf32>
    %37 = tpu.matmul %35, %36, %cst_36 {dimension_numbers = #tpu.dot_dimension_numbers<[1], [0], [0], [1], [0, 0, 1, 1], [], []>} : vector<48x576xbf16>, vector<576x192xbf16>, vector<48x192xf32> -> vector<48x192xf32>
    %c0_37 = arith.constant 0 : index
    %c0_38 = arith.constant 0 : index
    %38 = vector.load %arg4[%c0_37, %c0_38] : memref<1x192xf32, #tpu.memory_space<vmem>>, vector<1x192xf32>
    %39 = vector.broadcast %38 : vector<1x192xf32> to vector<48x192xf32>
    %40 = arith.addf %37, %39 : vector<48x192xf32>
    %cst_39 = arith.constant 0.000000e+00 : f32
    %41 = vector.broadcast %cst_39 : f32 to vector<48x192xf32>
    %42 = arith.maximumf %40, %41 : vector<48x192xf32>
    %c0_40 = arith.constant 0 : index
    %c192_41 = arith.constant 192 : index
    %43 = vector.load %arg18[%c0_40, %c192_41] : memref<48x1152xf32, #tpu.memory_space<vmem>>, vector<48x192xf32>
    tpu.vector_store %arg18[%c0_40, %c192_41], %42 {strides = array<i32>} : memref<48x1152xf32, #tpu.memory_space<vmem>>, vector<48x192xf32>,
    %c0_42 = arith.constant 0 : index
    %c192_43 = arith.constant 192 : index
    %44 = vector.load %arg18[%c0_42, %c192_43] : memref<48x1152xf32, #tpu.memory_space<vmem>>, vector<40x192xf32>
    %c8_44 = arith.constant 8 : index
    %c0_45 = arith.constant 0 : index
    %45 = vector.load %arg18[%c8_44, %c0_45] : memref<48x1152xf32, #tpu.memory_space<vmem>>, vector<40x192xf32>
    tpu.vector_store %arg18[%c8_44, %c0_45], %44 {strides = array<i32>} : memref<48x1152xf32, #tpu.memory_space<vmem>>, vector<40x192xf32>,
    %c8_46 = arith.constant 8 : index
    %c192_47 = arith.constant 192 : index
    %46 = vector.load %arg18[%c8_46, %c192_47] : memref<48x1152xf32, #tpu.memory_space<vmem>>, vector<40x192xf32>
    %c0_48 = arith.constant 0 : index
    %c384_49 = arith.constant 384 : index
    %47 = vector.load %arg18[%c0_48, %c384_49] : memref<48x1152xf32, #tpu.memory_space<vmem>>, vector<40x192xf32>
    tpu.vector_store %arg18[%c0_48, %c384_49], %46 {strides = array<i32>} : memref<48x1152xf32, #tpu.memory_space<vmem>>, vector<40x192xf32>,
    %cst_50 = arith.constant 0.000000e+00 : f32
    %48 = vector.broadcast %cst_50 : f32 to vector<8x192xf32>
    %c0_51 = arith.constant 0 : index
    %c0_52 = arith.constant 0 : index
    %49 = vector.load %arg18[%c0_51, %c0_52] : memref<48x1152xf32, #tpu.memory_space<vmem>>, vector<8x192xf32>
    tpu.vector_store %arg18[%c0_51, %c0_52], %48 {strides = array<i32>} : memref<48x1152xf32, #tpu.memory_space<vmem>>, vector<8x192xf32>,
    %c40_53 = arith.constant 40 : index
    %c384_54 = arith.constant 384 : index
    %50 = vector.load %arg18[%c40_53, %c384_54] : memref<48x1152xf32, #tpu.memory_space<vmem>>, vector<8x192xf32>
    tpu.vector_store %arg18[%c40_53, %c384_54], %48 {strides = array<i32>} : memref<48x1152xf32, #tpu.memory_space<vmem>>, vector<8x192xf32>,
    %c0_55 = arith.constant 0 : index
    %c0_56 = arith.constant 0 : index
    %51 = vector.load %arg18[%c0_55, %c0_56] : memref<48x1152xf32, #tpu.memory_space<vmem>>, vector<48x576xf32>
    %52 = arith.truncf %51 : vector<48x576xf32> to vector<48x576xbf16>
    %c0_57 = arith.constant 0 : index
    %c0_58 = arith.constant 0 : index
    %53 = vector.load %arg5[%c0_57, %c0_58] : memref<576x192xbf16, #tpu.memory_space<vmem>>, vector<576x192xbf16>
    %cst_59 = arith.constant dense<0.000000e+00> : vector<48x192xf32>
    %54 = tpu.matmul %52, %53, %cst_59 {dimension_numbers = #tpu.dot_dimension_numbers<[1], [0], [0], [1], [0, 0, 1, 1], [], []>} : vector<48x576xbf16>, vector<576x192xbf16>, vector<48x192xf32> -> vector<48x192xf32>
    %c0_60 = arith.constant 0 : index
    %c0_61 = arith.constant 0 : index
    %55 = vector.load %arg6[%c0_60, %c0_61] : memref<1x192xf32, #tpu.memory_space<vmem>>, vector<1x192xf32>
    %56 = vector.broadcast %55 : vector<1x192xf32> to vector<48x192xf32>
    %57 = arith.addf %54, %56 : vector<48x192xf32>
    %58 = arith.addf %57, %25 : vector<48x192xf32>
    %cst_62 = arith.constant 0.000000e+00 : f32
    %59 = vector.broadcast %cst_62 : f32 to vector<48x192xf32>
    %60 = arith.maximumf %58, %59 : vector<48x192xf32>
    %c0_i32_63 = arith.constant 0 : i32
    %61 = tpu.memref_slice %arg24[%c0_i32_63] : memref<4x!tpu.dma_semaphore, #tpu.memory_space<semaphore_mem>> -> memref<1x!tpu.dma_semaphore, #tpu.memory_space<semaphore_mem>>
    %62 = tpu.memref_squeeze %61 : memref<1x!tpu.dma_semaphore, #tpu.memory_space<semaphore_mem>> -> memref<!tpu.dma_semaphore, #tpu.memory_space<semaphore_mem>>
    tpu.wait_dma2 semaphore(%62 : memref<!tpu.dma_semaphore, #tpu.memory_space<semaphore_mem>>) src(%arg7 : memref<576x384xbf16, #tpu.memory_space<any>>) dst(%arg20 : memref<576x384xbf16, #tpu.memory_space<vmem>>)
    %c0_64 = arith.constant 0 : index
    %c192_65 = arith.constant 192 : index
    %63 = vector.load %arg18[%c0_64, %c192_65] : memref<48x1152xf32, #tpu.memory_space<vmem>>, vector<48x192xf32>
    tpu.vector_store %arg18[%c0_64, %c192_65], %60 {strides = array<i32>} : memref<48x1152xf32, #tpu.memory_space<vmem>>, vector<48x192xf32>,
    %c0_66 = arith.constant 0 : index
    %c192_67 = arith.constant 192 : index
    %64 = vector.load %arg18[%c0_66, %c192_67] : memref<48x1152xf32, #tpu.memory_space<vmem>>, vector<40x192xf32>
    %c8_68 = arith.constant 8 : index
    %c0_69 = arith.constant 0 : index
    %65 = vector.load %arg18[%c8_68, %c0_69] : memref<48x1152xf32, #tpu.memory_space<vmem>>, vector<40x192xf32>
    tpu.vector_store %arg18[%c8_68, %c0_69], %64 {strides = array<i32>} : memref<48x1152xf32, #tpu.memory_space<vmem>>, vector<40x192xf32>,
    %c8_70 = arith.constant 8 : index
    %c192_71 = arith.constant 192 : index
    %66 = vector.load %arg18[%c8_70, %c192_71] : memref<48x1152xf32, #tpu.memory_space<vmem>>, vector<40x192xf32>
    %c0_72 = arith.constant 0 : index
    %c384_73 = arith.constant 384 : index
    %67 = vector.load %arg18[%c0_72, %c384_73] : memref<48x1152xf32, #tpu.memory_space<vmem>>, vector<40x192xf32>
    tpu.vector_store %arg18[%c0_72, %c384_73], %66 {strides = array<i32>} : memref<48x1152xf32, #tpu.memory_space<vmem>>, vector<40x192xf32>,
    %cst_74 = arith.constant 0.000000e+00 : f32
    %68 = vector.broadcast %cst_74 : f32 to vector<8x192xf32>
    %c0_75 = arith.constant 0 : index
    %c0_76 = arith.constant 0 : index
    %69 = vector.load %arg18[%c0_75, %c0_76] : memref<48x1152xf32, #tpu.memory_space<vmem>>, vector<8x192xf32>
    tpu.vector_store %arg18[%c0_75, %c0_76], %68 {strides = array<i32>} : memref<48x1152xf32, #tpu.memory_space<vmem>>, vector<8x192xf32>,
    %c40_77 = arith.constant 40 : index
    %c384_78 = arith.constant 384 : index
    %70 = vector.load %arg18[%c40_77, %c384_78] : memref<48x1152xf32, #tpu.memory_space<vmem>>, vector<8x192xf32>
    tpu.vector_store %arg18[%c40_77, %c384_78], %68 {strides = array<i32>} : memref<48x1152xf32, #tpu.memory_space<vmem>>, vector<8x192xf32>,
    %c0_79 = arith.constant 0 : index
    %c0_80 = arith.constant 0 : index
    %71 = vector.load %arg18[%c0_79, %c0_80] : memref<48x1152xf32, #tpu.memory_space<vmem>>, vector<48x576xf32>
    %72 = arith.truncf %71 : vector<48x576xf32> to vector<48x576xbf16>
    %c0_81 = arith.constant 0 : index
    %c0_82 = arith.constant 0 : index
    %73 = vector.load %arg20[%c0_81, %c0_82] : memref<576x384xbf16, #tpu.memory_space<vmem>>, vector<576x384xbf16>
    %cst_83 = arith.constant dense<0.000000e+00> : vector<48x384xf32>
    %74 = tpu.matmul %72, %73, %cst_83 {dimension_numbers = #tpu.dot_dimension_numbers<[1], [0], [0], [1], [0, 0, 1, 1], [], []>} : vector<48x576xbf16>, vector<576x384xbf16>, vector<48x384xf32> -> vector<48x384xf32>
    %c0_84 = arith.constant 0 : index
    %c0_85 = arith.constant 0 : index
    %75 = vector.load %arg8[%c0_84, %c0_85] : memref<1x384xf32, #tpu.memory_space<vmem>>, vector<1x384xf32>
    %76 = vector.broadcast %75 : vector<1x384xf32> to vector<48x384xf32>
    %77 = arith.addf %74, %76 : vector<48x384xf32>
    %cst_86 = arith.constant 0.000000e+00 : f32
    %78 = vector.broadcast %cst_86 : f32 to vector<48x384xf32>
    %79 = arith.maximumf %77, %78 : vector<48x384xf32>
    %c1_i32_87 = arith.constant 1 : i32
    %80 = tpu.memref_slice %arg24[%c1_i32_87] : memref<4x!tpu.dma_semaphore, #tpu.memory_space<semaphore_mem>> -> memref<1x!tpu.dma_semaphore, #tpu.memory_space<semaphore_mem>>
    %81 = tpu.memref_squeeze %80 : memref<1x!tpu.dma_semaphore, #tpu.memory_space<semaphore_mem>> -> memref<!tpu.dma_semaphore, #tpu.memory_space<semaphore_mem>>
    tpu.wait_dma2 semaphore(%81 : memref<!tpu.dma_semaphore, #tpu.memory_space<semaphore_mem>>) src(%arg9 : memref<1152x384xbf16, #tpu.memory_space<any>>) dst(%arg21 : memref<1152x384xbf16, #tpu.memory_space<vmem>>)
    %c0_88 = arith.constant 0 : index
    %c384_89 = arith.constant 384 : index
    %82 = vector.load %arg18[%c0_88, %c384_89] : memref<48x1152xf32, #tpu.memory_space<vmem>>, vector<48x384xf32>
    tpu.vector_store %arg18[%c0_88, %c384_89], %79 {strides = array<i32>} : memref<48x1152xf32, #tpu.memory_space<vmem>>, vector<48x384xf32>,
    %c0_90 = arith.constant 0 : index
    %c384_91 = arith.constant 384 : index
    %83 = vector.load %arg18[%c0_90, %c384_91] : memref<48x1152xf32, #tpu.memory_space<vmem>>, vector<40x384xf32>
    %c8_92 = arith.constant 8 : index
    %c0_93 = arith.constant 0 : index
    %84 = vector.load %arg18[%c8_92, %c0_93] : memref<48x1152xf32, #tpu.memory_space<vmem>>, vector<40x384xf32>
    tpu.vector_store %arg18[%c8_92, %c0_93], %83 {strides = array<i32>} : memref<48x1152xf32, #tpu.memory_space<vmem>>, vector<40x384xf32>,
    %c8_94 = arith.constant 8 : index
    %c384_95 = arith.constant 384 : index
    %85 = vector.load %arg18[%c8_94, %c384_95] : memref<48x1152xf32, #tpu.memory_space<vmem>>, vector<40x384xf32>
    %c0_96 = arith.constant 0 : index
    %c768 = arith.constant 768 : index
    %86 = vector.load %arg18[%c0_96, %c768] : memref<48x1152xf32, #tpu.memory_space<vmem>>, vector<40x384xf32>
    tpu.vector_store %arg18[%c0_96, %c768], %85 {strides = array<i32>} : memref<48x1152xf32, #tpu.memory_space<vmem>>, vector<40x384xf32>,
    %cst_97 = arith.constant 0.000000e+00 : f32
    %87 = vector.broadcast %cst_97 : f32 to vector<8x384xf32>
    %c0_98 = arith.constant 0 : index
    %c0_99 = arith.constant 0 : index
    %88 = vector.load %arg18[%c0_98, %c0_99] : memref<48x1152xf32, #tpu.memory_space<vmem>>, vector<8x384xf32>
    tpu.vector_store %arg18[%c0_98, %c0_99], %87 {strides = array<i32>} : memref<48x1152xf32, #tpu.memory_space<vmem>>, vector<8x384xf32>,
    %c40_100 = arith.constant 40 : index
    %c768_101 = arith.constant 768 : index
    %89 = vector.load %arg18[%c40_100, %c768_101] : memref<48x1152xf32, #tpu.memory_space<vmem>>, vector<8x384xf32>
    tpu.vector_store %arg18[%c40_100, %c768_101], %87 {strides = array<i32>} : memref<48x1152xf32, #tpu.memory_space<vmem>>, vector<8x384xf32>,
    %c0_102 = arith.constant 0 : index
    %c0_103 = arith.constant 0 : index
    %90 = vector.load %arg18[%c0_102, %c0_103] : memref<48x1152xf32, #tpu.memory_space<vmem>>, vector<48x1152xf32>
    %91 = arith.truncf %90 : vector<48x1152xf32> to vector<48x1152xbf16>
    %c0_104 = arith.constant 0 : index
    %c0_105 = arith.constant 0 : index
    %92 = vector.load %arg21[%c0_104, %c0_105] : memref<1152x384xbf16, #tpu.memory_space<vmem>>, vector<1152x384xbf16>
    %cst_106 = arith.constant dense<0.000000e+00> : vector<48x384xf32>
    %93 = tpu.matmul %91, %92, %cst_106 {dimension_numbers = #tpu.dot_dimension_numbers<[1], [0], [0], [1], [0, 0, 1, 1], [], []>} : vector<48x1152xbf16>, vector<1152x384xbf16>, vector<48x384xf32> -> vector<48x384xf32>
    %c0_107 = arith.constant 0 : index
    %c0_108 = arith.constant 0 : index
    %94 = vector.load %arg10[%c0_107, %c0_108] : memref<1x384xf32, #tpu.memory_space<vmem>>, vector<1x384xf32>
    %95 = vector.broadcast %94 : vector<1x384xf32> to vector<48x384xf32>
    %96 = arith.addf %93, %95 : vector<48x384xf32>
    %cst_109 = arith.constant 0.000000e+00 : f32
    %97 = vector.broadcast %cst_109 : f32 to vector<48x384xf32>
    %98 = arith.maximumf %96, %97 : vector<48x384xf32>
    %c2_i32_110 = arith.constant 2 : i32
    %99 = tpu.memref_slice %arg24[%c2_i32_110] : memref<4x!tpu.dma_semaphore, #tpu.memory_space<semaphore_mem>> -> memref<1x!tpu.dma_semaphore, #tpu.memory_space<semaphore_mem>>
    %100 = tpu.memref_squeeze %99 : memref<1x!tpu.dma_semaphore, #tpu.memory_space<semaphore_mem>> -> memref<!tpu.dma_semaphore, #tpu.memory_space<semaphore_mem>>
    tpu.wait_dma2 semaphore(%100 : memref<!tpu.dma_semaphore, #tpu.memory_space<semaphore_mem>>) src(%arg11 : memref<1152x384xbf16, #tpu.memory_space<any>>) dst(%arg22 : memref<1152x384xbf16, #tpu.memory_space<vmem>>)
    %c0_111 = arith.constant 0 : index
    %c384_112 = arith.constant 384 : index
    %101 = vector.load %arg18[%c0_111, %c384_112] : memref<48x1152xf32, #tpu.memory_space<vmem>>, vector<48x384xf32>
    tpu.vector_store %arg18[%c0_111, %c384_112], %98 {strides = array<i32>} : memref<48x1152xf32, #tpu.memory_space<vmem>>, vector<48x384xf32>,
    %c0_113 = arith.constant 0 : index
    %c384_114 = arith.constant 384 : index
    %102 = vector.load %arg18[%c0_113, %c384_114] : memref<48x1152xf32, #tpu.memory_space<vmem>>, vector<40x384xf32>
    %c8_115 = arith.constant 8 : index
    %c0_116 = arith.constant 0 : index
    %103 = vector.load %arg18[%c8_115, %c0_116] : memref<48x1152xf32, #tpu.memory_space<vmem>>, vector<40x384xf32>
    tpu.vector_store %arg18[%c8_115, %c0_116], %102 {strides = array<i32>} : memref<48x1152xf32, #tpu.memory_space<vmem>>, vector<40x384xf32>,
    %c8_117 = arith.constant 8 : index
    %c384_118 = arith.constant 384 : index
    %104 = vector.load %arg18[%c8_117, %c384_118] : memref<48x1152xf32, #tpu.memory_space<vmem>>, vector<40x384xf32>
    %c0_119 = arith.constant 0 : index
    %c768_120 = arith.constant 768 : index
    %105 = vector.load %arg18[%c0_119, %c768_120] : memref<48x1152xf32, #tpu.memory_space<vmem>>, vector<40x384xf32>
    tpu.vector_store %arg18[%c0_119, %c768_120], %104 {strides = array<i32>} : memref<48x1152xf32, #tpu.memory_space<vmem>>, vector<40x384xf32>,
    %cst_121 = arith.constant 0.000000e+00 : f32
    %106 = vector.broadcast %cst_121 : f32 to vector<8x384xf32>
    %c0_122 = arith.constant 0 : index
    %c0_123 = arith.constant 0 : index
    %107 = vector.load %arg18[%c0_122, %c0_123] : memref<48x1152xf32, #tpu.memory_space<vmem>>, vector<8x384xf32>
    tpu.vector_store %arg18[%c0_122, %c0_123], %106 {strides = array<i32>} : memref<48x1152xf32, #tpu.memory_space<vmem>>, vector<8x384xf32>,
    %c40_124 = arith.constant 40 : index
    %c768_125 = arith.constant 768 : index
    %108 = vector.load %arg18[%c40_124, %c768_125] : memref<48x1152xf32, #tpu.memory_space<vmem>>, vector<8x384xf32>
    tpu.vector_store %arg18[%c40_124, %c768_125], %106 {strides = array<i32>} : memref<48x1152xf32, #tpu.memory_space<vmem>>, vector<8x384xf32>,
    %c0_126 = arith.constant 0 : index
    %c0_127 = arith.constant 0 : index
    %109 = vector.load %arg18[%c0_126, %c0_127] : memref<48x1152xf32, #tpu.memory_space<vmem>>, vector<48x1152xf32>
    %110 = arith.truncf %109 : vector<48x1152xf32> to vector<48x1152xbf16>
    %c0_128 = arith.constant 0 : index
    %c0_129 = arith.constant 0 : index
    %111 = vector.load %arg22[%c0_128, %c0_129] : memref<1152x384xbf16, #tpu.memory_space<vmem>>, vector<1152x384xbf16>
    %cst_130 = arith.constant dense<0.000000e+00> : vector<48x384xf32>
    %112 = tpu.matmul %110, %111, %cst_130 {dimension_numbers = #tpu.dot_dimension_numbers<[1], [0], [0], [1], [0, 0, 1, 1], [], []>} : vector<48x1152xbf16>, vector<1152x384xbf16>, vector<48x384xf32> -> vector<48x384xf32>
    %c0_131 = arith.constant 0 : index
    %c0_132 = arith.constant 0 : index
    %113 = vector.load %arg12[%c0_131, %c0_132] : memref<1x384xf32, #tpu.memory_space<vmem>>, vector<1x384xf32>
    %114 = vector.broadcast %113 : vector<1x384xf32> to vector<48x384xf32>
    %115 = arith.addf %112, %114 : vector<48x384xf32>
    %116 = arith.addf %115, %79 : vector<48x384xf32>
    %cst_133 = arith.constant 0.000000e+00 : f32
    %117 = vector.broadcast %cst_133 : f32 to vector<48x384xf32>
    %118 = arith.maximumf %116, %117 : vector<48x384xf32>
    %c0_134 = arith.constant 0 : index
    %c0_135 = arith.constant 0 : index
    %119 = vector.load %arg18[%c0_134, %c0_135] : memref<48x1152xf32, #tpu.memory_space<vmem>>, vector<48x384xf32>
    tpu.vector_store %arg18[%c0_134, %c0_135], %118 {strides = array<i32>} : memref<48x1152xf32, #tpu.memory_space<vmem>>, vector<48x384xf32>,
    %c0_136 = arith.constant 0 : index
    %c0_137 = arith.constant 0 : index
    %120 = vector.load %arg18[%c0_136, %c0_137] : memref<48x1152xf32, #tpu.memory_space<vmem>>, vector<8x384xf32>
    %c0_138 = arith.constant 0 : index
    %c0_139 = arith.constant 0 : index
    %121 = vector.load %arg19[%c0_138, %c0_139] : memref<8x2304xf32, #tpu.memory_space<vmem>>, vector<8x384xf32>
    tpu.vector_store %arg19[%c0_138, %c0_139], %120 {strides = array<i32>} : memref<8x2304xf32, #tpu.memory_space<vmem>>, vector<8x384xf32>,
    %c8_140 = arith.constant 8 : index
    %c0_141 = arith.constant 0 : index
    %122 = vector.load %arg18[%c8_140, %c0_141] : memref<48x1152xf32, #tpu.memory_space<vmem>>, vector<8x384xf32>
    %c0_142 = arith.constant 0 : index
    %c384_143 = arith.constant 384 : index
    %123 = vector.load %arg19[%c0_142, %c384_143] : memref<8x2304xf32, #tpu.memory_space<vmem>>, vector<8x384xf32>
    tpu.vector_store %arg19[%c0_142, %c384_143], %122 {strides = array<i32>} : memref<8x2304xf32, #tpu.memory_space<vmem>>, vector<8x384xf32>,
    %c16 = arith.constant 16 : index
    %c0_144 = arith.constant 0 : index
    %124 = vector.load %arg18[%c16, %c0_144] : memref<48x1152xf32, #tpu.memory_space<vmem>>, vector<8x384xf32>
    %c0_145 = arith.constant 0 : index
    %c768_146 = arith.constant 768 : index
    %125 = vector.load %arg19[%c0_145, %c768_146] : memref<8x2304xf32, #tpu.memory_space<vmem>>, vector<8x384xf32>
    tpu.vector_store %arg19[%c0_145, %c768_146], %124 {strides = array<i32>} : memref<8x2304xf32, #tpu.memory_space<vmem>>, vector<8x384xf32>,
    %c24 = arith.constant 24 : index
    %c0_147 = arith.constant 0 : index
    %126 = vector.load %arg18[%c24, %c0_147] : memref<48x1152xf32, #tpu.memory_space<vmem>>, vector<8x384xf32>
    %c0_148 = arith.constant 0 : index
    %c1152 = arith.constant 1152 : index
    %127 = vector.load %arg19[%c0_148, %c1152] : memref<8x2304xf32, #tpu.memory_space<vmem>>, vector<8x384xf32>
    tpu.vector_store %arg19[%c0_148, %c1152], %126 {strides = array<i32>} : memref<8x2304xf32, #tpu.memory_space<vmem>>, vector<8x384xf32>,
    %c32 = arith.constant 32 : index
    %c0_149 = arith.constant 0 : index
    %128 = vector.load %arg18[%c32, %c0_149] : memref<48x1152xf32, #tpu.memory_space<vmem>>, vector<8x384xf32>
    %c0_150 = arith.constant 0 : index
    %c1536 = arith.constant 1536 : index
    %129 = vector.load %arg19[%c0_150, %c1536] : memref<8x2304xf32, #tpu.memory_space<vmem>>, vector<8x384xf32>
    tpu.vector_store %arg19[%c0_150, %c1536], %128 {strides = array<i32>} : memref<8x2304xf32, #tpu.memory_space<vmem>>, vector<8x384xf32>,
    %c40_151 = arith.constant 40 : index
    %c0_152 = arith.constant 0 : index
    %130 = vector.load %arg18[%c40_151, %c0_152] : memref<48x1152xf32, #tpu.memory_space<vmem>>, vector<8x384xf32>
    %c0_153 = arith.constant 0 : index
    %c1920 = arith.constant 1920 : index
    %131 = vector.load %arg19[%c0_153, %c1920] : memref<8x2304xf32, #tpu.memory_space<vmem>>, vector<8x384xf32>
    tpu.vector_store %arg19[%c0_153, %c1920], %130 {strides = array<i32>} : memref<8x2304xf32, #tpu.memory_space<vmem>>, vector<8x384xf32>,
    %c3_i32_154 = arith.constant 3 : i32
    %132 = tpu.memref_slice %arg24[%c3_i32_154] : memref<4x!tpu.dma_semaphore, #tpu.memory_space<semaphore_mem>> -> memref<1x!tpu.dma_semaphore, #tpu.memory_space<semaphore_mem>>
    %133 = tpu.memref_squeeze %132 : memref<1x!tpu.dma_semaphore, #tpu.memory_space<semaphore_mem>> -> memref<!tpu.dma_semaphore, #tpu.memory_space<semaphore_mem>>
    tpu.wait_dma2 semaphore(%133 : memref<!tpu.dma_semaphore, #tpu.memory_space<semaphore_mem>>) src(%arg13 : memref<2304x256xbf16, #tpu.memory_space<any>>) dst(%arg23 : memref<2304x256xbf16, #tpu.memory_space<vmem>>)
    %c0_155 = arith.constant 0 : index
    %c0_156 = arith.constant 0 : index
    %134 = vector.load %arg19[%c0_155, %c0_156] : memref<8x2304xf32, #tpu.memory_space<vmem>>, vector<8x2304xf32>
    %135 = arith.truncf %134 : vector<8x2304xf32> to vector<8x2304xbf16>
    %c0_157 = arith.constant 0 : index
    %c0_158 = arith.constant 0 : index
    %136 = vector.load %arg23[%c0_157, %c0_158] : memref<2304x256xbf16, #tpu.memory_space<vmem>>, vector<2304x256xbf16>
    %cst_159 = arith.constant dense<0.000000e+00> : vector<8x256xf32>
    %137 = tpu.matmul %135, %136, %cst_159 {dimension_numbers = #tpu.dot_dimension_numbers<[1], [0], [0], [1], [0, 0, 1, 1], [], []>} : vector<8x2304xbf16>, vector<2304x256xbf16>, vector<8x256xf32> -> vector<8x256xf32>
    %c0_160 = arith.constant 0 : index
    %c0_161 = arith.constant 0 : index
    %138 = vector.load %arg14[%c0_160, %c0_161] : memref<1x256xf32, #tpu.memory_space<vmem>>, vector<1x256xf32>
    %139 = vector.broadcast %138 : vector<1x256xf32> to vector<8x256xf32>
    %140 = arith.addf %137, %139 : vector<8x256xf32>
    %cst_162 = arith.constant 0.000000e+00 : f32
    %141 = vector.broadcast %cst_162 : f32 to vector<8x256xf32>
    %142 = arith.maximumf %140, %141 : vector<8x256xf32>
    %143 = arith.truncf %142 : vector<8x256xf32> to vector<8x256xbf16>
    %c0_163 = arith.constant 0 : index
    %c0_164 = arith.constant 0 : index
    %144 = vector.load %arg15[%c0_163, %c0_164] : memref<256x128xbf16, #tpu.memory_space<vmem>>, vector<256x128xbf16>
    %cst_165 = arith.constant dense<0.000000e+00> : vector<8x128xf32>
    %145 = tpu.matmul %143, %144, %cst_165 {dimension_numbers = #tpu.dot_dimension_numbers<[1], [0], [0], [1], [0, 0, 1, 1], [], []>} : vector<8x256xbf16>, vector<256x128xbf16>, vector<8x128xf32> -> vector<8x128xf32>
    %c0_166 = arith.constant 0 : index
    %c0_167 = arith.constant 0 : index
    %146 = vector.load %arg16[%c0_166, %c0_167] : memref<1x128xf32, #tpu.memory_space<vmem>>, vector<1x128xf32>
    %147 = vector.broadcast %146 : vector<1x128xf32> to vector<8x128xf32>
    %148 = arith.addf %145, %147 : vector<8x128xf32>
    %c0_168 = arith.constant 0 : index
    %c0_169 = arith.constant 0 : index
    %149 = vector.load %arg17[%c0_168, %c0_169] : memref<8x128xf32, #tpu.memory_space<vmem>>, vector<8x128xf32>
    tpu.vector_store %arg17[%c0_168, %c0_169], %148 {strides = array<i32>} : memref<8x128xf32, #tpu.memory_space<vmem>>, vector<8x128xf32>,
    return
  }
}

</mosaic_0001>

<llo_original>
// kernel: deep_q_forward.1
$region0: #{deep_q_forward.1}
  #allocation0 [shape = 'u32[]', space=smem, size = 0x4, offset = 0x4, fixed_abs, tag = 'smem constant byte address 0x4 - core index']
  #allocation1 [shape = 'u32[144,128]{1,0:T(1,128)}', space=vmem, size = 0x12000, scoped, tag = 'internal scratch']
  #allocation2 [shape = 'f32[48,1152]{1,0:T(8,128)}', space=vmem, size = 0x36000, scoped, tag = 'scratch operand']
  #allocation3 [shape = 'f32[8,2304]{1,0:T(8,128)}', space=vmem, size = 0x12000, scoped, tag = 'scratch operand']
  #allocation4 [shape = 'bf16[576,384]{1,0:T(8,128)(2,1)}', space=vmem, size = 0x6c000, scoped, tag = 'scratch operand']
  #allocation5 [shape = 'bf16[1152,384]{1,0:T(8,128)(2,1)}', space=vmem, size = 0xd8000, scoped, tag = 'scratch operand']
  #allocation6 [shape = 'bf16[1152,384]{1,0:T(8,128)(2,1)}', space=vmem, size = 0xd8000, scoped, tag = 'scratch operand']
  #allocation7 [shape = 'bf16[2304,256]{1,0:T(8,128)(2,1)}', space=vmem, size = 0x120000, scoped, tag = 'scratch operand']
  #allocation8 [shape = 's32[4]{0}', space=sflag, size = 0x10, scoped, tag = 'scratch operand']
  #allocation20 [shape = 's32[]', space=sflag, size = 0x4, offset = 0, fixed_abs, tag = 'sflag constant byte address 0x0 - dummy sync flag']
  #allocation21 [shape = 's32[]', space=sflag, size = 0x4, offset = 0, fixed_abs, tag = 'sflag constant byte address 0x0 - dummy sync flag']
  #allocation22 [shape = 's32[]', space=sflag, size = 0x4, offset = 0, fixed_abs, tag = 'sflag constant byte address 0x0 - dummy sync flag']
  #allocation23 [shape = 'u32[]', space=smem, size = 0x4, offset = 0x44, fixed_abs, tag = 'smem constant byte address 0x44 - assertion arg 0']
  #allocation24 [shape = 'u32[]', space=smem, size = 0x4, offset = 0x48, fixed_abs, tag = 'smem constant byte address 0x48 - assertion arg 1']
  #allocation25 [shape = 's32[]', space=sflag, size = 0x4, offset = 0, fixed_abs, tag = 'sflag constant byte address 0x0 - dummy sync flag']
  #allocation26 [shape = 's32[]', space=sflag, size = 0x4, offset = 0, fixed_abs, tag = 'sflag constant byte address 0x0 - dummy sync flag']
  #allocation27 [shape = 's32[]', space=sflag, size = 0x4, offset = 0, fixed_abs, tag = 'sflag constant byte address 0x0 - dummy sync flag']
  %s0 = inlined_call_operand.vmem [shape: f32[48,48], index: 0, kind: input, shape index: {}]
  %s1 = inlined_call_operand.hbm [shape: bf16[144,192], index: 1, kind: input, shape index: {}]
  %s2 = inlined_call_operand.vmem [shape: f32[1,192], index: 2, kind: input, shape index: {}]
  %s3 = inlined_call_operand.vmem [shape: bf16[576,192], index: 3, kind: input, shape index: {}]
  %s4 = inlined_call_operand.hbm [shape: f32[1,192], index: 4, kind: input, shape index: {}]
  %s5 = inlined_call_operand.vmem [shape: bf16[576,192], index: 5, kind: input, shape index: {}]
  %s6 = inlined_call_operand.hbm [shape: f32[1,192], index: 6, kind: input, shape index: {}]
  %s7 = inlined_call_operand.vmem [shape: bf16[576,384], index: 7, kind: input, shape index: {}]
  %s8 = inlined_call_operand.vmem [shape: f32[1,384], index: 8, kind: input, shape index: {}]
  %s9 = inlined_call_operand.hbm [shape: bf16[1152,384], index: 9, kind: input, shape index: {}]
  %s10 = inlined_call_operand.hbm [shape: f32[1,384], index: 10, kind: input, shape index: {}]
  %s11 = inlined_call_operand.hbm [shape: bf16[1152,384], index: 11, kind: input, shape index: {}]
  %s12 = inlined_call_operand.hbm [shape: f32[1,384], index: 12, kind: input, shape index: {}]
  %s13 = inlined_call_operand.vmem [shape: bf16[2304,256], index: 13, kind: input, shape index: {}]
  %s14 = inlined_call_operand.hbm [shape: f32[1,256], index: 14, kind: input, shape index: {}]
  %s15 = inlined_call_operand.vmem [shape: bf16[256,128], index: 15, kind: input, shape index: {}]
  %s16 = inlined_call_operand.hbm [shape: f32[1,128], index: 16, kind: input, shape index: {}]
  %s17 = inlined_call_operand.vmem [shape: f32[8,128], index: 17, kind: output, shape index: {}]
  %s18 = sld [smem:[#allocation0]]
  $region166: #{deep_q_forward.1} parent=0
    _
  %s20 = ssub.s32 1, %s18
  %s21 = scalar_select 0, %s20, %s18
  $region1: #{deep_q_forward.1} parent=0
    #allocation9 [shape = 'u8[73728]{0}', space=vmem, size = 0x12000, scoped, tag = 'input window, operand 1, single buffered']
    #allocation10 [shape = 's32[1]{0}', space=sflag, size = 0x4, scoped, tag = 'scoped memory for deep_q_forward.1']
    #allocation11 [shape = 'u8[1024]{0}', space=vmem, size = 0x400, scoped, tag = 'input window, operand 4, single buffered']
    #allocation12 [shape = 's32[1]{0}', space=sflag, size = 0x4, scoped, tag = 'scoped memory for deep_q_forward.1']
    #allocation13 [shape = 'u8[1024]{0}', space=vmem, size = 0x400, scoped, tag = 'input window, operand 6, single buffered']
    #allocation14 [shape = 'u8[1536]{0}', space=vmem, size = 0x800, scoped, tag = 'input window, operand 10, single buffered']
    #allocation15 [shape = 's32[1]{0}', space=sflag, size = 0x4, scoped, tag = 'scoped memory for deep_q_forward.1']
    #allocation16 [shape = 'u8[1536]{0}', space=vmem, size = 0x800, scoped, tag = 'input window, operand 12, single buffered']
    #allocation17 [shape = 'u8[1024]{0}', space=vmem, size = 0x400, scoped, tag = 'input window, operand 14, single buffered']
    #allocation18 [shape = 's32[1]{0}', space=sflag, size = 0x4, scoped, tag = 'scoped memory for deep_q_forward.1']
    #allocation19 [shape = 'u8[512]{0}', space=vmem, size = 0x400, scoped, tag = 'input window, operand 16, single buffered']
    %22 = vsyncpa [#allocation10], 0
    %23 = vsyncpa [#allocation12], 0
    %24 = vsyncpa [#allocation15], 0
    %25 = vsyncpa [#allocation18], 0
    // Predicated region
    $region2: #{deep_q_forward.1} parent=1 // pred_check
      _
    $region3: #{deep_q_forward.1} parent=1 // pred_check_branch
      %27 = sbr.rel (0) target = $region5
    $region4: #{deep_q_forward.1} parent=1 // pred_region
      _
    $region5: #{deep_q_forward.1} parent=1 // pred_fallthru
      _
    // Predicated region
    $region6: #{deep_q_forward.1} parent=1 // pred_check
      _
    $region7: #{deep_q_forward.1} parent=1 // pred_check_branch
      %29 = sbr.rel (0) target = $region9
    $region8: #{deep_q_forward.1} parent=1 // pred_region
      %s31 = ssub.s32 2304, 2304
      %32 = vsyncadd [#allocation10], %s31
      %s33 = sshll.u32 [#allocation9], 4
      %s34 = int_to_ptr.vmem [resolvable:$true] %s33
      %39 = dma.hbm_to_vmem [thread:$0]  %s1, 2304, %s34, [#allocation10], 128, 128, 8
    $region9: #{deep_q_forward.1} parent=1 // pred_fallthru
      _
    // Predicated region
    $region10: #{deep_q_forward.1} parent=1 // pred_check
      _
    $region11: #{deep_q_forward.1} parent=1 // pred_check_branch
      %41 = sbr.rel (0) target = $region13
    $region12: #{deep_q_forward.1} parent=1 // pred_region
      _
    $region13: #{deep_q_forward.1} parent=1 // pred_fallthru
      _
    // Predicated region
    $region14: #{deep_q_forward.1} parent=1 // pred_check
      _
    $region15: #{deep_q_forward.1} parent=1 // pred_check_branch
      %43 = sbr.rel (0) target = $region17
    $region16: #{deep_q_forward.1} parent=1 // pred_region
      _
    $region17: #{deep_q_forward.1} parent=1 // pred_fallthru
      _
    // Predicated region
    $region18: #{deep_q_forward.1} parent=1 // pred_check
      _
    $region19: #{deep_q_forward.1} parent=1 // pred_check_branch
      %45 = sbr.rel (0) target = $region21
    $region20: #{deep_q_forward.1} parent=1 // pred_region
      %s47 = ssub.s32 32, 32
      %48 = vsyncadd [#allocation12], %s47
      %s50 = sshll.u32 [#allocation11], 4
      %s51 = int_to_ptr.vmem [resolvable:$true] %s50
      %53 = dma.hbm_to_vmem [thread:$0]  %s4, 32, %s51, [#allocation12]
    $region21: #{deep_q_forward.1} parent=1 // pred_fallthru
      _
    // Predicated region
    $region22: #{deep_q_forward.1} parent=1 // pred_check
      _
    $region23: #{deep_q_forward.1} parent=1 // pred_check_branch
      %55 = sbr.rel (0) target = $region25
    $region24: #{deep_q_forward.1} parent=1 // pred_region
      _
    $region25: #{deep_q_forward.1} parent=1 // pred_fallthru
      _
    // Predicated region
    $region26: #{deep_q_forward.1} parent=1 // pred_check
      _
    $region27: #{deep_q_forward.1} parent=1 // pred_check_branch
      %57 = sbr.rel (0) target = $region29
    $region28: #{deep_q_forward.1} parent=1 // pred_region
      %s59 = ssub.s32 32, 32
      %60 = vsyncadd [#allocation12], %s59
      %s62 = sshll.u32 [#allocation13], 4
      %s63 = int_to_ptr.vmem [resolvable:$true] %s62
      %65 = dma.hbm_to_vmem [thread:$0]  %s6, 32, %s63, [#allocation12]
    $region29: #{deep_q_forward.1} parent=1 // pred_fallthru
      _
    // Predicated region
    $region30: #{deep_q_forward.1} parent=1 // pred_check
      _
    $region31: #{deep_q_forward.1} parent=1 // pred_check_branch
      %67 = sbr.rel (0) target = $region33
    $region32: #{deep_q_forward.1} parent=1 // pred_region
      _
    $region33: #{deep_q_forward.1} parent=1 // pred_fallthru
      _
    // Predicated region
    $region34: #{deep_q_forward.1} parent=1 // pred_check
      _
    $region35: #{deep_q_forward.1} parent=1 // pred_check_branch
      %69 = sbr.rel (0) target = $region37
    $region36: #{deep_q_forward.1} parent=1 // pred_region
      %s71 = ssub.s32 48, 48
      %72 = vsyncadd [#allocation15], %s71
      %s74 = sshll.u32 [#allocation14], 4
      %s75 = int_to_ptr.vmem [resolvable:$true] %s74
      %77 = dma.hbm_to_vmem [thread:$0]  %s10, 48, %s75, [#allocation15]
    $region37: #{deep_q_forward.1} parent=1 // pred_fallthru
      _
    // Predicated region
    $region38: #{deep_q_forward.1} parent=1 // pred_check
      _
    $region39: #{deep_q_forward.1} parent=1 // pred_check_branch
      %79 = sbr.rel (0) target = $region41
    $region40: #{deep_q_forward.1} parent=1 // pred_region
      %s81 = ssub.s32 48, 48
      %82 = vsyncadd [#allocation15], %s81
      %s84 = sshll.u32 [#allocation16], 4
      %s85 = int_to_ptr.vmem [resolvable:$true] %s84
      %87 = dma.hbm_to_vmem [thread:$0]  %s12, 48, %s85, [#allocation15]
    $region41: #{deep_q_forward.1} parent=1 // pred_fallthru
      _
    // Predicated region
    $region42: #{deep_q_forward.1} parent=1 // pred_check
      _
    $region43: #{deep_q_forward.1} parent=1 // pred_check_branch
      %89 = sbr.rel (0) target = $region45
    $region44: #{deep_q_forward.1} parent=1 // pred_region
      %s91 = ssub.s32 32, 32
      %92 = vsyncadd [#allocation18], %s91
      %s94 = sshll.u32 [#allocation17], 4
      %s95 = int_to_ptr.vmem [resolvable:$true] %s94
      %97 = dma.hbm_to_vmem [thread:$0]  %s14, 32, %s95, [#allocation18]
    $region45: #{deep_q_forward.1} parent=1 // pred_fallthru
      _
    // Predicated region
    $region46: #{deep_q_forward.1} parent=1 // pred_check
      _
    $region47: #{deep_q_forward.1} parent=1 // pred_check_branch
      %99 = sbr.rel (0) target = $region49
    $region48: #{deep_q_forward.1} parent=1 // pred_region
      _
    $region49: #{deep_q_forward.1} parent=1 // pred_fallthru
      _
    // Predicated region
    $region50: #{deep_q_forward.1} parent=1 // pred_check
      _
    $region51: #{deep_q_forward.1} parent=1 // pred_check_branch
      %101 = sbr.rel (0) target = $region53
    $region52: #{deep_q_forward.1} parent=1 // pred_region
      %s103 = ssub.s32 16, 16
      %104 = vsyncadd [#allocation18], %s103
      %s106 = sshll.u32 [#allocation19], 4
      %s107 = int_to_ptr.vmem [resolvable:$true] %s106
      %109 = dma.hbm_to_vmem [thread:$0]  %s16, 16, %s107, [#allocation18]
    $region53: #{deep_q_forward.1} parent=1 // pred_fallthru
      _
    // Predicated region
    $region54: #{deep_q_forward.1} parent=1 // pred_check
      _
    $region55: #{deep_q_forward.1} parent=1 // pred_check_branch
      %111 = sbr.rel (0) target = $region57
    $region56: #{deep_q_forward.1} parent=1 // pred_region
      %112 = dma.done [#allocation10], 2304
    $region57: #{deep_q_forward.1} parent=1 // pred_fallthru
      _
    // Predicated region
    $region58: #{deep_q_forward.1} parent=1 // pred_check
      _
    $region59: #{deep_q_forward.1} parent=1 // pred_check_branch
      %114 = sbr.rel (0) target = $region61
    $region60: #{deep_q_forward.1} parent=1 // pred_region
      %115 = dma.done [#allocation12], 32
    $region61: #{deep_q_forward.1} parent=1 // pred_fallthru
      _
    // Predicated region
    $region62: #{deep_q_forward.1} parent=1 // pred_check
      _
    $region63: #{deep_q_forward.1} parent=1 // pred_check_branch
      %117 = sbr.rel (0) target = $region65
    $region64: #{deep_q_forward.1} parent=1 // pred_region
      %118 = dma.done [#allocation12], 32
    $region65: #{deep_q_forward.1} parent=1 // pred_fallthru
      _
    // Predicated region
    $region66: #{deep_q_forward.1} parent=1 // pred_check
      _
    $region67: #{deep_q_forward.1} parent=1 // pred_check_branch
      %120 = sbr.rel (0) target = $region69
    $region68: #{deep_q_forward.1} parent=1 // pred_region
      %121 = dma.done [#allocation15], 48
    $region69: #{deep_q_forward.1} parent=1 // pred_fallthru
      _
    // Predicated region
    $region70: #{deep_q_forward.1} parent=1 // pred_check
      _
    $region71: #{deep_q_forward.1} parent=1 // pred_check_branch
      %123 = sbr.rel (0) target = $region73
    $region72: #{deep_q_forward.1} parent=1 // pred_region
      %124 = dma.done [#allocation15], 48
    $region73: #{deep_q_forward.1} parent=1 // pred_fallthru
      _
    // Predicated region
    $region74: #{deep_q_forward.1} parent=1 // pred_check
      _
    $region75: #{deep_q_forward.1} parent=1 // pred_check_branch
      %126 = sbr.rel (0) target = $region77
    $region76: #{deep_q_forward.1} parent=1 // pred_region
      %127 = dma.done [#allocation18], 32
    $region77: #{deep_q_forward.1} parent=1 // pred_fallthru
      _
    // Predicated region
    $region78: #{deep_q_forward.1} parent=1 // pred_check
      _
    $region79: #{deep_q_forward.1} parent=1 // pred_check_branch
      %129 = sbr.rel (0) target = $region81
    $region80: #{deep_q_forward.1} parent=1 // pred_region
      %130 = dma.done [#allocation18], 16
    $region81: #{deep_q_forward.1} parent=1 // pred_fallthru
      _
    %p133 = scmp.lt.u32.totalorder 864, 8
    %p134 = pneg %p133
    // Predicated region
    $region82: #{deep_q_forward.1} parent=1 // pred_check
      _
    $region83: #{deep_q_forward.1} parent=1 // pred_check_branch
      %136 = sbr.rel (%p133) target = $region85
    $region84: #{deep_q_forward.1} parent=1 // pred_region
      %s152 = sand.u32 864, 7
      %p153 = scmp.eq.s32.totalorder %s152, 0
      // Predicated region
      $region97: #{deep_q_forward.1} parent=84 // pred_check
        %p154 = pneg %p153
      $region98: #{deep_q_forward.1} parent=84 // pred_check_branch
        %156 = sbr.rel (%p154) target = $region100
      $region99: #{deep_q_forward.1} parent=84 // pred_region
        loop: start=0, step=1, limit=1
        $region101: #{deep_q_forward.1} parent=99 // loop_pre_header
          _
        $region102: #{deep_q_forward.1} parent=99 // loop_header
          %s158 = sphi 0, %s162
          %p159 = scmp.ge.s32.totalorder %s158, 1
          %s163 = sphi %s7, %s7
          %s164 = sphi [#allocation4], [#allocation4]
        $region103: #{deep_q_forward.1} parent=99 // loop_header_branch
          %161 = sbr.rel (%p159) target = $region107
        $region104: #{deep_q_forward.1} parent=99 // loop_body
          %v165 = vld [vmem:[%s163] sm:$0xff]
          %166 = vst [vmem:[%s164] sm:$0xff] %v165
          %v167 = vld [vmem:[%s163 + $0x8] sm:$0xff]
          %168 = vst [vmem:[%s164 + $0x8] sm:$0xff] %v167
          %v169 = vld [vmem:[%s163 + $0x10] sm:$0xff]
          %170 = vst [vmem:[%s164 + $0x10] sm:$0xff] %v169
          %v171 = vld [vmem:[%s163 + $0x18] sm:$0xff]
          %172 = vst [vmem:[%s164 + $0x18] sm:$0xff] %v171
          %v173 = vld [vmem:[%s163 + $0x20] sm:$0xff]
          %174 = vst [vmem:[%s164 + $0x20] sm:$0xff] %v173
          %v175 = vld [vmem:[%s163 + $0x28] sm:$0xff]
          %176 = vst [vmem:[%s164 + $0x28] sm:$0xff] %v175
          %v177 = vld [vmem:[%s163 + $0x30] sm:$0xff]
          %178 = vst [vmem:[%s164 + $0x30] sm:$0xff] %v177
          %v179 = vld [vmem:[%s163 + $0x38] sm:$0xff]
          %180 = vst [vmem:[%s164 + $0x38] sm:$0xff] %v179
          %v181 = vld [vmem:[%s163 + $0x40] sm:$0xff]
          %182 = vst [vmem:[%s164 + $0x40] sm:$0xff] %v181
          %v183 = vld [vmem:[%s163 + $0x48] sm:$0xff]
          %184 = vst [vmem:[%s164 + $0x48] sm:$0xff] %v183
          %v185 = vld [vmem:[%s163 + $0x50] sm:$0xff]
          %186 = vst [vmem:[%s164 + $0x50] sm:$0xff] %v185
          %v187 = vld [vmem:[%s163 + $0x58] sm:$0xff]
          %188 = vst [vmem:[%s164 + $0x58] sm:$0xff] %v187
          %v189 = vld [vmem:[%s163 + $0x60] sm:$0xff]
          %190 = vst [vmem:[%s164 + $0x60] sm:$0xff] %v189
          %v191 = vld [vmem:[%s163 + $0x68] sm:$0xff]
          %192 = vst [vmem:[%s164 + $0x68] sm:$0xff] %v191
          %v193 = vld [vmem:[%s163 + $0x70] sm:$0xff]
          %194 = vst [vmem:[%s164 + $0x70] sm:$0xff] %v193
          %v195 = vld [vmem:[%s163 + $0x78] sm:$0xff]
          %196 = vst [vmem:[%s164 + $0x78] sm:$0xff] %v195
          %v197 = vld [vmem:[%s163 + $0x80] sm:$0xff]
          %198 = vst [vmem:[%s164 + $0x80] sm:$0xff] %v197
          %v199 = vld [vmem:[%s163 + $0x88] sm:$0xff]
          %200 = vst [vmem:[%s164 + $0x88] sm:$0xff] %v199
          %v201 = vld [vmem:[%s163 + $0x90] sm:$0xff]
          %202 = vst [vmem:[%s164 + $0x90] sm:$0xff] %v201
          %v203 = vld [vmem:[%s163 + $0x98] sm:$0xff]
          %204 = vst [vmem:[%s164 + $0x98] sm:$0xff] %v203
          %v205 = vld [vmem:[%s163 + $0xa0] sm:$0xff]
          %206 = vst [vmem:[%s164 + $0xa0] sm:$0xff] %v205
          %v207 = vld [vmem:[%s163 + $0xa8] sm:$0xff]
          %208 = vst [vmem:[%s164 + $0xa8] sm:$0xff] %v207
          %v209 = vld [vmem:[%s163 + $0xb0] sm:$0xff]
          %210 = vst [vmem:[%s164 + $0xb0] sm:$0xff] %v209
          %v211 = vld [vmem:[%s163 + $0xb8] sm:$0xff]
          %212 = vst [vmem:[%s164 + $0xb8] sm:$0xff] %v211
          %v213 = vld [vmem:[%s163 + $0xc0] sm:$0xff]
          %214 = vst [vmem:[%s164 + $0xc0] sm:$0xff] %v213
          %v215 = vld [vmem:[%s163 + $0xc8] sm:$0xff]
          %216 = vst [vmem:[%s164 + $0xc8] sm:$0xff] %v215
          %v217 = vld [vmem:[%s163 + $0xd0] sm:$0xff]
          %218 = vst [vmem:[%s164 + $0xd0] sm:$0xff] %v217
          %v219 = vld [vmem:[%s163 + $0xd8] sm:$0xff]
          %220 = vst [vmem:[%s164 + $0xd8] sm:$0xff] %v219
          %v221 = vld [vmem:[%s163 + $0xe0] sm:$0xff]
          %222 = vst [vmem:[%s164 + $0xe0] sm:$0xff] %v221
          %v223 = vld [vmem:[%s163 + $0xe8] sm:$0xff]
          %224 = vst [vmem:[%s164 + $0xe8] sm:$0xff] %v223
          %v225 = vld [vmem:[%s163 + $0xf0] sm:$0xff]
          %226 = vst [vmem:[%s164 + $0xf0] sm:$0xff] %v225
          %v227 = vld [vmem:[%s163 + $0xf8] sm:$0xff]
          %228 = vst [vmem:[%s164 + $0xf8] sm:$0xff] %v227
          %v229 = vld [vmem:[%s163 + $0x100] sm:$0xff]
          %230 = vst [vmem:[%s164 + $0x100] sm:$0xff] %v229
          %v231 = vld [vmem:[%s163 + $0x108] sm:$0xff]
          %232 = vst [vmem:[%s164 + $0x108] sm:$0xff] %v231
          %v233 = vld [vmem:[%s163 + $0x110] sm:$0xff]
          %234 = vst [vmem:[%s164 + $0x110] sm:$0xff] %v233
          %v235 = vld [vmem:[%s163 + $0x118] sm:$0xff]
          %236 = vst [vmem:[%s164 + $0x118] sm:$0xff] %v235
          %v237 = vld [vmem:[%s163 + $0x120] sm:$0xff]
          %238 = vst [vmem:[%s164 + $0x120] sm:$0xff] %v237
          %v239 = vld [vmem:[%s163 + $0x128] sm:$0xff]
          %240 = vst [vmem:[%s164 + $0x128] sm:$0xff] %v239
          %v241 = vld [vmem:[%s163 + $0x130] sm:$0xff]
          %242 = vst [vmem:[%s164 + $0x130] sm:$0xff] %v241
          %v243 = vld [vmem:[%s163 + $0x138] sm:$0xff]
          %244 = vst [vmem:[%s164 + $0x138] sm:$0xff] %v243
          %v245 = vld [vmem:[%s163 + $0x140] sm:$0xff]
          %246 = vst [vmem:[%s164 + $0x140] sm:$0xff] %v245
          %v247 = vld [vmem:[%s163 + $0x148] sm:$0xff]
          %248 = vst [vmem:[%s164 + $0x148] sm:$0xff] %v247
          %v249 = vld [vmem:[%s163 + $0x150] sm:$0xff]
          %250 = vst [vmem:[%s164 + $0x150] sm:$0xff] %v249
          %v251 = vld [vmem:[%s163 + $0x158] sm:$0xff]
          %252 = vst [vmem:[%s164 + $0x158] sm:$0xff] %v251
          %v253 = vld [vmem:[%s163 + $0x160] sm:$0xff]
          %254 = vst [vmem:[%s164 + $0x160] sm:$0xff] %v253
          %v255 = vld [vmem:[%s163 + $0x168] sm:$0xff]
          %256 = vst [vmem:[%s164 + $0x168] sm:$0xff] %v255
          %v257 = vld [vmem:[%s163 + $0x170] sm:$0xff]
          %258 = vst [vmem:[%s164 + $0x170] sm:$0xff] %v257
          %v259 = vld [vmem:[%s163 + $0x178] sm:$0xff]
          %260 = vst [vmem:[%s164 + $0x178] sm:$0xff] %v259
          %v261 = vld [vmem:[%s163 + $0x180] sm:$0xff]
          %262 = vst [vmem:[%s164 + $0x180] sm:$0xff] %v261
          %v263 = vld [vmem:[%s163 + $0x188] sm:$0xff]
          %264 = vst [vmem:[%s164 + $0x188] sm:$0xff] %v263
          %v265 = vld [vmem:[%s163 + $0x190] sm:$0xff]
          %266 = vst [vmem:[%s164 + $0x190] sm:$0xff] %v265
          %v267 = vld [vmem:[%s163 + $0x198] sm:$0xff]
          %268 = vst [vmem:[%s164 + $0x198] sm:$0xff] %v267
          %v269 = vld [vmem:[%s163 + $0x1a0] sm:$0xff]
          %270 = vst [vmem:[%s164 + $0x1a0] sm:$0xff] %v269
          %v271 = vld [vmem:[%s163 + $0x1a8] sm:$0xff]
          %272 = vst [vmem:[%s164 + $0x1a8] sm:$0xff] %v271
          %v273 = vld [vmem:[%s163 + $0x1b0] sm:$0xff]
          %274 = vst [vmem:[%s164 + $0x1b0] sm:$0xff] %v273
          %v275 = vld [vmem:[%s163 + $0x1b8] sm:$0xff]
          %276 = vst [vmem:[%s164 + $0x1b8] sm:$0xff] %v275
          %v277 = vld [vmem:[%s163 + $0x1c0] sm:$0xff]
          %278 = vst [vmem:[%s164 + $0x1c0] sm:$0xff] %v277
          %v279 = vld [vmem:[%s163 + $0x1c8] sm:$0xff]
          %280 = vst [vmem:[%s164 + $0x1c8] sm:$0xff] %v279
          %v281 = vld [vmem:[%s163 + $0x1d0] sm:$0xff]
          %282 = vst [vmem:[%s164 + $0x1d0] sm:$0xff] %v281
          %v283 = vld [vmem:[%s163 + $0x1d8] sm:$0xff]
          %284 = vst [vmem:[%s164 + $0x1d8] sm:$0xff] %v283
          %v285 = vld [vmem:[%s163 + $0x1e0] sm:$0xff]
          %286 = vst [vmem:[%s164 + $0x1e0] sm:$0xff] %v285
          %v287 = vld [vmem:[%s163 + $0x1e8] sm:$0xff]
          %288 = vst [vmem:[%s164 + $0x1e8] sm:$0xff] %v287
          %v289 = vld [vmem:[%s163 + $0x1f0] sm:$0xff]
          %290 = vst [vmem:[%s164 + $0x1f0] sm:$0xff] %v289
          %v291 = vld [vmem:[%s163 + $0x1f8] sm:$0xff]
          %292 = vst [vmem:[%s164 + $0x1f8] sm:$0xff] %v291
          %v293 = vld [vmem:[%s163 + $0x200] sm:$0xff]
          %294 = vst [vmem:[%s164 + $0x200] sm:$0xff] %v293
          %v295 = vld [vmem:[%s163 + $0x208] sm:$0xff]
          %296 = vst [vmem:[%s164 + $0x208] sm:$0xff] %v295
          %v297 = vld [vmem:[%s163 + $0x210] sm:$0xff]
          %298 = vst [vmem:[%s164 + $0x210] sm:$0xff] %v297
          %v299 = vld [vmem:[%s163 + $0x218] sm:$0xff]
          %300 = vst [vmem:[%s164 + $0x218] sm:$0xff] %v299
          %v301 = vld [vmem:[%s163 + $0x220] sm:$0xff]
          %302 = vst [vmem:[%s164 + $0x220] sm:$0xff] %v301
          %v303 = vld [vmem:[%s163 + $0x228] sm:$0xff]
          %304 = vst [vmem:[%s164 + $0x228] sm:$0xff] %v303
          %v305 = vld [vmem:[%s163 + $0x230] sm:$0xff]
          %306 = vst [vmem:[%s164 + $0x230] sm:$0xff] %v305
          %v307 = vld [vmem:[%s163 + $0x238] sm:$0xff]
          %308 = vst [vmem:[%s164 + $0x238] sm:$0xff] %v307
          %v309 = vld [vmem:[%s163 + $0x240] sm:$0xff]
          %310 = vst [vmem:[%s164 + $0x240] sm:$0xff] %v309
          %v311 = vld [vmem:[%s163 + $0x248] sm:$0xff]
          %312 = vst [vmem:[%s164 + $0x248] sm:$0xff] %v311
          %v313 = vld [vmem:[%s163 + $0x250] sm:$0xff]
          %314 = vst [vmem:[%s164 + $0x250] sm:$0xff] %v313
          %v315 = vld [vmem:[%s163 + $0x258] sm:$0xff]
          %316 = vst [vmem:[%s164 + $0x258] sm:$0xff] %v315
          %v317 = vld [vmem:[%s163 + $0x260] sm:$0xff]
          %318 = vst [vmem:[%s164 + $0x260] sm:$0xff] %v317
          %v319 = vld [vmem:[%s163 + $0x268] sm:$0xff]
          %320 = vst [vmem:[%s164 + $0x268] sm:$0xff] %v319
          %v321 = vld [vmem:[%s163 + $0x270] sm:$0xff]
          %322 = vst [vmem:[%s164 + $0x270] sm:$0xff] %v321
          %v323 = vld [vmem:[%s163 + $0x278] sm:$0xff]
          %324 = vst [vmem:[%s164 + $0x278] sm:$0xff] %v323
          %v325 = vld [vmem:[%s163 + $0x280] sm:$0xff]
          %326 = vst [vmem:[%s164 + $0x280] sm:$0xff] %v325
          %v327 = vld [vmem:[%s163 + $0x288] sm:$0xff]
          %328 = vst [vmem:[%s164 + $0x288] sm:$0xff] %v327
          %v329 = vld [vmem:[%s163 + $0x290] sm:$0xff]
          %330 = vst [vmem:[%s164 + $0x290] sm:$0xff] %v329
          %v331 = vld [vmem:[%s163 + $0x298] sm:$0xff]
          %332 = vst [vmem:[%s164 + $0x298] sm:$0xff] %v331
          %v333 = vld [vmem:[%s163 + $0x2a0] sm:$0xff]
          %334 = vst [vmem:[%s164 + $0x2a0] sm:$0xff] %v333
          %v335 = vld [vmem:[%s163 + $0x2a8] sm:$0xff]
          %336 = vst [vmem:[%s164 + $0x2a8] sm:$0xff] %v335
          %v337 = vld [vmem:[%s163 + $0x2b0] sm:$0xff]
          %338 = vst [vmem:[%s164 + $0x2b0] sm:$0xff] %v337
          %v339 = vld [vmem:[%s163 + $0x2b8] sm:$0xff]
          %340 = vst [vmem:[%s164 + $0x2b8] sm:$0xff] %v339
          %v341 = vld [vmem:[%s163 + $0x2c0] sm:$0xff]
          %342 = vst [vmem:[%s164 + $0x2c0] sm:$0xff] %v341
          %v343 = vld [vmem:[%s163 + $0x2c8] sm:$0xff]
          %344 = vst [vmem:[%s164 + $0x2c8] sm:$0xff] %v343
          %v345 = vld [vmem:[%s163 + $0x2d0] sm:$0xff]
          %346 = vst [vmem:[%s164 + $0x2d0] sm:$0xff] %v345
          %v347 = vld [vmem:[%s163 + $0x2d8] sm:$0xff]
          %348 = vst [vmem:[%s164 + $0x2d8] sm:$0xff] %v347
          %v349 = vld [vmem:[%s163 + $0x2e0] sm:$0xff]
          %350 = vst [vmem:[%s164 + $0x2e0] sm:$0xff] %v349
          %v351 = vld [vmem:[%s163 + $0x2e8] sm:$0xff]
          %352 = vst [vmem:[%s164 + $0x2e8] sm:$0xff] %v351
          %v353 = vld [vmem:[%s163 + $0x2f0] sm:$0xff]
          %354 = vst [vmem:[%s164 + $0x2f0] sm:$0xff] %v353
          %v355 = vld [vmem:[%s163 + $0x2f8] sm:$0xff]
          %356 = vst [vmem:[%s164 + $0x2f8] sm:$0xff] %v355
          %v357 = vld [vmem:[%s163 + $0x300] sm:$0xff]
          %358 = vst [vmem:[%s164 + $0x300] sm:$0xff] %v357
          %v359 = vld [vmem:[%s163 + $0x308] sm:$0xff]
          %360 = vst [vmem:[%s164 + $0x308] sm:$0xff] %v359
          %v361 = vld [vmem:[%s163 + $0x310] sm:$0xff]
          %362 = vst [vmem:[%s164 + $0x310] sm:$0xff] %v361
          %v363 = vld [vmem:[%s163 + $0x318] sm:$0xff]
          %364 = vst [vmem:[%s164 + $0x318] sm:$0xff] %v363
          %v365 = vld [vmem:[%s163 + $0x320] sm:$0xff]
          %366 = vst [vmem:[%s164 + $0x320] sm:$0xff] %v365
          %v367 = vld [vmem:[%s163 + $0x328] sm:$0xff]
          %368 = vst [vmem:[%s164 + $0x328] sm:$0xff] %v367
          %v369 = vld [vmem:[%s163 + $0x330] sm:$0xff]
          %370 = vst [vmem:[%s164 + $0x330] sm:$0xff] %v369
          %v371 = vld [vmem:[%s163 + $0x338] sm:$0xff]
          %372 = vst [vmem:[%s164 + $0x338] sm:$0xff] %v371
          %v373 = vld [vmem:[%s163 + $0x340] sm:$0xff]
          %374 = vst [vmem:[%s164 + $0x340] sm:$0xff] %v373
          %v375 = vld [vmem:[%s163 + $0x348] sm:$0xff]
          %376 = vst [vmem:[%s164 + $0x348] sm:$0xff] %v375
          %v377 = vld [vmem:[%s163 + $0x350] sm:$0xff]
          %378 = vst [vmem:[%s164 + $0x350] sm:$0xff] %v377
          %v379 = vld [vmem:[%s163 + $0x358] sm:$0xff]
          %380 = vst [vmem:[%s164 + $0x358] sm:$0xff] %v379
        $region105: #{deep_q_forward.1} parent=99 // loop_footer
          %s162 = sadd.s32 1, %s158
        $region106: #{deep_q_forward.1} parent=99 // loop_footer_branch
          %157 = sbr.rel target = $region102
        $region107: #{deep_q_forward.1} parent=99 // loop_exit
          _
      $region100: #{deep_q_forward.1} parent=84 // pred_fallthru
        _
      %p381 = pneg %p153
      // Predicated region
      $region108: #{deep_q_forward.1} parent=84 // pred_check
        _
      $region109: #{deep_q_forward.1} parent=84 // pred_check_branch
        %383 = sbr.rel (%p153) target = $region111
      $region110: #{deep_q_forward.1} parent=84 // pred_region
        %s384 = sand.u32 864, 7
      $region111: #{deep_q_forward.1} parent=84 // pred_fallthru
        _
    $region85: #{deep_q_forward.1} parent=1 // pred_fallthru
      _
    // Predicated region
    $region86: #{deep_q_forward.1} parent=1 // pred_check
      %p137 = pneg %p133
    $region87: #{deep_q_forward.1} parent=1 // pred_check_branch
      %139 = sbr.rel (%p137) target = $region89
    $region88: #{deep_q_forward.1} parent=1 // pred_region
      %s140 = sshll.u32 1, 864
      %s141 = ssub.s32 %s140, 1
      loop: start=0, step=1, limit=1
      $region90: #{deep_q_forward.1} parent=88 // loop_pre_header
        _
      $region91: #{deep_q_forward.1} parent=88 // loop_header
        %s143 = sphi 0, %s147
        %p144 = scmp.ge.s32.totalorder %s143, 1
        %s148 = sphi %s7, %s7
        %s149 = sphi [#allocation4], [#allocation4]
      $region92: #{deep_q_forward.1} parent=88 // loop_header_branch
        %146 = sbr.rel (%p144) target = $region96
      $region93: #{deep_q_forward.1} parent=88 // loop_body
        %v150 = vld [vmem:[%s148] sm:%s141]
        %151 = vst [vmem:[%s149] sm:%s141] %v150
      $region94: #{deep_q_forward.1} parent=88 // loop_footer
        %s147 = sadd.s32 1, %s143
      $region95: #{deep_q_forward.1} parent=88 // loop_footer_branch
        %142 = sbr.rel target = $region91
      $region96: #{deep_q_forward.1} parent=88 // loop_exit
        _
    $region89: #{deep_q_forward.1} parent=1 // pred_fallthru
      _
    // Predicated region
    $region112: #{deep_q_forward.1} parent=1 // pred_check
      _
    $region113: #{deep_q_forward.1} parent=1 // pred_check_branch
      %387 = sbr.rel (0) target = $region115
    $region114: #{deep_q_forward.1} parent=1 // pred_region
      %388 = vsyncadd [#allocation8], 13824
    $region115: #{deep_q_forward.1} parent=1 // pred_fallthru
      _
    %s389 = scalar_lea.sflag [#allocation8], 1
    // Predicated region
    $region116: #{deep_q_forward.1} parent=1 // pred_check
      _
    $region117: #{deep_q_forward.1} parent=1 // pred_check_branch
      %391 = sbr.rel target = $region119
    $region118: #{deep_q_forward.1} parent=1 // pred_region
      %392 = sst [smem:[#allocation23]] [#allocation22]
      %393 = sst [smem:[#allocation24]] [#allocation21]
    $region119: #{deep_q_forward.1} parent=1 // pred_fallthru
      _
    %395 = shalt.err (0)
    %s397 = sshll.u32 [#allocation5], 4
    %s398 = int_to_ptr.vmem [resolvable:$true] %s397
    %400 = dma.hbm_to_vmem [thread:$0]  %s9, 27648, %s398, %s389
    %s401 = scalar_lea.sflag [#allocation8], 2
    // Predicated region
    $region120: #{deep_q_forward.1} parent=1 // pred_check
      _
    $region121: #{deep_q_forward.1} parent=1 // pred_check_branch
      %403 = sbr.rel target = $region123
    $region122: #{deep_q_forward.1} parent=1 // pred_region
      %404 = sst [smem:[#allocation23]] [#allocation26]
      %405 = sst [smem:[#allocation24]] [#allocation25]
    $region123: #{deep_q_forward.1} parent=1 // pred_fallthru
      _
    %407 = shalt.err (0)
    %s409 = sshll.u32 [#allocation6], 4
    %s410 = int_to_ptr.vmem [resolvable:$true] %s409
    %412 = dma.hbm_to_vmem [thread:$0]  %s11, 27648, %s410, %s401
    %s413 = scalar_lea.sflag [#allocation8], 3
    %p415 = scmp.lt.u32.totalorder 2304, 8
    %p416 = pneg %p415
    // Predicated region
    $region124: #{deep_q_forward.1} parent=1 // pred_check
      _
    $region125: #{deep_q_forward.1} parent=1 // pred_check_branch
      %418 = sbr.rel (%p415) target = $region127
    $region126: #{deep_q_forward.1} parent=1 // pred_region
      %s434 = sand.u32 2304, 7
      %p435 = scmp.eq.s32.totalorder %s434, 0
      // Predicated region
      $region139: #{deep_q_forward.1} parent=126 // pred_check
        %p436 = pneg %p435
      $region140: #{deep_q_forward.1} parent=126 // pred_check_branch
        %438 = sbr.rel (%p436) target = $region142
      $region141: #{deep_q_forward.1} parent=126 // pred_region
        loop: start=0, step=1, limit=1
        $region143: #{deep_q_forward.1} parent=141 // loop_pre_header
          _
        $region144: #{deep_q_forward.1} parent=141 // loop_header
          %s440 = sphi 0, %s444
          %p441 = scmp.ge.s32.totalorder %s440, 1
          %s445 = sphi %s13, %s13
          %s446 = sphi [#allocation7], [#allocation7]
        $region145: #{deep_q_forward.1} parent=141 // loop_header_branch
          %443 = sbr.rel (%p441) target = $region149
        $region146: #{deep_q_forward.1} parent=141 // loop_body
          %v447 = vld [vmem:[%s445] sm:$0xff]
          %448 = vst [vmem:[%s446] sm:$0xff] %v447
          %v449 = vld [vmem:[%s445 + $0x8] sm:$0xff]
          %450 = vst [vmem:[%s446 + $0x8] sm:$0xff] %v449
          %v451 = vld [vmem:[%s445 + $0x10] sm:$0xff]
          %452 = vst [vmem:[%s446 + $0x10] sm:$0xff] %v451
          %v453 = vld [vmem:[%s445 + $0x18] sm:$0xff]
          %454 = vst [vmem:[%s446 + $0x18] sm:$0xff] %v453
          %v455 = vld [vmem:[%s445 + $0x20] sm:$0xff]
          %456 = vst [vmem:[%s446 + $0x20] sm:$0xff] %v455
          %v457 = vld [vmem:[%s445 + $0x28] sm:$0xff]
          %458 = vst [vmem:[%s446 + $0x28] sm:$0xff] %v457
          %v459 = vld [vmem:[%s445 + $0x30] sm:$0xff]
          %460 = vst [vmem:[%s446 + $0x30] sm:$0xff] %v459
          %v461 = vld [vmem:[%s445 + $0x38] sm:$0xff]
          %462 = vst [vmem:[%s446 + $0x38] sm:$0xff] %v461
          %v463 = vld [vmem:[%s445 + $0x40] sm:$0xff]
          %464 = vst [vmem:[%s446 + $0x40] sm:$0xff] %v463
          %v465 = vld [vmem:[%s445 + $0x48] sm:$0xff]
          %466 = vst [vmem:[%s446 + $0x48] sm:$0xff] %v465
          %v467 = vld [vmem:[%s445 + $0x50] sm:$0xff]
          %468 = vst [vmem:[%s446 + $0x50] sm:$0xff] %v467
          %v469 = vld [vmem:[%s445 + $0x58] sm:$0xff]
          %470 = vst [vmem:[%s446 + $0x58] sm:$0xff] %v469
          %v471 = vld [vmem:[%s445 + $0x60] sm:$0xff]
          %472 = vst [vmem:[%s446 + $0x60] sm:$0xff] %v471
          %v473 = vld [vmem:[%s445 + $0x68] sm:$0xff]
          %474 = vst [vmem:[%s446 + $0x68] sm:$0xff] %v473
          %v475 = vld [vmem:[%s445 + $0x70] sm:$0xff]
          %476 = vst [vmem:[%s446 + $0x70] sm:$0xff] %v475
          %v477 = vld [vmem:[%s445 + $0x78] sm:$0xff]
          %478 = vst [vmem:[%s446 + $0x78] sm:$0xff] %v477
          %v479 = vld [vmem:[%s445 + $0x80] sm:$0xff]
          %480 = vst [vmem:[%s446 + $0x80] sm:$0xff] %v479
          %v481 = vld [vmem:[%s445 + $0x88] sm:$0xff]
          %482 = vst [vmem:[%s446 + $0x88] sm:$0xff] %v481
          %v483 = vld [vmem:[%s445 + $0x90] sm:$0xff]
          %484 = vst [vmem:[%s446 + $0x90] sm:$0xff] %v483
          %v485 = vld [vmem:[%s445 + $0x98] sm:$0xff]
          %486 = vst [vmem:[%s446 + $0x98] sm:$0xff] %v485
          %v487 = vld [vmem:[%s445 + $0xa0] sm:$0xff]
          %488 = vst [vmem:[%s446 + $0xa0] sm:$0xff] %v487
          %v489 = vld [vmem:[%s445 + $0xa8] sm:$0xff]
          %490 = vst [vmem:[%s446 + $0xa8] sm:$0xff] %v489
          %v491 = vld [vmem:[%s445 + $0xb0] sm:$0xff]
          %492 = vst [vmem:[%s446 + $0xb0] sm:$0xff] %v491
          %v493 = vld [vmem:[%s445 + $0xb8] sm:$0xff]
          %494 = vst [vmem:[%s446 + $0xb8] sm:$0xff] %v493
          %v495 = vld [vmem:[%s445 + $0xc0] sm:$0xff]
          %496 = vst [vmem:[%s446 + $0xc0] sm:$0xff] %v495
          %v497 = vld [vmem:[%s445 + $0xc8] sm:$0xff]
          %498 = vst [vmem:[%s446 + $0xc8] sm:$0xff] %v497
          %v499 = vld [vmem:[%s445 + $0xd0] sm:$0xff]
          %500 = vst [vmem:[%s446 + $0xd0] sm:$0xff] %v499
          %v501 = vld [vmem:[%s445 + $0xd8] sm:$0xff]
          %502 = vst [vmem:[%s446 + $0xd8] sm:$0xff] %v501
          %v503 = vld [vmem:[%s445 + $0xe0] sm:$0xff]
          %504 = vst [vmem:[%s446 + $0xe0] sm:$0xff] %v503
          %v505 = vld [vmem:[%s445 + $0xe8] sm:$0xff]
          %506 = vst [vmem:[%s446 + $0xe8] sm:$0xff] %v505
          %v507 = vld [vmem:[%s445 + $0xf0] sm:$0xff]
          %508 = vst [vmem:[%s446 + $0xf0] sm:$0xff] %v507
          %v509 = vld [vmem:[%s445 + $0xf8] sm:$0xff]
          %510 = vst [vmem:[%s446 + $0xf8] sm:$0xff] %v509
          %v511 = vld [vmem:[%s445 + $0x100] sm:$0xff]
          %512 = vst [vmem:[%s446 + $0x100] sm:$0xff] %v511
          %v513 = vld [vmem:[%s445 + $0x108] sm:$0xff]
          %514 = vst [vmem:[%s446 + $0x108] sm:$0xff] %v513
          %v515 = vld [vmem:[%s445 + $0x110] sm:$0xff]
          %516 = vst [vmem:[%s446 + $0x110] sm:$0xff] %v515
          %v517 = vld [vmem:[%s445 + $0x118] sm:$0xff]
          %518 = vst [vmem:[%s446 + $0x118] sm:$0xff] %v517
          %v519 = vld [vmem:[%s445 + $0x120] sm:$0xff]
          %520 = vst [vmem:[%s446 + $0x120] sm:$0xff] %v519
          %v521 = vld [vmem:[%s445 + $0x128] sm:$0xff]
          %522 = vst [vmem:[%s446 + $0x128] sm:$0xff] %v521
          %v523 = vld [vmem:[%s445 + $0x130] sm:$0xff]
          %524 = vst [vmem:[%s446 + $0x130] sm:$0xff] %v523
          %v525 = vld [vmem:[%s445 + $0x138] sm:$0xff]
          %526 = vst [vmem:[%s446 + $0x138] sm:$0xff] %v525
          %v527 = vld [vmem:[%s445 + $0x140] sm:$0xff]
          %528 = vst [vmem:[%s446 + $0x140] sm:$0xff] %v527
          %v529 = vld [vmem:[%s445 + $0x148] sm:$0xff]
          %530 = vst [vmem:[%s446 + $0x148] sm:$0xff] %v529
          %v531 = vld [vmem:[%s445 + $0x150] sm:$0xff]
          %532 = vst [vmem:[%s446 + $0x150] sm:$0xff] %v531
          %v533 = vld [vmem:[%s445 + $0x158] sm:$0xff]
          %534 = vst [vmem:[%s446 + $0x158] sm:$0xff] %v533
          %v535 = vld [vmem:[%s445 + $0x160] sm:$0xff]
          %536 = vst [vmem:[%s446 + $0x160] sm:$0xff] %v535
          %v537 = vld [vmem:[%s445 + $0x168] sm:$0xff]
          %538 = vst [vmem:[%s446 + $0x168] sm:$0xff] %v537
          %v539 = vld [vmem:[%s445 + $0x170] sm:$0xff]
          %540 = vst [vmem:[%s446 + $0x170] sm:$0xff] %v539
          %v541 = vld [vmem:[%s445 + $0x178] sm:$0xff]
          %542 = vst [vmem:[%s446 + $0x178] sm:$0xff] %v541
          %v543 = vld [vmem:[%s445 + $0x180] sm:$0xff]
          %544 = vst [vmem:[%s446 + $0x180] sm:$0xff] %v543
          %v545 = vld [vmem:[%s445 + $0x188] sm:$0xff]
          %546 = vst [vmem:[%s446 + $0x188] sm:$0xff] %v545
          %v547 = vld [vmem:[%s445 + $0x190] sm:$0xff]
          %548 = vst [vmem:[%s446 + $0x190] sm:$0xff] %v547
          %v549 = vld [vmem:[%s445 + $0x198] sm:$0xff]
          %550 = vst [vmem:[%s446 + $0x198] sm:$0xff] %v549
          %v551 = vld [vmem:[%s445 + $0x1a0] sm:$0xff]
          %552 = vst [vmem:[%s446 + $0x1a0] sm:$0xff] %v551
          %v553 = vld [vmem:[%s445 + $0x1a8] sm:$0xff]
          %554 = vst [vmem:[%s446 + $0x1a8] sm:$0xff] %v553
          %v555 = vld [vmem:[%s445 + $0x1b0] sm:$0xff]
          %556 = vst [vmem:[%s446 + $0x1b0] sm:$0xff] %v555
          %v557 = vld [vmem:[%s445 + $0x1b8] sm:$0xff]
          %558 = vst [vmem:[%s446 + $0x1b8] sm:$0xff] %v557
          %v559 = vld [vmem:[%s445 + $0x1c0] sm:$0xff]
          %560 = vst [vmem:[%s446 + $0x1c0] sm:$0xff] %v559
          %v561 = vld [vmem:[%s445 + $0x1c8] sm:$0xff]
          %562 = vst [vmem:[%s446 + $0x1c8] sm:$0xff] %v561
          %v563 = vld [vmem:[%s445 + $0x1d0] sm:$0xff]
          %564 = vst [vmem:[%s446 + $0x1d0] sm:$0xff] %v563
          %v565 = vld [vmem:[%s445 + $0x1d8] sm:$0xff]
          %566 = vst [vmem:[%s446 + $0x1d8] sm:$0xff] %v565
          %v567 = vld [vmem:[%s445 + $0x1e0] sm:$0xff]
          %568 = vst [vmem:[%s446 + $0x1e0] sm:$0xff] %v567
          %v569 = vld [vmem:[%s445 + $0x1e8] sm:$0xff]
          %570 = vst [vmem:[%s446 + $0x1e8] sm:$0xff] %v569
          %v571 = vld [vmem:[%s445 + $0x1f0] sm:$0xff]
          %572 = vst [vmem:[%s446 + $0x1f0] sm:$0xff] %v571
          %v573 = vld [vmem:[%s445 + $0x1f8] sm:$0xff]
          %574 = vst [vmem:[%s446 + $0x1f8] sm:$0xff] %v573
          %v575 = vld [vmem:[%s445 + $0x200] sm:$0xff]
          %576 = vst [vmem:[%s446 + $0x200] sm:$0xff] %v575
          %v577 = vld [vmem:[%s445 + $0x208] sm:$0xff]
          %578 = vst [vmem:[%s446 + $0x208] sm:$0xff] %v577
          %v579 = vld [vmem:[%s445 + $0x210] sm:$0xff]
          %580 = vst [vmem:[%s446 + $0x210] sm:$0xff] %v579
          %v581 = vld [vmem:[%s445 + $0x218] sm:$0xff]
          %582 = vst [vmem:[%s446 + $0x218] sm:$0xff] %v581
          %v583 = vld [vmem:[%s445 + $0x220] sm:$0xff]
          %584 = vst [vmem:[%s446 + $0x220] sm:$0xff] %v583
          %v585 = vld [vmem:[%s445 + $0x228] sm:$0xff]
          %586 = vst [vmem:[%s446 + $0x228] sm:$0xff] %v585
          %v587 = vld [vmem:[%s445 + $0x230] sm:$0xff]
          %588 = vst [vmem:[%s446 + $0x230] sm:$0xff] %v587
          %v589 = vld [vmem:[%s445 + $0x238] sm:$0xff]
          %590 = vst [vmem:[%s446 + $0x238] sm:$0xff] %v589
          %v591 = vld [vmem:[%s445 + $0x240] sm:$0xff]
          %592 = vst [vmem:[%s446 + $0x240] sm:$0xff] %v591
          %v593 = vld [vmem:[%s445 + $0x248] sm:$0xff]
          %594 = vst [vmem:[%s446 + $0x248] sm:$0xff] %v593
          %v595 = vld [vmem:[%s445 + $0x250] sm:$0xff]
          %596 = vst [vmem:[%s446 + $0x250] sm:$0xff] %v595
          %v597 = vld [vmem:[%s445 + $0x258] sm:$0xff]
          %598 = vst [vmem:[%s446 + $0x258] sm:$0xff] %v597
          %v599 = vld [vmem:[%s445 + $0x260] sm:$0xff]
          %600 = vst [vmem:[%s446 + $0x260] sm:$0xff] %v599
          %v601 = vld [vmem:[%s445 + $0x268] sm:$0xff]
          %602 = vst [vmem:[%s446 + $0x268] sm:$0xff] %v601
          %v603 = vld [vmem:[%s445 + $0x270] sm:$0xff]
          %604 = vst [vmem:[%s446 + $0x270] sm:$0xff] %v603
          %v605 = vld [vmem:[%s445 + $0x278] sm:$0xff]
          %606 = vst [vmem:[%s446 + $0x278] sm:$0xff] %v605
          %v607 = vld [vmem:[%s445 + $0x280] sm:$0xff]
          %608 = vst [vmem:[%s446 + $0x280] sm:$0xff] %v607
          %v609 = vld [vmem:[%s445 + $0x288] sm:$0xff]
          %610 = vst [vmem:[%s446 + $0x288] sm:$0xff] %v609
          %v611 = vld [vmem:[%s445 + $0x290] sm:$0xff]
          %612 = vst [vmem:[%s446 + $0x290] sm:$0xff] %v611
          %v613 = vld [vmem:[%s445 + $0x298] sm:$0xff]
          %614 = vst [vmem:[%s446 + $0x298] sm:$0xff] %v613
          %v615 = vld [vmem:[%s445 + $0x2a0] sm:$0xff]
          %616 = vst [vmem:[%s446 + $0x2a0] sm:$0xff] %v615
          %v617 = vld [vmem:[%s445 + $0x2a8] sm:$0xff]
          %618 = vst [vmem:[%s446 + $0x2a8] sm:$0xff] %v617
          %v619 = vld [vmem:[%s445 + $0x2b0] sm:$0xff]
          %620 = vst [vmem:[%s446 + $0x2b0] sm:$0xff] %v619
          %v621 = vld [vmem:[%s445 + $0x2b8] sm:$0xff]
          %622 = vst [vmem:[%s446 + $0x2b8] sm:$0xff] %v621
          %v623 = vld [vmem:[%s445 + $0x2c0] sm:$0xff]
          %624 = vst [vmem:[%s446 + $0x2c0] sm:$0xff] %v623
          %v625 = vld [vmem:[%s445 + $0x2c8] sm:$0xff]
          %626 = vst [vmem:[%s446 + $0x2c8] sm:$0xff] %v625
          %v627 = vld [vmem:[%s445 + $0x2d0] sm:$0xff]
          %628 = vst [vmem:[%s446 + $0x2d0] sm:$0xff] %v627
          %v629 = vld [vmem:[%s445 + $0x2d8] sm:$0xff]
          %630 = vst [vmem:[%s446 + $0x2d8] sm:$0xff] %v629
          %v631 = vld [vmem:[%s445 + $0x2e0] sm:$0xff]
          %632 = vst [vmem:[%s446 + $0x2e0] sm:$0xff] %v631
          %v633 = vld [vmem:[%s445 + $0x2e8] sm:$0xff]
          %634 = vst [vmem:[%s446 + $0x2e8] sm:$0xff] %v633
          %v635 = vld [vmem:[%s445 + $0x2f0] sm:$0xff]
          %636 = vst [vmem:[%s446 + $0x2f0] sm:$0xff] %v635
          %v637 = vld [vmem:[%s445 + $0x2f8] sm:$0xff]
          %638 = vst [vmem:[%s446 + $0x2f8] sm:$0xff] %v637
          %v639 = vld [vmem:[%s445 + $0x300] sm:$0xff]
          %640 = vst [vmem:[%s446 + $0x300] sm:$0xff] %v639
          %v641 = vld [vmem:[%s445 + $0x308] sm:$0xff]
          %642 = vst [vmem:[%s446 + $0x308] sm:$0xff] %v641
          %v643 = vld [vmem:[%s445 + $0x310] sm:$0xff]
          %644 = vst [vmem:[%s446 + $0x310] sm:$0xff] %v643
          %v645 = vld [vmem:[%s445 + $0x318] sm:$0xff]
          %646 = vst [vmem:[%s446 + $0x318] sm:$0xff] %v645
          %v647 = vld [vmem:[%s445 + $0x320] sm:$0xff]
          %648 = vst [vmem:[%s446 + $0x320] sm:$0xff] %v647
          %v649 = vld [vmem:[%s445 + $0x328] sm:$0xff]
          %650 = vst [vmem:[%s446 + $0x328] sm:$0xff] %v649
          %v651 = vld [vmem:[%s445 + $0x330] sm:$0xff]
          %652 = vst [vmem:[%s446 + $0x330] sm:$0xff] %v651
          %v653 = vld [vmem:[%s445 + $0x338] sm:$0xff]
          %654 = vst [vmem:[%s446 + $0x338] sm:$0xff] %v653
          %v655 = vld [vmem:[%s445 + $0x340] sm:$0xff]
          %656 = vst [vmem:[%s446 + $0x340] sm:$0xff] %v655
          %v657 = vld [vmem:[%s445 + $0x348] sm:$0xff]
          %658 = vst [vmem:[%s446 + $0x348] sm:$0xff] %v657
          %v659 = vld [vmem:[%s445 + $0x350] sm:$0xff]
          %660 = vst [vmem:[%s446 + $0x350] sm:$0xff] %v659
          %v661 = vld [vmem:[%s445 + $0x358] sm:$0xff]
          %662 = vst [vmem:[%s446 + $0x358] sm:$0xff] %v661
          %v663 = vld [vmem:[%s445 + $0x360] sm:$0xff]
          %664 = vst [vmem:[%s446 + $0x360] sm:$0xff] %v663
          %v665 = vld [vmem:[%s445 + $0x368] sm:$0xff]
          %666 = vst [vmem:[%s446 + $0x368] sm:$0xff] %v665
          %v667 = vld [vmem:[%s445 + $0x370] sm:$0xff]
          %668 = vst [vmem:[%s446 + $0x370] sm:$0xff] %v667
          %v669 = vld [vmem:[%s445 + $0x378] sm:$0xff]
          %670 = vst [vmem:[%s446 + $0x378] sm:$0xff] %v669
          %v671 = vld [vmem:[%s445 + $0x380] sm:$0xff]
          %672 = vst [vmem:[%s446 + $0x380] sm:$0xff] %v671
          %v673 = vld [vmem:[%s445 + $0x388] sm:$0xff]
          %674 = vst [vmem:[%s446 + $0x388] sm:$0xff] %v673
          %v675 = vld [vmem:[%s445 + $0x390] sm:$0xff]
          %676 = vst [vmem:[%s446 + $0x390] sm:$0xff] %v675
          %v677 = vld [vmem:[%s445 + $0x398] sm:$0xff]
          %678 = vst [vmem:[%s446 + $0x398] sm:$0xff] %v677
          %v679 = vld [vmem:[%s445 + $0x3a0] sm:$0xff]
          %680 = vst [vmem:[%s446 + $0x3a0] sm:$0xff] %v679
          %v681 = vld [vmem:[%s445 + $0x3a8] sm:$0xff]
          %682 = vst [vmem:[%s446 + $0x3a8] sm:$0xff] %v681
          %v683 = vld [vmem:[%s445 + $0x3b0] sm:$0xff]
          %684 = vst [vmem:[%s446 + $0x3b0] sm:$0xff] %v683
          %v685 = vld [vmem:[%s445 + $0x3b8] sm:$0xff]
          %686 = vst [vmem:[%s446 + $0x3b8] sm:$0xff] %v685
          %v687 = vld [vmem:[%s445 + $0x3c0] sm:$0xff]
          %688 = vst [vmem:[%s446 + $0x3c0] sm:$0xff] %v687
          %v689 = vld [vmem:[%s445 + $0x3c8] sm:$0xff]
          %690 = vst [vmem:[%s446 + $0x3c8] sm:$0xff] %v689
          %v691 = vld [vmem:[%s445 + $0x3d0] sm:$0xff]
          %692 = vst [vmem:[%s446 + $0x3d0] sm:$0xff] %v691
          %v693 = vld [vmem:[%s445 + $0x3d8] sm:$0xff]
          %694 = vst [vmem:[%s446 + $0x3d8] sm:$0xff] %v693
          %v695 = vld [vmem:[%s445 + $0x3e0] sm:$0xff]
          %696 = vst [vmem:[%s446 + $0x3e0] sm:$0xff] %v695
          %v697 = vld [vmem:[%s445 + $0x3e8] sm:$0xff]
          %698 = vst [vmem:[%s446 + $0x3e8] sm:$0xff] %v697
          %v699 = vld [vmem:[%s445 + $0x3f0] sm:$0xff]
          %700 = vst [vmem:[%s446 + $0x3f0] sm:$0xff] %v699
          %v701 = vld [vmem:[%s445 + $0x3f8] sm:$0xff]
          %702 = vst [vmem:[%s446 + $0x3f8] sm:$0xff] %v701
          %v703 = vld [vmem:[%s445 + $0x400] sm:$0xff]
          %704 = vst [vmem:[%s446 + $0x400] sm:$0xff] %v703
          %v705 = vld [vmem:[%s445 + $0x408] sm:$0xff]
          %706 = vst [vmem:[%s446 + $0x408] sm:$0xff] %v705
          %v707 = vld [vmem:[%s445 + $0x410] sm:$0xff]
          %708 = vst [vmem:[%s446 + $0x410] sm:$0xff] %v707
          %v709 = vld [vmem:[%s445 + $0x418] sm:$0xff]
          %710 = vst [vmem:[%s446 + $0x418] sm:$0xff] %v709
          %v711 = vld [vmem:[%s445 + $0x420] sm:$0xff]
          %712 = vst [vmem:[%s446 + $0x420] sm:$0xff] %v711
          %v713 = vld [vmem:[%s445 + $0x428] sm:$0xff]
          %714 = vst [vmem:[%s446 + $0x428] sm:$0xff] %v713
          %v715 = vld [vmem:[%s445 + $0x430] sm:$0xff]
          %716 = vst [vmem:[%s446 + $0x430] sm:$0xff] %v715
          %v717 = vld [vmem:[%s445 + $0x438] sm:$0xff]
          %718 = vst [vmem:[%s446 + $0x438] sm:$0xff] %v717
          %v719 = vld [vmem:[%s445 + $0x440] sm:$0xff]
          %720 = vst [vmem:[%s446 + $0x440] sm:$0xff] %v719
          %v721 = vld [vmem:[%s445 + $0x448] sm:$0xff]
          %722 = vst [vmem:[%s446 + $0x448] sm:$0xff] %v721
          %v723 = vld [vmem:[%s445 + $0x450] sm:$0xff]
          %724 = vst [vmem:[%s446 + $0x450] sm:$0xff] %v723
          %v725 = vld [vmem:[%s445 + $0x458] sm:$0xff]
          %726 = vst [vmem:[%s446 + $0x458] sm:$0xff] %v725
          %v727 = vld [vmem:[%s445 + $0x460] sm:$0xff]
          %728 = vst [vmem:[%s446 + $0x460] sm:$0xff] %v727
          %v729 = vld [vmem:[%s445 + $0x468] sm:$0xff]
          %730 = vst [vmem:[%s446 + $0x468] sm:$0xff] %v729
          %v731 = vld [vmem:[%s445 + $0x470] sm:$0xff]
          %732 = vst [vmem:[%s446 + $0x470] sm:$0xff] %v731
          %v733 = vld [vmem:[%s445 + $0x478] sm:$0xff]
          %734 = vst [vmem:[%s446 + $0x478] sm:$0xff] %v733
          %v735 = vld [vmem:[%s445 + $0x480] sm:$0xff]
          %736 = vst [vmem:[%s446 + $0x480] sm:$0xff] %v735
          %v737 = vld [vmem:[%s445 + $0x488] sm:$0xff]
          %738 = vst [vmem:[%s446 + $0x488] sm:$0xff] %v737
          %v739 = vld [vmem:[%s445 + $0x490] sm:$0xff]
          %740 = vst [vmem:[%s446 + $0x490] sm:$0xff] %v739
          %v741 = vld [vmem:[%s445 + $0x498] sm:$0xff]
          %742 = vst [vmem:[%s446 + $0x498] sm:$0xff] %v741
          %v743 = vld [vmem:[%s445 + $0x4a0] sm:$0xff]
          %744 = vst [vmem:[%s446 + $0x4a0] sm:$0xff] %v743
          %v745 = vld [vmem:[%s445 + $0x4a8] sm:$0xff]
          %746 = vst [vmem:[%s446 + $0x4a8] sm:$0xff] %v745
          %v747 = vld [vmem:[%s445 + $0x4b0] sm:$0xff]
          %748 = vst [vmem:[%s446 + $0x4b0] sm:$0xff] %v747
          %v749 = vld [vmem:[%s445 + $0x4b8] sm:$0xff]
          %750 = vst [vmem:[%s446 + $0x4b8] sm:$0xff] %v749
          %v751 = vld [vmem:[%s445 + $0x4c0] sm:$0xff]
          %752 = vst [vmem:[%s446 + $0x4c0] sm:$0xff] %v751
          %v753 = vld [vmem:[%s445 + $0x4c8] sm:$0xff]
          %754 = vst [vmem:[%s446 + $0x4c8] sm:$0xff] %v753
          %v755 = vld [vmem:[%s445 + $0x4d0] sm:$0xff]
          %756 = vst [vmem:[%s446 + $0x4d0] sm:$0xff] %v755
          %v757 = vld [vmem:[%s445 + $0x4d8] sm:$0xff]
          %758 = vst [vmem:[%s446 + $0x4d8] sm:$0xff] %v757
          %v759 = vld [vmem:[%s445 + $0x4e0] sm:$0xff]
          %760 = vst [vmem:[%s446 + $0x4e0] sm:$0xff] %v759
          %v761 = vld [vmem:[%s445 + $0x4e8] sm:$0xff]
          %762 = vst [vmem:[%s446 + $0x4e8] sm:$0xff] %v761
          %v763 = vld [vmem:[%s445 + $0x4f0] sm:$0xff]
          %764 = vst [vmem:[%s446 + $0x4f0] sm:$0xff] %v763
          %v765 = vld [vmem:[%s445 + $0x4f8] sm:$0xff]
          %766 = vst [vmem:[%s446 + $0x4f8] sm:$0xff] %v765
          %v767 = vld [vmem:[%s445 + $0x500] sm:$0xff]
          %768 = vst [vmem:[%s446 + $0x500] sm:$0xff] %v767
          %v769 = vld [vmem:[%s445 + $0x508] sm:$0xff]
          %770 = vst [vmem:[%s446 + $0x508] sm:$0xff] %v769
          %v771 = vld [vmem:[%s445 + $0x510] sm:$0xff]
          %772 = vst [vmem:[%s446 + $0x510] sm:$0xff] %v771
          %v773 = vld [vmem:[%s445 + $0x518] sm:$0xff]
          %774 = vst [vmem:[%s446 + $0x518] sm:$0xff] %v773
          %v775 = vld [vmem:[%s445 + $0x520] sm:$0xff]
          %776 = vst [vmem:[%s446 + $0x520] sm:$0xff] %v775
          %v777 = vld [vmem:[%s445 + $0x528] sm:$0xff]
          %778 = vst [vmem:[%s446 + $0x528] sm:$0xff] %v777
          %v779 = vld [vmem:[%s445 + $0x530] sm:$0xff]
          %780 = vst [vmem:[%s446 + $0x530] sm:$0xff] %v779
          %v781 = vld [vmem:[%s445 + $0x538] sm:$0xff]
          %782 = vst [vmem:[%s446 + $0x538] sm:$0xff] %v781
          %v783 = vld [vmem:[%s445 + $0x540] sm:$0xff]
          %784 = vst [vmem:[%s446 + $0x540] sm:$0xff] %v783
          %v785 = vld [vmem:[%s445 + $0x548] sm:$0xff]
          %786 = vst [vmem:[%s446 + $0x548] sm:$0xff] %v785
          %v787 = vld [vmem:[%s445 + $0x550] sm:$0xff]
          %788 = vst [vmem:[%s446 + $0x550] sm:$0xff] %v787
          %v789 = vld [vmem:[%s445 + $0x558] sm:$0xff]
          %790 = vst [vmem:[%s446 + $0x558] sm:$0xff] %v789
          %v791 = vld [vmem:[%s445 + $0x560] sm:$0xff]
          %792 = vst [vmem:[%s446 + $0x560] sm:$0xff] %v791
          %v793 = vld [vmem:[%s445 + $0x568] sm:$0xff]
          %794 = vst [vmem:[%s446 + $0x568] sm:$0xff] %v793
          %v795 = vld [vmem:[%s445 + $0x570] sm:$0xff]
          %796 = vst [vmem:[%s446 + $0x570] sm:$0xff] %v795
          %v797 = vld [vmem:[%s445 + $0x578] sm:$0xff]
          %798 = vst [vmem:[%s446 + $0x578] sm:$0xff] %v797
          %v799 = vld [vmem:[%s445 + $0x580] sm:$0xff]
          %800 = vst [vmem:[%s446 + $0x580] sm:$0xff] %v799
          %v801 = vld [vmem:[%s445 + $0x588] sm:$0xff]
          %802 = vst [vmem:[%s446 + $0x588] sm:$0xff] %v801
          %v803 = vld [vmem:[%s445 + $0x590] sm:$0xff]
          %804 = vst [vmem:[%s446 + $0x590] sm:$0xff] %v803
          %v805 = vld [vmem:[%s445 + $0x598] sm:$0xff]
          %806 = vst [vmem:[%s446 + $0x598] sm:$0xff] %v805
          %v807 = vld [vmem:[%s445 + $0x5a0] sm:$0xff]
          %808 = vst [vmem:[%s446 + $0x5a0] sm:$0xff] %v807
          %v809 = vld [vmem:[%s445 + $0x5a8] sm:$0xff]
          %810 = vst [vmem:[%s446 + $0x5a8] sm:$0xff] %v809
          %v811 = vld [vmem:[%s445 + $0x5b0] sm:$0xff]
          %812 = vst [vmem:[%s446 + $0x5b0] sm:$0xff] %v811
          %v813 = vld [vmem:[%s445 + $0x5b8] sm:$0xff]
          %814 = vst [vmem:[%s446 + $0x5b8] sm:$0xff] %v813
          %v815 = vld [vmem:[%s445 + $0x5c0] sm:$0xff]
          %816 = vst [vmem:[%s446 + $0x5c0] sm:$0xff] %v815
          %v817 = vld [vmem:[%s445 + $0x5c8] sm:$0xff]
          %818 = vst [vmem:[%s446 + $0x5c8] sm:$0xff] %v817
          %v819 = vld [vmem:[%s445 + $0x5d0] sm:$0xff]
          %820 = vst [vmem:[%s446 + $0x5d0] sm:$0xff] %v819
          %v821 = vld [vmem:[%s445 + $0x5d8] sm:$0xff]
          %822 = vst [vmem:[%s446 + $0x5d8] sm:$0xff] %v821
          %v823 = vld [vmem:[%s445 + $0x5e0] sm:$0xff]
          %824 = vst [vmem:[%s446 + $0x5e0] sm:$0xff] %v823
          %v825 = vld [vmem:[%s445 + $0x5e8] sm:$0xff]
          %826 = vst [vmem:[%s446 + $0x5e8] sm:$0xff] %v825
          %v827 = vld [vmem:[%s445 + $0x5f0] sm:$0xff]
          %828 = vst [vmem:[%s446 + $0x5f0] sm:$0xff] %v827
          %v829 = vld [vmem:[%s445 + $0x5f8] sm:$0xff]
          %830 = vst [vmem:[%s446 + $0x5f8] sm:$0xff] %v829
          %v831 = vld [vmem:[%s445 + $0x600] sm:$0xff]
          %832 = vst [vmem:[%s446 + $0x600] sm:$0xff] %v831
          %v833 = vld [vmem:[%s445 + $0x608] sm:$0xff]
          %834 = vst [vmem:[%s446 + $0x608] sm:$0xff] %v833
          %v835 = vld [vmem:[%s445 + $0x610] sm:$0xff]
          %836 = vst [vmem:[%s446 + $0x610] sm:$0xff] %v835
          %v837 = vld [vmem:[%s445 + $0x618] sm:$0xff]
          %838 = vst [vmem:[%s446 + $0x618] sm:$0xff] %v837
          %v839 = vld [vmem:[%s445 + $0x620] sm:$0xff]
          %840 = vst [vmem:[%s446 + $0x620] sm:$0xff] %v839
          %v841 = vld [vmem:[%s445 + $0x628] sm:$0xff]
          %842 = vst [vmem:[%s446 + $0x628] sm:$0xff] %v841
          %v843 = vld [vmem:[%s445 + $0x630] sm:$0xff]
          %844 = vst [vmem:[%s446 + $0x630] sm:$0xff] %v843
          %v845 = vld [vmem:[%s445 + $0x638] sm:$0xff]
          %846 = vst [vmem:[%s446 + $0x638] sm:$0xff] %v845
          %v847 = vld [vmem:[%s445 + $0x640] sm:$0xff]
          %848 = vst [vmem:[%s446 + $0x640] sm:$0xff] %v847
          %v849 = vld [vmem:[%s445 + $0x648] sm:$0xff]
          %850 = vst [vmem:[%s446 + $0x648] sm:$0xff] %v849
          %v851 = vld [vmem:[%s445 + $0x650] sm:$0xff]
          %852 = vst [vmem:[%s446 + $0x650] sm:$0xff] %v851
          %v853 = vld [vmem:[%s445 + $0x658] sm:$0xff]
          %854 = vst [vmem:[%s446 + $0x658] sm:$0xff] %v853
          %v855 = vld [vmem:[%s445 + $0x660] sm:$0xff]
          %856 = vst [vmem:[%s446 + $0x660] sm:$0xff] %v855
          %v857 = vld [vmem:[%s445 + $0x668] sm:$0xff]
          %858 = vst [vmem:[%s446 + $0x668] sm:$0xff] %v857
          %v859 = vld [vmem:[%s445 + $0x670] sm:$0xff]
          %860 = vst [vmem:[%s446 + $0x670] sm:$0xff] %v859
          %v861 = vld [vmem:[%s445 + $0x678] sm:$0xff]
          %862 = vst [vmem:[%s446 + $0x678] sm:$0xff] %v861
          %v863 = vld [vmem:[%s445 + $0x680] sm:$0xff]
          %864 = vst [vmem:[%s446 + $0x680] sm:$0xff] %v863
          %v865 = vld [vmem:[%s445 + $0x688] sm:$0xff]
          %866 = vst [vmem:[%s446 + $0x688] sm:$0xff] %v865
          %v867 = vld [vmem:[%s445 + $0x690] sm:$0xff]
          %868 = vst [vmem:[%s446 + $0x690] sm:$0xff] %v867
          %v869 = vld [vmem:[%s445 + $0x698] sm:$0xff]
          %870 = vst [vmem:[%s446 + $0x698] sm:$0xff] %v869
          %v871 = vld [vmem:[%s445 + $0x6a0] sm:$0xff]
          %872 = vst [vmem:[%s446 + $0x6a0] sm:$0xff] %v871
          %v873 = vld [vmem:[%s445 + $0x6a8] sm:$0xff]
          %874 = vst [vmem:[%s446 + $0x6a8] sm:$0xff] %v873
          %v875 = vld [vmem:[%s445 + $0x6b0] sm:$0xff]
          %876 = vst [vmem:[%s446 + $0x6b0] sm:$0xff] %v875
          %v877 = vld [vmem:[%s445 + $0x6b8] sm:$0xff]
          %878 = vst [vmem:[%s446 + $0x6b8] sm:$0xff] %v877
          %v879 = vld [vmem:[%s445 + $0x6c0] sm:$0xff]
          %880 = vst [vmem:[%s446 + $0x6c0] sm:$0xff] %v879
          %v881 = vld [vmem:[%s445 + $0x6c8] sm:$0xff]
          %882 = vst [vmem:[%s446 + $0x6c8] sm:$0xff] %v881
          %v883 = vld [vmem:[%s445 + $0x6d0] sm:$0xff]
          %884 = vst [vmem:[%s446 + $0x6d0] sm:$0xff] %v883
          %v885 = vld [vmem:[%s445 + $0x6d8] sm:$0xff]
          %886 = vst [vmem:[%s446 + $0x6d8] sm:$0xff] %v885
          %v887 = vld [vmem:[%s445 + $0x6e0] sm:$0xff]
          %888 = vst [vmem:[%s446 + $0x6e0] sm:$0xff] %v887
          %v889 = vld [vmem:[%s445 + $0x6e8] sm:$0xff]
          %890 = vst [vmem:[%s446 + $0x6e8] sm:$0xff] %v889
          %v891 = vld [vmem:[%s445 + $0x6f0] sm:$0xff]
          %892 = vst [vmem:[%s446 + $0x6f0] sm:$0xff] %v891
          %v893 = vld [vmem:[%s445 + $0x6f8] sm:$0xff]
          %894 = vst [vmem:[%s446 + $0x6f8] sm:$0xff] %v893
          %v895 = vld [vmem:[%s445 + $0x700] sm:$0xff]
          %896 = vst [vmem:[%s446 + $0x700] sm:$0xff] %v895
          %v897 = vld [vmem:[%s445 + $0x708] sm:$0xff]
          %898 = vst [vmem:[%s446 + $0x708] sm:$0xff] %v897
          %v899 = vld [vmem:[%s445 + $0x710] sm:$0xff]
          %900 = vst [vmem:[%s446 + $0x710] sm:$0xff] %v899
          %v901 = vld [vmem:[%s445 + $0x718] sm:$0xff]
          %902 = vst [vmem:[%s446 + $0x718] sm:$0xff] %v901
          %v903 = vld [vmem:[%s445 + $0x720] sm:$0xff]
          %904 = vst [vmem:[%s446 + $0x720] sm:$0xff] %v903
          %v905 = vld [vmem:[%s445 + $0x728] sm:$0xff]
          %906 = vst [vmem:[%s446 + $0x728] sm:$0xff] %v905
          %v907 = vld [vmem:[%s445 + $0x730] sm:$0xff]
          %908 = vst [vmem:[%s446 + $0x730] sm:$0xff] %v907
          %v909 = vld [vmem:[%s445 + $0x738] sm:$0xff]
          %910 = vst [vmem:[%s446 + $0x738] sm:$0xff] %v909
          %v911 = vld [vmem:[%s445 + $0x740] sm:$0xff]
          %912 = vst [vmem:[%s446 + $0x740] sm:$0xff] %v911
          %v913 = vld [vmem:[%s445 + $0x748] sm:$0xff]
          %914 = vst [vmem:[%s446 + $0x748] sm:$0xff] %v913
          %v915 = vld [vmem:[%s445 + $0x750] sm:$0xff]
          %916 = vst [vmem:[%s446 + $0x750] sm:$0xff] %v915
          %v917 = vld [vmem:[%s445 + $0x758] sm:$0xff]
          %918 = vst [vmem:[%s446 + $0x758] sm:$0xff] %v917
          %v919 = vld [vmem:[%s445 + $0x760] sm:$0xff]
          %920 = vst [vmem:[%s446 + $0x760] sm:$0xff] %v919
          %v921 = vld [vmem:[%s445 + $0x768] sm:$0xff]
          %922 = vst [vmem:[%s446 + $0x768] sm:$0xff] %v921
          %v923 = vld [vmem:[%s445 + $0x770] sm:$0xff]
          %924 = vst [vmem:[%s446 + $0x770] sm:$0xff] %v923
          %v925 = vld [vmem:[%s445 + $0x778] sm:$0xff]
          %926 = vst [vmem:[%s446 + $0x778] sm:$0xff] %v925
          %v927 = vld [vmem:[%s445 + $0x780] sm:$0xff]
          %928 = vst [vmem:[%s446 + $0x780] sm:$0xff] %v927
          %v929 = vld [vmem:[%s445 + $0x788] sm:$0xff]
          %930 = vst [vmem:[%s446 + $0x788] sm:$0xff] %v929
          %v931 = vld [vmem:[%s445 + $0x790] sm:$0xff]
          %932 = vst [vmem:[%s446 + $0x790] sm:$0xff] %v931
          %v933 = vld [vmem:[%s445 + $0x798] sm:$0xff]
          %934 = vst [vmem:[%s446 + $0x798] sm:$0xff] %v933
          %v935 = vld [vmem:[%s445 + $0x7a0] sm:$0xff]
          %936 = vst [vmem:[%s446 + $0x7a0] sm:$0xff] %v935
          %v937 = vld [vmem:[%s445 + $0x7a8] sm:$0xff]
          %938 = vst [vmem:[%s446 + $0x7a8] sm:$0xff] %v937
          %v939 = vld [vmem:[%s445 + $0x7b0] sm:$0xff]
          %940 = vst [vmem:[%s446 + $0x7b0] sm:$0xff] %v939
          %v941 = vld [vmem:[%s445 + $0x7b8] sm:$0xff]
          %942 = vst [vmem:[%s446 + $0x7b8] sm:$0xff] %v941
          %v943 = vld [vmem:[%s445 + $0x7c0] sm:$0xff]
          %944 = vst [vmem:[%s446 + $0x7c0] sm:$0xff] %v943
          %v945 = vld [vmem:[%s445 + $0x7c8] sm:$0xff]
          %946 = vst [vmem:[%s446 + $0x7c8] sm:$0xff] %v945
          %v947 = vld [vmem:[%s445 + $0x7d0] sm:$0xff]
          %948 = vst [vmem:[%s446 + $0x7d0] sm:$0xff] %v947
          %v949 = vld [vmem:[%s445 + $0x7d8] sm:$0xff]
          %950 = vst [vmem:[%s446 + $0x7d8] sm:$0xff] %v949
          %v951 = vld [vmem:[%s445 + $0x7e0] sm:$0xff]
          %952 = vst [vmem:[%s446 + $0x7e0] sm:$0xff] %v951
          %v953 = vld [vmem:[%s445 + $0x7e8] sm:$0xff]
          %954 = vst [vmem:[%s446 + $0x7e8] sm:$0xff] %v953
          %v955 = vld [vmem:[%s445 + $0x7f0] sm:$0xff]
          %956 = vst [vmem:[%s446 + $0x7f0] sm:$0xff] %v955
          %v957 = vld [vmem:[%s445 + $0x7f8] sm:$0xff]
          %958 = vst [vmem:[%s446 + $0x7f8] sm:$0xff] %v957
          %v959 = vld [vmem:[%s445 + $0x800] sm:$0xff]
          %960 = vst [vmem:[%s446 + $0x800] sm:$0xff] %v959
          %v961 = vld [vmem:[%s445 + $0x808] sm:$0xff]
          %962 = vst [vmem:[%s446 + $0x808] sm:$0xff] %v961
          %v963 = vld [vmem:[%s445 + $0x810] sm:$0xff]
          %964 = vst [vmem:[%s446 + $0x810] sm:$0xff] %v963
          %v965 = vld [vmem:[%s445 + $0x818] sm:$0xff]
          %966 = vst [vmem:[%s446 + $0x818] sm:$0xff] %v965
          %v967 = vld [vmem:[%s445 + $0x820] sm:$0xff]
          %968 = vst [vmem:[%s446 + $0x820] sm:$0xff] %v967
          %v969 = vld [vmem:[%s445 + $0x828] sm:$0xff]
          %970 = vst [vmem:[%s446 + $0x828] sm:$0xff] %v969
          %v971 = vld [vmem:[%s445 + $0x830] sm:$0xff]
          %972 = vst [vmem:[%s446 + $0x830] sm:$0xff] %v971
          %v973 = vld [vmem:[%s445 + $0x838] sm:$0xff]
          %974 = vst [vmem:[%s446 + $0x838] sm:$0xff] %v973
          %v975 = vld [vmem:[%s445 + $0x840] sm:$0xff]
          %976 = vst [vmem:[%s446 + $0x840] sm:$0xff] %v975
          %v977 = vld [vmem:[%s445 + $0x848] sm:$0xff]
          %978 = vst [vmem:[%s446 + $0x848] sm:$0xff] %v977
          %v979 = vld [vmem:[%s445 + $0x850] sm:$0xff]
          %980 = vst [vmem:[%s446 + $0x850] sm:$0xff] %v979
          %v981 = vld [vmem:[%s445 + $0x858] sm:$0xff]
          %982 = vst [vmem:[%s446 + $0x858] sm:$0xff] %v981
          %v983 = vld [vmem:[%s445 + $0x860] sm:$0xff]
          %984 = vst [vmem:[%s446 + $0x860] sm:$0xff] %v983
          %v985 = vld [vmem:[%s445 + $0x868] sm:$0xff]
          %986 = vst [vmem:[%s446 + $0x868] sm:$0xff] %v985
          %v987 = vld [vmem:[%s445 + $0x870] sm:$0xff]
          %988 = vst [vmem:[%s446 + $0x870] sm:$0xff] %v987
          %v989 = vld [vmem:[%s445 + $0x878] sm:$0xff]
          %990 = vst [vmem:[%s446 + $0x878] sm:$0xff] %v989
          %v991 = vld [vmem:[%s445 + $0x880] sm:$0xff]
          %992 = vst [vmem:[%s446 + $0x880] sm:$0xff] %v991
          %v993 = vld [vmem:[%s445 + $0x888] sm:$0xff]
          %994 = vst [vmem:[%s446 + $0x888] sm:$0xff] %v993
          %v995 = vld [vmem:[%s445 + $0x890] sm:$0xff]
          %996 = vst [vmem:[%s446 + $0x890] sm:$0xff] %v995
          %v997 = vld [vmem:[%s445 + $0x898] sm:$0xff]
          %998 = vst [vmem:[%s446 + $0x898] sm:$0xff] %v997
          %v999 = vld [vmem:[%s445 + $0x8a0] sm:$0xff]
          %1000 = vst [vmem:[%s446 + $0x8a0] sm:$0xff] %v999
          %v1001 = vld [vmem:[%s445 + $0x8a8] sm:$0xff]
          %1002 = vst [vmem:[%s446 + $0x8a8] sm:$0xff] %v1001
          %v1003 = vld [vmem:[%s445 + $0x8b0] sm:$0xff]
          %1004 = vst [vmem:[%s446 + $0x8b0] sm:$0xff] %v1003
          %v1005 = vld [vmem:[%s445 + $0x8b8] sm:$0xff]
          %1006 = vst [vmem:[%s446 + $0x8b8] sm:$0xff] %v1005
          %v1007 = vld [vmem:[%s445 + $0x8c0] sm:$0xff]
          %1008 = vst [vmem:[%s446 + $0x8c0] sm:$0xff] %v1007
          %v1009 = vld [vmem:[%s445 + $0x8c8] sm:$0xff]
          %1010 = vst [vmem:[%s446 + $0x8c8] sm:$0xff] %v1009
          %v1011 = vld [vmem:[%s445 + $0x8d0] sm:$0xff]
          %1012 = vst [vmem:[%s446 + $0x8d0] sm:$0xff] %v1011
          %v1013 = vld [vmem:[%s445 + $0x8d8] sm:$0xff]
          %1014 = vst [vmem:[%s446 + $0x8d8] sm:$0xff] %v1013
          %v1015 = vld [vmem:[%s445 + $0x8e0] sm:$0xff]
          %1016 = vst [vmem:[%s446 + $0x8e0] sm:$0xff] %v1015
          %v1017 = vld [vmem:[%s445 + $0x8e8] sm:$0xff]
          %1018 = vst [vmem:[%s446 + $0x8e8] sm:$0xff] %v1017
          %v1019 = vld [vmem:[%s445 + $0x8f0] sm:$0xff]
          %1020 = vst [vmem:[%s446 + $0x8f0] sm:$0xff] %v1019
          %v1021 = vld [vmem:[%s445 + $0x8f8] sm:$0xff]
          %1022 = vst [vmem:[%s446 + $0x8f8] sm:$0xff] %v1021
        $region147: #{deep_q_forward.1} parent=141 // loop_footer
          %s444 = sadd.s32 1, %s440
        $region148: #{deep_q_forward.1} parent=141 // loop_footer_branch
          %439 = sbr.rel target = $region144
        $region149: #{deep_q_forward.1} parent=141 // loop_exit
          _
      $region142: #{deep_q_forward.1} parent=126 // pred_fallthru
        _
      %p1023 = pneg %p435
      // Predicated region
      $region150: #{deep_q_forward.1} parent=126 // pred_check
        _
      $region151: #{deep_q_forward.1} parent=126 // pred_check_branch
        %1025 = sbr.rel (%p435) target = $region153
      $region152: #{deep_q_forward.1} parent=126 // pred_region
        %s1026 = sand.u32 2304, 7
      $region153: #{deep_q_forward.1} parent=126 // pred_fallthru
        _
    $region127: #{deep_q_forward.1} parent=1 // pred_fallthru
      _
    // Predicated region
    $region128: #{deep_q_forward.1} parent=1 // pred_check
      %p419 = pneg %p415
    $region129: #{deep_q_forward.1} parent=1 // pred_check_branch
      %421 = sbr.rel (%p419) target = $region131
    $region130: #{deep_q_forward.1} parent=1 // pred_region
      %s422 = sshll.u32 1, 2304
      %s423 = ssub.s32 %s422, 1
      loop: start=0, step=1, limit=1
      $region132: #{deep_q_forward.1} parent=130 // loop_pre_header
        _
      $region133: #{deep_q_forward.1} parent=130 // loop_header
        %s425 = sphi 0, %s429
        %p426 = scmp.ge.s32.totalorder %s425, 1
        %s430 = sphi %s13, %s13
        %s431 = sphi [#allocation7], [#allocation7]
      $region134: #{deep_q_forward.1} parent=130 // loop_header_branch
        %428 = sbr.rel (%p426) target = $region138
      $region135: #{deep_q_forward.1} parent=130 // loop_body
        %v432 = vld [vmem:[%s430] sm:%s423]
        %433 = vst [vmem:[%s431] sm:%s423] %v432
      $region136: #{deep_q_forward.1} parent=130 // loop_footer
        %s429 = sadd.s32 1, %s425
      $region137: #{deep_q_forward.1} parent=130 // loop_footer_branch
        %424 = sbr.rel target = $region133
      $region138: #{deep_q_forward.1} parent=130 // loop_exit
        _
    $region131: #{deep_q_forward.1} parent=1 // pred_fallthru
      _
    // Predicated region
    $region154: #{deep_q_forward.1} parent=1 // pred_check
      _
    $region155: #{deep_q_forward.1} parent=1 // pred_check_branch
      %1029 = sbr.rel (0) target = $region157
    $region156: #{deep_q_forward.1} parent=1 // pred_region
      %1030 = vsyncadd %s413, 36864
    $region157: #{deep_q_forward.1} parent=1 // pred_fallthru
      _
    %v1031 = vld [vmem:[%s0] sm:$0xff]
    %v1032 = vld [vmem:[%s0 + $0x8] sm:$0xff]
    %v1033 = vld [vmem:[%s0 + $0x10] sm:$0xff]
    %v1034 = vld [vmem:[%s0 + $0x18] sm:$0xff]
    %v1035 = vld [vmem:[%s0 + $0x20] sm:$0xff]
    %v1036 = vld [vmem:[%s0 + $0x28] sm:$0xff]
    %1043 = vrot.lane.b32.xlu0 %v1031, 48
    %v1044 = vpop.permute.xlu0 %1043
    %1045 = vrot.lane.b32.xlu0 %v1032, 48
    %v1046 = vpop.permute.xlu0 %1045
    %1047 = vrot.lane.b32.xlu0 %v1033, 48
    %v1048 = vpop.permute.xlu0 %1047
    %1049 = vrot.lane.b32.xlu0 %v1034, 48
    %v1050 = vpop.permute.xlu0 %1049
    %1051 = vrot.lane.b32.xlu0 %v1035, 48
    %v1052 = vpop.permute.xlu0 %1051
    %1053 = vrot.lane.b32.xlu0 %v1036, 48
    %v1054 = vpop.permute.xlu0 %1053
    %vm1061 = vcmask 785792
    %1062 = vst.msk [vmem:[#allocation2] sm:$0xff] %vm1061, %v1044
    %1063 = vst.msk [vmem:[#allocation2 + $0x48] sm:$0xff] %vm1061, %v1046
    %1064 = vst.msk [vmem:[#allocation2 + $0x90] sm:$0xff] %vm1061, %v1048
    %1065 = vst.msk [vmem:[#allocation2 + $0xd8] sm:$0xff] %vm1061, %v1050
    %1066 = vst.msk [vmem:[#allocation2 + $0x120] sm:$0xff] %vm1061, %v1052
    %1067 = vst.msk [vmem:[#allocation2 + $0x168] sm:$0xff] %vm1061, %v1054
    %v1068 = vld [vmem:[#allocation2] sm:$0xff]
    %v1069 = vld [vmem:[#allocation2 + $0x48] sm:$0xff]
    %v1070 = vld [vmem:[#allocation2 + $0x90] sm:$0xff]
    %v1071 = vld [vmem:[#allocation2 + $0xd8] sm:$0xff]
    %v1072 = vld [vmem:[#allocation2 + $0x120] sm:$0xff]
    %1078 = vrot.lane.b32.xlu0 %v1068, 80
    %v1079 = vpop.permute.xlu0 %1078
    %1080 = vrot.lane.b32.xlu0 %v1069, 80
    %v1081 = vpop.permute.xlu0 %1080
    %1082 = vrot.lane.b32.xlu0 %v1070, 80
    %v1083 = vpop.permute.xlu0 %1082
    %1084 = vrot.lane.b32.xlu0 %v1071, 80
    %v1085 = vpop.permute.xlu0 %1084
    %1086 = vrot.lane.b32.xlu0 %v1072, 80
    %v1087 = vpop.permute.xlu0 %1086
    %vm1093 = vcmask 392192
    %1094 = vst.msk [vmem:[#allocation2 + $0x48] sm:$0xff] %vm1093, %v1079
    %1095 = vst.msk [vmem:[#allocation2 + $0x90] sm:$0xff] %vm1093, %v1081
    %1096 = vst.msk [vmem:[#allocation2 + $0xd8] sm:$0xff] %vm1093, %v1083
    %1097 = vst.msk [vmem:[#allocation2 + $0x120] sm:$0xff] %vm1093, %v1085
    %1098 = vst.msk [vmem:[#allocation2 + $0x168] sm:$0xff] %vm1093, %v1087
    %v1099 = vld [vmem:[#allocation2 + $0x48] sm:$0xff]
    %v1100 = vld [vmem:[#allocation2 + $0x90] sm:$0xff]
    %v1101 = vld [vmem:[#allocation2 + $0xd8] sm:$0xff]
    %v1102 = vld [vmem:[#allocation2 + $0x120] sm:$0xff]
    %v1103 = vld [vmem:[#allocation2 + $0x168] sm:$0xff]
    %1109 = vrot.lane.b32.xlu0 %v1099, 48
    %v1110 = vpop.permute.xlu0 %1109
    %1111 = vrot.lane.b32.xlu0 %v1100, 48
    %v1112 = vpop.permute.xlu0 %1111
    %1113 = vrot.lane.b32.xlu0 %v1101, 48
    %v1114 = vpop.permute.xlu0 %1113
    %1115 = vrot.lane.b32.xlu0 %v1102, 48
    %v1116 = vpop.permute.xlu0 %1115
    %1117 = vrot.lane.b32.xlu0 %v1103, 48
    %v1118 = vpop.permute.xlu0 %1117
    %vm1124 = vcmask 1048320
    %1125 = vst.msk [vmem:[#allocation2] sm:$0xff] %vm1124, %v1110
    %vm1126 = vcmask 130048
    %1127 = vst.msk [vmem:[#allocation2 + $0x8] sm:$0xff] %vm1126, %v1110
    %1128 = vst.msk [vmem:[#allocation2 + $0x48] sm:$0xff] %vm1124, %v1112
    %1129 = vst.msk [vmem:[#allocation2 + $0x50] sm:$0xff] %vm1126, %v1112
    %1130 = vst.msk [vmem:[#allocation2 + $0x90] sm:$0xff] %vm1124, %v1114
    %1131 = vst.msk [vmem:[#allocation2 + $0x98] sm:$0xff] %vm1126, %v1114
    %1132 = vst.msk [vmem:[#allocation2 + $0xd8] sm:$0xff] %vm1124, %v1116
    %1133 = vst.msk [vmem:[#allocation2 + $0xe0] sm:$0xff] %vm1126, %v1116
    %1134 = vst.msk [vmem:[#allocation2 + $0x120] sm:$0xff] %vm1124, %v1118
    %1135 = vst.msk [vmem:[#allocation2 + $0x128] sm:$0xff] %vm1126, %v1118
    %1136 = vst.msk [vmem:[#allocation2] sm:$0xff] %vm1093, 0.0
    %1137 = vst.msk [vmem:[#allocation2 + $0x168] sm:$0xff] %vm1124, 0.0
    %1138 = vst.msk [vmem:[#allocation2 + $0x170] sm:$0xff] %vm1126, 0.0
    %v1139 = vld [vmem:[#allocation2] sm:$0xff]
    %v1140 = vld [vmem:[#allocation2 + $0x8] sm:$0xff]
    %v1141 = vld [vmem:[#allocation2 + $0x48] sm:$0xff]
    %v1142 = vld [vmem:[#allocation2 + $0x50] sm:$0xff]
    %v1143 = vld [vmem:[#allocation2 + $0x90] sm:$0xff]
    %v1144 = vld [vmem:[#allocation2 + $0x98] sm:$0xff]
    %v1145 = vld [vmem:[#allocation2 + $0xd8] sm:$0xff]
    %v1146 = vld [vmem:[#allocation2 + $0xe0] sm:$0xff]
    %v1147 = vld [vmem:[#allocation2 + $0x120] sm:$0xff]
    %v1148 = vld [vmem:[#allocation2 + $0x128] sm:$0xff]
    %v1149 = vld [vmem:[#allocation2 + $0x168] sm:$0xff]
    %v1150 = vld [vmem:[#allocation2 + $0x170] sm:$0xff]
    %v1151 = vpack.c.bf16 %v1141, %v1139
    %v1152 = vpack.c.bf16 %v1142, %v1140
    %v1153 = vpack.c.bf16 %v1145, %v1143
    %v1154 = vpack.c.bf16 %v1146, %v1144
    %v1155 = vpack.c.bf16 %v1149, %v1147
    %v1156 = vpack.c.bf16 %v1150, %v1148
    %v1157 = vld [vmem:[#allocation9] sm:$0xff]
    %v1158 = vld [vmem:[#allocation9 + $0x8] sm:$0xff]
    %v1159 = vld [vmem:[#allocation9 + $0x10] sm:$0xff]
    %v1160 = vld [vmem:[#allocation9 + $0x18] sm:$0xff]
    %v1161 = vld [vmem:[#allocation9 + $0x20] sm:$0xff]
    %v1162 = vld [vmem:[#allocation9 + $0x28] sm:$0xff]
    %v1163 = vld [vmem:[#allocation9 + $0x30] sm:$0xff]
    %v1164 = vld [vmem:[#allocation9 + $0x38] sm:$0xff]
    %v1165 = vld [vmem:[#allocation9 + $0x40] sm:$0xff]
    %v1166 = vld [vmem:[#allocation9 + $0x48] sm:$0xff]
    %v1167 = vld [vmem:[#allocation9 + $0x50] sm:$0xff]
    %v1168 = vld [vmem:[#allocation9 + $0x58] sm:$0xff]
    %v1169 = vld [vmem:[#allocation9 + $0x60] sm:$0xff]
    %v1170 = vld [vmem:[#allocation9 + $0x68] sm:$0xff]
    %v1171 = vld [vmem:[#allocation9 + $0x70] sm:$0xff]
    %v1172 = vld [vmem:[#allocation9 + $0x78] sm:$0xff]
    %v1173 = vld [vmem:[#allocation9 + $0x80] sm:$0xff]
    %v1174 = vld [vmem:[#allocation9 + $0x88] sm:$0xff]
    %v1175 = vld [vmem:[%s2] sm:$0x3]
    %v1177 = vlaneseq
    %v1178 = vshrl.u32 %v1177, 7
    %v1179 = vsub.s32 0, %v1178
    %v1180 = vrot.slane %v1175, %v1179
    %v1181 = vlaneseq
    %v1182 = vshrl.u32 %v1181, 7
    %v1183 = vsub.s32 1, %v1182
    %v1184 = vrot.slane %v1175, %v1183
    %v1205 = vunpack.c.l.b16 %v1157
    %v1206 = vunpack.c.h.b16 %v1157
    %v1207 = vunpack.c.l.b16 %v1158
    %v1208 = vunpack.c.h.b16 %v1158
    %v1209 = vunpack.c.l.b16 %v1159
    %v1210 = vunpack.c.h.b16 %v1159
    %v1211 = vunpack.c.l.b16 %v1160
    %v1212 = vunpack.c.h.b16 %v1160
    %v1213 = vunpack.c.l.b16 %v1161
    %v1214 = vunpack.c.h.b16 %v1161
    %v1215 = vunpack.c.l.b16 %v1162
    %v1216 = vunpack.c.h.b16 %v1162
    %v1217 = vunpack.c.l.b16 %v1163
    %v1218 = vunpack.c.h.b16 %v1163
    %v1219 = vunpack.c.l.b16 %v1164
    %v1220 = vunpack.c.h.b16 %v1164
    %v1221 = vunpack.c.l.b16 %v1165
    %v1222 = vunpack.c.h.b16 %v1165
    %v1223 = vunpack.c.l.b16 %v1166
    %v1224 = vunpack.c.h.b16 %v1166
    %v1225 = vunpack.c.l.b16 %v1167
    %v1226 = vunpack.c.h.b16 %v1167
    %v1227 = vunpack.c.l.b16 %v1168
    %v1228 = vunpack.c.h.b16 %v1168
    %v1229 = vunpack.c.l.b16 %v1169
    %v1230 = vunpack.c.h.b16 %v1169
    %v1231 = vunpack.c.l.b16 %v1170
    %v1232 = vunpack.c.h.b16 %v1170
    %v1233 = vunpack.c.l.b16 %v1171
    %v1234 = vunpack.c.h.b16 %v1171
    %v1235 = vunpack.c.l.b16 %v1172
    %v1236 = vunpack.c.h.b16 %v1172
    %v1237 = vunpack.c.l.b16 %v1173
    %v1238 = vunpack.c.h.b16 %v1173
    %v1239 = vunpack.c.l.b16 %v1174
    %v1240 = vunpack.c.h.b16 %v1174
    %v1241 = vpack.c.b16 %v1207, %v1205
    %v1242 = vpack.c.b16 %v1208, %v1206
    %v1243 = vpack.c.b16 %v1211, %v1209
    %v1244 = vpack.c.b16 %v1212, %v1210
    %v1245 = vpack.c.b16 %v1215, %v1213
    %v1246 = vpack.c.b16 %v1216, %v1214
    %v1247 = vpack.c.b16 %v1219, %v1217
    %v1248 = vpack.c.b16 %v1220, %v1218
    %v1249 = vpack.c.b16 %v1223, %v1221
    %v1250 = vpack.c.b16 %v1224, %v1222
    %v1251 = vpack.c.b16 %v1227, %v1225
    %v1252 = vpack.c.b16 %v1228, %v1226
    %v1253 = vpack.c.b16 %v1231, %v1229
    %v1254 = vpack.c.b16 %v1232, %v1230
    %v1255 = vpack.c.b16 %v1235, %v1233
    %v1256 = vpack.c.b16 %v1236, %v1234
    %v1257 = vpack.c.b16 %v1239, %v1237
    %v1258 = vpack.c.b16 %v1240, %v1238
    %v1278 = vsel %vm1126, %v1152, 0
    %v1281 = vsel %vm1126, %v1154, 0
    %v1284 = vsel %vm1126, %v1156, 0
    %1286 = vmatprep.subr.bf16.mxu0 %v1256
    %1287 = vmatpush1.bf16.msra.mxu0 %v1255
    %1288 = vmatprep.subr.bf16.mxu0 %v1254
    %1289 = vmatpush1.bf16.msra.mxu0 %v1253
    %1290 = vmatprep.subr.bf16.mxu0 %v1252
    %1291 = vmatpush1.bf16.msra.mxu0 %v1251
    %1292 = vmatprep.subr.bf16.mxu0 %v1250
    %1293 = vmatpush1.bf16.msra.mxu0 %v1249
    %1294 = vmatprep.subr.bf16.mxu0 %v1248
    %1295 = vmatpush1.bf16.msra.mxu0 %v1247
    %1296 = vmatprep.subr.bf16.mxu0 %v1246
    %1297 = vmatpush1.bf16.msra.mxu0 %v1245
    %1298 = vmatprep.subr.bf16.mxu0 %v1244
    %1299 = vmatpush1.bf16.msra.mxu0 %v1243
    %1300 = vmatprep.subr.bf16.mxu0 %v1242
    %1301 = vmatpush1.bf16.msra.mxu0 %v1241
    %1302 = vmatprep.subr.bf16.mxu0 0
    %1303 = vmatpush2.bf16.msra.mxu0 0
    %1304 = vmatprep.subr.bf16.mxu0 0
    %1305 = vmatpush2.bf16.msra.mxu0 0
    %1306 = vmatprep.subr.bf16.mxu0 0
    %1307 = vmatpush2.bf16.msra.mxu0 0
    %1308 = vmatprep.subr.bf16.mxu0 0
    %1309 = vmatpush2.bf16.msra.mxu0 0
    %1310 = vmatprep.subr.bf16.mxu0 0
    %1311 = vmatpush2.bf16.msra.mxu0 0
    %1312 = vmatprep.subr.bf16.mxu0 0
    %1313 = vmatpush2.bf16.msra.mxu0 0
    %1314 = vmatprep.subr.bf16.mxu0 0
    %1315 = vmatpush2.bf16.msra.mxu0 0
    %1316 = vmatprep.subr.bf16.mxu0 %v1258
    %1317 = vmatpush2.bf16.msra.mxu0 %v1257
    %1318 = vmatprep.mubr.bf16.mxu0 %v1278
    %1319 = vmatmul.mubr.bf16.gmra.mxu0 %v1151
    %v1320 = vpop.f32.mrf.mxu0
    %v1321 = vadd.f32 %v1180, %v1320
    %v1322 = vpop.f32.mrf.mxu0
    %v1323 = vadd.f32 %v1184, %v1322
    %v1324 = vpop.f32.mrf.mxu0
    %v1325 = vadd.f32 %v1180, %v1324
    %v1326 = vpop.f32.mrf.mxu0
    %v1327 = vadd.f32 %v1184, %v1326
    %1328 = vmatprep.mubr.bf16.mxu0 %v1281
    %1329 = vmatmul.mubr.bf16.gmra.mxu0 %v1153
    %v1330 = vpop.f32.mrf.mxu0
    %v1331 = vadd.f32 %v1180, %v1330
    %v1332 = vpop.f32.mrf.mxu0
    %v1333 = vadd.f32 %v1184, %v1332
    %v1334 = vpop.f32.mrf.mxu0
    %v1335 = vadd.f32 %v1180, %v1334
    %v1336 = vpop.f32.mrf.mxu0
    %v1337 = vadd.f32 %v1184, %v1336
    %1338 = vmatprep.mubr.bf16.mxu0 %v1284
    %1339 = vmatmul.mubr.bf16.gmra.mxu0 %v1155
    %v1340 = vpop.f32.mrf.mxu0
    %v1341 = vadd.f32 %v1180, %v1340
    %v1342 = vpop.f32.mrf.mxu0
    %v1343 = vadd.f32 %v1184, %v1342
    %v1344 = vpop.f32.mrf.mxu0
    %v1345 = vadd.f32 %v1180, %v1344
    %v1346 = vpop.f32.mrf.mxu0
    %v1347 = vadd.f32 %v1184, %v1346
    %1348 = vdwg.mxu0
    %v1349 = vmax.f32 %v1321, 0.0
    %v1350 = vmax.f32 %v1323, 0.0
    %v1351 = vmax.f32 %v1325, 0.0
    %v1352 = vmax.f32 %v1327, 0.0
    %v1353 = vmax.f32 %v1331, 0.0
    %v1354 = vmax.f32 %v1333, 0.0
    %v1355 = vmax.f32 %v1335, 0.0
    %v1356 = vmax.f32 %v1337, 0.0
    %v1357 = vmax.f32 %v1341, 0.0
    %v1358 = vmax.f32 %v1343, 0.0
    %v1359 = vmax.f32 %v1345, 0.0
    %v1360 = vmax.f32 %v1347, 0.0
    %1373 = vrot.lane.b32.xlu0 %v1349, 64
    %v1374 = vpop.permute.xlu0 %1373
    %1375 = vrot.lane.b32.xlu0 %v1350, 64
    %v1376 = vpop.permute.xlu0 %1375
    %1377 = vrot.lane.b32.xlu0 %v1351, 64
    %v1378 = vpop.permute.xlu0 %1377
    %1379 = vrot.lane.b32.xlu0 %v1352, 64
    %v1380 = vpop.permute.xlu0 %1379
    %1381 = vrot.lane.b32.xlu0 %v1353, 64
    %v1382 = vpop.permute.xlu0 %1381
    %1383 = vrot.lane.b32.xlu0 %v1354, 64
    %v1384 = vpop.permute.xlu0 %1383
    %1385 = vrot.lane.b32.xlu0 %v1355, 64
    %v1386 = vpop.permute.xlu0 %1385
    %1387 = vrot.lane.b32.xlu0 %v1356, 64
    %v1388 = vpop.permute.xlu0 %1387
    %1389 = vrot.lane.b32.xlu0 %v1357, 64
    %v1390 = vpop.permute.xlu0 %1389
    %1391 = vrot.lane.b32.xlu0 %v1358, 64
    %v1392 = vpop.permute.xlu0 %1391
    %1393 = vrot.lane.b32.xlu0 %v1359, 64
    %v1394 = vpop.permute.xlu0 %1393
    %1395 = vrot.lane.b32.xlu0 %v1360, 64
    %v1396 = vpop.permute.xlu0 %1395
    %vm1397 = vcmask 523264
    %v1398 = vsel %vm1397, %v1374, %v1376
    %v1399 = vsel %vm1397, %v1378, %v1380
    %v1400 = vsel %vm1397, %v1382, %v1384
    %v1401 = vsel %vm1397, %v1386, %v1388
    %v1402 = vsel %vm1397, %v1390, %v1392
    %v1403 = vsel %vm1397, %v1394, %v1396
    %vm1416 = vcmask 1048064
    %1417 = vst.msk [vmem:[#allocation2 + $0x8] sm:$0xff] %vm1416, %v1374
    %1418 = vst [vmem:[#allocation2 + $0x10] sm:$0xff] %v1398
    %1419 = vst.msk [vmem:[#allocation2 + $0x50] sm:$0xff] %vm1416, %v1378
    %1420 = vst [vmem:[#allocation2 + $0x58] sm:$0xff] %v1399
    %1421 = vst.msk [vmem:[#allocation2 + $0x98] sm:$0xff] %vm1416, %v1382
    %1422 = vst [vmem:[#allocation2 + $0xa0] sm:$0xff] %v1400
    %1423 = vst.msk [vmem:[#allocation2 + $0xe0] sm:$0xff] %vm1416, %v1386
    %1424 = vst [vmem:[#allocation2 + $0xe8] sm:$0xff] %v1401
    %1425 = vst.msk [vmem:[#allocation2 + $0x128] sm:$0xff] %vm1416, %v1390
    %1426 = vst [vmem:[#allocation2 + $0x130] sm:$0xff] %v1402
    %1427 = vst.msk [vmem:[#allocation2 + $0x170] sm:$0xff] %vm1416, %v1394
    %1428 = vst [vmem:[#allocation2 + $0x178] sm:$0xff] %v1403
    %v1429 = vld [vmem:[#allocation2 + $0x8] sm:$0xff]
    %v1430 = vld [vmem:[#allocation2 + $0x10] sm:$0xff]
    %v1431 = vld [vmem:[#allocation2 + $0x50] sm:$0xff]
    %v1432 = vld [vmem:[#allocation2 + $0x58] sm:$0xff]
    %v1433 = vld [vmem:[#allocation2 + $0x98] sm:$0xff]
    %v1434 = vld [vmem:[#allocation2 + $0xa0] sm:$0xff]
    %v1435 = vld [vmem:[#allocation2 + $0xe0] sm:$0xff]
    %v1436 = vld [vmem:[#allocation2 + $0xe8] sm:$0xff]
    %v1437 = vld [vmem:[#allocation2 + $0x128] sm:$0xff]
    %v1438 = vld [vmem:[#allocation2 + $0x130] sm:$0xff]
    %1449 = vrot.lane.b32.xlu0 %v1429, 64
    %v1450 = vpop.permute.xlu0 %1449
    %1451 = vrot.lane.b32.xlu0 %v1430, 64
    %v1452 = vpop.permute.xlu0 %1451
    %1453 = vrot.lane.b32.xlu0 %v1431, 64
    %v1454 = vpop.permute.xlu0 %1453
    %1455 = vrot.lane.b32.xlu0 %v1432, 64
    %v1456 = vpop.permute.xlu0 %1455
    %1457 = vrot.lane.b32.xlu0 %v1433, 64
    %v1458 = vpop.permute.xlu0 %1457
    %1459 = vrot.lane.b32.xlu0 %v1434, 64
    %v1460 = vpop.permute.xlu0 %1459
    %1461 = vrot.lane.b32.xlu0 %v1435, 64
    %v1462 = vpop.permute.xlu0 %1461
    %1463 = vrot.lane.b32.xlu0 %v1436, 64
    %v1464 = vpop.permute.xlu0 %1463
    %1465 = vrot.lane.b32.xlu0 %v1437, 64
    %v1466 = vpop.permute.xlu0 %1465
    %1467 = vrot.lane.b32.xlu0 %v1438, 64
    %v1468 = vpop.permute.xlu0 %1467
    %v1469 = vsel %vm1397, %v1450, %v1452
    %v1470 = vsel %vm1397, %v1454, %v1456
    %v1471 = vsel %vm1397, %v1458, %v1460
    %v1472 = vsel %vm1397, %v1462, %v1464
    %v1473 = vsel %vm1397, %v1466, %v1468
    %1484 = vst [vmem:[#allocation2 + $0x48] sm:$0xff] %v1469
    %1485 = vst.msk [vmem:[#allocation2 + $0x50] sm:$0xff] %vm1397, %v1452
    %1486 = vst [vmem:[#allocation2 + $0x90] sm:$0xff] %v1470
    %1487 = vst.msk [vmem:[#allocation2 + $0x98] sm:$0xff] %vm1397, %v1456
    %1488 = vst [vmem:[#allocation2 + $0xd8] sm:$0xff] %v1471
    %1489 = vst.msk [vmem:[#allocation2 + $0xe0] sm:$0xff] %vm1397, %v1460
    %1490 = vst [vmem:[#allocation2 + $0x120] sm:$0xff] %v1472
    %1491 = vst.msk [vmem:[#allocation2 + $0x128] sm:$0xff] %vm1397, %v1464
    %1492 = vst [vmem:[#allocation2 + $0x168] sm:$0xff] %v1473
    %1493 = vst.msk [vmem:[#allocation2 + $0x170] sm:$0xff] %vm1397, %v1468
    %v1494 = vld [vmem:[#allocation2 + $0x50] sm:$0xff]
    %v1495 = vld [vmem:[#allocation2 + $0x58] sm:$0xff]
    %v1496 = vld [vmem:[#allocation2 + $0x98] sm:$0xff]
    %v1497 = vld [vmem:[#allocation2 + $0xa0] sm:$0xff]
    %v1498 = vld [vmem:[#allocation2 + $0xe0] sm:$0xff]
    %v1499 = vld [vmem:[#allocation2 + $0xe8] sm:$0xff]
    %v1500 = vld [vmem:[#allocation2 + $0x128] sm:$0xff]
    %v1501 = vld [vmem:[#allocation2 + $0x130] sm:$0xff]
    %v1502 = vld [vmem:[#allocation2 + $0x170] sm:$0xff]
    %v1503 = vld [vmem:[#allocation2 + $0x178] sm:$0xff]
    %1514 = vrot.lane.b32.xlu0 %v1494, 64
    %v1515 = vpop.permute.xlu0 %1514
    %1516 = vrot.lane.b32.xlu0 %v1495, 64
    %v1517 = vpop.permute.xlu0 %1516
    %1518 = vrot.lane.b32.xlu0 %v1496, 64
    %v1519 = vpop.permute.xlu0 %1518
    %1520 = vrot.lane.b32.xlu0 %v1497, 64
    %v1521 = vpop.permute.xlu0 %1520
    %1522 = vrot.lane.b32.xlu0 %v1498, 64
    %v1523 = vpop.permute.xlu0 %1522
    %1524 = vrot.lane.b32.xlu0 %v1499, 64
    %v1525 = vpop.permute.xlu0 %1524
    %1526 = vrot.lane.b32.xlu0 %v1500, 64
    %v1527 = vpop.permute.xlu0 %1526
    %1528 = vrot.lane.b32.xlu0 %v1501, 64
    %v1529 = vpop.permute.xlu0 %1528
    %1530 = vrot.lane.b32.xlu0 %v1502, 64
    %v1531 = vpop.permute.xlu0 %1530
    %1532 = vrot.lane.b32.xlu0 %v1503, 64
    %v1533 = vpop.permute.xlu0 %1532
    %v1534 = vsel %vm1397, %v1515, %v1517
    %v1535 = vsel %vm1397, %v1519, %v1521
    %v1536 = vsel %vm1397, %v1523, %v1525
    %v1537 = vsel %vm1397, %v1527, %v1529
    %v1538 = vsel %vm1397, %v1531, %v1533
    %1549 = vst [vmem:[#allocation2 + $0x18] sm:$0xff] %v1534
    %1550 = vst.msk [vmem:[#allocation2 + $0x20] sm:$0xff] %vm1397, %v1517
    %1551 = vst [vmem:[#allocation2 + $0x60] sm:$0xff] %v1535
    %1552 = vst.msk [vmem:[#allocation2 + $0x68] sm:$0xff] %vm1397, %v1521
    %1553 = vst [vmem:[#allocation2 + $0xa8] sm:$0xff] %v1536
    %1554 = vst.msk [vmem:[#allocation2 + $0xb0] sm:$0xff] %vm1397, %v1525
    %1555 = vst [vmem:[#allocation2 + $0xf0] sm:$0xff] %v1537
    %1556 = vst.msk [vmem:[#allocation2 + $0xf8] sm:$0xff] %vm1397, %v1529
    %1557 = vst [vmem:[#allocation2 + $0x138] sm:$0xff] %v1538
    %1558 = vst.msk [vmem:[#allocation2 + $0x140] sm:$0xff] %vm1397, %v1533
    %1559 = vst [vmem:[#allocation2] sm:$0xff] 0.0
    %1560 = vst.msk [vmem:[#allocation2 + $0x8] sm:$0xff] %vm1397, 0.0
    %1561 = vst [vmem:[#allocation2 + $0x180] sm:$0xff] 0.0
    %1562 = vst.msk [vmem:[#allocation2 + $0x188] sm:$0xff] %vm1397, 0.0
    %v1563 = vld [vmem:[#allocation2] sm:$0xff]
    %v1564 = vld [vmem:[#allocation2 + $0x8] sm:$0xff]
    %v1565 = vld [vmem:[#allocation2 + $0x10] sm:$0xff]
    %v1566 = vld [vmem:[#allocation2 + $0x18] sm:$0xff]
    %v1567 = vld [vmem:[#allocation2 + $0x20] sm:$0xff]
    %v1568 = vld [vmem:[#allocation2 + $0x48] sm:$0xff]
    %v1569 = vld [vmem:[#allocation2 + $0x50] sm:$0xff]
    %v1570 = vld [vmem:[#allocation2 + $0x58] sm:$0xff]
    %v1571 = vld [vmem:[#allocation2 + $0x60] sm:$0xff]
    %v1572 = vld [vmem:[#allocation2 + $0x68] sm:$0xff]
    %v1573 = vld [vmem:[#allocation2 + $0x90] sm:$0xff]
    %v1574 = vld [vmem:[#allocation2 + $0x98] sm:$0xff]
    %v1575 = vld [vmem:[#allocation2 + $0xa0] sm:$0xff]
    %v1576 = vld [vmem:[#allocation2 + $0xa8] sm:$0xff]
    %v1577 = vld [vmem:[#allocation2 + $0xb0] sm:$0xff]
    %v1578 = vld [vmem:[#allocation2 + $0xd8] sm:$0xff]
    %v1579 = vld [vmem:[#allocation2 + $0xe0] sm:$0xff]
    %v1580 = vld [vmem:[#allocation2 + $0xe8] sm:$0xff]
    %v1581 = vld [vmem:[#allocation2 + $0xf0] sm:$0xff]
    %v1582 = vld [vmem:[#allocation2 + $0xf8] sm:$0xff]
    %v1583 = vld [vmem:[#allocation2 + $0x120] sm:$0xff]
    %v1584 = vld [vmem:[#allocation2 + $0x128] sm:$0xff]
    %v1585 = vld [vmem:[#allocation2 + $0x130] sm:$0xff]
    %v1586 = vld [vmem:[#allocation2 + $0x138] sm:$0xff]
    %v1587 = vld [vmem:[#allocation2 + $0x140] sm:$0xff]
    %v1588 = vld [vmem:[#allocation2 + $0x168] sm:$0xff]
    %v1589 = vld [vmem:[#allocation2 + $0x170] sm:$0xff]
    %v1590 = vld [vmem:[#allocation2 + $0x178] sm:$0xff]
    %v1591 = vld [vmem:[#allocation2 + $0x180] sm:$0xff]
    %v1592 = vld [vmem:[#allocation2 + $0x188] sm:$0xff]
    %v1593 = vpack.c.bf16 %v1568, %v1563
    %v1594 = vpack.c.bf16 %v1569, %v1564
    %v1595 = vpack.c.bf16 %v1570, %v1565
    %v1596 = vpack.c.bf16 %v1571, %v1566
    %v1597 = vpack.c.bf16 %v1572, %v1567
    %v1598 = vpack.c.bf16 %v1578, %v1573
    %v1599 = vpack.c.bf16 %v1579, %v1574
    %v1600 = vpack.c.bf16 %v1580, %v1575
    %v1601 = vpack.c.bf16 %v1581, %v1576
    %v1602 = vpack.c.bf16 %v1582, %v1577
    %v1603 = vpack.c.bf16 %v1588, %v1583
    %v1604 = vpack.c.bf16 %v1589, %v1584
    %v1605 = vpack.c.bf16 %v1590, %v1585
    %v1606 = vpack.c.bf16 %v1591, %v1586
    %v1607 = vpack.c.bf16 %v1592, %v1587
    %v1608 = vld [vmem:[%s3] sm:$0xff]
    %v1609 = vld [vmem:[%s3 + $0x8] sm:$0xff]
    %v1610 = vld [vmem:[%s3 + $0x10] sm:$0xff]
    %v1611 = vld [vmem:[%s3 + $0x18] sm:$0xff]
    %v1612 = vld [vmem:[%s3 + $0x20] sm:$0xff]
    %v1613 = vld [vmem:[%s3 + $0x28] sm:$0xff]
    %v1614 = vld [vmem:[%s3 + $0x30] sm:$0xff]
    %v1615 = vld [vmem:[%s3 + $0x38] sm:$0xff]
    %v1616 = vld [vmem:[%s3 + $0x40] sm:$0xff]
    %v1617 = vld [vmem:[%s3 + $0x48] sm:$0xff]
    %v1618 = vld [vmem:[%s3 + $0x50] sm:$0xff]
    %v1619 = vld [vmem:[%s3 + $0x58] sm:$0xff]
    %v1620 = vld [vmem:[%s3 + $0x60] sm:$0xff]
    %v1621 = vld [vmem:[%s3 + $0x68] sm:$0xff]
    %v1622 = vld [vmem:[%s3 + $0x70] sm:$0xff]
    %v1623 = vld [vmem:[%s3 + $0x78] sm:$0xff]
    %v1624 = vld [vmem:[%s3 + $0x80] sm:$0xff]
    %v1625 = vld [vmem:[%s3 + $0x88] sm:$0xff]
    %v1626 = vld [vmem:[%s3 + $0x90] sm:$0xff]
    %v1627 = vld [vmem:[%s3 + $0x98] sm:$0xff]
    %v1628 = vld [vmem:[%s3 + $0xa0] sm:$0xff]
    %v1629 = vld [vmem:[%s3 + $0xa8] sm:$0xff]
    %v1630 = vld [vmem:[%s3 + $0xb0] sm:$0xff]
    %v1631 = vld [vmem:[%s3 + $0xb8] sm:$0xff]
    %v1632 = vld [vmem:[%s3 + $0xc0] sm:$0xff]
    %v1633 = vld [vmem:[%s3 + $0xc8] sm:$0xff]
    %v1634 = vld [vmem:[%s3 + $0xd0] sm:$0xff]
    %v1635 = vld [vmem:[%s3 + $0xd8] sm:$0xff]
    %v1636 = vld [vmem:[%s3 + $0xe0] sm:$0xff]
    %v1637 = vld [vmem:[%s3 + $0xe8] sm:$0xff]
    %v1638 = vld [vmem:[%s3 + $0xf0] sm:$0xff]
    %v1639 = vld [vmem:[%s3 + $0xf8] sm:$0xff]
    %v1640 = vld [vmem:[%s3 + $0x100] sm:$0xff]
    %v1641 = vld [vmem:[%s3 + $0x108] sm:$0xff]
    %v1642 = vld [vmem:[%s3 + $0x110] sm:$0xff]
    %v1643 = vld [vmem:[%s3 + $0x118] sm:$0xff]
    %v1644 = vld [vmem:[%s3 + $0x120] sm:$0xff]
    %v1645 = vld [vmem:[%s3 + $0x128] sm:$0xff]
    %v1646 = vld [vmem:[%s3 + $0x130] sm:$0xff]
    %v1647 = vld [vmem:[%s3 + $0x138] sm:$0xff]
    %v1648 = vld [vmem:[%s3 + $0x140] sm:$0xff]
    %v1649 = vld [vmem:[%s3 + $0x148] sm:$0xff]
    %v1650 = vld [vmem:[%s3 + $0x150] sm:$0xff]
    %v1651 = vld [vmem:[%s3 + $0x158] sm:$0xff]
    %v1652 = vld [vmem:[%s3 + $0x160] sm:$0xff]
    %v1653 = vld [vmem:[%s3 + $0x168] sm:$0xff]
    %v1654 = vld [vmem:[%s3 + $0x170] sm:$0xff]
    %v1655 = vld [vmem:[%s3 + $0x178] sm:$0xff]
    %v1656 = vld [vmem:[%s3 + $0x180] sm:$0xff]
    %v1657 = vld [vmem:[%s3 + $0x188] sm:$0xff]
    %v1658 = vld [vmem:[%s3 + $0x190] sm:$0xff]
    %v1659 = vld [vmem:[%s3 + $0x198] sm:$0xff]
    %v1660 = vld [vmem:[%s3 + $0x1a0] sm:$0xff]
    %v1661 = vld [vmem:[%s3 + $0x1a8] sm:$0xff]
    %v1662 = vld [vmem:[%s3 + $0x1b0] sm:$0xff]
    %v1663 = vld [vmem:[%s3 + $0x1b8] sm:$0xff]
    %v1664 = vld [vmem:[%s3 + $0x1c0] sm:$0xff]
    %v1665 = vld [vmem:[%s3 + $0x1c8] sm:$0xff]
    %v1666 = vld [vmem:[%s3 + $0x1d0] sm:$0xff]
    %v1667 = vld [vmem:[%s3 + $0x1d8] sm:$0xff]
    %v1668 = vld [vmem:[%s3 + $0x1e0] sm:$0xff]
    %v1669 = vld [vmem:[%s3 + $0x1e8] sm:$0xff]
    %v1670 = vld [vmem:[%s3 + $0x1f0] sm:$0xff]
    %v1671 = vld [vmem:[%s3 + $0x1f8] sm:$0xff]
    %v1672 = vld [vmem:[%s3 + $0x200] sm:$0xff]
    %v1673 = vld [vmem:[%s3 + $0x208] sm:$0xff]
    %v1674 = vld [vmem:[%s3 + $0x210] sm:$0xff]
    %v1675 = vld [vmem:[%s3 + $0x218] sm:$0xff]
    %v1676 = vld [vmem:[%s3 + $0x220] sm:$0xff]
    %v1677 = vld [vmem:[%s3 + $0x228] sm:$0xff]
    %v1678 = vld [vmem:[%s3 + $0x230] sm:$0xff]
    %v1679 = vld [vmem:[%s3 + $0x238] sm:$0xff]
    %v1680 = vld [vmem:[#allocation11] sm:$0x3]
    %v1682 = vlaneseq
    %v1683 = vshrl.u32 %v1682, 7
    %v1684 = vsub.s32 0, %v1683
    %v1685 = vrot.slane %v1680, %v1684
    %v1686 = vlaneseq
    %v1687 = vshrl.u32 %v1686, 7
    %v1688 = vsub.s32 1, %v1687
    %v1689 = vrot.slane %v1680, %v1688
    %v1764 = vunpack.c.l.b16 %v1608
    %v1765 = vunpack.c.h.b16 %v1608
    %v1766 = vunpack.c.l.b16 %v1609
    %v1767 = vunpack.c.h.b16 %v1609
    %v1768 = vunpack.c.l.b16 %v1610
    %v1769 = vunpack.c.h.b16 %v1610
    %v1770 = vunpack.c.l.b16 %v1611
    %v1771 = vunpack.c.h.b16 %v1611
    %v1772 = vunpack.c.l.b16 %v1612
    %v1773 = vunpack.c.h.b16 %v1612
    %v1774 = vunpack.c.l.b16 %v1613
    %v1775 = vunpack.c.h.b16 %v1613
    %v1776 = vunpack.c.l.b16 %v1614
    %v1777 = vunpack.c.h.b16 %v1614
    %v1778 = vunpack.c.l.b16 %v1615
    %v1779 = vunpack.c.h.b16 %v1615
    %v1780 = vunpack.c.l.b16 %v1616
    %v1781 = vunpack.c.h.b16 %v1616
    %v1782 = vunpack.c.l.b16 %v1617
    %v1783 = vunpack.c.h.b16 %v1617
    %v1784 = vunpack.c.l.b16 %v1618
    %v1785 = vunpack.c.h.b16 %v1618
    %v1786 = vunpack.c.l.b16 %v1619
    %v1787 = vunpack.c.h.b16 %v1619
    %v1788 = vunpack.c.l.b16 %v1620
    %v1789 = vunpack.c.h.b16 %v1620
    %v1790 = vunpack.c.l.b16 %v1621
    %v1791 = vunpack.c.h.b16 %v1621
    %v1792 = vunpack.c.l.b16 %v1622
    %v1793 = vunpack.c.h.b16 %v1622
    %v1794 = vunpack.c.l.b16 %v1623
    %v1795 = vunpack.c.h.b16 %v1623
    %v1796 = vunpack.c.l.b16 %v1624
    %v1797 = vunpack.c.h.b16 %v1624
    %v1798 = vunpack.c.l.b16 %v1625
    %v1799 = vunpack.c.h.b16 %v1625
    %v1800 = vunpack.c.l.b16 %v1626
    %v1801 = vunpack.c.h.b16 %v1626
    %v1802 = vunpack.c.l.b16 %v1627
    %v1803 = vunpack.c.h.b16 %v1627
    %v1804 = vunpack.c.l.b16 %v1628
    %v1805 = vunpack.c.h.b16 %v1628
    %v1806 = vunpack.c.l.b16 %v1629
    %v1807 = vunpack.c.h.b16 %v1629
    %v1808 = vunpack.c.l.b16 %v1630
    %v1809 = vunpack.c.h.b16 %v1630
    %v1810 = vunpack.c.l.b16 %v1631
    %v1811 = vunpack.c.h.b16 %v1631
    %v1812 = vunpack.c.l.b16 %v1632
    %v1813 = vunpack.c.h.b16 %v1632
    %v1814 = vunpack.c.l.b16 %v1633
    %v1815 = vunpack.c.h.b16 %v1633
    %v1816 = vunpack.c.l.b16 %v1634
    %v1817 = vunpack.c.h.b16 %v1634
    %v1818 = vunpack.c.l.b16 %v1635
    %v1819 = vunpack.c.h.b16 %v1635
    %v1820 = vunpack.c.l.b16 %v1636
    %v1821 = vunpack.c.h.b16 %v1636
    %v1822 = vunpack.c.l.b16 %v1637
    %v1823 = vunpack.c.h.b16 %v1637
    %v1824 = vunpack.c.l.b16 %v1638
    %v1825 = vunpack.c.h.b16 %v1638
    %v1826 = vunpack.c.l.b16 %v1639
    %v1827 = vunpack.c.h.b16 %v1639
    %v1828 = vunpack.c.l.b16 %v1640
    %v1829 = vunpack.c.h.b16 %v1640
    %v1830 = vunpack.c.l.b16 %v1641
    %v1831 = vunpack.c.h.b16 %v1641
    %v1832 = vunpack.c.l.b16 %v1642
    %v1833 = vunpack.c.h.b16 %v1642
    %v1834 = vunpack.c.l.b16 %v1643
    %v1835 = vunpack.c.h.b16 %v1643
    %v1836 = vunpack.c.l.b16 %v1644
    %v1837 = vunpack.c.h.b16 %v1644
    %v1838 = vunpack.c.l.b16 %v1645
    %v1839 = vunpack.c.h.b16 %v1645
    %v1840 = vunpack.c.l.b16 %v1646
    %v1841 = vunpack.c.h.b16 %v1646
    %v1842 = vunpack.c.l.b16 %v1647
    %v1843 = vunpack.c.h.b16 %v1647
    %v1844 = vunpack.c.l.b16 %v1648
    %v1845 = vunpack.c.h.b16 %v1648
    %v1846 = vunpack.c.l.b16 %v1649
    %v1847 = vunpack.c.h.b16 %v1649
    %v1848 = vunpack.c.l.b16 %v1650
    %v1849 = vunpack.c.h.b16 %v1650
    %v1850 = vunpack.c.l.b16 %v1651
    %v1851 = vunpack.c.h.b16 %v1651
    %v1852 = vunpack.c.l.b16 %v1652
    %v1853 = vunpack.c.h.b16 %v1652
    %v1854 = vunpack.c.l.b16 %v1653
    %v1855 = vunpack.c.h.b16 %v1653
    %v1856 = vunpack.c.l.b16 %v1654
    %v1857 = vunpack.c.h.b16 %v1654
    %v1858 = vunpack.c.l.b16 %v1655
    %v1859 = vunpack.c.h.b16 %v1655
    %v1860 = vunpack.c.l.b16 %v1656
    %v1861 = vunpack.c.h.b16 %v1656
    %v1862 = vunpack.c.l.b16 %v1657
    %v1863 = vunpack.c.h.b16 %v1657
    %v1864 = vunpack.c.l.b16 %v1658
    %v1865 = vunpack.c.h.b16 %v1658
    %v1866 = vunpack.c.l.b16 %v1659
    %v1867 = vunpack.c.h.b16 %v1659
    %v1868 = vunpack.c.l.b16 %v1660
    %v1869 = vunpack.c.h.b16 %v1660
    %v1870 = vunpack.c.l.b16 %v1661
    %v1871 = vunpack.c.h.b16 %v1661
    %v1872 = vunpack.c.l.b16 %v1662
    %v1873 = vunpack.c.h.b16 %v1662
    %v1874 = vunpack.c.l.b16 %v1663
    %v1875 = vunpack.c.h.b16 %v1663
    %v1876 = vunpack.c.l.b16 %v1664
    %v1877 = vunpack.c.h.b16 %v1664
    %v1878 = vunpack.c.l.b16 %v1665
    %v1879 = vunpack.c.h.b16 %v1665
    %v1880 = vunpack.c.l.b16 %v1666
    %v1881 = vunpack.c.h.b16 %v1666
    %v1882 = vunpack.c.l.b16 %v1667
    %v1883 = vunpack.c.h.b16 %v1667
    %v1884 = vunpack.c.l.b16 %v1668
    %v1885 = vunpack.c.h.b16 %v1668
    %v1886 = vunpack.c.l.b16 %v1669
    %v1887 = vunpack.c.h.b16 %v1669
    %v1888 = vunpack.c.l.b16 %v1670
    %v1889 = vunpack.c.h.b16 %v1670
    %v1890 = vunpack.c.l.b16 %v1671
    %v1891 = vunpack.c.h.b16 %v1671
    %v1892 = vunpack.c.l.b16 %v1672
    %v1893 = vunpack.c.h.b16 %v1672
    %v1894 = vunpack.c.l.b16 %v1673
    %v1895 = vunpack.c.h.b16 %v1673
    %v1896 = vunpack.c.l.b16 %v1674
    %v1897 = vunpack.c.h.b16 %v1674
    %v1898 = vunpack.c.l.b16 %v1675
    %v1899 = vunpack.c.h.b16 %v1675
    %v1900 = vunpack.c.l.b16 %v1676
    %v1901 = vunpack.c.h.b16 %v1676
    %v1902 = vunpack.c.l.b16 %v1677
    %v1903 = vunpack.c.h.b16 %v1677
    %v1904 = vunpack.c.l.b16 %v1678
    %v1905 = vunpack.c.h.b16 %v1678
    %v1906 = vunpack.c.l.b16 %v1679
    %v1907 = vunpack.c.h.b16 %v1679
    %v1908 = vpack.c.b16 %v1766, %v1764
    %v1909 = vpack.c.b16 %v1767, %v1765
    %v1910 = vpack.c.b16 %v1770, %v1768
    %v1911 = vpack.c.b16 %v1771, %v1769
    %v1912 = vpack.c.b16 %v1774, %v1772
    %v1913 = vpack.c.b16 %v1775, %v1773
    %v1914 = vpack.c.b16 %v1778, %v1776
    %v1915 = vpack.c.b16 %v1779, %v1777
    %v1916 = vpack.c.b16 %v1782, %v1780
    %v1917 = vpack.c.b16 %v1783, %v1781
    %v1918 = vpack.c.b16 %v1786, %v1784
    %v1919 = vpack.c.b16 %v1787, %v1785
    %v1920 = vpack.c.b16 %v1790, %v1788
    %v1921 = vpack.c.b16 %v1791, %v1789
    %v1922 = vpack.c.b16 %v1794, %v1792
    %v1923 = vpack.c.b16 %v1795, %v1793
    %v1924 = vpack.c.b16 %v1798, %v1796
    %v1925 = vpack.c.b16 %v1799, %v1797
    %v1926 = vpack.c.b16 %v1802, %v1800
    %v1927 = vpack.c.b16 %v1803, %v1801
    %v1928 = vpack.c.b16 %v1806, %v1804
    %v1929 = vpack.c.b16 %v1807, %v1805
    %v1930 = vpack.c.b16 %v1810, %v1808
    %v1931 = vpack.c.b16 %v1811, %v1809
    %v1932 = vpack.c.b16 %v1814, %v1812
    %v1933 = vpack.c.b16 %v1815, %v1813
    %v1934 = vpack.c.b16 %v1818, %v1816
    %v1935 = vpack.c.b16 %v1819, %v1817
    %v1936 = vpack.c.b16 %v1822, %v1820
    %v1937 = vpack.c.b16 %v1823, %v1821
    %v1938 = vpack.c.b16 %v1826, %v1824
    %v1939 = vpack.c.b16 %v1827, %v1825
    %v1940 = vpack.c.b16 %v1830, %v1828
    %v1941 = vpack.c.b16 %v1831, %v1829
    %v1942 = vpack.c.b16 %v1834, %v1832
    %v1943 = vpack.c.b16 %v1835, %v1833
    %v1944 = vpack.c.b16 %v1838, %v1836
    %v1945 = vpack.c.b16 %v1839, %v1837
    %v1946 = vpack.c.b16 %v1842, %v1840
    %v1947 = vpack.c.b16 %v1843, %v1841
    %v1948 = vpack.c.b16 %v1846, %v1844
    %v1949 = vpack.c.b16 %v1847, %v1845
    %v1950 = vpack.c.b16 %v1850, %v1848
    %v1951 = vpack.c.b16 %v1851, %v1849
    %v1952 = vpack.c.b16 %v1854, %v1852
    %v1953 = vpack.c.b16 %v1855, %v1853
    %v1954 = vpack.c.b16 %v1858, %v1856
    %v1955 = vpack.c.b16 %v1859, %v1857
    %v1956 = vpack.c.b16 %v1862, %v1860
    %v1957 = vpack.c.b16 %v1863, %v1861
    %v1958 = vpack.c.b16 %v1866, %v1864
    %v1959 = vpack.c.b16 %v1867, %v1865
    %v1960 = vpack.c.b16 %v1870, %v1868
    %v1961 = vpack.c.b16 %v1871, %v1869
    %v1962 = vpack.c.b16 %v1874, %v1872
    %v1963 = vpack.c.b16 %v1875, %v1873
    %v1964 = vpack.c.b16 %v1878, %v1876
    %v1965 = vpack.c.b16 %v1879, %v1877
    %v1966 = vpack.c.b16 %v1882, %v1880
    %v1967 = vpack.c.b16 %v1883, %v1881
    %v1968 = vpack.c.b16 %v1886, %v1884
    %v1969 = vpack.c.b16 %v1887, %v1885
    %v1970 = vpack.c.b16 %v1890, %v1888
    %v1971 = vpack.c.b16 %v1891, %v1889
    %v1972 = vpack.c.b16 %v1894, %v1892
    %v1973 = vpack.c.b16 %v1895, %v1893
    %v1974 = vpack.c.b16 %v1898, %v1896
    %v1975 = vpack.c.b16 %v1899, %v1897
    %v1976 = vpack.c.b16 %v1902, %v1900
    %v1977 = vpack.c.b16 %v1903, %v1901
    %v1978 = vpack.c.b16 %v1906, %v1904
    %v1979 = vpack.c.b16 %v1907, %v1905
    %v2053 = vsel %vm1397, %v1597, 0
    %v2056 = vsel %vm1397, %v1602, 0
    %v2059 = vsel %vm1397, %v1607, 0
    %2061 = vmatprep.subr.bf16.mxu0 %v1923
    %2062 = vmatpush1.bf16.msra.mxu0 %v1922
    %2063 = vmatprep.subr.bf16.mxu0 %v1921
    %2064 = vmatpush1.bf16.msra.mxu0 %v1920
    %2065 = vmatprep.subr.bf16.mxu0 %v1919
    %2066 = vmatpush1.bf16.msra.mxu0 %v1918
    %2067 = vmatprep.subr.bf16.mxu0 %v1917
    %2068 = vmatpush1.bf16.msra.mxu0 %v1916
    %2069 = vmatprep.subr.bf16.mxu0 %v1915
    %2070 = vmatpush1.bf16.msra.mxu0 %v1914
    %2071 = vmatprep.subr.bf16.mxu0 %v1913
    %2072 = vmatpush1.bf16.msra.mxu0 %v1912
    %2073 = vmatprep.subr.bf16.mxu0 %v1911
    %2074 = vmatpush1.bf16.msra.mxu0 %v1910
    %2075 = vmatprep.subr.bf16.mxu0 %v1909
    %2076 = vmatpush1.bf16.msra.mxu0 %v1908
    %2077 = vmatprep.subr.bf16.mxu0 %v1939
    %2078 = vmatpush2.bf16.msra.mxu0 %v1938
    %2079 = vmatprep.subr.bf16.mxu0 %v1937
    %2080 = vmatpush2.bf16.msra.mxu0 %v1936
    %2081 = vmatprep.subr.bf16.mxu0 %v1935
    %2082 = vmatpush2.bf16.msra.mxu0 %v1934
    %2083 = vmatprep.subr.bf16.mxu0 %v1933
    %2084 = vmatpush2.bf16.msra.mxu0 %v1932
    %2085 = vmatprep.subr.bf16.mxu0 %v1931
    %2086 = vmatpush2.bf16.msra.mxu0 %v1930
    %2087 = vmatprep.subr.bf16.mxu0 %v1929
    %2088 = vmatpush2.bf16.msra.mxu0 %v1928
    %2089 = vmatprep.subr.bf16.mxu0 %v1927
    %2090 = vmatpush2.bf16.msra.mxu0 %v1926
    %2091 = vmatprep.subr.bf16.mxu0 %v1925
    %2092 = vmatpush2.bf16.msra.mxu0 %v1924
    %2093 = vmatprep.mubr.bf16.mxu0 %v1594
    %2094 = vmatmul.mubr.bf16.gmra.mxu0 %v1593
    %v2095 = vpop.f32.mrf.mxu0
    %v2096 = vadd.f32 %v1685, %v2095
    %v2097 = vpop.f32.mrf.mxu0
    %v2098 = vadd.f32 %v1689, %v2097
    %v2099 = vpop.f32.mrf.mxu0
    %v2100 = vadd.f32 %v1685, %v2099
    %v2101 = vpop.f32.mrf.mxu0
    %v2102 = vadd.f32 %v1689, %v2101
    %2103 = vmatprep.mubr.bf16.mxu0 %v1599
    %2104 = vmatmul.mubr.bf16.gmra.mxu0 %v1598
    %v2105 = vpop.f32.mrf.mxu0
    %v2106 = vadd.f32 %v1685, %v2105
    %v2107 = vpop.f32.mrf.mxu0
    %v2108 = vadd.f32 %v1689, %v2107
    %v2109 = vpop.f32.mrf.mxu0
    %v2110 = vadd.f32 %v1685, %v2109
    %v2111 = vpop.f32.mrf.mxu0
    %v2112 = vadd.f32 %v1689, %v2111
    %2113 = vmatprep.mubr.bf16.mxu0 %v1604
    %2114 = vmatmul.mubr.bf16.gmra.mxu0 %v1603
    %v2115 = vpop.f32.mrf.mxu0
    %v2116 = vadd.f32 %v1685, %v2115
    %v2117 = vpop.f32.mrf.mxu0
    %v2118 = vadd.f32 %v1689, %v2117
    %v2119 = vpop.f32.mrf.mxu0
    %v2120 = vadd.f32 %v1685, %v2119
    %v2121 = vpop.f32.mrf.mxu0
    %v2122 = vadd.f32 %v1689, %v2121
    %2123 = vdwg.mxu0
    %2124 = vmatprep.subr.bf16.mxu0 %v1955
    %2125 = vmatpush1.bf16.msra.mxu0 %v1954
    %2126 = vmatprep.subr.bf16.mxu0 %v1953
    %2127 = vmatpush1.bf16.msra.mxu0 %v1952
    %2128 = vmatprep.subr.bf16.mxu0 %v1951
    %2129 = vmatpush1.bf16.msra.mxu0 %v1950
    %2130 = vmatprep.subr.bf16.mxu0 %v1949
    %2131 = vmatpush1.bf16.msra.mxu0 %v1948
    %2132 = vmatprep.subr.bf16.mxu0 %v1947
    %2133 = vmatpush1.bf16.msra.mxu0 %v1946
    %2134 = vmatprep.subr.bf16.mxu0 %v1945
    %2135 = vmatpush1.bf16.msra.mxu0 %v1944
    %2136 = vmatprep.subr.bf16.mxu0 %v1943
    %2137 = vmatpush1.bf16.msra.mxu0 %v1942
    %2138 = vmatprep.subr.bf16.mxu0 %v1941
    %2139 = vmatpush1.bf16.msra.mxu0 %v1940
    %2140 = vmatprep.subr.bf16.mxu0 %v1971
    %2141 = vmatpush2.bf16.msra.mxu0 %v1970
    %2142 = vmatprep.subr.bf16.mxu0 %v1969
    %2143 = vmatpush2.bf16.msra.mxu0 %v1968
    %2144 = vmatprep.subr.bf16.mxu0 %v1967
    %2145 = vmatpush2.bf16.msra.mxu0 %v1966
    %2146 = vmatprep.subr.bf16.mxu0 %v1965
    %2147 = vmatpush2.bf16.msra.mxu0 %v1964
    %2148 = vmatprep.subr.bf16.mxu0 %v1963
    %2149 = vmatpush2.bf16.msra.mxu0 %v1962
    %2150 = vmatprep.subr.bf16.mxu0 %v1961
    %2151 = vmatpush2.bf16.msra.mxu0 %v1960
    %2152 = vmatprep.subr.bf16.mxu0 %v1959
    %2153 = vmatpush2.bf16.msra.mxu0 %v1958
    %2154 = vmatprep.subr.bf16.mxu0 %v1957
    %2155 = vmatpush2.bf16.msra.mxu0 %v1956
    %2156 = vmatprep.mubr.bf16.mxu0 %v1596
    %2157 = vmatmul.mubr.bf16.gmra.mxu0 %v1595
    %v2158 = vpop.f32.mrf.mxu0
    %v2159 = vadd.f32 %v2096, %v2158
    %v2160 = vpop.f32.mrf.mxu0
    %v2161 = vadd.f32 %v2098, %v2160
    %v2162 = vpop.f32.mrf.mxu0
    %v2163 = vadd.f32 %v2100, %v2162
    %v2164 = vpop.f32.mrf.mxu0
    %v2165 = vadd.f32 %v2102, %v2164
    %2166 = vmatprep.mubr.bf16.mxu0 %v1601
    %2167 = vmatmul.mubr.bf16.gmra.mxu0 %v1600
    %v2168 = vpop.f32.mrf.mxu0
    %v2169 = vadd.f32 %v2106, %v2168
    %v2170 = vpop.f32.mrf.mxu0
    %v2171 = vadd.f32 %v2108, %v2170
    %v2172 = vpop.f32.mrf.mxu0
    %v2173 = vadd.f32 %v2110, %v2172
    %v2174 = vpop.f32.mrf.mxu0
    %v2175 = vadd.f32 %v2112, %v2174
    %2176 = vmatprep.mubr.bf16.mxu0 %v1606
    %2177 = vmatmul.mubr.bf16.gmra.mxu0 %v1605
    %v2178 = vpop.f32.mrf.mxu0
    %v2179 = vadd.f32 %v2116, %v2178
    %v2180 = vpop.f32.mrf.mxu0
    %v2181 = vadd.f32 %v2118, %v2180
    %v2182 = vpop.f32.mrf.mxu0
    %v2183 = vadd.f32 %v2120, %v2182
    %v2184 = vpop.f32.mrf.mxu0
    %v2185 = vadd.f32 %v2122, %v2184
    %2186 = vdwg.mxu0
    %2187 = vmatprep.subr.bf16.mxu0 0
    %2188 = vmatpush1.bf16.msra.mxu0 0
    %2189 = vmatprep.subr.bf16.mxu0 0
    %2190 = vmatpush1.bf16.msra.mxu0 0
    %2191 = vmatprep.subr.bf16.mxu0 0
    %2192 = vmatpush1.bf16.msra.mxu0 0
    %2193 = vmatprep.subr.bf16.mxu0 0
    %2194 = vmatpush1.bf16.msra.mxu0 0
    %2195 = vmatprep.subr.bf16.mxu0 %v1979
    %2196 = vmatpush1.bf16.msra.mxu0 %v1978
    %2197 = vmatprep.subr.bf16.mxu0 %v1977
    %2198 = vmatpush1.bf16.msra.mxu0 %v1976
    %2199 = vmatprep.subr.bf16.mxu0 %v1975
    %2200 = vmatpush1.bf16.msra.mxu0 %v1974
    %2201 = vmatprep.subr.bf16.mxu0 %v1973
    %2202 = vmatpush1.bf16.msra.mxu0 %v1972
    %2203 = vmatprep.subr.bf16.mxu0 0
    %2204 = vmatpush2.bf16.msra.mxu0 0
    %2205 = vmatprep.subr.bf16.mxu0 0
    %2206 = vmatpush2.bf16.msra.mxu0 0
    %2207 = vmatprep.subr.bf16.mxu0 0
    %2208 = vmatpush2.bf16.msra.mxu0 0
    %2209 = vmatprep.subr.bf16.mxu0 0
    %2210 = vmatpush2.bf16.msra.mxu0 0
    %2211 = vmatprep.subr.bf16.mxu0 0
    %2212 = vmatpush2.bf16.msra.mxu0 0
    %2213 = vmatprep.subr.bf16.mxu0 0
    %2214 = vmatpush2.bf16.msra.mxu0 0
    %2215 = vmatprep.subr.bf16.mxu0 0
    %2216 = vmatpush2.bf16.msra.mxu0 0
    %2217 = vmatprep.subr.bf16.mxu0 0
    %2218 = vmatpush2.bf16.msra.mxu0 0
    %2219 = vmatprep.mubr.bf16.mxu0 0
    %2220 = vmatmul.mubr.bf16.gmra.mxu0 %v2053
    %v2221 = vpop.f32.mrf.mxu0
    %v2222 = vadd.f32 %v2159, %v2221
    %v2223 = vpop.f32.mrf.mxu0
    %v2224 = vadd.f32 %v2161, %v2223
    %v2225 = vpop.f32.mrf.mxu0
    %v2226 = vadd.f32 %v2163, %v2225
    %v2227 = vpop.f32.mrf.mxu0
    %v2228 = vadd.f32 %v2165, %v2227
    %2229 = vmatprep.mubr.bf16.mxu0 0
    %2230 = vmatmul.mubr.bf16.gmra.mxu0 %v2056
    %v2231 = vpop.f32.mrf.mxu0
    %v2232 = vadd.f32 %v2169, %v2231
    %v2233 = vpop.f32.mrf.mxu0
    %v2234 = vadd.f32 %v2171, %v2233
    %v2235 = vpop.f32.mrf.mxu0
    %v2236 = vadd.f32 %v2173, %v2235
    %v2237 = vpop.f32.mrf.mxu0
    %v2238 = vadd.f32 %v2175, %v2237
    %2239 = vmatprep.mubr.bf16.mxu0 0
    %2240 = vmatmul.mubr.bf16.gmra.mxu0 %v2059
    %v2241 = vpop.f32.mrf.mxu0
    %v2242 = vadd.f32 %v2179, %v2241
    %v2243 = vpop.f32.mrf.mxu0
    %v2244 = vadd.f32 %v2181, %v2243
    %v2245 = vpop.f32.mrf.mxu0
    %v2246 = vadd.f32 %v2183, %v2245
    %v2247 = vpop.f32.mrf.mxu0
    %v2248 = vadd.f32 %v2185, %v2247
    %2249 = vdwg.mxu0
    %v2250 = vmax.f32 %v2222, 0.0
    %v2251 = vmax.f32 %v2224, 0.0
    %v2252 = vmax.f32 %v2226, 0.0
    %v2253 = vmax.f32 %v2228, 0.0
    %v2254 = vmax.f32 %v2232, 0.0
    %v2255 = vmax.f32 %v2234, 0.0
    %v2256 = vmax.f32 %v2236, 0.0
    %v2257 = vmax.f32 %v2238, 0.0
    %v2258 = vmax.f32 %v2242, 0.0
    %v2259 = vmax.f32 %v2244, 0.0
    %v2260 = vmax.f32 %v2246, 0.0
    %v2261 = vmax.f32 %v2248, 0.0
    %2274 = vrot.lane.b32.xlu0 %v2250, 64
    %v2275 = vpop.permute.xlu0 %2274
    %2276 = vrot.lane.b32.xlu0 %v2251, 64
    %v2277 = vpop.permute.xlu0 %2276
    %2278 = vrot.lane.b32.xlu0 %v2252, 64
    %v2279 = vpop.permute.xlu0 %2278
    %2280 = vrot.lane.b32.xlu0 %v2253, 64
    %v2281 = vpop.permute.xlu0 %2280
    %2282 = vrot.lane.b32.xlu0 %v2254, 64
    %v2283 = vpop.permute.xlu0 %2282
    %2284 = vrot.lane.b32.xlu0 %v2255, 64
    %v2285 = vpop.permute.xlu0 %2284
    %2286 = vrot.lane.b32.xlu0 %v2256, 64
    %v2287 = vpop.permute.xlu0 %2286
    %2288 = vrot.lane.b32.xlu0 %v2257, 64
    %v2289 = vpop.permute.xlu0 %2288
    %2290 = vrot.lane.b32.xlu0 %v2258, 64
    %v2291 = vpop.permute.xlu0 %2290
    %2292 = vrot.lane.b32.xlu0 %v2259, 64
    %v2293 = vpop.permute.xlu0 %2292
    %2294 = vrot.lane.b32.xlu0 %v2260, 64
    %v2295 = vpop.permute.xlu0 %2294
    %2296 = vrot.lane.b32.xlu0 %v2261, 64
    %v2297 = vpop.permute.xlu0 %2296
    %v2298 = vsel %vm1397, %v2275, %v2277
    %v2299 = vsel %vm1397, %v2279, %v2281
    %v2300 = vsel %vm1397, %v2283, %v2285
    %v2301 = vsel %vm1397, %v2287, %v2289
    %v2302 = vsel %vm1397, %v2291, %v2293
    %v2303 = vsel %vm1397, %v2295, %v2297
    %2316 = vst.msk [vmem:[#allocation2 + $0x8] sm:$0xff] %vm1416, %v2275
    %2317 = vst [vmem:[#allocation2 + $0x10] sm:$0xff] %v2298
    %2318 = vst.msk [vmem:[#allocation2 + $0x50] sm:$0xff] %vm1416, %v2279
    %2319 = vst [vmem:[#allocation2 + $0x58] sm:$0xff] %v2299
    %2320 = vst.msk [vmem:[#allocation2 + $0x98] sm:$0xff] %vm1416, %v2283
    %2321 = vst [vmem:[#allocation2 + $0xa0] sm:$0xff] %v2300
    %2322 = vst.msk [vmem:[#allocation2 + $0xe0] sm:$0xff] %vm1416, %v2287
    %2323 = vst [vmem:[#allocation2 + $0xe8] sm:$0xff] %v2301
    %2324 = vst.msk [vmem:[#allocation2 + $0x128] sm:$0xff] %vm1416, %v2291
    %2325 = vst [vmem:[#allocation2 + $0x130] sm:$0xff] %v2302
    %2326 = vst.msk [vmem:[#allocation2 + $0x170] sm:$0xff] %vm1416, %v2295
    %2327 = vst [vmem:[#allocation2 + $0x178] sm:$0xff] %v2303
    %v2328 = vld [vmem:[#allocation2 + $0x8] sm:$0xff]
    %v2329 = vld [vmem:[#allocation2 + $0x10] sm:$0xff]
    %v2330 = vld [vmem:[#allocation2 + $0x50] sm:$0xff]
    %v2331 = vld [vmem:[#allocation2 + $0x58] sm:$0xff]
    %v2332 = vld [vmem:[#allocation2 + $0x98] sm:$0xff]
    %v2333 = vld [vmem:[#allocation2 + $0xa0] sm:$0xff]
    %v2334 = vld [vmem:[#allocation2 + $0xe0] sm:$0xff]
    %v2335 = vld [vmem:[#allocation2 + $0xe8] sm:$0xff]
    %v2336 = vld [vmem:[#allocation2 + $0x128] sm:$0xff]
    %v2337 = vld [vmem:[#allocation2 + $0x130] sm:$0xff]
    %2348 = vrot.lane.b32.xlu0 %v2328, 64
    %v2349 = vpop.permute.xlu0 %2348
    %2350 = vrot.lane.b32.xlu0 %v2329, 64
    %v2351 = vpop.permute.xlu0 %2350
    %2352 = vrot.lane.b32.xlu0 %v2330, 64
    %v2353 = vpop.permute.xlu0 %2352
    %2354 = vrot.lane.b32.xlu0 %v2331, 64
    %v2355 = vpop.permute.xlu0 %2354
    %2356 = vrot.lane.b32.xlu0 %v2332, 64
    %v2357 = vpop.permute.xlu0 %2356
    %2358 = vrot.lane.b32.xlu0 %v2333, 64
    %v2359 = vpop.permute.xlu0 %2358
    %2360 = vrot.lane.b32.xlu0 %v2334, 64
    %v2361 = vpop.permute.xlu0 %2360
    %2362 = vrot.lane.b32.xlu0 %v2335, 64
    %v2363 = vpop.permute.xlu0 %2362
    %2364 = vrot.lane.b32.xlu0 %v2336, 64
    %v2365 = vpop.permute.xlu0 %2364
    %2366 = vrot.lane.b32.xlu0 %v2337, 64
    %v2367 = vpop.permute.xlu0 %2366
    %v2368 = vsel %vm1397, %v2349, %v2351
    %v2369 = vsel %vm1397, %v2353, %v2355
    %v2370 = vsel %vm1397, %v2357, %v2359
    %v2371 = vsel %vm1397, %v2361, %v2363
    %v2372 = vsel %vm1397, %v2365, %v2367
    %2383 = vst [vmem:[#allocation2 + $0x48] sm:$0xff] %v2368
    %2384 = vst.msk [vmem:[#allocation2 + $0x50] sm:$0xff] %vm1397, %v2351
    %2385 = vst [vmem:[#allocation2 + $0x90] sm:$0xff] %v2369
    %2386 = vst.msk [vmem:[#allocation2 + $0x98] sm:$0xff] %vm1397, %v2355
    %2387 = vst [vmem:[#allocation2 + $0xd8] sm:$0xff] %v2370
    %2388 = vst.msk [vmem:[#allocation2 + $0xe0] sm:$0xff] %vm1397, %v2359
    %2389 = vst [vmem:[#allocation2 + $0x120] sm:$0xff] %v2371
    %2390 = vst.msk [vmem:[#allocation2 + $0x128] sm:$0xff] %vm1397, %v2363
    %2391 = vst [vmem:[#allocation2 + $0x168] sm:$0xff] %v2372
    %2392 = vst.msk [vmem:[#allocation2 + $0x170] sm:$0xff] %vm1397, %v2367
    %v2393 = vld [vmem:[#allocation2 + $0x50] sm:$0xff]
    %v2394 = vld [vmem:[#allocation2 + $0x58] sm:$0xff]
    %v2395 = vld [vmem:[#allocation2 + $0x98] sm:$0xff]
    %v2396 = vld [vmem:[#allocation2 + $0xa0] sm:$0xff]
    %v2397 = vld [vmem:[#allocation2 + $0xe0] sm:$0xff]
    %v2398 = vld [vmem:[#allocation2 + $0xe8] sm:$0xff]
    %v2399 = vld [vmem:[#allocation2 + $0x128] sm:$0xff]
    %v2400 = vld [vmem:[#allocation2 + $0x130] sm:$0xff]
    %v2401 = vld [vmem:[#allocation2 + $0x170] sm:$0xff]
    %v2402 = vld [vmem:[#allocation2 + $0x178] sm:$0xff]
    %2413 = vrot.lane.b32.xlu0 %v2393, 64
    %v2414 = vpop.permute.xlu0 %2413
    %2415 = vrot.lane.b32.xlu0 %v2394, 64
    %v2416 = vpop.permute.xlu0 %2415
    %2417 = vrot.lane.b32.xlu0 %v2395, 64
    %v2418 = vpop.permute.xlu0 %2417
    %2419 = vrot.lane.b32.xlu0 %v2396, 64
    %v2420 = vpop.permute.xlu0 %2419
    %2421 = vrot.lane.b32.xlu0 %v2397, 64
    %v2422 = vpop.permute.xlu0 %2421
    %2423 = vrot.lane.b32.xlu0 %v2398, 64
    %v2424 = vpop.permute.xlu0 %2423
    %2425 = vrot.lane.b32.xlu0 %v2399, 64
    %v2426 = vpop.permute.xlu0 %2425
    %2427 = vrot.lane.b32.xlu0 %v2400, 64
    %v2428 = vpop.permute.xlu0 %2427
    %2429 = vrot.lane.b32.xlu0 %v2401, 64
    %v2430 = vpop.permute.xlu0 %2429
    %2431 = vrot.lane.b32.xlu0 %v2402, 64
    %v2432 = vpop.permute.xlu0 %2431
    %v2433 = vsel %vm1397, %v2414, %v2416
    %v2434 = vsel %vm1397, %v2418, %v2420
    %v2435 = vsel %vm1397, %v2422, %v2424
    %v2436 = vsel %vm1397, %v2426, %v2428
    %v2437 = vsel %vm1397, %v2430, %v2432
    %2448 = vst [vmem:[#allocation2 + $0x18] sm:$0xff] %v2433
    %2449 = vst.msk [vmem:[#allocation2 + $0x20] sm:$0xff] %vm1397, %v2416
    %2450 = vst [vmem:[#allocation2 + $0x60] sm:$0xff] %v2434
    %2451 = vst.msk [vmem:[#allocation2 + $0x68] sm:$0xff] %vm1397, %v2420
    %2452 = vst [vmem:[#allocation2 + $0xa8] sm:$0xff] %v2435
    %2453 = vst.msk [vmem:[#allocation2 + $0xb0] sm:$0xff] %vm1397, %v2424
    %2454 = vst [vmem:[#allocation2 + $0xf0] sm:$0xff] %v2436
    %2455 = vst.msk [vmem:[#allocation2 + $0xf8] sm:$0xff] %vm1397, %v2428
    %2456 = vst [vmem:[#allocation2 + $0x138] sm:$0xff] %v2437
    %2457 = vst.msk [vmem:[#allocation2 + $0x140] sm:$0xff] %vm1397, %v2432
    %2458 = vst [vmem:[#allocation2] sm:$0xff] 0.0
    %2459 = vst.msk [vmem:[#allocation2 + $0x8] sm:$0xff] %vm1397, 0.0
    %2460 = vst [vmem:[#allocation2 + $0x180] sm:$0xff] 0.0
    %2461 = vst.msk [vmem:[#allocation2 + $0x188] sm:$0xff] %vm1397, 0.0
    %v2462 = vld [vmem:[#allocation2] sm:$0xff]
    %v2463 = vld [vmem:[#allocation2 + $0x8] sm:$0xff]
    %v2464 = vld [vmem:[#allocation2 + $0x10] sm:$0xff]
    %v2465 = vld [vmem:[#allocation2 + $0x18] sm:$0xff]
    %v2466 = vld [vmem:[#allocation2 + $0x20] sm:$0xff]
    %v2467 = vld [vmem:[#allocation2 + $0x48] sm:$0xff]
    %v2468 = vld [vmem:[#allocation2 + $0x50] sm:$0xff]
    %v2469 = vld [vmem:[#allocation2 + $0x58] sm:$0xff]
    %v2470 = vld [vmem:[#allocation2 + $0x60] sm:$0xff]
    %v2471 = vld [vmem:[#allocation2 + $0x68] sm:$0xff]
    %v2472 = vld [vmem:[#allocation2 + $0x90] sm:$0xff]
    %v2473 = vld [vmem:[#allocation2 + $0x98] sm:$0xff]
    %v2474 = vld [vmem:[#allocation2 + $0xa0] sm:$0xff]
    %v2475 = vld [vmem:[#allocation2 + $0xa8] sm:$0xff]
    %v2476 = vld [vmem:[#allocation2 + $0xb0] sm:$0xff]
    %v2477 = vld [vmem:[#allocation2 + $0xd8] sm:$0xff]
    %v2478 = vld [vmem:[#allocation2 + $0xe0] sm:$0xff]
    %v2479 = vld [vmem:[#allocation2 + $0xe8] sm:$0xff]
    %v2480 = vld [vmem:[#allocation2 + $0xf0] sm:$0xff]
    %v2481 = vld [vmem:[#allocation2 + $0xf8] sm:$0xff]
    %v2482 = vld [vmem:[#allocation2 + $0x120] sm:$0xff]
    %v2483 = vld [vmem:[#allocation2 + $0x128] sm:$0xff]
    %v2484 = vld [vmem:[#allocation2 + $0x130] sm:$0xff]
    %v2485 = vld [vmem:[#allocation2 + $0x138] sm:$0xff]
    %v2486 = vld [vmem:[#allocation2 + $0x140] sm:$0xff]
    %v2487 = vld [vmem:[#allocation2 + $0x168] sm:$0xff]
    %v2488 = vld [vmem:[#allocation2 + $0x170] sm:$0xff]
    %v2489 = vld [vmem:[#allocation2 + $0x178] sm:$0xff]
    %v2490 = vld [vmem:[#allocation2 + $0x180] sm:$0xff]
    %v2491 = vld [vmem:[#allocation2 + $0x188] sm:$0xff]
    %v2492 = vpack.c.bf16 %v2467, %v2462
    %v2493 = vpack.c.bf16 %v2468, %v2463
    %v2494 = vpack.c.bf16 %v2469, %v2464
    %v2495 = vpack.c.bf16 %v2470, %v2465
    %v2496 = vpack.c.bf16 %v2471, %v2466
    %v2497 = vpack.c.bf16 %v2477, %v2472
    %v2498 = vpack.c.bf16 %v2478, %v2473
    %v2499 = vpack.c.bf16 %v2479, %v2474
    %v2500 = vpack.c.bf16 %v2480, %v2475
    %v2501 = vpack.c.bf16 %v2481, %v2476
    %v2502 = vpack.c.bf16 %v2487, %v2482
    %v2503 = vpack.c.bf16 %v2488, %v2483
    %v2504 = vpack.c.bf16 %v2489, %v2484
    %v2505 = vpack.c.bf16 %v2490, %v2485
    %v2506 = vpack.c.bf16 %v2491, %v2486
    %v2507 = vld [vmem:[%s5] sm:$0xff]
    %v2508 = vld [vmem:[%s5 + $0x8] sm:$0xff]
    %v2509 = vld [vmem:[%s5 + $0x10] sm:$0xff]
    %v2510 = vld [vmem:[%s5 + $0x18] sm:$0xff]
    %v2511 = vld [vmem:[%s5 + $0x20] sm:$0xff]
    %v2512 = vld [vmem:[%s5 + $0x28] sm:$0xff]
    %v2513 = vld [vmem:[%s5 + $0x30] sm:$0xff]
    %v2514 = vld [vmem:[%s5 + $0x38] sm:$0xff]
    %v2515 = vld [vmem:[%s5 + $0x40] sm:$0xff]
    %v2516 = vld [vmem:[%s5 + $0x48] sm:$0xff]
    %v2517 = vld [vmem:[%s5 + $0x50] sm:$0xff]
    %v2518 = vld [vmem:[%s5 + $0x58] sm:$0xff]
    %v2519 = vld [vmem:[%s5 + $0x60] sm:$0xff]
    %v2520 = vld [vmem:[%s5 + $0x68] sm:$0xff]
    %v2521 = vld [vmem:[%s5 + $0x70] sm:$0xff]
    %v2522 = vld [vmem:[%s5 + $0x78] sm:$0xff]
    %v2523 = vld [vmem:[%s5 + $0x80] sm:$0xff]
    %v2524 = vld [vmem:[%s5 + $0x88] sm:$0xff]
    %v2525 = vld [vmem:[%s5 + $0x90] sm:$0xff]
    %v2526 = vld [vmem:[%s5 + $0x98] sm:$0xff]
    %v2527 = vld [vmem:[%s5 + $0xa0] sm:$0xff]
    %v2528 = vld [vmem:[%s5 + $0xa8] sm:$0xff]
    %v2529 = vld [vmem:[%s5 + $0xb0] sm:$0xff]
    %v2530 = vld [vmem:[%s5 + $0xb8] sm:$0xff]
    %v2531 = vld [vmem:[%s5 + $0xc0] sm:$0xff]
    %v2532 = vld [vmem:[%s5 + $0xc8] sm:$0xff]
    %v2533 = vld [vmem:[%s5 + $0xd0] sm:$0xff]
    %v2534 = vld [vmem:[%s5 + $0xd8] sm:$0xff]
    %v2535 = vld [vmem:[%s5 + $0xe0] sm:$0xff]
    %v2536 = vld [vmem:[%s5 + $0xe8] sm:$0xff]
    %v2537 = vld [vmem:[%s5 + $0xf0] sm:$0xff]
    %v2538 = vld [vmem:[%s5 + $0xf8] sm:$0xff]
    %v2539 = vld [vmem:[%s5 + $0x100] sm:$0xff]
    %v2540 = vld [vmem:[%s5 + $0x108] sm:$0xff]
    %v2541 = vld [vmem:[%s5 + $0x110] sm:$0xff]
    %v2542 = vld [vmem:[%s5 + $0x118] sm:$0xff]
    %v2543 = vld [vmem:[%s5 + $0x120] sm:$0xff]
    %v2544 = vld [vmem:[%s5 + $0x128] sm:$0xff]
    %v2545 = vld [vmem:[%s5 + $0x130] sm:$0xff]
    %v2546 = vld [vmem:[%s5 + $0x138] sm:$0xff]
    %v2547 = vld [vmem:[%s5 + $0x140] sm:$0xff]
    %v2548 = vld [vmem:[%s5 + $0x148] sm:$0xff]
    %v2549 = vld [vmem:[%s5 + $0x150] sm:$0xff]
    %v2550 = vld [vmem:[%s5 + $0x158] sm:$0xff]
    %v2551 = vld [vmem:[%s5 + $0x160] sm:$0xff]
    %v2552 = vld [vmem:[%s5 + $0x168] sm:$0xff]
    %v2553 = vld [vmem:[%s5 + $0x170] sm:$0xff]
    %v2554 = vld [vmem:[%s5 + $0x178] sm:$0xff]
    %v2555 = vld [vmem:[%s5 + $0x180] sm:$0xff]
    %v2556 = vld [vmem:[%s5 + $0x188] sm:$0xff]
    %v2557 = vld [vmem:[%s5 + $0x190] sm:$0xff]
    %v2558 = vld [vmem:[%s5 + $0x198] sm:$0xff]
    %v2559 = vld [vmem:[%s5 + $0x1a0] sm:$0xff]
    %v2560 = vld [vmem:[%s5 + $0x1a8] sm:$0xff]
    %v2561 = vld [vmem:[%s5 + $0x1b0] sm:$0xff]
    %v2562 = vld [vmem:[%s5 + $0x1b8] sm:$0xff]
    %v2563 = vld [vmem:[%s5 + $0x1c0] sm:$0xff]
    %v2564 = vld [vmem:[%s5 + $0x1c8] sm:$0xff]
    %v2565 = vld [vmem:[%s5 + $0x1d0] sm:$0xff]
    %v2566 = vld [vmem:[%s5 + $0x1d8] sm:$0xff]
    %v2567 = vld [vmem:[%s5 + $0x1e0] sm:$0xff]
    %v2568 = vld [vmem:[%s5 + $0x1e8] sm:$0xff]
    %v2569 = vld [vmem:[%s5 + $0x1f0] sm:$0xff]
    %v2570 = vld [vmem:[%s5 + $0x1f8] sm:$0xff]
    %v2571 = vld [vmem:[%s5 + $0x200] sm:$0xff]
    %v2572 = vld [vmem:[%s5 + $0x208] sm:$0xff]
    %v2573 = vld [vmem:[%s5 + $0x210] sm:$0xff]
    %v2574 = vld [vmem:[%s5 + $0x218] sm:$0xff]
    %v2575 = vld [vmem:[%s5 + $0x220] sm:$0xff]
    %v2576 = vld [vmem:[%s5 + $0x228] sm:$0xff]
    %v2577 = vld [vmem:[%s5 + $0x230] sm:$0xff]
    %v2578 = vld [vmem:[%s5 + $0x238] sm:$0xff]
    %v2579 = vld [vmem:[#allocation13] sm:$0x3]
    %v2581 = vlaneseq
    %v2582 = vshrl.u32 %v2581, 7
    %v2583 = vsub.s32 0, %v2582
    %v2584 = vrot.slane %v2579, %v2583
    %v2585 = vlaneseq
    %v2586 = vshrl.u32 %v2585, 7
    %v2587 = vsub.s32 1, %v2586
    %v2588 = vrot.slane %v2579, %v2587
    %v2663 = vunpack.c.l.b16 %v2507
    %v2664 = vunpack.c.h.b16 %v2507
    %v2665 = vunpack.c.l.b16 %v2508
    %v2666 = vunpack.c.h.b16 %v2508
    %v2667 = vunpack.c.l.b16 %v2509
    %v2668 = vunpack.c.h.b16 %v2509
    %v2669 = vunpack.c.l.b16 %v2510
    %v2670 = vunpack.c.h.b16 %v2510
    %v2671 = vunpack.c.l.b16 %v2511
    %v2672 = vunpack.c.h.b16 %v2511
    %v2673 = vunpack.c.l.b16 %v2512
    %v2674 = vunpack.c.h.b16 %v2512
    %v2675 = vunpack.c.l.b16 %v2513
    %v2676 = vunpack.c.h.b16 %v2513
    %v2677 = vunpack.c.l.b16 %v2514
    %v2678 = vunpack.c.h.b16 %v2514
    %v2679 = vunpack.c.l.b16 %v2515
    %v2680 = vunpack.c.h.b16 %v2515
    %v2681 = vunpack.c.l.b16 %v2516
    %v2682 = vunpack.c.h.b16 %v2516
    %v2683 = vunpack.c.l.b16 %v2517
    %v2684 = vunpack.c.h.b16 %v2517
    %v2685 = vunpack.c.l.b16 %v2518
    %v2686 = vunpack.c.h.b16 %v2518
    %v2687 = vunpack.c.l.b16 %v2519
    %v2688 = vunpack.c.h.b16 %v2519
    %v2689 = vunpack.c.l.b16 %v2520
    %v2690 = vunpack.c.h.b16 %v2520
    %v2691 = vunpack.c.l.b16 %v2521
    %v2692 = vunpack.c.h.b16 %v2521
    %v2693 = vunpack.c.l.b16 %v2522
    %v2694 = vunpack.c.h.b16 %v2522
    %v2695 = vunpack.c.l.b16 %v2523
    %v2696 = vunpack.c.h.b16 %v2523
    %v2697 = vunpack.c.l.b16 %v2524
    %v2698 = vunpack.c.h.b16 %v2524
    %v2699 = vunpack.c.l.b16 %v2525
    %v2700 = vunpack.c.h.b16 %v2525
    %v2701 = vunpack.c.l.b16 %v2526
    %v2702 = vunpack.c.h.b16 %v2526
    %v2703 = vunpack.c.l.b16 %v2527
    %v2704 = vunpack.c.h.b16 %v2527
    %v2705 = vunpack.c.l.b16 %v2528
    %v2706 = vunpack.c.h.b16 %v2528
    %v2707 = vunpack.c.l.b16 %v2529
    %v2708 = vunpack.c.h.b16 %v2529
    %v2709 = vunpack.c.l.b16 %v2530
    %v2710 = vunpack.c.h.b16 %v2530
    %v2711 = vunpack.c.l.b16 %v2531
    %v2712 = vunpack.c.h.b16 %v2531
    %v2713 = vunpack.c.l.b16 %v2532
    %v2714 = vunpack.c.h.b16 %v2532
    %v2715 = vunpack.c.l.b16 %v2533
    %v2716 = vunpack.c.h.b16 %v2533
    %v2717 = vunpack.c.l.b16 %v2534
    %v2718 = vunpack.c.h.b16 %v2534
    %v2719 = vunpack.c.l.b16 %v2535
    %v2720 = vunpack.c.h.b16 %v2535
    %v2721 = vunpack.c.l.b16 %v2536
    %v2722 = vunpack.c.h.b16 %v2536
    %v2723 = vunpack.c.l.b16 %v2537
    %v2724 = vunpack.c.h.b16 %v2537
    %v2725 = vunpack.c.l.b16 %v2538
    %v2726 = vunpack.c.h.b16 %v2538
    %v2727 = vunpack.c.l.b16 %v2539
    %v2728 = vunpack.c.h.b16 %v2539
    %v2729 = vunpack.c.l.b16 %v2540
    %v2730 = vunpack.c.h.b16 %v2540
    %v2731 = vunpack.c.l.b16 %v2541
    %v2732 = vunpack.c.h.b16 %v2541
    %v2733 = vunpack.c.l.b16 %v2542
    %v2734 = vunpack.c.h.b16 %v2542
    %v2735 = vunpack.c.l.b16 %v2543
    %v2736 = vunpack.c.h.b16 %v2543
    %v2737 = vunpack.c.l.b16 %v2544
    %v2738 = vunpack.c.h.b16 %v2544
    %v2739 = vunpack.c.l.b16 %v2545
    %v2740 = vunpack.c.h.b16 %v2545
    %v2741 = vunpack.c.l.b16 %v2546
    %v2742 = vunpack.c.h.b16 %v2546
    %v2743 = vunpack.c.l.b16 %v2547
    %v2744 = vunpack.c.h.b16 %v2547
    %v2745 = vunpack.c.l.b16 %v2548
    %v2746 = vunpack.c.h.b16 %v2548
    %v2747 = vunpack.c.l.b16 %v2549
    %v2748 = vunpack.c.h.b16 %v2549
    %v2749 = vunpack.c.l.b16 %v2550
    %v2750 = vunpack.c.h.b16 %v2550
    %v2751 = vunpack.c.l.b16 %v2551
    %v2752 = vunpack.c.h.b16 %v2551
    %v2753 = vunpack.c.l.b16 %v2552
    %v2754 = vunpack.c.h.b16 %v2552
    %v2755 = vunpack.c.l.b16 %v2553
    %v2756 = vunpack.c.h.b16 %v2553
    %v2757 = vunpack.c.l.b16 %v2554
    %v2758 = vunpack.c.h.b16 %v2554
    %v2759 = vunpack.c.l.b16 %v2555
    %v2760 = vunpack.c.h.b16 %v2555
    %v2761 = vunpack.c.l.b16 %v2556
    %v2762 = vunpack.c.h.b16 %v2556
    %v2763 = vunpack.c.l.b16 %v2557
    %v2764 = vunpack.c.h.b16 %v2557
    %v2765 = vunpack.c.l.b16 %v2558
    %v2766 = vunpack.c.h.b16 %v2558
    %v2767 = vunpack.c.l.b16 %v2559
    %v2768 = vunpack.c.h.b16 %v2559
    %v2769 = vunpack.c.l.b16 %v2560
    %v2770 = vunpack.c.h.b16 %v2560
    %v2771 = vunpack.c.l.b16 %v2561
    %v2772 = vunpack.c.h.b16 %v2561
    %v2773 = vunpack.c.l.b16 %v2562
    %v2774 = vunpack.c.h.b16 %v2562
    %v2775 = vunpack.c.l.b16 %v2563
    %v2776 = vunpack.c.h.b16 %v2563
    %v2777 = vunpack.c.l.b16 %v2564
    %v2778 = vunpack.c.h.b16 %v2564
    %v2779 = vunpack.c.l.b16 %v2565
    %v2780 = vunpack.c.h.b16 %v2565
    %v2781 = vunpack.c.l.b16 %v2566
    %v2782 = vunpack.c.h.b16 %v2566
    %v2783 = vunpack.c.l.b16 %v2567
    %v2784 = vunpack.c.h.b16 %v2567
    %v2785 = vunpack.c.l.b16 %v2568
    %v2786 = vunpack.c.h.b16 %v2568
    %v2787 = vunpack.c.l.b16 %v2569
    %v2788 = vunpack.c.h.b16 %v2569
    %v2789 = vunpack.c.l.b16 %v2570
    %v2790 = vunpack.c.h.b16 %v2570
    %v2791 = vunpack.c.l.b16 %v2571
    %v2792 = vunpack.c.h.b16 %v2571
    %v2793 = vunpack.c.l.b16 %v2572
    %v2794 = vunpack.c.h.b16 %v2572
    %v2795 = vunpack.c.l.b16 %v2573
    %v2796 = vunpack.c.h.b16 %v2573
    %v2797 = vunpack.c.l.b16 %v2574
    %v2798 = vunpack.c.h.b16 %v2574
    %v2799 = vunpack.c.l.b16 %v2575
    %v2800 = vunpack.c.h.b16 %v2575
    %v2801 = vunpack.c.l.b16 %v2576
    %v2802 = vunpack.c.h.b16 %v2576
    %v2803 = vunpack.c.l.b16 %v2577
    %v2804 = vunpack.c.h.b16 %v2577
    %v2805 = vunpack.c.l.b16 %v2578
    %v2806 = vunpack.c.h.b16 %v2578
    %v2807 = vpack.c.b16 %v2665, %v2663
    %v2808 = vpack.c.b16 %v2666, %v2664
    %v2809 = vpack.c.b16 %v2669, %v2667
    %v2810 = vpack.c.b16 %v2670, %v2668
    %v2811 = vpack.c.b16 %v2673, %v2671
    %v2812 = vpack.c.b16 %v2674, %v2672
    %v2813 = vpack.c.b16 %v2677, %v2675
    %v2814 = vpack.c.b16 %v2678, %v2676
    %v2815 = vpack.c.b16 %v2681, %v2679
    %v2816 = vpack.c.b16 %v2682, %v2680
    %v2817 = vpack.c.b16 %v2685, %v2683
    %v2818 = vpack.c.b16 %v2686, %v2684
    %v2819 = vpack.c.b16 %v2689, %v2687
    %v2820 = vpack.c.b16 %v2690, %v2688
    %v2821 = vpack.c.b16 %v2693, %v2691
    %v2822 = vpack.c.b16 %v2694, %v2692
    %v2823 = vpack.c.b16 %v2697, %v2695
    %v2824 = vpack.c.b16 %v2698, %v2696
    %v2825 = vpack.c.b16 %v2701, %v2699
    %v2826 = vpack.c.b16 %v2702, %v2700
    %v2827 = vpack.c.b16 %v2705, %v2703
    %v2828 = vpack.c.b16 %v2706, %v2704
    %v2829 = vpack.c.b16 %v2709, %v2707
    %v2830 = vpack.c.b16 %v2710, %v2708
    %v2831 = vpack.c.b16 %v2713, %v2711
    %v2832 = vpack.c.b16 %v2714, %v2712
    %v2833 = vpack.c.b16 %v2717, %v2715
    %v2834 = vpack.c.b16 %v2718, %v2716
    %v2835 = vpack.c.b16 %v2721, %v2719
    %v2836 = vpack.c.b16 %v2722, %v2720
    %v2837 = vpack.c.b16 %v2725, %v2723
    %v2838 = vpack.c.b16 %v2726, %v2724
    %v2839 = vpack.c.b16 %v2729, %v2727
    %v2840 = vpack.c.b16 %v2730, %v2728
    %v2841 = vpack.c.b16 %v2733, %v2731
    %v2842 = vpack.c.b16 %v2734, %v2732
    %v2843 = vpack.c.b16 %v2737, %v2735
    %v2844 = vpack.c.b16 %v2738, %v2736
    %v2845 = vpack.c.b16 %v2741, %v2739
    %v2846 = vpack.c.b16 %v2742, %v2740
    %v2847 = vpack.c.b16 %v2745, %v2743
    %v2848 = vpack.c.b16 %v2746, %v2744
    %v2849 = vpack.c.b16 %v2749, %v2747
    %v2850 = vpack.c.b16 %v2750, %v2748
    %v2851 = vpack.c.b16 %v2753, %v2751
    %v2852 = vpack.c.b16 %v2754, %v2752
    %v2853 = vpack.c.b16 %v2757, %v2755
    %v2854 = vpack.c.b16 %v2758, %v2756
    %v2855 = vpack.c.b16 %v2761, %v2759
    %v2856 = vpack.c.b16 %v2762, %v2760
    %v2857 = vpack.c.b16 %v2765, %v2763
    %v2858 = vpack.c.b16 %v2766, %v2764
    %v2859 = vpack.c.b16 %v2769, %v2767
    %v2860 = vpack.c.b16 %v2770, %v2768
    %v2861 = vpack.c.b16 %v2773, %v2771
    %v2862 = vpack.c.b16 %v2774, %v2772
    %v2863 = vpack.c.b16 %v2777, %v2775
    %v2864 = vpack.c.b16 %v2778, %v2776
    %v2865 = vpack.c.b16 %v2781, %v2779
    %v2866 = vpack.c.b16 %v2782, %v2780
    %v2867 = vpack.c.b16 %v2785, %v2783
    %v2868 = vpack.c.b16 %v2786, %v2784
    %v2869 = vpack.c.b16 %v2789, %v2787
    %v2870 = vpack.c.b16 %v2790, %v2788
    %v2871 = vpack.c.b16 %v2793, %v2791
    %v2872 = vpack.c.b16 %v2794, %v2792
    %v2873 = vpack.c.b16 %v2797, %v2795
    %v2874 = vpack.c.b16 %v2798, %v2796
    %v2875 = vpack.c.b16 %v2801, %v2799
    %v2876 = vpack.c.b16 %v2802, %v2800
    %v2877 = vpack.c.b16 %v2805, %v2803
    %v2878 = vpack.c.b16 %v2806, %v2804
    %v2952 = vsel %vm1397, %v2496, 0
    %v2955 = vsel %vm1397, %v2501, 0
    %v2958 = vsel %vm1397, %v2506, 0
    %2960 = vmatprep.subr.bf16.mxu0 %v2822
    %2961 = vmatpush1.bf16.msra.mxu0 %v2821
    %2962 = vmatprep.subr.bf16.mxu0 %v2820
    %2963 = vmatpush1.bf16.msra.mxu0 %v2819
    %2964 = vmatprep.subr.bf16.mxu0 %v2818
    %2965 = vmatpush1.bf16.msra.mxu0 %v2817
    %2966 = vmatprep.subr.bf16.mxu0 %v2816
    %2967 = vmatpush1.bf16.msra.mxu0 %v2815
    %2968 = vmatprep.subr.bf16.mxu0 %v2814
    %2969 = vmatpush1.bf16.msra.mxu0 %v2813
    %2970 = vmatprep.subr.bf16.mxu0 %v2812
    %2971 = vmatpush1.bf16.msra.mxu0 %v2811
    %2972 = vmatprep.subr.bf16.mxu0 %v2810
    %2973 = vmatpush1.bf16.msra.mxu0 %v2809
    %2974 = vmatprep.subr.bf16.mxu0 %v2808
    %2975 = vmatpush1.bf16.msra.mxu0 %v2807
    %2976 = vmatprep.subr.bf16.mxu0 %v2838
    %2977 = vmatpush2.bf16.msra.mxu0 %v2837
    %2978 = vmatprep.subr.bf16.mxu0 %v2836
    %2979 = vmatpush2.bf16.msra.mxu0 %v2835
    %2980 = vmatprep.subr.bf16.mxu0 %v2834
    %2981 = vmatpush2.bf16.msra.mxu0 %v2833
    %2982 = vmatprep.subr.bf16.mxu0 %v2832
    %2983 = vmatpush2.bf16.msra.mxu0 %v2831
    %2984 = vmatprep.subr.bf16.mxu0 %v2830
    %2985 = vmatpush2.bf16.msra.mxu0 %v2829
    %2986 = vmatprep.subr.bf16.mxu0 %v2828
    %2987 = vmatpush2.bf16.msra.mxu0 %v2827
    %2988 = vmatprep.subr.bf16.mxu0 %v2826
    %2989 = vmatpush2.bf16.msra.mxu0 %v2825
    %2990 = vmatprep.subr.bf16.mxu0 %v2824
    %2991 = vmatpush2.bf16.msra.mxu0 %v2823
    %2992 = vmatprep.mubr.bf16.mxu0 %v2493
    %2993 = vmatmul.mubr.bf16.gmra.mxu0 %v2492
    %v2994 = vpop.f32.mrf.mxu0
    %v2995 = vadd.f32 %v2584, %v2994
    %v2996 = vpop.f32.mrf.mxu0
    %v2997 = vadd.f32 %v2588, %v2996
    %v2998 = vpop.f32.mrf.mxu0
    %v2999 = vadd.f32 %v2584, %v2998
    %v3000 = vpop.f32.mrf.mxu0
    %v3001 = vadd.f32 %v2588, %v3000
    %3002 = vmatprep.mubr.bf16.mxu0 %v2498
    %3003 = vmatmul.mubr.bf16.gmra.mxu0 %v2497
    %v3004 = vpop.f32.mrf.mxu0
    %v3005 = vadd.f32 %v2584, %v3004
    %v3006 = vpop.f32.mrf.mxu0
    %v3007 = vadd.f32 %v2588, %v3006
    %v3008 = vpop.f32.mrf.mxu0
    %v3009 = vadd.f32 %v2584, %v3008
    %v3010 = vpop.f32.mrf.mxu0
    %v3011 = vadd.f32 %v2588, %v3010
    %3012 = vmatprep.mubr.bf16.mxu0 %v2503
    %3013 = vmatmul.mubr.bf16.gmra.mxu0 %v2502
    %v3014 = vpop.f32.mrf.mxu0
    %v3015 = vadd.f32 %v2584, %v3014
    %v3016 = vpop.f32.mrf.mxu0
    %v3017 = vadd.f32 %v2588, %v3016
    %v3018 = vpop.f32.mrf.mxu0
    %v3019 = vadd.f32 %v2584, %v3018
    %v3020 = vpop.f32.mrf.mxu0
    %v3021 = vadd.f32 %v2588, %v3020
    %3022 = vdwg.mxu0
    %3023 = vmatprep.subr.bf16.mxu0 %v2854
    %3024 = vmatpush1.bf16.msra.mxu0 %v2853
    %3025 = vmatprep.subr.bf16.mxu0 %v2852
    %3026 = vmatpush1.bf16.msra.mxu0 %v2851
    %3027 = vmatprep.subr.bf16.mxu0 %v2850
    %3028 = vmatpush1.bf16.msra.mxu0 %v2849
    %3029 = vmatprep.subr.bf16.mxu0 %v2848
    %3030 = vmatpush1.bf16.msra.mxu0 %v2847
    %3031 = vmatprep.subr.bf16.mxu0 %v2846
    %3032 = vmatpush1.bf16.msra.mxu0 %v2845
    %3033 = vmatprep.subr.bf16.mxu0 %v2844
    %3034 = vmatpush1.bf16.msra.mxu0 %v2843
    %3035 = vmatprep.subr.bf16.mxu0 %v2842
    %3036 = vmatpush1.bf16.msra.mxu0 %v2841
    %3037 = vmatprep.subr.bf16.mxu0 %v2840
    %3038 = vmatpush1.bf16.msra.mxu0 %v2839
    %3039 = vmatprep.subr.bf16.mxu0 %v2870
    %3040 = vmatpush2.bf16.msra.mxu0 %v2869
    %3041 = vmatprep.subr.bf16.mxu0 %v2868
    %3042 = vmatpush2.bf16.msra.mxu0 %v2867
    %3043 = vmatprep.subr.bf16.mxu0 %v2866
    %3044 = vmatpush2.bf16.msra.mxu0 %v2865
    %3045 = vmatprep.subr.bf16.mxu0 %v2864
    %3046 = vmatpush2.bf16.msra.mxu0 %v2863
    %3047 = vmatprep.subr.bf16.mxu0 %v2862
    %3048 = vmatpush2.bf16.msra.mxu0 %v2861
    %3049 = vmatprep.subr.bf16.mxu0 %v2860
    %3050 = vmatpush2.bf16.msra.mxu0 %v2859
    %3051 = vmatprep.subr.bf16.mxu0 %v2858
    %3052 = vmatpush2.bf16.msra.mxu0 %v2857
    %3053 = vmatprep.subr.bf16.mxu0 %v2856
    %3054 = vmatpush2.bf16.msra.mxu0 %v2855
    %3055 = vmatprep.mubr.bf16.mxu0 %v2495
    %3056 = vmatmul.mubr.bf16.gmra.mxu0 %v2494
    %v3057 = vpop.f32.mrf.mxu0
    %v3058 = vadd.f32 %v2995, %v3057
    %v3059 = vpop.f32.mrf.mxu0
    %v3060 = vadd.f32 %v2997, %v3059
    %v3061 = vpop.f32.mrf.mxu0
    %v3062 = vadd.f32 %v2999, %v3061
    %v3063 = vpop.f32.mrf.mxu0
    %v3064 = vadd.f32 %v3001, %v3063
    %3065 = vmatprep.mubr.bf16.mxu0 %v2500
    %3066 = vmatmul.mubr.bf16.gmra.mxu0 %v2499
    %v3067 = vpop.f32.mrf.mxu0
    %v3068 = vadd.f32 %v3005, %v3067
    %v3069 = vpop.f32.mrf.mxu0
    %v3070 = vadd.f32 %v3007, %v3069
    %v3071 = vpop.f32.mrf.mxu0
    %v3072 = vadd.f32 %v3009, %v3071
    %v3073 = vpop.f32.mrf.mxu0
    %v3074 = vadd.f32 %v3011, %v3073
    %3075 = vmatprep.mubr.bf16.mxu0 %v2505
    %3076 = vmatmul.mubr.bf16.gmra.mxu0 %v2504
    %v3077 = vpop.f32.mrf.mxu0
    %v3078 = vadd.f32 %v3015, %v3077
    %v3079 = vpop.f32.mrf.mxu0
    %v3080 = vadd.f32 %v3017, %v3079
    %v3081 = vpop.f32.mrf.mxu0
    %v3082 = vadd.f32 %v3019, %v3081
    %v3083 = vpop.f32.mrf.mxu0
    %v3084 = vadd.f32 %v3021, %v3083
    %3085 = vdwg.mxu0
    %3086 = vmatprep.subr.bf16.mxu0 0
    %3087 = vmatpush1.bf16.msra.mxu0 0
    %3088 = vmatprep.subr.bf16.mxu0 0
    %3089 = vmatpush1.bf16.msra.mxu0 0
    %3090 = vmatprep.subr.bf16.mxu0 0
    %3091 = vmatpush1.bf16.msra.mxu0 0
    %3092 = vmatprep.subr.bf16.mxu0 0
    %3093 = vmatpush1.bf16.msra.mxu0 0
    %3094 = vmatprep.subr.bf16.mxu0 %v2878
    %3095 = vmatpush1.bf16.msra.mxu0 %v2877
    %3096 = vmatprep.subr.bf16.mxu0 %v2876
    %3097 = vmatpush1.bf16.msra.mxu0 %v2875
    %3098 = vmatprep.subr.bf16.mxu0 %v2874
    %3099 = vmatpush1.bf16.msra.mxu0 %v2873
    %3100 = vmatprep.subr.bf16.mxu0 %v2872
    %3101 = vmatpush1.bf16.msra.mxu0 %v2871
    %3102 = vmatprep.subr.bf16.mxu0 0
    %3103 = vmatpush2.bf16.msra.mxu0 0
    %3104 = vmatprep.subr.bf16.mxu0 0
    %3105 = vmatpush2.bf16.msra.mxu0 0
    %3106 = vmatprep.subr.bf16.mxu0 0
    %3107 = vmatpush2.bf16.msra.mxu0 0
    %3108 = vmatprep.subr.bf16.mxu0 0
    %3109 = vmatpush2.bf16.msra.mxu0 0
    %3110 = vmatprep.subr.bf16.mxu0 0
    %3111 = vmatpush2.bf16.msra.mxu0 0
    %3112 = vmatprep.subr.bf16.mxu0 0
    %3113 = vmatpush2.bf16.msra.mxu0 0
    %3114 = vmatprep.subr.bf16.mxu0 0
    %3115 = vmatpush2.bf16.msra.mxu0 0
    %3116 = vmatprep.subr.bf16.mxu0 0
    %3117 = vmatpush2.bf16.msra.mxu0 0
    %3118 = vmatprep.mubr.bf16.mxu0 0
    %3119 = vmatmul.mubr.bf16.gmra.mxu0 %v2952
    %v3120 = vpop.f32.mrf.mxu0
    %v3121 = vadd.f32 %v3058, %v3120
    %v3122 = vpop.f32.mrf.mxu0
    %v3123 = vadd.f32 %v3060, %v3122
    %v3124 = vpop.f32.mrf.mxu0
    %v3125 = vadd.f32 %v3062, %v3124
    %v3126 = vpop.f32.mrf.mxu0
    %v3127 = vadd.f32 %v3064, %v3126
    %3128 = vmatprep.mubr.bf16.mxu0 0
    %3129 = vmatmul.mubr.bf16.gmra.mxu0 %v2955
    %v3130 = vpop.f32.mrf.mxu0
    %v3131 = vadd.f32 %v3068, %v3130
    %v3132 = vpop.f32.mrf.mxu0
    %v3133 = vadd.f32 %v3070, %v3132
    %v3134 = vpop.f32.mrf.mxu0
    %v3135 = vadd.f32 %v3072, %v3134
    %v3136 = vpop.f32.mrf.mxu0
    %v3137 = vadd.f32 %v3074, %v3136
    %3138 = vmatprep.mubr.bf16.mxu0 0
    %3139 = vmatmul.mubr.bf16.gmra.mxu0 %v2958
    %v3140 = vpop.f32.mrf.mxu0
    %v3141 = vadd.f32 %v3078, %v3140
    %v3142 = vpop.f32.mrf.mxu0
    %v3143 = vadd.f32 %v3080, %v3142
    %v3144 = vpop.f32.mrf.mxu0
    %v3145 = vadd.f32 %v3082, %v3144
    %v3146 = vpop.f32.mrf.mxu0
    %v3147 = vadd.f32 %v3084, %v3146
    %3148 = vdwg.mxu0
    %v3149 = vadd.f32 %v3121, %v1349
    %v3150 = vadd.f32 %v3123, %v1350
    %v3151 = vadd.f32 %v3125, %v1351
    %v3152 = vadd.f32 %v3127, %v1352
    %v3153 = vadd.f32 %v3131, %v1353
    %v3154 = vadd.f32 %v3133, %v1354
    %v3155 = vadd.f32 %v3135, %v1355
    %v3156 = vadd.f32 %v3137, %v1356
    %v3157 = vadd.f32 %v3141, %v1357
    %v3158 = vadd.f32 %v3143, %v1358
    %v3159 = vadd.f32 %v3145, %v1359
    %v3160 = vadd.f32 %v3147, %v1360
    %v3161 = vmax.f32 %v3149, 0.0
    %v3162 = vmax.f32 %v3150, 0.0
    %v3163 = vmax.f32 %v3151, 0.0
    %v3164 = vmax.f32 %v3152, 0.0
    %v3165 = vmax.f32 %v3153, 0.0
    %v3166 = vmax.f32 %v3154, 0.0
    %v3167 = vmax.f32 %v3155, 0.0
    %v3168 = vmax.f32 %v3156, 0.0
    %v3169 = vmax.f32 %v3157, 0.0
    %v3170 = vmax.f32 %v3158, 0.0
    %v3171 = vmax.f32 %v3159, 0.0
    %v3172 = vmax.f32 %v3160, 0.0
    %s3173 = smul.u32 4, 72
    %s3174 = smul.u32 %s3173, 3
    %s3175 = sshll.u32 %s3174, 4
    %3176 = dma.done [#allocation8], %s3175
    %3189 = vrot.lane.b32.xlu0 %v3161, 64
    %v3190 = vpop.permute.xlu0 %3189
    %3191 = vrot.lane.b32.xlu0 %v3162, 64
    %v3192 = vpop.permute.xlu0 %3191
    %3193 = vrot.lane.b32.xlu0 %v3163, 64
    %v3194 = vpop.permute.xlu0 %3193
    %3195 = vrot.lane.b32.xlu0 %v3164, 64
    %v3196 = vpop.permute.xlu0 %3195
    %3197 = vrot.lane.b32.xlu0 %v3165, 64
    %v3198 = vpop.permute.xlu0 %3197
    %3199 = vrot.lane.b32.xlu0 %v3166, 64
    %v3200 = vpop.permute.xlu0 %3199
    %3201 = vrot.lane.b32.xlu0 %v3167, 64
    %v3202 = vpop.permute.xlu0 %3201
    %3203 = vrot.lane.b32.xlu0 %v3168, 64
    %v3204 = vpop.permute.xlu0 %3203
    %3205 = vrot.lane.b32.xlu0 %v3169, 64
    %v3206 = vpop.permute.xlu0 %3205
    %3207 = vrot.lane.b32.xlu0 %v3170, 64
    %v3208 = vpop.permute.xlu0 %3207
    %3209 = vrot.lane.b32.xlu0 %v3171, 64
    %v3210 = vpop.permute.xlu0 %3209
    %3211 = vrot.lane.b32.xlu0 %v3172, 64
    %v3212 = vpop.permute.xlu0 %3211
    %v3213 = vsel %vm1397, %v3190, %v3192
    %v3214 = vsel %vm1397, %v3194, %v3196
    %v3215 = vsel %vm1397, %v3198, %v3200
    %v3216 = vsel %vm1397, %v3202, %v3204
    %v3217 = vsel %vm1397, %v3206, %v3208
    %v3218 = vsel %vm1397, %v3210, %v3212
    %3231 = vst.msk [vmem:[#allocation2 + $0x8] sm:$0xff] %vm1416, %v3190
    %3232 = vst [vmem:[#allocation2 + $0x10] sm:$0xff] %v3213
    %3233 = vst.msk [vmem:[#allocation2 + $0x50] sm:$0xff] %vm1416, %v3194
    %3234 = vst [vmem:[#allocation2 + $0x58] sm:$0xff] %v3214
    %3235 = vst.msk [vmem:[#allocation2 + $0x98] sm:$0xff] %vm1416, %v3198
    %3236 = vst [vmem:[#allocation2 + $0xa0] sm:$0xff] %v3215
    %3237 = vst.msk [vmem:[#allocation2 + $0xe0] sm:$0xff] %vm1416, %v3202
    %3238 = vst [vmem:[#allocation2 + $0xe8] sm:$0xff] %v3216
    %3239 = vst.msk [vmem:[#allocation2 + $0x128] sm:$0xff] %vm1416, %v3206
    %3240 = vst [vmem:[#allocation2 + $0x130] sm:$0xff] %v3217
    %3241 = vst.msk [vmem:[#allocation2 + $0x170] sm:$0xff] %vm1416, %v3210
    %3242 = vst [vmem:[#allocation2 + $0x178] sm:$0xff] %v3218
    %v3243 = vld [vmem:[#allocation2 + $0x8] sm:$0xff]
    %v3244 = vld [vmem:[#allocation2 + $0x10] sm:$0xff]
    %v3245 = vld [vmem:[#allocation2 + $0x50] sm:$0xff]
    %v3246 = vld [vmem:[#allocation2 + $0x58] sm:$0xff]
    %v3247 = vld [vmem:[#allocation2 + $0x98] sm:$0xff]
    %v3248 = vld [vmem:[#allocation2 + $0xa0] sm:$0xff]
    %v3249 = vld [vmem:[#allocation2 + $0xe0] sm:$0xff]
    %v3250 = vld [vmem:[#allocation2 + $0xe8] sm:$0xff]
    %v3251 = vld [vmem:[#allocation2 + $0x128] sm:$0xff]
    %v3252 = vld [vmem:[#allocation2 + $0x130] sm:$0xff]
    %3263 = vrot.lane.b32.xlu0 %v3243, 64
    %v3264 = vpop.permute.xlu0 %3263
    %3265 = vrot.lane.b32.xlu0 %v3244, 64
    %v3266 = vpop.permute.xlu0 %3265
    %3267 = vrot.lane.b32.xlu0 %v3245, 64
    %v3268 = vpop.permute.xlu0 %3267
    %3269 = vrot.lane.b32.xlu0 %v3246, 64
    %v3270 = vpop.permute.xlu0 %3269
    %3271 = vrot.lane.b32.xlu0 %v3247, 64
    %v3272 = vpop.permute.xlu0 %3271
    %3273 = vrot.lane.b32.xlu0 %v3248, 64
    %v3274 = vpop.permute.xlu0 %3273
    %3275 = vrot.lane.b32.xlu0 %v3249, 64
    %v3276 = vpop.permute.xlu0 %3275
    %3277 = vrot.lane.b32.xlu0 %v3250, 64
    %v3278 = vpop.permute.xlu0 %3277
    %3279 = vrot.lane.b32.xlu0 %v3251, 64
    %v3280 = vpop.permute.xlu0 %3279
    %3281 = vrot.lane.b32.xlu0 %v3252, 64
    %v3282 = vpop.permute.xlu0 %3281
    %v3283 = vsel %vm1397, %v3264, %v3266
    %v3284 = vsel %vm1397, %v3268, %v3270
    %v3285 = vsel %vm1397, %v3272, %v3274
    %v3286 = vsel %vm1397, %v3276, %v3278
    %v3287 = vsel %vm1397, %v3280, %v3282
    %3298 = vst [vmem:[#allocation2 + $0x48] sm:$0xff] %v3283
    %3299 = vst.msk [vmem:[#allocation2 + $0x50] sm:$0xff] %vm1397, %v3266
    %3300 = vst [vmem:[#allocation2 + $0x90] sm:$0xff] %v3284
    %3301 = vst.msk [vmem:[#allocation2 + $0x98] sm:$0xff] %vm1397, %v3270
    %3302 = vst [vmem:[#allocation2 + $0xd8] sm:$0xff] %v3285
    %3303 = vst.msk [vmem:[#allocation2 + $0xe0] sm:$0xff] %vm1397, %v3274
    %3304 = vst [vmem:[#allocation2 + $0x120] sm:$0xff] %v3286
    %3305 = vst.msk [vmem:[#allocation2 + $0x128] sm:$0xff] %vm1397, %v3278
    %3306 = vst [vmem:[#allocation2 + $0x168] sm:$0xff] %v3287
    %3307 = vst.msk [vmem:[#allocation2 + $0x170] sm:$0xff] %vm1397, %v3282
    %v3308 = vld [vmem:[#allocation2 + $0x50] sm:$0xff]
    %v3309 = vld [vmem:[#allocation2 + $0x58] sm:$0xff]
    %v3310 = vld [vmem:[#allocation2 + $0x98] sm:$0xff]
    %v3311 = vld [vmem:[#allocation2 + $0xa0] sm:$0xff]
    %v3312 = vld [vmem:[#allocation2 + $0xe0] sm:$0xff]
    %v3313 = vld [vmem:[#allocation2 + $0xe8] sm:$0xff]
    %v3314 = vld [vmem:[#allocation2 + $0x128] sm:$0xff]
    %v3315 = vld [vmem:[#allocation2 + $0x130] sm:$0xff]
    %v3316 = vld [vmem:[#allocation2 + $0x170] sm:$0xff]
    %v3317 = vld [vmem:[#allocation2 + $0x178] sm:$0xff]
    %3328 = vrot.lane.b32.xlu0 %v3308, 64
    %v3329 = vpop.permute.xlu0 %3328
    %3330 = vrot.lane.b32.xlu0 %v3309, 64
    %v3331 = vpop.permute.xlu0 %3330
    %3332 = vrot.lane.b32.xlu0 %v3310, 64
    %v3333 = vpop.permute.xlu0 %3332
    %3334 = vrot.lane.b32.xlu0 %v3311, 64
    %v3335 = vpop.permute.xlu0 %3334
    %3336 = vrot.lane.b32.xlu0 %v3312, 64
    %v3337 = vpop.permute.xlu0 %3336
    %3338 = vrot.lane.b32.xlu0 %v3313, 64
    %v3339 = vpop.permute.xlu0 %3338
    %3340 = vrot.lane.b32.xlu0 %v3314, 64
    %v3341 = vpop.permute.xlu0 %3340
    %3342 = vrot.lane.b32.xlu0 %v3315, 64
    %v3343 = vpop.permute.xlu0 %3342
    %3344 = vrot.lane.b32.xlu0 %v3316, 64
    %v3345 = vpop.permute.xlu0 %3344
    %3346 = vrot.lane.b32.xlu0 %v3317, 64
    %v3347 = vpop.permute.xlu0 %3346
    %v3348 = vsel %vm1397, %v3329, %v3331
    %v3349 = vsel %vm1397, %v3333, %v3335
    %v3350 = vsel %vm1397, %v3337, %v3339
    %v3351 = vsel %vm1397, %v3341, %v3343
    %v3352 = vsel %vm1397, %v3345, %v3347
    %3363 = vst [vmem:[#allocation2 + $0x18] sm:$0xff] %v3348
    %3364 = vst.msk [vmem:[#allocation2 + $0x20] sm:$0xff] %vm1397, %v3331
    %3365 = vst [vmem:[#allocation2 + $0x60] sm:$0xff] %v3349
    %3366 = vst.msk [vmem:[#allocation2 + $0x68] sm:$0xff] %vm1397, %v3335
    %3367 = vst [vmem:[#allocation2 + $0xa8] sm:$0xff] %v3350
    %3368 = vst.msk [vmem:[#allocation2 + $0xb0] sm:$0xff] %vm1397, %v3339
    %3369 = vst [vmem:[#allocation2 + $0xf0] sm:$0xff] %v3351
    %3370 = vst.msk [vmem:[#allocation2 + $0xf8] sm:$0xff] %vm1397, %v3343
    %3371 = vst [vmem:[#allocation2 + $0x138] sm:$0xff] %v3352
    %3372 = vst.msk [vmem:[#allocation2 + $0x140] sm:$0xff] %vm1397, %v3347
    %3373 = vst [vmem:[#allocation2] sm:$0xff] 0.0
    %3374 = vst.msk [vmem:[#allocation2 + $0x8] sm:$0xff] %vm1397, 0.0
    %3375 = vst [vmem:[#allocation2 + $0x180] sm:$0xff] 0.0
    %3376 = vst.msk [vmem:[#allocation2 + $0x188] sm:$0xff] %vm1397, 0.0
    %v3377 = vld [vmem:[#allocation2] sm:$0xff]
    %v3378 = vld [vmem:[#allocation2 + $0x8] sm:$0xff]
    %v3379 = vld [vmem:[#allocation2 + $0x10] sm:$0xff]
    %v3380 = vld [vmem:[#allocation2 + $0x18] sm:$0xff]
    %v3381 = vld [vmem:[#allocation2 + $0x20] sm:$0xff]
    %v3382 = vld [vmem:[#allocation2 + $0x48] sm:$0xff]
    %v3383 = vld [vmem:[#allocation2 + $0x50] sm:$0xff]
    %v3384 = vld [vmem:[#allocation2 + $0x58] sm:$0xff]
    %v3385 = vld [vmem:[#allocation2 + $0x60] sm:$0xff]
    %v3386 = vld [vmem:[#allocation2 + $0x68] sm:$0xff]
    %v3387 = vld [vmem:[#allocation2 + $0x90] sm:$0xff]
    %v3388 = vld [vmem:[#allocation2 + $0x98] sm:$0xff]
    %v3389 = vld [vmem:[#allocation2 + $0xa0] sm:$0xff]
    %v3390 = vld [vmem:[#allocation2 + $0xa8] sm:$0xff]
    %v3391 = vld [vmem:[#allocation2 + $0xb0] sm:$0xff]
    %v3392 = vld [vmem:[#allocation2 + $0xd8] sm:$0xff]
    %v3393 = vld [vmem:[#allocation2 + $0xe0] sm:$0xff]
    %v3394 = vld [vmem:[#allocation2 + $0xe8] sm:$0xff]
    %v3395 = vld [vmem:[#allocation2 + $0xf0] sm:$0xff]
    %v3396 = vld [vmem:[#allocation2 + $0xf8] sm:$0xff]
    %v3397 = vld [vmem:[#allocation2 + $0x120] sm:$0xff]
    %v3398 = vld [vmem:[#allocation2 + $0x128] sm:$0xff]
    %v3399 = vld [vmem:[#allocation2 + $0x130] sm:$0xff]
    %v3400 = vld [vmem:[#allocation2 + $0x138] sm:$0xff]
    %v3401 = vld [vmem:[#allocation2 + $0x140] sm:$0xff]
    %v3402 = vld [vmem:[#allocation2 + $0x168] sm:$0xff]
    %v3403 = vld [vmem:[#allocation2 + $0x170] sm:$0xff]
    %v3404 = vld [vmem:[#allocation2 + $0x178] sm:$0xff]
    %v3405 = vld [vmem:[#allocation2 + $0x180] sm:$0xff]
    %v3406 = vld [vmem:[#allocation2 + $0x188] sm:$0xff]
    %v3407 = vpack.c.bf16 %v3382, %v3377
    %v3408 = vpack.c.bf16 %v3383, %v3378
    %v3409 = vpack.c.bf16 %v3384, %v3379
    %v3410 = vpack.c.bf16 %v3385, %v3380
    %v3411 = vpack.c.bf16 %v3386, %v3381
    %v3412 = vpack.c.bf16 %v3392, %v3387
    %v3413 = vpack.c.bf16 %v3393, %v3388
    %v3414 = vpack.c.bf16 %v3394, %v3389
    %v3415 = vpack.c.bf16 %v3395, %v3390
    %v3416 = vpack.c.bf16 %v3396, %v3391
    %v3417 = vpack.c.bf16 %v3402, %v3397
    %v3418 = vpack.c.bf16 %v3403, %v3398
    %v3419 = vpack.c.bf16 %v3404, %v3399
    %v3420 = vpack.c.bf16 %v3405, %v3400
    %v3421 = vpack.c.bf16 %v3406, %v3401
    %v3422 = vld [vmem:[#allocation4] sm:$0xff]
    %v3423 = vld [vmem:[#allocation4 + $0x8] sm:$0xf]
    %v3424 = vld [vmem:[#allocation4 + $0xc] sm:$0xff]
    %v3425 = vld [vmem:[#allocation4 + $0x14] sm:$0xf]
    %v3426 = vld [vmem:[#allocation4 + $0x18] sm:$0xff]
    %v3427 = vld [vmem:[#allocation4 + $0x20] sm:$0xf]
    %v3428 = vld [vmem:[#allocation4 + $0x24] sm:$0xff]
    %v3429 = vld [vmem:[#allocation4 + $0x2c] sm:$0xf]
    %v3430 = vld [vmem:[#allocation4 + $0x30] sm:$0xff]
    %v3431 = vld [vmem:[#allocation4 + $0x38] sm:$0xf]
    %v3432 = vld [vmem:[#allocation4 + $0x3c] sm:$0xff]
    %v3433 = vld [vmem:[#allocation4 + $0x44] sm:$0xf]
    %v3434 = vld [vmem:[#allocation4 + $0x48] sm:$0xff]
    %v3435 = vld [vmem:[#allocation4 + $0x50] sm:$0xf]
    %v3436 = vld [vmem:[#allocation4 + $0x54] sm:$0xff]
    %v3437 = vld [vmem:[#allocation4 + $0x5c] sm:$0xf]
    %v3438 = vld [vmem:[#allocation4 + $0x60] sm:$0xff]
    %v3439 = vld [vmem:[#allocation4 + $0x68] sm:$0xf]
    %v3440 = vld [vmem:[#allocation4 + $0x6c] sm:$0xff]
    %v3441 = vld [vmem:[#allocation4 + $0x74] sm:$0xf]
    %v3442 = vld [vmem:[#allocation4 + $0x78] sm:$0xff]
    %v3443 = vld [vmem:[#allocation4 + $0x80] sm:$0xf]
    %v3444 = vld [vmem:[#allocation4 + $0x84] sm:$0xff]
    %v3445 = vld [vmem:[#allocation4 + $0x8c] sm:$0xf]
    %v3446 = vld [vmem:[#allocation4 + $0x90] sm:$0xff]
    %v3447 = vld [vmem:[#allocation4 + $0x98] sm:$0xf]
    %v3448 = vld [vmem:[#allocation4 + $0x9c] sm:$0xff]
    %v3449 = vld [vmem:[#allocation4 + $0xa4] sm:$0xf]
    %v3450 = vld [vmem:[#allocation4 + $0xa8] sm:$0xff]
    %v3451 = vld [vmem:[#allocation4 + $0xb0] sm:$0xf]
    %v3452 = vld [vmem:[#allocation4 + $0xb4] sm:$0xff]
    %v3453 = vld [vmem:[#allocation4 + $0xbc] sm:$0xf]
    %v3454 = vld [vmem:[#allocation4 + $0xc0] sm:$0xff]
    %v3455 = vld [vmem:[#allocation4 + $0xc8] sm:$0xf]
    %v3456 = vld [vmem:[#allocation4 + $0xcc] sm:$0xff]
    %v3457 = vld [vmem:[#allocation4 + $0xd4] sm:$0xf]
    %v3458 = vld [vmem:[#allocation4 + $0xd8] sm:$0xff]
    %v3459 = vld [vmem:[#allocation4 + $0xe0] sm:$0xf]
    %v3460 = vld [vmem:[#allocation4 + $0xe4] sm:$0xff]
    %v3461 = vld [vmem:[#allocation4 + $0xec] sm:$0xf]
    %v3462 = vld [vmem:[#allocation4 + $0xf0] sm:$0xff]
    %v3463 = vld [vmem:[#allocation4 + $0xf8] sm:$0xf]
    %v3464 = vld [vmem:[#allocation4 + $0xfc] sm:$0xff]
    %v3465 = vld [vmem:[#allocation4 + $0x104] sm:$0xf]
    %v3466 = vld [vmem:[#allocation4 + $0x108] sm:$0xff]
    %v3467 = vld [vmem:[#allocation4 + $0x110] sm:$0xf]
    %v3468 = vld [vmem:[#allocation4 + $0x114] sm:$0xff]
    %v3469 = vld [vmem:[#allocation4 + $0x11c] sm:$0xf]
    %v3470 = vld [vmem:[#allocation4 + $0x120] sm:$0xff]
    %v3471 = vld [vmem:[#allocation4 + $0x128] sm:$0xf]
    %v3472 = vld [vmem:[#allocation4 + $0x12c] sm:$0xff]
    %v3473 = vld [vmem:[#allocation4 + $0x134] sm:$0xf]
    %v3474 = vld [vmem:[#allocation4 + $0x138] sm:$0xff]
    %v3475 = vld [vmem:[#allocation4 + $0x140] sm:$0xf]
    %v3476 = vld [vmem:[#allocation4 + $0x144] sm:$0xff]
    %v3477 = vld [vmem:[#allocation4 + $0x14c] sm:$0xf]
    %v3478 = vld [vmem:[#allocation4 + $0x150] sm:$0xff]
    %v3479 = vld [vmem:[#allocation4 + $0x158] sm:$0xf]
    %v3480 = vld [vmem:[#allocation4 + $0x15c] sm:$0xff]
    %v3481 = vld [vmem:[#allocation4 + $0x164] sm:$0xf]
    %v3482 = vld [vmem:[#allocation4 + $0x168] sm:$0xff]
    %v3483 = vld [vmem:[#allocation4 + $0x170] sm:$0xf]
    %v3484 = vld [vmem:[#allocation4 + $0x174] sm:$0xff]
    %v3485 = vld [vmem:[#allocation4 + $0x17c] sm:$0xf]
    %v3486 = vld [vmem:[#allocation4 + $0x180] sm:$0xff]
    %v3487 = vld [vmem:[#allocation4 + $0x188] sm:$0xf]
    %v3488 = vld [vmem:[#allocation4 + $0x18c] sm:$0xff]
    %v3489 = vld [vmem:[#allocation4 + $0x194] sm:$0xf]
    %v3490 = vld [vmem:[#allocation4 + $0x198] sm:$0xff]
    %v3491 = vld [vmem:[#allocation4 + $0x1a0] sm:$0xf]
    %v3492 = vld [vmem:[#allocation4 + $0x1a4] sm:$0xff]
    %v3493 = vld [vmem:[#allocation4 + $0x1ac] sm:$0xf]
    %v3494 = vld [vmem:[#allocation4 + $0x1b0] sm:$0xff]
    %v3495 = vld [vmem:[#allocation4 + $0x1b8] sm:$0xf]
    %v3496 = vld [vmem:[#allocation4 + $0x1bc] sm:$0xff]
    %v3497 = vld [vmem:[#allocation4 + $0x1c4] sm:$0xf]
    %v3498 = vld [vmem:[#allocation4 + $0x1c8] sm:$0xff]
    %v3499 = vld [vmem:[#allocation4 + $0x1d0] sm:$0xf]
    %v3500 = vld [vmem:[#allocation4 + $0x1d4] sm:$0xff]
    %v3501 = vld [vmem:[#allocation4 + $0x1dc] sm:$0xf]
    %v3502 = vld [vmem:[#allocation4 + $0x1e0] sm:$0xff]
    %v3503 = vld [vmem:[#allocation4 + $0x1e8] sm:$0xf]
    %v3504 = vld [vmem:[#allocation4 + $0x1ec] sm:$0xff]
    %v3505 = vld [vmem:[#allocation4 + $0x1f4] sm:$0xf]
    %v3506 = vld [vmem:[#allocation4 + $0x1f8] sm:$0xff]
    %v3507 = vld [vmem:[#allocation4 + $0x200] sm:$0xf]
    %v3508 = vld [vmem:[#allocation4 + $0x204] sm:$0xff]
    %v3509 = vld [vmem:[#allocation4 + $0x20c] sm:$0xf]
    %v3510 = vld [vmem:[#allocation4 + $0x210] sm:$0xff]
    %v3511 = vld [vmem:[#allocation4 + $0x218] sm:$0xf]
    %v3512 = vld [vmem:[#allocation4 + $0x21c] sm:$0xff]
    %v3513 = vld [vmem:[#allocation4 + $0x224] sm:$0xf]
    %v3514 = vld [vmem:[#allocation4 + $0x228] sm:$0xff]
    %v3515 = vld [vmem:[#allocation4 + $0x230] sm:$0xf]
    %v3516 = vld [vmem:[#allocation4 + $0x234] sm:$0xff]
    %v3517 = vld [vmem:[#allocation4 + $0x23c] sm:$0xf]
    %v3518 = vld [vmem:[#allocation4 + $0x240] sm:$0xff]
    %v3519 = vld [vmem:[#allocation4 + $0x248] sm:$0xf]
    %v3520 = vld [vmem:[#allocation4 + $0x24c] sm:$0xff]
    %v3521 = vld [vmem:[#allocation4 + $0x254] sm:$0xf]
    %v3522 = vld [vmem:[#allocation4 + $0x258] sm:$0xff]
    %v3523 = vld [vmem:[#allocation4 + $0x260] sm:$0xf]
    %v3524 = vld [vmem:[#allocation4 + $0x264] sm:$0xff]
    %v3525 = vld [vmem:[#allocation4 + $0x26c] sm:$0xf]
    %v3526 = vld [vmem:[#allocation4 + $0x270] sm:$0xff]
    %v3527 = vld [vmem:[#allocation4 + $0x278] sm:$0xf]
    %v3528 = vld [vmem:[#allocation4 + $0x27c] sm:$0xff]
    %v3529 = vld [vmem:[#allocation4 + $0x284] sm:$0xf]
    %v3530 = vld [vmem:[#allocation4 + $0x288] sm:$0xff]
    %v3531 = vld [vmem:[#allocation4 + $0x290] sm:$0xf]
    %v3532 = vld [vmem:[#allocation4 + $0x294] sm:$0xff]
    %v3533 = vld [vmem:[#allocation4 + $0x29c] sm:$0xf]
    %v3534 = vld [vmem:[#allocation4 + $0x2a0] sm:$0xff]
    %v3535 = vld [vmem:[#allocation4 + $0x2a8] sm:$0xf]
    %v3536 = vld [vmem:[#allocation4 + $0x2ac] sm:$0xff]
    %v3537 = vld [vmem:[#allocation4 + $0x2b4] sm:$0xf]
    %v3538 = vld [vmem:[#allocation4 + $0x2b8] sm:$0xff]
    %v3539 = vld [vmem:[#allocation4 + $0x2c0] sm:$0xf]
    %v3540 = vld [vmem:[#allocation4 + $0x2c4] sm:$0xff]
    %v3541 = vld [vmem:[#allocation4 + $0x2cc] sm:$0xf]
    %v3542 = vld [vmem:[#allocation4 + $0x2d0] sm:$0xff]
    %v3543 = vld [vmem:[#allocation4 + $0x2d8] sm:$0xf]
    %v3544 = vld [vmem:[#allocation4 + $0x2dc] sm:$0xff]
    %v3545 = vld [vmem:[#allocation4 + $0x2e4] sm:$0xf]
    %v3546 = vld [vmem:[#allocation4 + $0x2e8] sm:$0xff]
    %v3547 = vld [vmem:[#allocation4 + $0x2f0] sm:$0xf]
    %v3548 = vld [vmem:[#allocation4 + $0x2f4] sm:$0xff]
    %v3549 = vld [vmem:[#allocation4 + $0x2fc] sm:$0xf]
    %v3550 = vld [vmem:[#allocation4 + $0x300] sm:$0xff]
    %v3551 = vld [vmem:[#allocation4 + $0x308] sm:$0xf]
    %v3552 = vld [vmem:[#allocation4 + $0x30c] sm:$0xff]
    %v3553 = vld [vmem:[#allocation4 + $0x314] sm:$0xf]
    %v3554 = vld [vmem:[#allocation4 + $0x318] sm:$0xff]
    %v3555 = vld [vmem:[#allocation4 + $0x320] sm:$0xf]
    %v3556 = vld [vmem:[#allocation4 + $0x324] sm:$0xff]
    %v3557 = vld [vmem:[#allocation4 + $0x32c] sm:$0xf]
    %v3558 = vld [vmem:[#allocation4 + $0x330] sm:$0xff]
    %v3559 = vld [vmem:[#allocation4 + $0x338] sm:$0xf]
    %v3560 = vld [vmem:[#allocation4 + $0x33c] sm:$0xff]
    %v3561 = vld [vmem:[#allocation4 + $0x344] sm:$0xf]
    %v3562 = vld [vmem:[#allocation4 + $0x348] sm:$0xff]
    %v3563 = vld [vmem:[#allocation4 + $0x350] sm:$0xf]
    %v3564 = vld [vmem:[#allocation4 + $0x354] sm:$0xff]
    %v3565 = vld [vmem:[#allocation4 + $0x35c] sm:$0xf]
    %v3566 = vld [vmem:[%s8] sm:$0x7]
    %v3568 = vlaneseq
    %v3569 = vshrl.u32 %v3568, 7
    %v3570 = vsub.s32 0, %v3569
    %v3571 = vrot.slane %v3566, %v3570
    %v3572 = vlaneseq
    %v3573 = vshrl.u32 %v3572, 7
    %v3574 = vsub.s32 1, %v3573
    %v3575 = vrot.slane %v3566, %v3574
    %v3576 = vlaneseq
    %v3577 = vshrl.u32 %v3576, 7
    %v3578 = vsub.s32 2, %v3577
    %v3579 = vrot.slane %v3566, %v3578
    %v3727 = vunpack.c.l.b16 %v3422
    %v3728 = vunpack.c.h.b16 %v3422
    %v3729 = vunpack.c.l.b16 %v3423
    %v3730 = vunpack.c.l.b16 %v3424
    %v3731 = vunpack.c.h.b16 %v3424
    %v3732 = vunpack.c.l.b16 %v3425
    %v3733 = vunpack.c.l.b16 %v3426
    %v3734 = vunpack.c.h.b16 %v3426
    %v3735 = vunpack.c.l.b16 %v3427
    %v3736 = vunpack.c.l.b16 %v3428
    %v3737 = vunpack.c.h.b16 %v3428
    %v3738 = vunpack.c.l.b16 %v3429
    %v3739 = vunpack.c.l.b16 %v3430
    %v3740 = vunpack.c.h.b16 %v3430
    %v3741 = vunpack.c.l.b16 %v3431
    %v3742 = vunpack.c.l.b16 %v3432
    %v3743 = vunpack.c.h.b16 %v3432
    %v3744 = vunpack.c.l.b16 %v3433
    %v3745 = vunpack.c.l.b16 %v3434
    %v3746 = vunpack.c.h.b16 %v3434
    %v3747 = vunpack.c.l.b16 %v3435
    %v3748 = vunpack.c.l.b16 %v3436
    %v3749 = vunpack.c.h.b16 %v3436
    %v3750 = vunpack.c.l.b16 %v3437
    %v3751 = vunpack.c.l.b16 %v3438
    %v3752 = vunpack.c.h.b16 %v3438
    %v3753 = vunpack.c.l.b16 %v3439
    %v3754 = vunpack.c.l.b16 %v3440
    %v3755 = vunpack.c.h.b16 %v3440
    %v3756 = vunpack.c.l.b16 %v3441
    %v3757 = vunpack.c.l.b16 %v3442
    %v3758 = vunpack.c.h.b16 %v3442
    %v3759 = vunpack.c.l.b16 %v3443
    %v3760 = vunpack.c.l.b16 %v3444
    %v3761 = vunpack.c.h.b16 %v3444
    %v3762 = vunpack.c.l.b16 %v3445
    %v3763 = vunpack.c.l.b16 %v3446
    %v3764 = vunpack.c.h.b16 %v3446
    %v3765 = vunpack.c.l.b16 %v3447
    %v3766 = vunpack.c.l.b16 %v3448
    %v3767 = vunpack.c.h.b16 %v3448
    %v3768 = vunpack.c.l.b16 %v3449
    %v3769 = vunpack.c.l.b16 %v3450
    %v3770 = vunpack.c.h.b16 %v3450
    %v3771 = vunpack.c.l.b16 %v3451
    %v3772 = vunpack.c.l.b16 %v3452
    %v3773 = vunpack.c.h.b16 %v3452
    %v3774 = vunpack.c.l.b16 %v3453
    %v3775 = vunpack.c.l.b16 %v3454
    %v3776 = vunpack.c.h.b16 %v3454
    %v3777 = vunpack.c.l.b16 %v3455
    %v3778 = vunpack.c.l.b16 %v3456
    %v3779 = vunpack.c.h.b16 %v3456
    %v3780 = vunpack.c.l.b16 %v3457
    %v3781 = vunpack.c.l.b16 %v3458
    %v3782 = vunpack.c.h.b16 %v3458
    %v3783 = vunpack.c.l.b16 %v3459
    %v3784 = vunpack.c.l.b16 %v3460
    %v3785 = vunpack.c.h.b16 %v3460
    %v3786 = vunpack.c.l.b16 %v3461
    %v3787 = vunpack.c.l.b16 %v3462
    %v3788 = vunpack.c.h.b16 %v3462
    %v3789 = vunpack.c.l.b16 %v3463
    %v3790 = vunpack.c.l.b16 %v3464
    %v3791 = vunpack.c.h.b16 %v3464
    %v3792 = vunpack.c.l.b16 %v3465
    %v3793 = vunpack.c.l.b16 %v3466
    %v3794 = vunpack.c.h.b16 %v3466
    %v3795 = vunpack.c.l.b16 %v3467
    %v3796 = vunpack.c.l.b16 %v3468
    %v3797 = vunpack.c.h.b16 %v3468
    %v3798 = vunpack.c.l.b16 %v3469
    %v3799 = vunpack.c.l.b16 %v3470
    %v3800 = vunpack.c.h.b16 %v3470
    %v3801 = vunpack.c.l.b16 %v3471
    %v3802 = vunpack.c.l.b16 %v3472
    %v3803 = vunpack.c.h.b16 %v3472
    %v3804 = vunpack.c.l.b16 %v3473
    %v3805 = vunpack.c.l.b16 %v3474
    %v3806 = vunpack.c.h.b16 %v3474
    %v3807 = vunpack.c.l.b16 %v3475
    %v3808 = vunpack.c.l.b16 %v3476
    %v3809 = vunpack.c.h.b16 %v3476
    %v3810 = vunpack.c.l.b16 %v3477
    %v3811 = vunpack.c.l.b16 %v3478
    %v3812 = vunpack.c.h.b16 %v3478
    %v3813 = vunpack.c.l.b16 %v3479
    %v3814 = vunpack.c.l.b16 %v3480
    %v3815 = vunpack.c.h.b16 %v3480
    %v3816 = vunpack.c.l.b16 %v3481
    %v3817 = vunpack.c.l.b16 %v3482
    %v3818 = vunpack.c.h.b16 %v3482
    %v3819 = vunpack.c.l.b16 %v3483
    %v3820 = vunpack.c.l.b16 %v3484
    %v3821 = vunpack.c.h.b16 %v3484
    %v3822 = vunpack.c.l.b16 %v3485
    %v3823 = vunpack.c.l.b16 %v3486
    %v3824 = vunpack.c.h.b16 %v3486
    %v3825 = vunpack.c.l.b16 %v3487
    %v3826 = vunpack.c.l.b16 %v3488
    %v3827 = vunpack.c.h.b16 %v3488
    %v3828 = vunpack.c.l.b16 %v3489
    %v3829 = vunpack.c.l.b16 %v3490
    %v3830 = vunpack.c.h.b16 %v3490
    %v3831 = vunpack.c.l.b16 %v3491
    %v3832 = vunpack.c.l.b16 %v3492
    %v3833 = vunpack.c.h.b16 %v3492
    %v3834 = vunpack.c.l.b16 %v3493
    %v3835 = vunpack.c.l.b16 %v3494
    %v3836 = vunpack.c.h.b16 %v3494
    %v3837 = vunpack.c.l.b16 %v3495
    %v3838 = vunpack.c.l.b16 %v3496
    %v3839 = vunpack.c.h.b16 %v3496
    %v3840 = vunpack.c.l.b16 %v3497
    %v3841 = vunpack.c.l.b16 %v3498
    %v3842 = vunpack.c.h.b16 %v3498
    %v3843 = vunpack.c.l.b16 %v3499
    %v3844 = vunpack.c.l.b16 %v3500
    %v3845 = vunpack.c.h.b16 %v3500
    %v3846 = vunpack.c.l.b16 %v3501
    %v3847 = vunpack.c.l.b16 %v3502
    %v3848 = vunpack.c.h.b16 %v3502
    %v3849 = vunpack.c.l.b16 %v3503
    %v3850 = vunpack.c.l.b16 %v3504
    %v3851 = vunpack.c.h.b16 %v3504
    %v3852 = vunpack.c.l.b16 %v3505
    %v3853 = vunpack.c.l.b16 %v3506
    %v3854 = vunpack.c.h.b16 %v3506
    %v3855 = vunpack.c.l.b16 %v3507
    %v3856 = vunpack.c.l.b16 %v3508
    %v3857 = vunpack.c.h.b16 %v3508
    %v3858 = vunpack.c.l.b16 %v3509
    %v3859 = vunpack.c.l.b16 %v3510
    %v3860 = vunpack.c.h.b16 %v3510
    %v3861 = vunpack.c.l.b16 %v3511
    %v3862 = vunpack.c.l.b16 %v3512
    %v3863 = vunpack.c.h.b16 %v3512
    %v3864 = vunpack.c.l.b16 %v3513
    %v3865 = vunpack.c.l.b16 %v3514
    %v3866 = vunpack.c.h.b16 %v3514
    %v3867 = vunpack.c.l.b16 %v3515
    %v3868 = vunpack.c.l.b16 %v3516
    %v3869 = vunpack.c.h.b16 %v3516
    %v3870 = vunpack.c.l.b16 %v3517
    %v3871 = vunpack.c.l.b16 %v3518
    %v3872 = vunpack.c.h.b16 %v3518
    %v3873 = vunpack.c.l.b16 %v3519
    %v3874 = vunpack.c.l.b16 %v3520
    %v3875 = vunpack.c.h.b16 %v3520
    %v3876 = vunpack.c.l.b16 %v3521
    %v3877 = vunpack.c.l.b16 %v3522
    %v3878 = vunpack.c.h.b16 %v3522
    %v3879 = vunpack.c.l.b16 %v3523
    %v3880 = vunpack.c.l.b16 %v3524
    %v3881 = vunpack.c.h.b16 %v3524
    %v3882 = vunpack.c.l.b16 %v3525
    %v3883 = vunpack.c.l.b16 %v3526
    %v3884 = vunpack.c.h.b16 %v3526
    %v3885 = vunpack.c.l.b16 %v3527
    %v3886 = vunpack.c.l.b16 %v3528
    %v3887 = vunpack.c.h.b16 %v3528
    %v3888 = vunpack.c.l.b16 %v3529
    %v3889 = vunpack.c.l.b16 %v3530
    %v3890 = vunpack.c.h.b16 %v3530
    %v3891 = vunpack.c.l.b16 %v3531
    %v3892 = vunpack.c.l.b16 %v3532
    %v3893 = vunpack.c.h.b16 %v3532
    %v3894 = vunpack.c.l.b16 %v3533
    %v3895 = vunpack.c.l.b16 %v3534
    %v3896 = vunpack.c.h.b16 %v3534
    %v3897 = vunpack.c.l.b16 %v3535
    %v3898 = vunpack.c.l.b16 %v3536
    %v3899 = vunpack.c.h.b16 %v3536
    %v3900 = vunpack.c.l.b16 %v3537
    %v3901 = vunpack.c.l.b16 %v3538
    %v3902 = vunpack.c.h.b16 %v3538
    %v3903 = vunpack.c.l.b16 %v3539
    %v3904 = vunpack.c.l.b16 %v3540
    %v3905 = vunpack.c.h.b16 %v3540
    %v3906 = vunpack.c.l.b16 %v3541
    %v3907 = vunpack.c.l.b16 %v3542
    %v3908 = vunpack.c.h.b16 %v3542
    %v3909 = vunpack.c.l.b16 %v3543
    %v3910 = vunpack.c.l.b16 %v3544
    %v3911 = vunpack.c.h.b16 %v3544
    %v3912 = vunpack.c.l.b16 %v3545
    %v3913 = vunpack.c.l.b16 %v3546
    %v3914 = vunpack.c.h.b16 %v3546
    %v3915 = vunpack.c.l.b16 %v3547
    %v3916 = vunpack.c.l.b16 %v3548
    %v3917 = vunpack.c.h.b16 %v3548
    %v3918 = vunpack.c.l.b16 %v3549
    %v3919 = vunpack.c.l.b16 %v3550
    %v3920 = vunpack.c.h.b16 %v3550
    %v3921 = vunpack.c.l.b16 %v3551
    %v3922 = vunpack.c.l.b16 %v3552
    %v3923 = vunpack.c.h.b16 %v3552
    %v3924 = vunpack.c.l.b16 %v3553
    %v3925 = vunpack.c.l.b16 %v3554
    %v3926 = vunpack.c.h.b16 %v3554
    %v3927 = vunpack.c.l.b16 %v3555
    %v3928 = vunpack.c.l.b16 %v3556
    %v3929 = vunpack.c.h.b16 %v3556
    %v3930 = vunpack.c.l.b16 %v3557
    %v3931 = vunpack.c.l.b16 %v3558
    %v3932 = vunpack.c.h.b16 %v3558
    %v3933 = vunpack.c.l.b16 %v3559
    %v3934 = vunpack.c.l.b16 %v3560
    %v3935 = vunpack.c.h.b16 %v3560
    %v3936 = vunpack.c.l.b16 %v3561
    %v3937 = vunpack.c.l.b16 %v3562
    %v3938 = vunpack.c.h.b16 %v3562
    %v3939 = vunpack.c.l.b16 %v3563
    %v3940 = vunpack.c.l.b16 %v3564
    %v3941 = vunpack.c.h.b16 %v3564
    %v3942 = vunpack.c.l.b16 %v3565
    %v3943 = vpack.c.b16 %v3730, %v3727
    %v3944 = vpack.c.b16 %v3731, %v3728
    %v3945 = vpack.c.b16 %v3732, %v3729
    %v3946 = vpack.c.b16 %v3736, %v3733
    %v3947 = vpack.c.b16 %v3737, %v3734
    %v3948 = vpack.c.b16 %v3738, %v3735
    %v3949 = vpack.c.b16 %v3742, %v3739
    %v3950 = vpack.c.b16 %v3743, %v3740
    %v3951 = vpack.c.b16 %v3744, %v3741
    %v3952 = vpack.c.b16 %v3748, %v3745
    %v3953 = vpack.c.b16 %v3749, %v3746
    %v3954 = vpack.c.b16 %v3750, %v3747
    %v3955 = vpack.c.b16 %v3754, %v3751
    %v3956 = vpack.c.b16 %v3755, %v3752
    %v3957 = vpack.c.b16 %v3756, %v3753
    %v3958 = vpack.c.b16 %v3760, %v3757
    %v3959 = vpack.c.b16 %v3761, %v3758
    %v3960 = vpack.c.b16 %v3762, %v3759
    %v3961 = vpack.c.b16 %v3766, %v3763
    %v3962 = vpack.c.b16 %v3767, %v3764
    %v3963 = vpack.c.b16 %v3768, %v3765
    %v3964 = vpack.c.b16 %v3772, %v3769
    %v3965 = vpack.c.b16 %v3773, %v3770
    %v3966 = vpack.c.b16 %v3774, %v3771
    %v3967 = vpack.c.b16 %v3778, %v3775
    %v3968 = vpack.c.b16 %v3779, %v3776
    %v3969 = vpack.c.b16 %v3780, %v3777
    %v3970 = vpack.c.b16 %v3784, %v3781
    %v3971 = vpack.c.b16 %v3785, %v3782
    %v3972 = vpack.c.b16 %v3786, %v3783
    %v3973 = vpack.c.b16 %v3790, %v3787
    %v3974 = vpack.c.b16 %v3791, %v3788
    %v3975 = vpack.c.b16 %v3792, %v3789
    %v3976 = vpack.c.b16 %v3796, %v3793
    %v3977 = vpack.c.b16 %v3797, %v3794
    %v3978 = vpack.c.b16 %v3798, %v3795
    %v3979 = vpack.c.b16 %v3802, %v3799
    %v3980 = vpack.c.b16 %v3803, %v3800
    %v3981 = vpack.c.b16 %v3804, %v3801
    %v3982 = vpack.c.b16 %v3808, %v3805
    %v3983 = vpack.c.b16 %v3809, %v3806
    %v3984 = vpack.c.b16 %v3810, %v3807
    %v3985 = vpack.c.b16 %v3814, %v3811
    %v3986 = vpack.c.b16 %v3815, %v3812
    %v3987 = vpack.c.b16 %v3816, %v3813
    %v3988 = vpack.c.b16 %v3820, %v3817
    %v3989 = vpack.c.b16 %v3821, %v3818
    %v3990 = vpack.c.b16 %v3822, %v3819
    %v3991 = vpack.c.b16 %v3826, %v3823
    %v3992 = vpack.c.b16 %v3827, %v3824
    %v3993 = vpack.c.b16 %v3828, %v3825
    %v3994 = vpack.c.b16 %v3832, %v3829
    %v3995 = vpack.c.b16 %v3833, %v3830
    %v3996 = vpack.c.b16 %v3834, %v3831
    %v3997 = vpack.c.b16 %v3838, %v3835
    %v3998 = vpack.c.b16 %v3839, %v3836
    %v3999 = vpack.c.b16 %v3840, %v3837
    %v4000 = vpack.c.b16 %v3844, %v3841
    %v4001 = vpack.c.b16 %v3845, %v3842
    %v4002 = vpack.c.b16 %v3846, %v3843
    %v4003 = vpack.c.b16 %v3850, %v3847
    %v4004 = vpack.c.b16 %v3851, %v3848
    %v4005 = vpack.c.b16 %v3852, %v3849
    %v4006 = vpack.c.b16 %v3856, %v3853
    %v4007 = vpack.c.b16 %v3857, %v3854
    %v4008 = vpack.c.b16 %v3858, %v3855
    %v4009 = vpack.c.b16 %v3862, %v3859
    %v4010 = vpack.c.b16 %v3863, %v3860
    %v4011 = vpack.c.b16 %v3864, %v3861
    %v4012 = vpack.c.b16 %v3868, %v3865
    %v4013 = vpack.c.b16 %v3869, %v3866
    %v4014 = vpack.c.b16 %v3870, %v3867
    %v4015 = vpack.c.b16 %v3874, %v3871
    %v4016 = vpack.c.b16 %v3875, %v3872
    %v4017 = vpack.c.b16 %v3876, %v3873
    %v4018 = vpack.c.b16 %v3880, %v3877
    %v4019 = vpack.c.b16 %v3881, %v3878
    %v4020 = vpack.c.b16 %v3882, %v3879
    %v4021 = vpack.c.b16 %v3886, %v3883
    %v4022 = vpack.c.b16 %v3887, %v3884
    %v4023 = vpack.c.b16 %v3888, %v3885
    %v4024 = vpack.c.b16 %v3892, %v3889
    %v4025 = vpack.c.b16 %v3893, %v3890
    %v4026 = vpack.c.b16 %v3894, %v3891
    %v4027 = vpack.c.b16 %v3898, %v3895
    %v4028 = vpack.c.b16 %v3899, %v3896
    %v4029 = vpack.c.b16 %v3900, %v3897
    %v4030 = vpack.c.b16 %v3904, %v3901
    %v4031 = vpack.c.b16 %v3905, %v3902
    %v4032 = vpack.c.b16 %v3906, %v3903
    %v4033 = vpack.c.b16 %v3910, %v3907
    %v4034 = vpack.c.b16 %v3911, %v3908
    %v4035 = vpack.c.b16 %v3912, %v3909
    %v4036 = vpack.c.b16 %v3916, %v3913
    %v4037 = vpack.c.b16 %v3917, %v3914
    %v4038 = vpack.c.b16 %v3918, %v3915
    %v4039 = vpack.c.b16 %v3922, %v3919
    %v4040 = vpack.c.b16 %v3923, %v3920
    %v4041 = vpack.c.b16 %v3924, %v3921
    %v4042 = vpack.c.b16 %v3928, %v3925
    %v4043 = vpack.c.b16 %v3929, %v3926
    %v4044 = vpack.c.b16 %v3930, %v3927
    %v4045 = vpack.c.b16 %v3934, %v3931
    %v4046 = vpack.c.b16 %v3935, %v3932
    %v4047 = vpack.c.b16 %v3936, %v3933
    %v4048 = vpack.c.b16 %v3940, %v3937
    %v4049 = vpack.c.b16 %v3941, %v3938
    %v4050 = vpack.c.b16 %v3942, %v3939
    %v4160 = vsel %vm1397, %v3411, 0
    %v4163 = vsel %vm1397, %v3416, 0
    %v4166 = vsel %vm1397, %v3421, 0
    %4168 = vmatprep.subr.bf16.mxu0 %v3965
    %4169 = vmatpush1.bf16.msra.mxu0 %v3964
    %4170 = vmatprep.subr.bf16.mxu0 %v3962
    %4171 = vmatpush1.bf16.msra.mxu0 %v3961
    %4172 = vmatprep.subr.bf16.mxu0 %v3959
    %4173 = vmatpush1.bf16.msra.mxu0 %v3958
    %4174 = vmatprep.subr.bf16.mxu0 %v3956
    %4175 = vmatpush1.bf16.msra.mxu0 %v3955
    %4176 = vmatprep.subr.bf16.mxu0 %v3953
    %4177 = vmatpush1.bf16.msra.mxu0 %v3952
    %4178 = vmatprep.subr.bf16.mxu0 %v3950
    %4179 = vmatpush1.bf16.msra.mxu0 %v3949
    %4180 = vmatprep.subr.bf16.mxu0 %v3947
    %4181 = vmatpush1.bf16.msra.mxu0 %v3946
    %4182 = vmatprep.subr.bf16.mxu0 %v3944
    %4183 = vmatpush1.bf16.msra.mxu0 %v3943
    %4184 = vmatprep.subr.bf16.mxu0 %v3989
    %4185 = vmatpush2.bf16.msra.mxu0 %v3988
    %4186 = vmatprep.subr.bf16.mxu0 %v3986
    %4187 = vmatpush2.bf16.msra.mxu0 %v3985
    %4188 = vmatprep.subr.bf16.mxu0 %v3983
    %4189 = vmatpush2.bf16.msra.mxu0 %v3982
    %4190 = vmatprep.subr.bf16.mxu0 %v3980
    %4191 = vmatpush2.bf16.msra.mxu0 %v3979
    %4192 = vmatprep.subr.bf16.mxu0 %v3977
    %4193 = vmatpush2.bf16.msra.mxu0 %v3976
    %4194 = vmatprep.subr.bf16.mxu0 %v3974
    %4195 = vmatpush2.bf16.msra.mxu0 %v3973
    %4196 = vmatprep.subr.bf16.mxu0 %v3971
    %4197 = vmatpush2.bf16.msra.mxu0 %v3970
    %4198 = vmatprep.subr.bf16.mxu0 %v3968
    %4199 = vmatpush2.bf16.msra.mxu0 %v3967
    %4200 = vmatprep.mubr.bf16.mxu0 %v3408
    %4201 = vmatmul.mubr.bf16.gmra.mxu0 %v3407
    %v4202 = vpop.f32.mrf.mxu0
    %v4203 = vadd.f32 %v3571, %v4202
    %v4204 = vpop.f32.mrf.mxu0
    %v4205 = vadd.f32 %v3575, %v4204
    %v4206 = vpop.f32.mrf.mxu0
    %v4207 = vadd.f32 %v3571, %v4206
    %v4208 = vpop.f32.mrf.mxu0
    %v4209 = vadd.f32 %v3575, %v4208
    %4210 = vmatprep.mubr.bf16.mxu0 %v3413
    %4211 = vmatmul.mubr.bf16.gmra.mxu0 %v3412
    %v4212 = vpop.f32.mrf.mxu0
    %v4213 = vadd.f32 %v3571, %v4212
    %v4214 = vpop.f32.mrf.mxu0
    %v4215 = vadd.f32 %v3575, %v4214
    %v4216 = vpop.f32.mrf.mxu0
    %v4217 = vadd.f32 %v3571, %v4216
    %v4218 = vpop.f32.mrf.mxu0
    %v4219 = vadd.f32 %v3575, %v4218
    %4220 = vmatprep.mubr.bf16.mxu0 %v3418
    %4221 = vmatmul.mubr.bf16.gmra.mxu0 %v3417
    %v4222 = vpop.f32.mrf.mxu0
    %v4223 = vadd.f32 %v3571, %v4222
    %v4224 = vpop.f32.mrf.mxu0
    %v4225 = vadd.f32 %v3575, %v4224
    %v4226 = vpop.f32.mrf.mxu0
    %v4227 = vadd.f32 %v3571, %v4226
    %v4228 = vpop.f32.mrf.mxu0
    %v4229 = vadd.f32 %v3575, %v4228
    %4230 = vdwg.mxu0
    %4231 = vmatprep.subr.bf16.mxu0 %v4013
    %4232 = vmatpush1.bf16.msra.mxu0 %v4012
    %4233 = vmatprep.subr.bf16.mxu0 %v4010
    %4234 = vmatpush1.bf16.msra.mxu0 %v4009
    %4235 = vmatprep.subr.bf16.mxu0 %v4007
    %4236 = vmatpush1.bf16.msra.mxu0 %v4006
    %4237 = vmatprep.subr.bf16.mxu0 %v4004
    %4238 = vmatpush1.bf16.msra.mxu0 %v4003
    %4239 = vmatprep.subr.bf16.mxu0 %v4001
    %4240 = vmatpush1.bf16.msra.mxu0 %v4000
    %4241 = vmatprep.subr.bf16.mxu0 %v3998
    %4242 = vmatpush1.bf16.msra.mxu0 %v3997
    %4243 = vmatprep.subr.bf16.mxu0 %v3995
    %4244 = vmatpush1.bf16.msra.mxu0 %v3994
    %4245 = vmatprep.subr.bf16.mxu0 %v3992
    %4246 = vmatpush1.bf16.msra.mxu0 %v3991
    %4247 = vmatprep.subr.bf16.mxu0 %v4037
    %4248 = vmatpush2.bf16.msra.mxu0 %v4036
    %4249 = vmatprep.subr.bf16.mxu0 %v4034
    %4250 = vmatpush2.bf16.msra.mxu0 %v4033
    %4251 = vmatprep.subr.bf16.mxu0 %v4031
    %4252 = vmatpush2.bf16.msra.mxu0 %v4030
    %4253 = vmatprep.subr.bf16.mxu0 %v4028
    %4254 = vmatpush2.bf16.msra.mxu0 %v4027
    %4255 = vmatprep.subr.bf16.mxu0 %v4025
    %4256 = vmatpush2.bf16.msra.mxu0 %v4024
    %4257 = vmatprep.subr.bf16.mxu0 %v4022
    %4258 = vmatpush2.bf16.msra.mxu0 %v4021
    %4259 = vmatprep.subr.bf16.mxu0 %v4019
    %4260 = vmatpush2.bf16.msra.mxu0 %v4018
    %4261 = vmatprep.subr.bf16.mxu0 %v4016
    %4262 = vmatpush2.bf16.msra.mxu0 %v4015
    %4263 = vmatprep.mubr.bf16.mxu0 %v3410
    %4264 = vmatmul.mubr.bf16.gmra.mxu0 %v3409
    %v4265 = vpop.f32.mrf.mxu0
    %v4266 = vadd.f32 %v4203, %v4265
    %v4267 = vpop.f32.mrf.mxu0
    %v4268 = vadd.f32 %v4205, %v4267
    %v4269 = vpop.f32.mrf.mxu0
    %v4270 = vadd.f32 %v4207, %v4269
    %v4271 = vpop.f32.mrf.mxu0
    %v4272 = vadd.f32 %v4209, %v4271
    %4273 = vmatprep.mubr.bf16.mxu0 %v3415
    %4274 = vmatmul.mubr.bf16.gmra.mxu0 %v3414
    %v4275 = vpop.f32.mrf.mxu0
    %v4276 = vadd.f32 %v4213, %v4275
    %v4277 = vpop.f32.mrf.mxu0
    %v4278 = vadd.f32 %v4215, %v4277
    %v4279 = vpop.f32.mrf.mxu0
    %v4280 = vadd.f32 %v4217, %v4279
    %v4281 = vpop.f32.mrf.mxu0
    %v4282 = vadd.f32 %v4219, %v4281
    %4283 = vmatprep.mubr.bf16.mxu0 %v3420
    %4284 = vmatmul.mubr.bf16.gmra.mxu0 %v3419
    %v4285 = vpop.f32.mrf.mxu0
    %v4286 = vadd.f32 %v4223, %v4285
    %v4287 = vpop.f32.mrf.mxu0
    %v4288 = vadd.f32 %v4225, %v4287
    %v4289 = vpop.f32.mrf.mxu0
    %v4290 = vadd.f32 %v4227, %v4289
    %v4291 = vpop.f32.mrf.mxu0
    %v4292 = vadd.f32 %v4229, %v4291
    %4293 = vdwg.mxu0
    %4294 = vmatprep.subr.bf16.mxu0 0
    %4295 = vmatpush1.bf16.msra.mxu0 0
    %4296 = vmatprep.subr.bf16.mxu0 0
    %4297 = vmatpush1.bf16.msra.mxu0 0
    %4298 = vmatprep.subr.bf16.mxu0 0
    %4299 = vmatpush1.bf16.msra.mxu0 0
    %4300 = vmatprep.subr.bf16.mxu0 0
    %4301 = vmatpush1.bf16.msra.mxu0 0
    %4302 = vmatprep.subr.bf16.mxu0 %v4049
    %4303 = vmatpush1.bf16.msra.mxu0 %v4048
    %4304 = vmatprep.subr.bf16.mxu0 %v4046
    %4305 = vmatpush1.bf16.msra.mxu0 %v4045
    %4306 = vmatprep.subr.bf16.mxu0 %v4043
    %4307 = vmatpush1.bf16.msra.mxu0 %v4042
    %4308 = vmatprep.subr.bf16.mxu0 %v4040
    %4309 = vmatpush1.bf16.msra.mxu0 %v4039
    %4310 = vmatprep.subr.bf16.mxu0 0
    %4311 = vmatpush2.bf16.msra.mxu0 0
    %4312 = vmatprep.subr.bf16.mxu0 0
    %4313 = vmatpush2.bf16.msra.mxu0 0
    %4314 = vmatprep.subr.bf16.mxu0 0
    %4315 = vmatpush2.bf16.msra.mxu0 0
    %4316 = vmatprep.subr.bf16.mxu0 0
    %4317 = vmatpush2.bf16.msra.mxu0 0
    %4318 = vmatprep.subr.bf16.mxu0 0
    %4319 = vmatpush2.bf16.msra.mxu0 0
    %4320 = vmatprep.subr.bf16.mxu0 0
    %4321 = vmatpush2.bf16.msra.mxu0 0
    %4322 = vmatprep.subr.bf16.mxu0 0
    %4323 = vmatpush2.bf16.msra.mxu0 0
    %4324 = vmatprep.subr.bf16.mxu0 0
    %4325 = vmatpush2.bf16.msra.mxu0 0
    %4326 = vmatprep.mubr.bf16.mxu0 0
    %4327 = vmatmul.mubr.bf16.gmra.mxu0 %v4160
    %v4328 = vpop.f32.mrf.mxu0
    %v4329 = vadd.f32 %v4266, %v4328
    %v4330 = vpop.f32.mrf.mxu0
    %v4331 = vadd.f32 %v4268, %v4330
    %v4332 = vpop.f32.mrf.mxu0
    %v4333 = vadd.f32 %v4270, %v4332
    %v4334 = vpop.f32.mrf.mxu0
    %v4335 = vadd.f32 %v4272, %v4334
    %4336 = vmatprep.mubr.bf16.mxu0 0
    %4337 = vmatmul.mubr.bf16.gmra.mxu0 %v4163
    %v4338 = vpop.f32.mrf.mxu0
    %v4339 = vadd.f32 %v4276, %v4338
    %v4340 = vpop.f32.mrf.mxu0
    %v4341 = vadd.f32 %v4278, %v4340
    %v4342 = vpop.f32.mrf.mxu0
    %v4343 = vadd.f32 %v4280, %v4342
    %v4344 = vpop.f32.mrf.mxu0
    %v4345 = vadd.f32 %v4282, %v4344
    %4346 = vmatprep.mubr.bf16.mxu0 0
    %4347 = vmatmul.mubr.bf16.gmra.mxu0 %v4166
    %v4348 = vpop.f32.mrf.mxu0
    %v4349 = vadd.f32 %v4286, %v4348
    %v4350 = vpop.f32.mrf.mxu0
    %v4351 = vadd.f32 %v4288, %v4350
    %v4352 = vpop.f32.mrf.mxu0
    %v4353 = vadd.f32 %v4290, %v4352
    %v4354 = vpop.f32.mrf.mxu0
    %v4355 = vadd.f32 %v4292, %v4354
    %4356 = vdwg.mxu0
    %4357 = vmatprep.subr.bf16.mxu0 0
    %4358 = vmatpush1.bf16.msra.mxu0 %v3966
    %4359 = vmatprep.subr.bf16.mxu0 0
    %4360 = vmatpush1.bf16.msra.mxu0 %v3963
    %4361 = vmatprep.subr.bf16.mxu0 0
    %4362 = vmatpush1.bf16.msra.mxu0 %v3960
    %4363 = vmatprep.subr.bf16.mxu0 0
    %4364 = vmatpush1.bf16.msra.mxu0 %v3957
    %4365 = vmatprep.subr.bf16.mxu0 0
    %4366 = vmatpush1.bf16.msra.mxu0 %v3954
    %4367 = vmatprep.subr.bf16.mxu0 0
    %4368 = vmatpush1.bf16.msra.mxu0 %v3951
    %4369 = vmatprep.subr.bf16.mxu0 0
    %4370 = vmatpush1.bf16.msra.mxu0 %v3948
    %4371 = vmatprep.subr.bf16.mxu0 0
    %4372 = vmatpush1.bf16.msra.mxu0 %v3945
    %4373 = vmatprep.subr.bf16.mxu0 0
    %4374 = vmatpush2.bf16.msra.mxu0 %v3990
    %4375 = vmatprep.subr.bf16.mxu0 0
    %4376 = vmatpush2.bf16.msra.mxu0 %v3987
    %4377 = vmatprep.subr.bf16.mxu0 0
    %4378 = vmatpush2.bf16.msra.mxu0 %v3984
    %4379 = vmatprep.subr.bf16.mxu0 0
    %4380 = vmatpush2.bf16.msra.mxu0 %v3981
    %4381 = vmatprep.subr.bf16.mxu0 0
    %4382 = vmatpush2.bf16.msra.mxu0 %v3978
    %4383 = vmatprep.subr.bf16.mxu0 0
    %4384 = vmatpush2.bf16.msra.mxu0 %v3975
    %4385 = vmatprep.subr.bf16.mxu0 0
    %4386 = vmatpush2.bf16.msra.mxu0 %v3972
    %4387 = vmatprep.subr.bf16.mxu0 0
    %4388 = vmatpush2.bf16.msra.mxu0 %v3969
    %4389 = vmatprep.mubr.bf16.mxu0 %v3408
    %4390 = vmatmul.mubr.bf16.gmra.mxu0 %v3407
    %v4391 = vpop.f32.mrf.mxu0
    %v4392 = vadd.f32 %v3579, %v4391
    %v4393 = vpop.f32.mrf.mxu0
    %v4394 = vpop.f32.mrf.mxu0
    %v4395 = vadd.f32 %v3579, %v4394
    %v4396 = vpop.f32.mrf.mxu0
    %4397 = vmatprep.mubr.bf16.mxu0 %v3413
    %4398 = vmatmul.mubr.bf16.gmra.mxu0 %v3412
    %v4399 = vpop.f32.mrf.mxu0
    %v4400 = vadd.f32 %v3579, %v4399
    %v4401 = vpop.f32.mrf.mxu0
    %v4402 = vpop.f32.mrf.mxu0
    %v4403 = vadd.f32 %v3579, %v4402
    %v4404 = vpop.f32.mrf.mxu0
    %4405 = vmatprep.mubr.bf16.mxu0 %v3418
    %4406 = vmatmul.mubr.bf16.gmra.mxu0 %v3417
    %v4407 = vpop.f32.mrf.mxu0
    %v4408 = vadd.f32 %v3579, %v4407
    %v4409 = vpop.f32.mrf.mxu0
    %v4410 = vpop.f32.mrf.mxu0
    %v4411 = vadd.f32 %v3579, %v4410
    %v4412 = vpop.f32.mrf.mxu0
    %4413 = vdwg.mxu0
    %4414 = vmatprep.subr.bf16.mxu0 0
    %4415 = vmatpush1.bf16.msra.mxu0 %v4014
    %4416 = vmatprep.subr.bf16.mxu0 0
    %4417 = vmatpush1.bf16.msra.mxu0 %v4011
    %4418 = vmatprep.subr.bf16.mxu0 0
    %4419 = vmatpush1.bf16.msra.mxu0 %v4008
    %4420 = vmatprep.subr.bf16.mxu0 0
    %4421 = vmatpush1.bf16.msra.mxu0 %v4005
    %4422 = vmatprep.subr.bf16.mxu0 0
    %4423 = vmatpush1.bf16.msra.mxu0 %v4002
    %4424 = vmatprep.subr.bf16.mxu0 0
    %4425 = vmatpush1.bf16.msra.mxu0 %v3999
    %4426 = vmatprep.subr.bf16.mxu0 0
    %4427 = vmatpush1.bf16.msra.mxu0 %v3996
    %4428 = vmatprep.subr.bf16.mxu0 0
    %4429 = vmatpush1.bf16.msra.mxu0 %v3993
    %4430 = vmatprep.subr.bf16.mxu0 0
    %4431 = vmatpush2.bf16.msra.mxu0 %v4038
    %4432 = vmatprep.subr.bf16.mxu0 0
    %4433 = vmatpush2.bf16.msra.mxu0 %v4035
    %4434 = vmatprep.subr.bf16.mxu0 0
    %4435 = vmatpush2.bf16.msra.mxu0 %v4032
    %4436 = vmatprep.subr.bf16.mxu0 0
    %4437 = vmatpush2.bf16.msra.mxu0 %v4029
    %4438 = vmatprep.subr.bf16.mxu0 0
    %4439 = vmatpush2.bf16.msra.mxu0 %v4026
    %4440 = vmatprep.subr.bf16.mxu0 0
    %4441 = vmatpush2.bf16.msra.mxu0 %v4023
    %4442 = vmatprep.subr.bf16.mxu0 0
    %4443 = vmatpush2.bf16.msra.mxu0 %v4020
    %4444 = vmatprep.subr.bf16.mxu0 0
    %4445 = vmatpush2.bf16.msra.mxu0 %v4017
    %4446 = vmatprep.mubr.bf16.mxu0 %v3410
    %4447 = vmatmul.mubr.bf16.gmra.mxu0 %v3409
    %v4448 = vpop.f32.mrf.mxu0
    %v4449 = vadd.f32 %v4392, %v4448
    %v4450 = vpop.f32.mrf.mxu0
    %v4451 = vpop.f32.mrf.mxu0
    %v4452 = vadd.f32 %v4395, %v4451
    %v4453 = vpop.f32.mrf.mxu0
    %4454 = vmatprep.mubr.bf16.mxu0 %v3415
    %4455 = vmatmul.mubr.bf16.gmra.mxu0 %v3414
    %v4456 = vpop.f32.mrf.mxu0
    %v4457 = vadd.f32 %v4400, %v4456
    %v4458 = vpop.f32.mrf.mxu0
    %v4459 = vpop.f32.mrf.mxu0
    %v4460 = vadd.f32 %v4403, %v4459
    %v4461 = vpop.f32.mrf.mxu0
    %4462 = vmatprep.mubr.bf16.mxu0 %v3420
    %4463 = vmatmul.mubr.bf16.gmra.mxu0 %v3419
    %v4464 = vpop.f32.mrf.mxu0
    %v4465 = vadd.f32 %v4408, %v4464
    %v4466 = vpop.f32.mrf.mxu0
    %v4467 = vpop.f32.mrf.mxu0
    %v4468 = vadd.f32 %v4411, %v4467
    %v4469 = vpop.f32.mrf.mxu0
    %4470 = vdwg.mxu0
    %4471 = vmatprep.subr.bf16.mxu0 0
    %4472 = vmatpush1.bf16.msra.mxu0 0
    %4473 = vmatprep.subr.bf16.mxu0 0
    %4474 = vmatpush1.bf16.msra.mxu0 0
    %4475 = vmatprep.subr.bf16.mxu0 0
    %4476 = vmatpush1.bf16.msra.mxu0 0
    %4477 = vmatprep.subr.bf16.mxu0 0
    %4478 = vmatpush1.bf16.msra.mxu0 0
    %4479 = vmatprep.subr.bf16.mxu0 0
    %4480 = vmatpush1.bf16.msra.mxu0 %v4050
    %4481 = vmatprep.subr.bf16.mxu0 0
    %4482 = vmatpush1.bf16.msra.mxu0 %v4047
    %4483 = vmatprep.subr.bf16.mxu0 0
    %4484 = vmatpush1.bf16.msra.mxu0 %v4044
    %4485 = vmatprep.subr.bf16.mxu0 0
    %4486 = vmatpush1.bf16.msra.mxu0 %v4041
    %4487 = vmatprep.subr.bf16.mxu0 0
    %4488 = vmatpush2.bf16.msra.mxu0 0
    %4489 = vmatprep.subr.bf16.mxu0 0
    %4490 = vmatpush2.bf16.msra.mxu0 0
    %4491 = vmatprep.subr.bf16.mxu0 0
    %4492 = vmatpush2.bf16.msra.mxu0 0
    %4493 = vmatprep.subr.bf16.mxu0 0
    %4494 = vmatpush2.bf16.msra.mxu0 0
    %4495 = vmatprep.subr.bf16.mxu0 0
    %4496 = vmatpush2.bf16.msra.mxu0 0
    %4497 = vmatprep.subr.bf16.mxu0 0
    %4498 = vmatpush2.bf16.msra.mxu0 0
    %4499 = vmatprep.subr.bf16.mxu0 0
    %4500 = vmatpush2.bf16.msra.mxu0 0
    %4501 = vmatprep.subr.bf16.mxu0 0
    %4502 = vmatpush2.bf16.msra.mxu0 0
    %4503 = vmatprep.mubr.bf16.mxu0 0
    %4504 = vmatmul.mubr.bf16.gmra.mxu0 %v4160
    %v4505 = vpop.f32.mrf.mxu0
    %v4506 = vadd.f32 %v4449, %v4505
    %v4507 = vpop.f32.mrf.mxu0
    %v4508 = vpop.f32.mrf.mxu0
    %v4509 = vadd.f32 %v4452, %v4508
    %v4510 = vpop.f32.mrf.mxu0
    %4511 = vmatprep.mubr.bf16.mxu0 0
    %4512 = vmatmul.mubr.bf16.gmra.mxu0 %v4163
    %v4513 = vpop.f32.mrf.mxu0
    %v4514 = vadd.f32 %v4457, %v4513
    %v4515 = vpop.f32.mrf.mxu0
    %v4516 = vpop.f32.mrf.mxu0
    %v4517 = vadd.f32 %v4460, %v4516
    %v4518 = vpop.f32.mrf.mxu0
    %4519 = vmatprep.mubr.bf16.mxu0 0
    %4520 = vmatmul.mubr.bf16.gmra.mxu0 %v4166
    %v4521 = vpop.f32.mrf.mxu0
    %v4522 = vadd.f32 %v4465, %v4521
    %v4523 = vpop.f32.mrf.mxu0
    %v4524 = vpop.f32.mrf.mxu0
    %v4525 = vadd.f32 %v4468, %v4524
    %v4526 = vpop.f32.mrf.mxu0
    %4527 = vdwg.mxu0
    %v4528 = vmax.f32 %v4329, 0.0
    %v4529 = vmax.f32 %v4331, 0.0
    %v4530 = vmax.f32 %v4506, 0.0
    %v4531 = vmax.f32 %v4333, 0.0
    %v4532 = vmax.f32 %v4335, 0.0
    %v4533 = vmax.f32 %v4509, 0.0
    %v4534 = vmax.f32 %v4339, 0.0
    %v4535 = vmax.f32 %v4341, 0.0
    %v4536 = vmax.f32 %v4514, 0.0
    %v4537 = vmax.f32 %v4343, 0.0
    %v4538 = vmax.f32 %v4345, 0.0
    %v4539 = vmax.f32 %v4517, 0.0
    %v4540 = vmax.f32 %v4349, 0.0
    %v4541 = vmax.f32 %v4351, 0.0
    %v4542 = vmax.f32 %v4522, 0.0
    %v4543 = vmax.f32 %v4353, 0.0
    %v4544 = vmax.f32 %v4355, 0.0
    %v4545 = vmax.f32 %v4525, 0.0
    %s4546 = smul.u32 4, 144
    %s4547 = smul.u32 %s4546, 3
    %s4548 = sshll.u32 %s4547, 4
    %4549 = dma.done %s389, %s4548
    %4550 = vst [vmem:[#allocation2 + $0x18] sm:$0xff] %v4528
    %4551 = vst [vmem:[#allocation2 + $0x20] sm:$0xff] %v4529
    %4552 = vst [vmem:[#allocation2 + $0x28] sm:$0xff] %v4530
    %4553 = vst [vmem:[#allocation2 + $0x60] sm:$0xff] %v4531
    %4554 = vst [vmem:[#allocation2 + $0x68] sm:$0xff] %v4532
    %4555 = vst [vmem:[#allocation2 + $0x70] sm:$0xff] %v4533
    %4556 = vst [vmem:[#allocation2 + $0xa8] sm:$0xff] %v4534
    %4557 = vst [vmem:[#allocation2 + $0xb0] sm:$0xff] %v4535
    %4558 = vst [vmem:[#allocation2 + $0xb8] sm:$0xff] %v4536
    %4559 = vst [vmem:[#allocation2 + $0xf0] sm:$0xff] %v4537
    %4560 = vst [vmem:[#allocation2 + $0xf8] sm:$0xff] %v4538
    %4561 = vst [vmem:[#allocation2 + $0x100] sm:$0xff] %v4539
    %4562 = vst [vmem:[#allocation2 + $0x138] sm:$0xff] %v4540
    %4563 = vst [vmem:[#allocation2 + $0x140] sm:$0xff] %v4541
    %4564 = vst [vmem:[#allocation2 + $0x148] sm:$0xff] %v4542
    %4565 = vst [vmem:[#allocation2 + $0x180] sm:$0xff] %v4543
    %4566 = vst [vmem:[#allocation2 + $0x188] sm:$0xff] %v4544
    %4567 = vst [vmem:[#allocation2 + $0x190] sm:$0xff] %v4545
    %v4568 = vld [vmem:[#allocation2 + $0x18] sm:$0xff]
    %v4569 = vld [vmem:[#allocation2 + $0x20] sm:$0xff]
    %v4570 = vld [vmem:[#allocation2 + $0x28] sm:$0xff]
    %v4571 = vld [vmem:[#allocation2 + $0x60] sm:$0xff]
    %v4572 = vld [vmem:[#allocation2 + $0x68] sm:$0xff]
    %v4573 = vld [vmem:[#allocation2 + $0x70] sm:$0xff]
    %v4574 = vld [vmem:[#allocation2 + $0xa8] sm:$0xff]
    %v4575 = vld [vmem:[#allocation2 + $0xb0] sm:$0xff]
    %v4576 = vld [vmem:[#allocation2 + $0xb8] sm:$0xff]
    %v4577 = vld [vmem:[#allocation2 + $0xf0] sm:$0xff]
    %v4578 = vld [vmem:[#allocation2 + $0xf8] sm:$0xff]
    %v4579 = vld [vmem:[#allocation2 + $0x100] sm:$0xff]
    %v4580 = vld [vmem:[#allocation2 + $0x138] sm:$0xff]
    %v4581 = vld [vmem:[#allocation2 + $0x140] sm:$0xff]
    %v4582 = vld [vmem:[#allocation2 + $0x148] sm:$0xff]
    %4583 = vst [vmem:[#allocation2 + $0x48] sm:$0xff] %v4568
    %4584 = vst [vmem:[#allocation2 + $0x50] sm:$0xff] %v4569
    %4585 = vst [vmem:[#allocation2 + $0x58] sm:$0xff] %v4570
    %4586 = vst [vmem:[#allocation2 + $0x90] sm:$0xff] %v4571
    %4587 = vst [vmem:[#allocation2 + $0x98] sm:$0xff] %v4572
    %4588 = vst [vmem:[#allocation2 + $0xa0] sm:$0xff] %v4573
    %4589 = vst [vmem:[#allocation2 + $0xd8] sm:$0xff] %v4574
    %4590 = vst [vmem:[#allocation2 + $0xe0] sm:$0xff] %v4575
    %4591 = vst [vmem:[#allocation2 + $0xe8] sm:$0xff] %v4576
    %4592 = vst [vmem:[#allocation2 + $0x120] sm:$0xff] %v4577
    %4593 = vst [vmem:[#allocation2 + $0x128] sm:$0xff] %v4578
    %4594 = vst [vmem:[#allocation2 + $0x130] sm:$0xff] %v4579
    %4595 = vst [vmem:[#allocation2 + $0x168] sm:$0xff] %v4580
    %4596 = vst [vmem:[#allocation2 + $0x170] sm:$0xff] %v4581
    %4597 = vst [vmem:[#allocation2 + $0x178] sm:$0xff] %v4582
    %v4598 = vld [vmem:[#allocation2 + $0x60] sm:$0xff]
    %v4599 = vld [vmem:[#allocation2 + $0x68] sm:$0xff]
    %v4600 = vld [vmem:[#allocation2 + $0x70] sm:$0xff]
    %v4601 = vld [vmem:[#allocation2 + $0xa8] sm:$0xff]
    %v4602 = vld [vmem:[#allocation2 + $0xb0] sm:$0xff]
    %v4603 = vld [vmem:[#allocation2 + $0xb8] sm:$0xff]
    %v4604 = vld [vmem:[#allocation2 + $0xf0] sm:$0xff]
    %v4605 = vld [vmem:[#allocation2 + $0xf8] sm:$0xff]
    %v4606 = vld [vmem:[#allocation2 + $0x100] sm:$0xff]
    %v4607 = vld [vmem:[#allocation2 + $0x138] sm:$0xff]
    %v4608 = vld [vmem:[#allocation2 + $0x140] sm:$0xff]
    %v4609 = vld [vmem:[#allocation2 + $0x148] sm:$0xff]
    %v4610 = vld [vmem:[#allocation2 + $0x180] sm:$0xff]
    %v4611 = vld [vmem:[#allocation2 + $0x188] sm:$0xff]
    %v4612 = vld [vmem:[#allocation2 + $0x190] sm:$0xff]
    %4613 = vst [vmem:[#allocation2 + $0x30] sm:$0xff] %v4598
    %4614 = vst [vmem:[#allocation2 + $0x38] sm:$0xff] %v4599
    %4615 = vst [vmem:[#allocation2 + $0x40] sm:$0xff] %v4600
    %4616 = vst [vmem:[#allocation2 + $0x78] sm:$0xff] %v4601
    %4617 = vst [vmem:[#allocation2 + $0x80] sm:$0xff] %v4602
    %4618 = vst [vmem:[#allocation2 + $0x88] sm:$0xff] %v4603
    %4619 = vst [vmem:[#allocation2 + $0xc0] sm:$0xff] %v4604
    %4620 = vst [vmem:[#allocation2 + $0xc8] sm:$0xff] %v4605
    %4621 = vst [vmem:[#allocation2 + $0xd0] sm:$0xff] %v4606
    %4622 = vst [vmem:[#allocation2 + $0x108] sm:$0xff] %v4607
    %4623 = vst [vmem:[#allocation2 + $0x110] sm:$0xff] %v4608
    %4624 = vst [vmem:[#allocation2 + $0x118] sm:$0xff] %v4609
    %4625 = vst [vmem:[#allocation2 + $0x150] sm:$0xff] %v4610
    %4626 = vst [vmem:[#allocation2 + $0x158] sm:$0xff] %v4611
    %4627 = vst [vmem:[#allocation2 + $0x160] sm:$0xff] %v4612
    %4628 = vst [vmem:[#allocation2] sm:$0xff] 0.0
    %4629 = vst [vmem:[#allocation2 + $0x8] sm:$0xff] 0.0
    %4630 = vst [vmem:[#allocation2 + $0x10] sm:$0xff] 0.0
    %4631 = vst [vmem:[#allocation2 + $0x198] sm:$0xff] 0.0
    %4632 = vst [vmem:[#allocation2 + $0x1a0] sm:$0xff] 0.0
    %4633 = vst [vmem:[#allocation2 + $0x1a8] sm:$0xff] 0.0
    %v4634 = vld [vmem:[#allocation2] sm:$0xff]
    %v4635 = vld [vmem:[#allocation2 + $0x8] sm:$0xff]
    %v4636 = vld [vmem:[#allocation2 + $0x10] sm:$0xff]
    %v4637 = vld [vmem:[#allocation2 + $0x18] sm:$0xff]
    %v4638 = vld [vmem:[#allocation2 + $0x20] sm:$0xff]
    %v4639 = vld [vmem:[#allocation2 + $0x28] sm:$0xff]
    %v4640 = vld [vmem:[#allocation2 + $0x30] sm:$0xff]
    %v4641 = vld [vmem:[#allocation2 + $0x38] sm:$0xff]
    %v4642 = vld [vmem:[#allocation2 + $0x40] sm:$0xff]
    %v4643 = vld [vmem:[#allocation2 + $0x48] sm:$0xff]
    %v4644 = vld [vmem:[#allocation2 + $0x50] sm:$0xff]
    %v4645 = vld [vmem:[#allocation2 + $0x58] sm:$0xff]
    %v4646 = vld [vmem:[#allocation2 + $0x60] sm:$0xff]
    %v4647 = vld [vmem:[#allocation2 + $0x68] sm:$0xff]
    %v4648 = vld [vmem:[#allocation2 + $0x70] sm:$0xff]
    %v4649 = vld [vmem:[#allocation2 + $0x78] sm:$0xff]
    %v4650 = vld [vmem:[#allocation2 + $0x80] sm:$0xff]
    %v4651 = vld [vmem:[#allocation2 + $0x88] sm:$0xff]
    %v4652 = vld [vmem:[#allocation2 + $0x90] sm:$0xff]
    %v4653 = vld [vmem:[#allocation2 + $0x98] sm:$0xff]
    %v4654 = vld [vmem:[#allocation2 + $0xa0] sm:$0xff]
    %v4655 = vld [vmem:[#allocation2 + $0xa8] sm:$0xff]
    %v4656 = vld [vmem:[#allocation2 + $0xb0] sm:$0xff]
    %v4657 = vld [vmem:[#allocation2 + $0xb8] sm:$0xff]
    %v4658 = vld [vmem:[#allocation2 + $0xc0] sm:$0xff]
    %v4659 = vld [vmem:[#allocation2 + $0xc8] sm:$0xff]
    %v4660 = vld [vmem:[#allocation2 + $0xd0] sm:$0xff]
    %v4661 = vld [vmem:[#allocation2 + $0xd8] sm:$0xff]
    %v4662 = vld [vmem:[#allocation2 + $0xe0] sm:$0xff]
    %v4663 = vld [vmem:[#allocation2 + $0xe8] sm:$0xff]
    %v4664 = vld [vmem:[#allocation2 + $0xf0] sm:$0xff]
    %v4665 = vld [vmem:[#allocation2 + $0xf8] sm:$0xff]
    %v4666 = vld [vmem:[#allocation2 + $0x100] sm:$0xff]
    %v4667 = vld [vmem:[#allocation2 + $0x108] sm:$0xff]
    %v4668 = vld [vmem:[#allocation2 + $0x110] sm:$0xff]
    %v4669 = vld [vmem:[#allocation2 + $0x118] sm:$0xff]
    %v4670 = vld [vmem:[#allocation2 + $0x120] sm:$0xff]
    %v4671 = vld [vmem:[#allocation2 + $0x128] sm:$0xff]
    %v4672 = vld [vmem:[#allocation2 + $0x130] sm:$0xff]
    %v4673 = vld [vmem:[#allocation2 + $0x138] sm:$0xff]
    %v4674 = vld [vmem:[#allocation2 + $0x140] sm:$0xff]
    %v4675 = vld [vmem:[#allocation2 + $0x148] sm:$0xff]
    %v4676 = vld [vmem:[#allocation2 + $0x150] sm:$0xff]
    %v4677 = vld [vmem:[#allocation2 + $0x158] sm:$0xff]
    %v4678 = vld [vmem:[#allocation2 + $0x160] sm:$0xff]
    %v4679 = vld [vmem:[#allocation2 + $0x168] sm:$0xff]
    %v4680 = vld [vmem:[#allocation2 + $0x170] sm:$0xff]
    %v4681 = vld [vmem:[#allocation2 + $0x178] sm:$0xff]
    %v4682 = vld [vmem:[#allocation2 + $0x180] sm:$0xff]
    %v4683 = vld [vmem:[#allocation2 + $0x188] sm:$0xff]
    %v4684 = vld [vmem:[#allocation2 + $0x190] sm:$0xff]
    %v4685 = vld [vmem:[#allocation2 + $0x198] sm:$0xff]
    %v4686 = vld [vmem:[#allocation2 + $0x1a0] sm:$0xff]
    %v4687 = vld [vmem:[#allocation2 + $0x1a8] sm:$0xff]
    %v4688 = vpack.c.bf16 %v4643, %v4634
    %v4689 = vpack.c.bf16 %v4644, %v4635
    %v4690 = vpack.c.bf16 %v4645, %v4636
    %v4691 = vpack.c.bf16 %v4646, %v4637
    %v4692 = vpack.c.bf16 %v4647, %v4638
    %v4693 = vpack.c.bf16 %v4648, %v4639
    %v4694 = vpack.c.bf16 %v4649, %v4640
    %v4695 = vpack.c.bf16 %v4650, %v4641
    %v4696 = vpack.c.bf16 %v4651, %v4642
    %v4697 = vpack.c.bf16 %v4661, %v4652
    %v4698 = vpack.c.bf16 %v4662, %v4653
    %v4699 = vpack.c.bf16 %v4663, %v4654
    %v4700 = vpack.c.bf16 %v4664, %v4655
    %v4701 = vpack.c.bf16 %v4665, %v4656
    %v4702 = vpack.c.bf16 %v4666, %v4657
    %v4703 = vpack.c.bf16 %v4667, %v4658
    %v4704 = vpack.c.bf16 %v4668, %v4659
    %v4705 = vpack.c.bf16 %v4669, %v4660
    %v4706 = vpack.c.bf16 %v4679, %v4670
    %v4707 = vpack.c.bf16 %v4680, %v4671
    %v4708 = vpack.c.bf16 %v4681, %v4672
    %v4709 = vpack.c.bf16 %v4682, %v4673
    %v4710 = vpack.c.bf16 %v4683, %v4674
    %v4711 = vpack.c.bf16 %v4684, %v4675
    %v4712 = vpack.c.bf16 %v4685, %v4676
    %v4713 = vpack.c.bf16 %v4686, %v4677
    %v4714 = vpack.c.bf16 %v4687, %v4678
    %v4715 = vld [vmem:[#allocation5] sm:$0xff]
    %v4716 = vld [vmem:[#allocation5 + $0x8] sm:$0xf]
    %v4717 = vld [vmem:[#allocation5 + $0xc] sm:$0xff]
    %v4718 = vld [vmem:[#allocation5 + $0x14] sm:$0xf]
    %v4719 = vld [vmem:[#allocation5 + $0x18] sm:$0xff]
    %v4720 = vld [vmem:[#allocation5 + $0x20] sm:$0xf]
    %v4721 = vld [vmem:[#allocation5 + $0x24] sm:$0xff]
    %v4722 = vld [vmem:[#allocation5 + $0x2c] sm:$0xf]
    %v4723 = vld [vmem:[#allocation5 + $0x30] sm:$0xff]
    %v4724 = vld [vmem:[#allocation5 + $0x38] sm:$0xf]
    %v4725 = vld [vmem:[#allocation5 + $0x3c] sm:$0xff]
    %v4726 = vld [vmem:[#allocation5 + $0x44] sm:$0xf]
    %v4727 = vld [vmem:[#allocation5 + $0x48] sm:$0xff]
    %v4728 = vld [vmem:[#allocation5 + $0x50] sm:$0xf]
    %v4729 = vld [vmem:[#allocation5 + $0x54] sm:$0xff]
    %v4730 = vld [vmem:[#allocation5 + $0x5c] sm:$0xf]
    %v4731 = vld [vmem:[#allocation5 + $0x60] sm:$0xff]
    %v4732 = vld [vmem:[#allocation5 + $0x68] sm:$0xf]
    %v4733 = vld [vmem:[#allocation5 + $0x6c] sm:$0xff]
    %v4734 = vld [vmem:[#allocation5 + $0x74] sm:$0xf]
    %v4735 = vld [vmem:[#allocation5 + $0x78] sm:$0xff]
    %v4736 = vld [vmem:[#allocation5 + $0x80] sm:$0xf]
    %v4737 = vld [vmem:[#allocation5 + $0x84] sm:$0xff]
    %v4738 = vld [vmem:[#allocation5 + $0x8c] sm:$0xf]
    %v4739 = vld [vmem:[#allocation5 + $0x90] sm:$0xff]
    %v4740 = vld [vmem:[#allocation5 + $0x98] sm:$0xf]
    %v4741 = vld [vmem:[#allocation5 + $0x9c] sm:$0xff]
    %v4742 = vld [vmem:[#allocation5 + $0xa4] sm:$0xf]
    %v4743 = vld [vmem:[#allocation5 + $0xa8] sm:$0xff]
    %v4744 = vld [vmem:[#allocation5 + $0xb0] sm:$0xf]
    %v4745 = vld [vmem:[#allocation5 + $0xb4] sm:$0xff]
    %v4746 = vld [vmem:[#allocation5 + $0xbc] sm:$0xf]
    %v4747 = vld [vmem:[#allocation5 + $0xc0] sm:$0xff]
    %v4748 = vld [vmem:[#allocation5 + $0xc8] sm:$0xf]
    %v4749 = vld [vmem:[#allocation5 + $0xcc] sm:$0xff]
    %v4750 = vld [vmem:[#allocation5 + $0xd4] sm:$0xf]
    %v4751 = vld [vmem:[#allocation5 + $0xd8] sm:$0xff]
    %v4752 = vld [vmem:[#allocation5 + $0xe0] sm:$0xf]
    %v4753 = vld [vmem:[#allocation5 + $0xe4] sm:$0xff]
    %v4754 = vld [vmem:[#allocation5 + $0xec] sm:$0xf]
    %v4755 = vld [vmem:[#allocation5 + $0xf0] sm:$0xff]
    %v4756 = vld [vmem:[#allocation5 + $0xf8] sm:$0xf]
    %v4757 = vld [vmem:[#allocation5 + $0xfc] sm:$0xff]
    %v4758 = vld [vmem:[#allocation5 + $0x104] sm:$0xf]
    %v4759 = vld [vmem:[#allocation5 + $0x108] sm:$0xff]
    %v4760 = vld [vmem:[#allocation5 + $0x110] sm:$0xf]
    %v4761 = vld [vmem:[#allocation5 + $0x114] sm:$0xff]
    %v4762 = vld [vmem:[#allocation5 + $0x11c] sm:$0xf]
    %v4763 = vld [vmem:[#allocation5 + $0x120] sm:$0xff]
    %v4764 = vld [vmem:[#allocation5 + $0x128] sm:$0xf]
    %v4765 = vld [vmem:[#allocation5 + $0x12c] sm:$0xff]
    %v4766 = vld [vmem:[#allocation5 + $0x134] sm:$0xf]
    %v4767 = vld [vmem:[#allocation5 + $0x138] sm:$0xff]
    %v4768 = vld [vmem:[#allocation5 + $0x140] sm:$0xf]
    %v4769 = vld [vmem:[#allocation5 + $0x144] sm:$0xff]
    %v4770 = vld [vmem:[#allocation5 + $0x14c] sm:$0xf]
    %v4771 = vld [vmem:[#allocation5 + $0x150] sm:$0xff]
    %v4772 = vld [vmem:[#allocation5 + $0x158] sm:$0xf]
    %v4773 = vld [vmem:[#allocation5 + $0x15c] sm:$0xff]
    %v4774 = vld [vmem:[#allocation5 + $0x164] sm:$0xf]
    %v4775 = vld [vmem:[#allocation5 + $0x168] sm:$0xff]
    %v4776 = vld [vmem:[#allocation5 + $0x170] sm:$0xf]
    %v4777 = vld [vmem:[#allocation5 + $0x174] sm:$0xff]
    %v4778 = vld [vmem:[#allocation5 + $0x17c] sm:$0xf]
    %v4779 = vld [vmem:[#allocation5 + $0x180] sm:$0xff]
    %v4780 = vld [vmem:[#allocation5 + $0x188] sm:$0xf]
    %v4781 = vld [vmem:[#allocation5 + $0x18c] sm:$0xff]
    %v4782 = vld [vmem:[#allocation5 + $0x194] sm:$0xf]
    %v4783 = vld [vmem:[#allocation5 + $0x198] sm:$0xff]
    %v4784 = vld [vmem:[#allocation5 + $0x1a0] sm:$0xf]
    %v4785 = vld [vmem:[#allocation5 + $0x1a4] sm:$0xff]
    %v4786 = vld [vmem:[#allocation5 + $0x1ac] sm:$0xf]
    %v4787 = vld [vmem:[#allocation5 + $0x1b0] sm:$0xff]
    %v4788 = vld [vmem:[#allocation5 + $0x1b8] sm:$0xf]
    %v4789 = vld [vmem:[#allocation5 + $0x1bc] sm:$0xff]
    %v4790 = vld [vmem:[#allocation5 + $0x1c4] sm:$0xf]
    %v4791 = vld [vmem:[#allocation5 + $0x1c8] sm:$0xff]
    %v4792 = vld [vmem:[#allocation5 + $0x1d0] sm:$0xf]
    %v4793 = vld [vmem:[#allocation5 + $0x1d4] sm:$0xff]
    %v4794 = vld [vmem:[#allocation5 + $0x1dc] sm:$0xf]
    %v4795 = vld [vmem:[#allocation5 + $0x1e0] sm:$0xff]
    %v4796 = vld [vmem:[#allocation5 + $0x1e8] sm:$0xf]
    %v4797 = vld [vmem:[#allocation5 + $0x1ec] sm:$0xff]
    %v4798 = vld [vmem:[#allocation5 + $0x1f4] sm:$0xf]
    %v4799 = vld [vmem:[#allocation5 + $0x1f8] sm:$0xff]
    %v4800 = vld [vmem:[#allocation5 + $0x200] sm:$0xf]
    %v4801 = vld [vmem:[#allocation5 + $0x204] sm:$0xff]
    %v4802 = vld [vmem:[#allocation5 + $0x20c] sm:$0xf]
    %v4803 = vld [vmem:[#allocation5 + $0x210] sm:$0xff]
    %v4804 = vld [vmem:[#allocation5 + $0x218] sm:$0xf]
    %v4805 = vld [vmem:[#allocation5 + $0x21c] sm:$0xff]
    %v4806 = vld [vmem:[#allocation5 + $0x224] sm:$0xf]
    %v4807 = vld [vmem:[#allocation5 + $0x228] sm:$0xff]
    %v4808 = vld [vmem:[#allocation5 + $0x230] sm:$0xf]
    %v4809 = vld [vmem:[#allocation5 + $0x234] sm:$0xff]
    %v4810 = vld [vmem:[#allocation5 + $0x23c] sm:$0xf]
    %v4811 = vld [vmem:[#allocation5 + $0x240] sm:$0xff]
    %v4812 = vld [vmem:[#allocation5 + $0x248] sm:$0xf]
    %v4813 = vld [vmem:[#allocation5 + $0x24c] sm:$0xff]
    %v4814 = vld [vmem:[#allocation5 + $0x254] sm:$0xf]
    %v4815 = vld [vmem:[#allocation5 + $0x258] sm:$0xff]
    %v4816 = vld [vmem:[#allocation5 + $0x260] sm:$0xf]
    %v4817 = vld [vmem:[#allocation5 + $0x264] sm:$0xff]
    %v4818 = vld [vmem:[#allocation5 + $0x26c] sm:$0xf]
    %v4819 = vld [vmem:[#allocation5 + $0x270] sm:$0xff]
    %v4820 = vld [vmem:[#allocation5 + $0x278] sm:$0xf]
    %v4821 = vld [vmem:[#allocation5 + $0x27c] sm:$0xff]
    %v4822 = vld [vmem:[#allocation5 + $0x284] sm:$0xf]
    %v4823 = vld [vmem:[#allocation5 + $0x288] sm:$0xff]
    %v4824 = vld [vmem:[#allocation5 + $0x290] sm:$0xf]
    %v4825 = vld [vmem:[#allocation5 + $0x294] sm:$0xff]
    %v4826 = vld [vmem:[#allocation5 + $0x29c] sm:$0xf]
    %v4827 = vld [vmem:[#allocation5 + $0x2a0] sm:$0xff]
    %v4828 = vld [vmem:[#allocation5 + $0x2a8] sm:$0xf]
    %v4829 = vld [vmem:[#allocation5 + $0x2ac] sm:$0xff]
    %v4830 = vld [vmem:[#allocation5 + $0x2b4] sm:$0xf]
    %v4831 = vld [vmem:[#allocation5 + $0x2b8] sm:$0xff]
    %v4832 = vld [vmem:[#allocation5 + $0x2c0] sm:$0xf]
    %v4833 = vld [vmem:[#allocation5 + $0x2c4] sm:$0xff]
    %v4834 = vld [vmem:[#allocation5 + $0x2cc] sm:$0xf]
    %v4835 = vld [vmem:[#allocation5 + $0x2d0] sm:$0xff]
    %v4836 = vld [vmem:[#allocation5 + $0x2d8] sm:$0xf]
    %v4837 = vld [vmem:[#allocation5 + $0x2dc] sm:$0xff]
    %v4838 = vld [vmem:[#allocation5 + $0x2e4] sm:$0xf]
    %v4839 = vld [vmem:[#allocation5 + $0x2e8] sm:$0xff]
    %v4840 = vld [vmem:[#allocation5 + $0x2f0] sm:$0xf]
    %v4841 = vld [vmem:[#allocation5 + $0x2f4] sm:$0xff]
    %v4842 = vld [vmem:[#allocation5 + $0x2fc] sm:$0xf]
    %v4843 = vld [vmem:[#allocation5 + $0x300] sm:$0xff]
    %v4844 = vld [vmem:[#allocation5 + $0x308] sm:$0xf]
    %v4845 = vld [vmem:[#allocation5 + $0x30c] sm:$0xff]
    %v4846 = vld [vmem:[#allocation5 + $0x314] sm:$0xf]
    %v4847 = vld [vmem:[#allocation5 + $0x318] sm:$0xff]
    %v4848 = vld [vmem:[#allocation5 + $0x320] sm:$0xf]
    %v4849 = vld [vmem:[#allocation5 + $0x324] sm:$0xff]
    %v4850 = vld [vmem:[#allocation5 + $0x32c] sm:$0xf]
    %v4851 = vld [vmem:[#allocation5 + $0x330] sm:$0xff]
    %v4852 = vld [vmem:[#allocation5 + $0x338] sm:$0xf]
    %v4853 = vld [vmem:[#allocation5 + $0x33c] sm:$0xff]
    %v4854 = vld [vmem:[#allocation5 + $0x344] sm:$0xf]
    %v4855 = vld [vmem:[#allocation5 + $0x348] sm:$0xff]
    %v4856 = vld [vmem:[#allocation5 + $0x350] sm:$0xf]
    %v4857 = vld [vmem:[#allocation5 + $0x354] sm:$0xff]
    %v4858 = vld [vmem:[#allocation5 + $0x35c] sm:$0xf]
    %v4859 = vld [vmem:[#allocation5 + $0x360] sm:$0xff]
    %v4860 = vld [vmem:[#allocation5 + $0x368] sm:$0xf]
    %v4861 = vld [vmem:[#allocation5 + $0x36c] sm:$0xff]
    %v4862 = vld [vmem:[#allocation5 + $0x374] sm:$0xf]
    %v4863 = vld [vmem:[#allocation5 + $0x378] sm:$0xff]
    %v4864 = vld [vmem:[#allocation5 + $0x380] sm:$0xf]
    %v4865 = vld [vmem:[#allocation5 + $0x384] sm:$0xff]
    %v4866 = vld [vmem:[#allocation5 + $0x38c] sm:$0xf]
    %v4867 = vld [vmem:[#allocation5 + $0x390] sm:$0xff]
    %v4868 = vld [vmem:[#allocation5 + $0x398] sm:$0xf]
    %v4869 = vld [vmem:[#allocation5 + $0x39c] sm:$0xff]
    %v4870 = vld [vmem:[#allocation5 + $0x3a4] sm:$0xf]
    %v4871 = vld [vmem:[#allocation5 + $0x3a8] sm:$0xff]
    %v4872 = vld [vmem:[#allocation5 + $0x3b0] sm:$0xf]
    %v4873 = vld [vmem:[#allocation5 + $0x3b4] sm:$0xff]
    %v4874 = vld [vmem:[#allocation5 + $0x3bc] sm:$0xf]
    %v4875 = vld [vmem:[#allocation5 + $0x3c0] sm:$0xff]
    %v4876 = vld [vmem:[#allocation5 + $0x3c8] sm:$0xf]
    %v4877 = vld [vmem:[#allocation5 + $0x3cc] sm:$0xff]
    %v4878 = vld [vmem:[#allocation5 + $0x3d4] sm:$0xf]
    %v4879 = vld [vmem:[#allocation5 + $0x3d8] sm:$0xff]
    %v4880 = vld [vmem:[#allocation5 + $0x3e0] sm:$0xf]
    %v4881 = vld [vmem:[#allocation5 + $0x3e4] sm:$0xff]
    %v4882 = vld [vmem:[#allocation5 + $0x3ec] sm:$0xf]
    %v4883 = vld [vmem:[#allocation5 + $0x3f0] sm:$0xff]
    %v4884 = vld [vmem:[#allocation5 + $0x3f8] sm:$0xf]
    %v4885 = vld [vmem:[#allocation5 + $0x3fc] sm:$0xff]
    %v4886 = vld [vmem:[#allocation5 + $0x404] sm:$0xf]
    %v4887 = vld [vmem:[#allocation5 + $0x408] sm:$0xff]
    %v4888 = vld [vmem:[#allocation5 + $0x410] sm:$0xf]
    %v4889 = vld [vmem:[#allocation5 + $0x414] sm:$0xff]
    %v4890 = vld [vmem:[#allocation5 + $0x41c] sm:$0xf]
    %v4891 = vld [vmem:[#allocation5 + $0x420] sm:$0xff]
    %v4892 = vld [vmem:[#allocation5 + $0x428] sm:$0xf]
    %v4893 = vld [vmem:[#allocation5 + $0x42c] sm:$0xff]
    %v4894 = vld [vmem:[#allocation5 + $0x434] sm:$0xf]
    %v4895 = vld [vmem:[#allocation5 + $0x438] sm:$0xff]
    %v4896 = vld [vmem:[#allocation5 + $0x440] sm:$0xf]
    %v4897 = vld [vmem:[#allocation5 + $0x444] sm:$0xff]
    %v4898 = vld [vmem:[#allocation5 + $0x44c] sm:$0xf]
    %v4899 = vld [vmem:[#allocation5 + $0x450] sm:$0xff]
    %v4900 = vld [vmem:[#allocation5 + $0x458] sm:$0xf]
    %v4901 = vld [vmem:[#allocation5 + $0x45c] sm:$0xff]
    %v4902 = vld [vmem:[#allocation5 + $0x464] sm:$0xf]
    %v4903 = vld [vmem:[#allocation5 + $0x468] sm:$0xff]
    %v4904 = vld [vmem:[#allocation5 + $0x470] sm:$0xf]
    %v4905 = vld [vmem:[#allocation5 + $0x474] sm:$0xff]
    %v4906 = vld [vmem:[#allocation5 + $0x47c] sm:$0xf]
    %v4907 = vld [vmem:[#allocation5 + $0x480] sm:$0xff]
    %v4908 = vld [vmem:[#allocation5 + $0x488] sm:$0xf]
    %v4909 = vld [vmem:[#allocation5 + $0x48c] sm:$0xff]
    %v4910 = vld [vmem:[#allocation5 + $0x494] sm:$0xf]
    %v4911 = vld [vmem:[#allocation5 + $0x498] sm:$0xff]
    %v4912 = vld [vmem:[#allocation5 + $0x4a0] sm:$0xf]
    %v4913 = vld [vmem:[#allocation5 + $0x4a4] sm:$0xff]
    %v4914 = vld [vmem:[#allocation5 + $0x4ac] sm:$0xf]
    %v4915 = vld [vmem:[#allocation5 + $0x4b0] sm:$0xff]
    %v4916 = vld [vmem:[#allocation5 + $0x4b8] sm:$0xf]
    %v4917 = vld [vmem:[#allocation5 + $0x4bc] sm:$0xff]
    %v4918 = vld [vmem:[#allocation5 + $0x4c4] sm:$0xf]
    %v4919 = vld [vmem:[#allocation5 + $0x4c8] sm:$0xff]
    %v4920 = vld [vmem:[#allocation5 + $0x4d0] sm:$0xf]
    %v4921 = vld [vmem:[#allocation5 + $0x4d4] sm:$0xff]
    %v4922 = vld [vmem:[#allocation5 + $0x4dc] sm:$0xf]
    %v4923 = vld [vmem:[#allocation5 + $0x4e0] sm:$0xff]
    %v4924 = vld [vmem:[#allocation5 + $0x4e8] sm:$0xf]
    %v4925 = vld [vmem:[#allocation5 + $0x4ec] sm:$0xff]
    %v4926 = vld [vmem:[#allocation5 + $0x4f4] sm:$0xf]
    %v4927 = vld [vmem:[#allocation5 + $0x4f8] sm:$0xff]
    %v4928 = vld [vmem:[#allocation5 + $0x500] sm:$0xf]
    %v4929 = vld [vmem:[#allocation5 + $0x504] sm:$0xff]
    %v4930 = vld [vmem:[#allocation5 + $0x50c] sm:$0xf]
    %v4931 = vld [vmem:[#allocation5 + $0x510] sm:$0xff]
    %v4932 = vld [vmem:[#allocation5 + $0x518] sm:$0xf]
    %v4933 = vld [vmem:[#allocation5 + $0x51c] sm:$0xff]
    %v4934 = vld [vmem:[#allocation5 + $0x524] sm:$0xf]
    %v4935 = vld [vmem:[#allocation5 + $0x528] sm:$0xff]
    %v4936 = vld [vmem:[#allocation5 + $0x530] sm:$0xf]
    %v4937 = vld [vmem:[#allocation5 + $0x534] sm:$0xff]
    %v4938 = vld [vmem:[#allocation5 + $0x53c] sm:$0xf]
    %v4939 = vld [vmem:[#allocation5 + $0x540] sm:$0xff]
    %v4940 = vld [vmem:[#allocation5 + $0x548] sm:$0xf]
    %v4941 = vld [vmem:[#allocation5 + $0x54c] sm:$0xff]
    %v4942 = vld [vmem:[#allocation5 + $0x554] sm:$0xf]
    %v4943 = vld [vmem:[#allocation5 + $0x558] sm:$0xff]
    %v4944 = vld [vmem:[#allocation5 + $0x560] sm:$0xf]
    %v4945 = vld [vmem:[#allocation5 + $0x564] sm:$0xff]
    %v4946 = vld [vmem:[#allocation5 + $0x56c] sm:$0xf]
    %v4947 = vld [vmem:[#allocation5 + $0x570] sm:$0xff]
    %v4948 = vld [vmem:[#allocation5 + $0x578] sm:$0xf]
    %v4949 = vld [vmem:[#allocation5 + $0x57c] sm:$0xff]
    %v4950 = vld [vmem:[#allocation5 + $0x584] sm:$0xf]
    %v4951 = vld [vmem:[#allocation5 + $0x588] sm:$0xff]
    %v4952 = vld [vmem:[#allocation5 + $0x590] sm:$0xf]
    %v4953 = vld [vmem:[#allocation5 + $0x594] sm:$0xff]
    %v4954 = vld [vmem:[#allocation5 + $0x59c] sm:$0xf]
    %v4955 = vld [vmem:[#allocation5 + $0x5a0] sm:$0xff]
    %v4956 = vld [vmem:[#allocation5 + $0x5a8] sm:$0xf]
    %v4957 = vld [vmem:[#allocation5 + $0x5ac] sm:$0xff]
    %v4958 = vld [vmem:[#allocation5 + $0x5b4] sm:$0xf]
    %v4959 = vld [vmem:[#allocation5 + $0x5b8] sm:$0xff]
    %v4960 = vld [vmem:[#allocation5 + $0x5c0] sm:$0xf]
    %v4961 = vld [vmem:[#allocation5 + $0x5c4] sm:$0xff]
    %v4962 = vld [vmem:[#allocation5 + $0x5cc] sm:$0xf]
    %v4963 = vld [vmem:[#allocation5 + $0x5d0] sm:$0xff]
    %v4964 = vld [vmem:[#allocation5 + $0x5d8] sm:$0xf]
    %v4965 = vld [vmem:[#allocation5 + $0x5dc] sm:$0xff]
    %v4966 = vld [vmem:[#allocation5 + $0x5e4] sm:$0xf]
    %v4967 = vld [vmem:[#allocation5 + $0x5e8] sm:$0xff]
    %v4968 = vld [vmem:[#allocation5 + $0x5f0] sm:$0xf]
    %v4969 = vld [vmem:[#allocation5 + $0x5f4] sm:$0xff]
    %v4970 = vld [vmem:[#allocation5 + $0x5fc] sm:$0xf]
    %v4971 = vld [vmem:[#allocation5 + $0x600] sm:$0xff]
    %v4972 = vld [vmem:[#allocation5 + $0x608] sm:$0xf]
    %v4973 = vld [vmem:[#allocation5 + $0x60c] sm:$0xff]
    %v4974 = vld [vmem:[#allocation5 + $0x614] sm:$0xf]
    %v4975 = vld [vmem:[#allocation5 + $0x618] sm:$0xff]
    %v4976 = vld [vmem:[#allocation5 + $0x620] sm:$0xf]
    %v4977 = vld [vmem:[#allocation5 + $0x624] sm:$0xff]
    %v4978 = vld [vmem:[#allocation5 + $0x62c] sm:$0xf]
    %v4979 = vld [vmem:[#allocation5 + $0x630] sm:$0xff]
    %v4980 = vld [vmem:[#allocation5 + $0x638] sm:$0xf]
    %v4981 = vld [vmem:[#allocation5 + $0x63c] sm:$0xff]
    %v4982 = vld [vmem:[#allocation5 + $0x644] sm:$0xf]
    %v4983 = vld [vmem:[#allocation5 + $0x648] sm:$0xff]
    %v4984 = vld [vmem:[#allocation5 + $0x650] sm:$0xf]
    %v4985 = vld [vmem:[#allocation5 + $0x654] sm:$0xff]
    %v4986 = vld [vmem:[#allocation5 + $0x65c] sm:$0xf]
    %v4987 = vld [vmem:[#allocation5 + $0x660] sm:$0xff]
    %v4988 = vld [vmem:[#allocation5 + $0x668] sm:$0xf]
    %v4989 = vld [vmem:[#allocation5 + $0x66c] sm:$0xff]
    %v4990 = vld [vmem:[#allocation5 + $0x674] sm:$0xf]
    %v4991 = vld [vmem:[#allocation5 + $0x678] sm:$0xff]
    %v4992 = vld [vmem:[#allocation5 + $0x680] sm:$0xf]
    %v4993 = vld [vmem:[#allocation5 + $0x684] sm:$0xff]
    %v4994 = vld [vmem:[#allocation5 + $0x68c] sm:$0xf]
    %v4995 = vld [vmem:[#allocation5 + $0x690] sm:$0xff]
    %v4996 = vld [vmem:[#allocation5 + $0x698] sm:$0xf]
    %v4997 = vld [vmem:[#allocation5 + $0x69c] sm:$0xff]
    %v4998 = vld [vmem:[#allocation5 + $0x6a4] sm:$0xf]
    %v4999 = vld [vmem:[#allocation5 + $0x6a8] sm:$0xff]
    %v5000 = vld [vmem:[#allocation5 + $0x6b0] sm:$0xf]
    %v5001 = vld [vmem:[#allocation5 + $0x6b4] sm:$0xff]
    %v5002 = vld [vmem:[#allocation5 + $0x6bc] sm:$0xf]
    %v5003 = vld [vmem:[#allocation14] sm:$0x7]
    %v5005 = vlaneseq
    %v5006 = vshrl.u32 %v5005, 7
    %v5007 = vsub.s32 0, %v5006
    %v5008 = vrot.slane %v5003, %v5007
    %v5009 = vlaneseq
    %v5010 = vshrl.u32 %v5009, 7
    %v5011 = vsub.s32 1, %v5010
    %v5012 = vrot.slane %v5003, %v5011
    %v5013 = vlaneseq
    %v5014 = vshrl.u32 %v5013, 7
    %v5015 = vsub.s32 2, %v5014
    %v5016 = vrot.slane %v5003, %v5015
    %v5308 = vunpack.c.l.b16 %v4715
    %v5309 = vunpack.c.h.b16 %v4715
    %v5310 = vunpack.c.l.b16 %v4716
    %v5311 = vunpack.c.l.b16 %v4717
    %v5312 = vunpack.c.h.b16 %v4717
    %v5313 = vunpack.c.l.b16 %v4718
    %v5314 = vunpack.c.l.b16 %v4719
    %v5315 = vunpack.c.h.b16 %v4719
    %v5316 = vunpack.c.l.b16 %v4720
    %v5317 = vunpack.c.l.b16 %v4721
    %v5318 = vunpack.c.h.b16 %v4721
    %v5319 = vunpack.c.l.b16 %v4722
    %v5320 = vunpack.c.l.b16 %v4723
    %v5321 = vunpack.c.h.b16 %v4723
    %v5322 = vunpack.c.l.b16 %v4724
    %v5323 = vunpack.c.l.b16 %v4725
    %v5324 = vunpack.c.h.b16 %v4725
    %v5325 = vunpack.c.l.b16 %v4726
    %v5326 = vunpack.c.l.b16 %v4727
    %v5327 = vunpack.c.h.b16 %v4727
    %v5328 = vunpack.c.l.b16 %v4728
    %v5329 = vunpack.c.l.b16 %v4729
    %v5330 = vunpack.c.h.b16 %v4729
    %v5331 = vunpack.c.l.b16 %v4730
    %v5332 = vunpack.c.l.b16 %v4731
    %v5333 = vunpack.c.h.b16 %v4731
    %v5334 = vunpack.c.l.b16 %v4732
    %v5335 = vunpack.c.l.b16 %v4733
    %v5336 = vunpack.c.h.b16 %v4733
    %v5337 = vunpack.c.l.b16 %v4734
    %v5338 = vunpack.c.l.b16 %v4735
    %v5339 = vunpack.c.h.b16 %v4735
    %v5340 = vunpack.c.l.b16 %v4736
    %v5341 = vunpack.c.l.b16 %v4737
    %v5342 = vunpack.c.h.b16 %v4737
    %v5343 = vunpack.c.l.b16 %v4738
    %v5344 = vunpack.c.l.b16 %v4739
    %v5345 = vunpack.c.h.b16 %v4739
    %v5346 = vunpack.c.l.b16 %v4740
    %v5347 = vunpack.c.l.b16 %v4741
    %v5348 = vunpack.c.h.b16 %v4741
    %v5349 = vunpack.c.l.b16 %v4742
    %v5350 = vunpack.c.l.b16 %v4743
    %v5351 = vunpack.c.h.b16 %v4743
    %v5352 = vunpack.c.l.b16 %v4744
    %v5353 = vunpack.c.l.b16 %v4745
    %v5354 = vunpack.c.h.b16 %v4745
    %v5355 = vunpack.c.l.b16 %v4746
    %v5356 = vunpack.c.l.b16 %v4747
    %v5357 = vunpack.c.h.b16 %v4747
    %v5358 = vunpack.c.l.b16 %v4748
    %v5359 = vunpack.c.l.b16 %v4749
    %v5360 = vunpack.c.h.b16 %v4749
    %v5361 = vunpack.c.l.b16 %v4750
    %v5362 = vunpack.c.l.b16 %v4751
    %v5363 = vunpack.c.h.b16 %v4751
    %v5364 = vunpack.c.l.b16 %v4752
    %v5365 = vunpack.c.l.b16 %v4753
    %v5366 = vunpack.c.h.b16 %v4753
    %v5367 = vunpack.c.l.b16 %v4754
    %v5368 = vunpack.c.l.b16 %v4755
    %v5369 = vunpack.c.h.b16 %v4755
    %v5370 = vunpack.c.l.b16 %v4756
    %v5371 = vunpack.c.l.b16 %v4757
    %v5372 = vunpack.c.h.b16 %v4757
    %v5373 = vunpack.c.l.b16 %v4758
    %v5374 = vunpack.c.l.b16 %v4759
    %v5375 = vunpack.c.h.b16 %v4759
    %v5376 = vunpack.c.l.b16 %v4760
    %v5377 = vunpack.c.l.b16 %v4761
    %v5378 = vunpack.c.h.b16 %v4761
    %v5379 = vunpack.c.l.b16 %v4762
    %v5380 = vunpack.c.l.b16 %v4763
    %v5381 = vunpack.c.h.b16 %v4763
    %v5382 = vunpack.c.l.b16 %v4764
    %v5383 = vunpack.c.l.b16 %v4765
    %v5384 = vunpack.c.h.b16 %v4765
    %v5385 = vunpack.c.l.b16 %v4766
    %v5386 = vunpack.c.l.b16 %v4767
    %v5387 = vunpack.c.h.b16 %v4767
    %v5388 = vunpack.c.l.b16 %v4768
    %v5389 = vunpack.c.l.b16 %v4769
    %v5390 = vunpack.c.h.b16 %v4769
    %v5391 = vunpack.c.l.b16 %v4770
    %v5392 = vunpack.c.l.b16 %v4771
    %v5393 = vunpack.c.h.b16 %v4771
    %v5394 = vunpack.c.l.b16 %v4772
    %v5395 = vunpack.c.l.b16 %v4773
    %v5396 = vunpack.c.h.b16 %v4773
    %v5397 = vunpack.c.l.b16 %v4774
    %v5398 = vunpack.c.l.b16 %v4775
    %v5399 = vunpack.c.h.b16 %v4775
    %v5400 = vunpack.c.l.b16 %v4776
    %v5401 = vunpack.c.l.b16 %v4777
    %v5402 = vunpack.c.h.b16 %v4777
    %v5403 = vunpack.c.l.b16 %v4778
    %v5404 = vunpack.c.l.b16 %v4779
    %v5405 = vunpack.c.h.b16 %v4779
    %v5406 = vunpack.c.l.b16 %v4780
    %v5407 = vunpack.c.l.b16 %v4781
    %v5408 = vunpack.c.h.b16 %v4781
    %v5409 = vunpack.c.l.b16 %v4782
    %v5410 = vunpack.c.l.b16 %v4783
    %v5411 = vunpack.c.h.b16 %v4783
    %v5412 = vunpack.c.l.b16 %v4784
    %v5413 = vunpack.c.l.b16 %v4785
    %v5414 = vunpack.c.h.b16 %v4785
    %v5415 = vunpack.c.l.b16 %v4786
    %v5416 = vunpack.c.l.b16 %v4787
    %v5417 = vunpack.c.h.b16 %v4787
    %v5418 = vunpack.c.l.b16 %v4788
    %v5419 = vunpack.c.l.b16 %v4789
    %v5420 = vunpack.c.h.b16 %v4789
    %v5421 = vunpack.c.l.b16 %v4790
    %v5422 = vunpack.c.l.b16 %v4791
    %v5423 = vunpack.c.h.b16 %v4791
    %v5424 = vunpack.c.l.b16 %v4792
    %v5425 = vunpack.c.l.b16 %v4793
    %v5426 = vunpack.c.h.b16 %v4793
    %v5427 = vunpack.c.l.b16 %v4794
    %v5428 = vunpack.c.l.b16 %v4795
    %v5429 = vunpack.c.h.b16 %v4795
    %v5430 = vunpack.c.l.b16 %v4796
    %v5431 = vunpack.c.l.b16 %v4797
    %v5432 = vunpack.c.h.b16 %v4797
    %v5433 = vunpack.c.l.b16 %v4798
    %v5434 = vunpack.c.l.b16 %v4799
    %v5435 = vunpack.c.h.b16 %v4799
    %v5436 = vunpack.c.l.b16 %v4800
    %v5437 = vunpack.c.l.b16 %v4801
    %v5438 = vunpack.c.h.b16 %v4801
    %v5439 = vunpack.c.l.b16 %v4802
    %v5440 = vunpack.c.l.b16 %v4803
    %v5441 = vunpack.c.h.b16 %v4803
    %v5442 = vunpack.c.l.b16 %v4804
    %v5443 = vunpack.c.l.b16 %v4805
    %v5444 = vunpack.c.h.b16 %v4805
    %v5445 = vunpack.c.l.b16 %v4806
    %v5446 = vunpack.c.l.b16 %v4807
    %v5447 = vunpack.c.h.b16 %v4807
    %v5448 = vunpack.c.l.b16 %v4808
    %v5449 = vunpack.c.l.b16 %v4809
    %v5450 = vunpack.c.h.b16 %v4809
    %v5451 = vunpack.c.l.b16 %v4810
    %v5452 = vunpack.c.l.b16 %v4811
    %v5453 = vunpack.c.h.b16 %v4811
    %v5454 = vunpack.c.l.b16 %v4812
    %v5455 = vunpack.c.l.b16 %v4813
    %v5456 = vunpack.c.h.b16 %v4813
    %v5457 = vunpack.c.l.b16 %v4814
    %v5458 = vunpack.c.l.b16 %v4815
    %v5459 = vunpack.c.h.b16 %v4815
    %v5460 = vunpack.c.l.b16 %v4816
    %v5461 = vunpack.c.l.b16 %v4817
    %v5462 = vunpack.c.h.b16 %v4817
    %v5463 = vunpack.c.l.b16 %v4818
    %v5464 = vunpack.c.l.b16 %v4819
    %v5465 = vunpack.c.h.b16 %v4819
    %v5466 = vunpack.c.l.b16 %v4820
    %v5467 = vunpack.c.l.b16 %v4821
    %v5468 = vunpack.c.h.b16 %v4821
    %v5469 = vunpack.c.l.b16 %v4822
    %v5470 = vunpack.c.l.b16 %v4823
    %v5471 = vunpack.c.h.b16 %v4823
    %v5472 = vunpack.c.l.b16 %v4824
    %v5473 = vunpack.c.l.b16 %v4825
    %v5474 = vunpack.c.h.b16 %v4825
    %v5475 = vunpack.c.l.b16 %v4826
    %v5476 = vunpack.c.l.b16 %v4827
    %v5477 = vunpack.c.h.b16 %v4827
    %v5478 = vunpack.c.l.b16 %v4828
    %v5479 = vunpack.c.l.b16 %v4829
    %v5480 = vunpack.c.h.b16 %v4829
    %v5481 = vunpack.c.l.b16 %v4830
    %v5482 = vunpack.c.l.b16 %v4831
    %v5483 = vunpack.c.h.b16 %v4831
    %v5484 = vunpack.c.l.b16 %v4832
    %v5485 = vunpack.c.l.b16 %v4833
    %v5486 = vunpack.c.h.b16 %v4833
    %v5487 = vunpack.c.l.b16 %v4834
    %v5488 = vunpack.c.l.b16 %v4835
    %v5489 = vunpack.c.h.b16 %v4835
    %v5490 = vunpack.c.l.b16 %v4836
    %v5491 = vunpack.c.l.b16 %v4837
    %v5492 = vunpack.c.h.b16 %v4837
    %v5493 = vunpack.c.l.b16 %v4838
    %v5494 = vunpack.c.l.b16 %v4839
    %v5495 = vunpack.c.h.b16 %v4839
    %v5496 = vunpack.c.l.b16 %v4840
    %v5497 = vunpack.c.l.b16 %v4841
    %v5498 = vunpack.c.h.b16 %v4841
    %v5499 = vunpack.c.l.b16 %v4842
    %v5500 = vunpack.c.l.b16 %v4843
    %v5501 = vunpack.c.h.b16 %v4843
    %v5502 = vunpack.c.l.b16 %v4844
    %v5503 = vunpack.c.l.b16 %v4845
    %v5504 = vunpack.c.h.b16 %v4845
    %v5505 = vunpack.c.l.b16 %v4846
    %v5506 = vunpack.c.l.b16 %v4847
    %v5507 = vunpack.c.h.b16 %v4847
    %v5508 = vunpack.c.l.b16 %v4848
    %v5509 = vunpack.c.l.b16 %v4849
    %v5510 = vunpack.c.h.b16 %v4849
    %v5511 = vunpack.c.l.b16 %v4850
    %v5512 = vunpack.c.l.b16 %v4851
    %v5513 = vunpack.c.h.b16 %v4851
    %v5514 = vunpack.c.l.b16 %v4852
    %v5515 = vunpack.c.l.b16 %v4853
    %v5516 = vunpack.c.h.b16 %v4853
    %v5517 = vunpack.c.l.b16 %v4854
    %v5518 = vunpack.c.l.b16 %v4855
    %v5519 = vunpack.c.h.b16 %v4855
    %v5520 = vunpack.c.l.b16 %v4856
    %v5521 = vunpack.c.l.b16 %v4857
    %v5522 = vunpack.c.h.b16 %v4857
    %v5523 = vunpack.c.l.b16 %v4858
    %v5524 = vunpack.c.l.b16 %v4859
    %v5525 = vunpack.c.h.b16 %v4859
    %v5526 = vunpack.c.l.b16 %v4860
    %v5527 = vunpack.c.l.b16 %v4861
    %v5528 = vunpack.c.h.b16 %v4861
    %v5529 = vunpack.c.l.b16 %v4862
    %v5530 = vunpack.c.l.b16 %v4863
    %v5531 = vunpack.c.h.b16 %v4863
    %v5532 = vunpack.c.l.b16 %v4864
    %v5533 = vunpack.c.l.b16 %v4865
    %v5534 = vunpack.c.h.b16 %v4865
    %v5535 = vunpack.c.l.b16 %v4866
    %v5536 = vunpack.c.l.b16 %v4867
    %v5537 = vunpack.c.h.b16 %v4867
    %v5538 = vunpack.c.l.b16 %v4868
    %v5539 = vunpack.c.l.b16 %v4869
    %v5540 = vunpack.c.h.b16 %v4869
    %v5541 = vunpack.c.l.b16 %v4870
    %v5542 = vunpack.c.l.b16 %v4871
    %v5543 = vunpack.c.h.b16 %v4871
    %v5544 = vunpack.c.l.b16 %v4872
    %v5545 = vunpack.c.l.b16 %v4873
    %v5546 = vunpack.c.h.b16 %v4873
    %v5547 = vunpack.c.l.b16 %v4874
    %v5548 = vunpack.c.l.b16 %v4875
    %v5549 = vunpack.c.h.b16 %v4875
    %v5550 = vunpack.c.l.b16 %v4876
    %v5551 = vunpack.c.l.b16 %v4877
    %v5552 = vunpack.c.h.b16 %v4877
    %v5553 = vunpack.c.l.b16 %v4878
    %v5554 = vunpack.c.l.b16 %v4879
    %v5555 = vunpack.c.h.b16 %v4879
    %v5556 = vunpack.c.l.b16 %v4880
    %v5557 = vunpack.c.l.b16 %v4881
    %v5558 = vunpack.c.h.b16 %v4881
    %v5559 = vunpack.c.l.b16 %v4882
    %v5560 = vunpack.c.l.b16 %v4883
    %v5561 = vunpack.c.h.b16 %v4883
    %v5562 = vunpack.c.l.b16 %v4884
    %v5563 = vunpack.c.l.b16 %v4885
    %v5564 = vunpack.c.h.b16 %v4885
    %v5565 = vunpack.c.l.b16 %v4886
    %v5566 = vunpack.c.l.b16 %v4887
    %v5567 = vunpack.c.h.b16 %v4887
    %v5568 = vunpack.c.l.b16 %v4888
    %v5569 = vunpack.c.l.b16 %v4889
    %v5570 = vunpack.c.h.b16 %v4889
    %v5571 = vunpack.c.l.b16 %v4890
    %v5572 = vunpack.c.l.b16 %v4891
    %v5573 = vunpack.c.h.b16 %v4891
    %v5574 = vunpack.c.l.b16 %v4892
    %v5575 = vunpack.c.l.b16 %v4893
    %v5576 = vunpack.c.h.b16 %v4893
    %v5577 = vunpack.c.l.b16 %v4894
    %v5578 = vunpack.c.l.b16 %v4895
    %v5579 = vunpack.c.h.b16 %v4895
    %v5580 = vunpack.c.l.b16 %v4896
    %v5581 = vunpack.c.l.b16 %v4897
    %v5582 = vunpack.c.h.b16 %v4897
    %v5583 = vunpack.c.l.b16 %v4898
    %v5584 = vunpack.c.l.b16 %v4899
    %v5585 = vunpack.c.h.b16 %v4899
    %v5586 = vunpack.c.l.b16 %v4900
    %v5587 = vunpack.c.l.b16 %v4901
    %v5588 = vunpack.c.h.b16 %v4901
    %v5589 = vunpack.c.l.b16 %v4902
    %v5590 = vunpack.c.l.b16 %v4903
    %v5591 = vunpack.c.h.b16 %v4903
    %v5592 = vunpack.c.l.b16 %v4904
    %v5593 = vunpack.c.l.b16 %v4905
    %v5594 = vunpack.c.h.b16 %v4905
    %v5595 = vunpack.c.l.b16 %v4906
    %v5596 = vunpack.c.l.b16 %v4907
    %v5597 = vunpack.c.h.b16 %v4907
    %v5598 = vunpack.c.l.b16 %v4908
    %v5599 = vunpack.c.l.b16 %v4909
    %v5600 = vunpack.c.h.b16 %v4909
    %v5601 = vunpack.c.l.b16 %v4910
    %v5602 = vunpack.c.l.b16 %v4911
    %v5603 = vunpack.c.h.b16 %v4911
    %v5604 = vunpack.c.l.b16 %v4912
    %v5605 = vunpack.c.l.b16 %v4913
    %v5606 = vunpack.c.h.b16 %v4913
    %v5607 = vunpack.c.l.b16 %v4914
    %v5608 = vunpack.c.l.b16 %v4915
    %v5609 = vunpack.c.h.b16 %v4915
    %v5610 = vunpack.c.l.b16 %v4916
    %v5611 = vunpack.c.l.b16 %v4917
    %v5612 = vunpack.c.h.b16 %v4917
    %v5613 = vunpack.c.l.b16 %v4918
    %v5614 = vunpack.c.l.b16 %v4919
    %v5615 = vunpack.c.h.b16 %v4919
    %v5616 = vunpack.c.l.b16 %v4920
    %v5617 = vunpack.c.l.b16 %v4921
    %v5618 = vunpack.c.h.b16 %v4921
    %v5619 = vunpack.c.l.b16 %v4922
    %v5620 = vunpack.c.l.b16 %v4923
    %v5621 = vunpack.c.h.b16 %v4923
    %v5622 = vunpack.c.l.b16 %v4924
    %v5623 = vunpack.c.l.b16 %v4925
    %v5624 = vunpack.c.h.b16 %v4925
    %v5625 = vunpack.c.l.b16 %v4926
    %v5626 = vunpack.c.l.b16 %v4927
    %v5627 = vunpack.c.h.b16 %v4927
    %v5628 = vunpack.c.l.b16 %v4928
    %v5629 = vunpack.c.l.b16 %v4929
    %v5630 = vunpack.c.h.b16 %v4929
    %v5631 = vunpack.c.l.b16 %v4930
    %v5632 = vunpack.c.l.b16 %v4931
    %v5633 = vunpack.c.h.b16 %v4931
    %v5634 = vunpack.c.l.b16 %v4932
    %v5635 = vunpack.c.l.b16 %v4933
    %v5636 = vunpack.c.h.b16 %v4933
    %v5637 = vunpack.c.l.b16 %v4934
    %v5638 = vunpack.c.l.b16 %v4935
    %v5639 = vunpack.c.h.b16 %v4935
    %v5640 = vunpack.c.l.b16 %v4936
    %v5641 = vunpack.c.l.b16 %v4937
    %v5642 = vunpack.c.h.b16 %v4937
    %v5643 = vunpack.c.l.b16 %v4938
    %v5644 = vunpack.c.l.b16 %v4939
    %v5645 = vunpack.c.h.b16 %v4939
    %v5646 = vunpack.c.l.b16 %v4940
    %v5647 = vunpack.c.l.b16 %v4941
    %v5648 = vunpack.c.h.b16 %v4941
    %v5649 = vunpack.c.l.b16 %v4942
    %v5650 = vunpack.c.l.b16 %v4943
    %v5651 = vunpack.c.h.b16 %v4943
    %v5652 = vunpack.c.l.b16 %v4944
    %v5653 = vunpack.c.l.b16 %v4945
    %v5654 = vunpack.c.h.b16 %v4945
    %v5655 = vunpack.c.l.b16 %v4946
    %v5656 = vunpack.c.l.b16 %v4947
    %v5657 = vunpack.c.h.b16 %v4947
    %v5658 = vunpack.c.l.b16 %v4948
    %v5659 = vunpack.c.l.b16 %v4949
    %v5660 = vunpack.c.h.b16 %v4949
    %v5661 = vunpack.c.l.b16 %v4950
    %v5662 = vunpack.c.l.b16 %v4951
    %v5663 = vunpack.c.h.b16 %v4951
    %v5664 = vunpack.c.l.b16 %v4952
    %v5665 = vunpack.c.l.b16 %v4953
    %v5666 = vunpack.c.h.b16 %v4953
    %v5667 = vunpack.c.l.b16 %v4954
    %v5668 = vunpack.c.l.b16 %v4955
    %v5669 = vunpack.c.h.b16 %v4955
    %v5670 = vunpack.c.l.b16 %v4956
    %v5671 = vunpack.c.l.b16 %v4957
    %v5672 = vunpack.c.h.b16 %v4957
    %v5673 = vunpack.c.l.b16 %v4958
    %v5674 = vunpack.c.l.b16 %v4959
    %v5675 = vunpack.c.h.b16 %v4959
    %v5676 = vunpack.c.l.b16 %v4960
    %v5677 = vunpack.c.l.b16 %v4961
    %v5678 = vunpack.c.h.b16 %v4961
    %v5679 = vunpack.c.l.b16 %v4962
    %v5680 = vunpack.c.l.b16 %v4963
    %v5681 = vunpack.c.h.b16 %v4963
    %v5682 = vunpack.c.l.b16 %v4964
    %v5683 = vunpack.c.l.b16 %v4965
    %v5684 = vunpack.c.h.b16 %v4965
    %v5685 = vunpack.c.l.b16 %v4966
    %v5686 = vunpack.c.l.b16 %v4967
    %v5687 = vunpack.c.h.b16 %v4967
    %v5688 = vunpack.c.l.b16 %v4968
    %v5689 = vunpack.c.l.b16 %v4969
    %v5690 = vunpack.c.h.b16 %v4969
    %v5691 = vunpack.c.l.b16 %v4970
    %v5692 = vunpack.c.l.b16 %v4971
    %v5693 = vunpack.c.h.b16 %v4971
    %v5694 = vunpack.c.l.b16 %v4972
    %v5695 = vunpack.c.l.b16 %v4973
    %v5696 = vunpack.c.h.b16 %v4973
    %v5697 = vunpack.c.l.b16 %v4974
    %v5698 = vunpack.c.l.b16 %v4975
    %v5699 = vunpack.c.h.b16 %v4975
    %v5700 = vunpack.c.l.b16 %v4976
    %v5701 = vunpack.c.l.b16 %v4977
    %v5702 = vunpack.c.h.b16 %v4977
    %v5703 = vunpack.c.l.b16 %v4978
    %v5704 = vunpack.c.l.b16 %v4979
    %v5705 = vunpack.c.h.b16 %v4979
    %v5706 = vunpack.c.l.b16 %v4980
    %v5707 = vunpack.c.l.b16 %v4981
    %v5708 = vunpack.c.h.b16 %v4981
    %v5709 = vunpack.c.l.b16 %v4982
    %v5710 = vunpack.c.l.b16 %v4983
    %v5711 = vunpack.c.h.b16 %v4983
    %v5712 = vunpack.c.l.b16 %v4984
    %v5713 = vunpack.c.l.b16 %v4985
    %v5714 = vunpack.c.h.b16 %v4985
    %v5715 = vunpack.c.l.b16 %v4986
    %v5716 = vunpack.c.l.b16 %v4987
    %v5717 = vunpack.c.h.b16 %v4987
    %v5718 = vunpack.c.l.b16 %v4988
    %v5719 = vunpack.c.l.b16 %v4989
    %v5720 = vunpack.c.h.b16 %v4989
    %v5721 = vunpack.c.l.b16 %v4990
    %v5722 = vunpack.c.l.b16 %v4991
    %v5723 = vunpack.c.h.b16 %v4991
    %v5724 = vunpack.c.l.b16 %v4992
    %v5725 = vunpack.c.l.b16 %v4993
    %v5726 = vunpack.c.h.b16 %v4993
    %v5727 = vunpack.c.l.b16 %v4994
    %v5728 = vunpack.c.l.b16 %v4995
    %v5729 = vunpack.c.h.b16 %v4995
    %v5730 = vunpack.c.l.b16 %v4996
    %v5731 = vunpack.c.l.b16 %v4997
    %v5732 = vunpack.c.h.b16 %v4997
    %v5733 = vunpack.c.l.b16 %v4998
    %v5734 = vunpack.c.l.b16 %v4999
    %v5735 = vunpack.c.h.b16 %v4999
    %v5736 = vunpack.c.l.b16 %v5000
    %v5737 = vunpack.c.l.b16 %v5001
    %v5738 = vunpack.c.h.b16 %v5001
    %v5739 = vunpack.c.l.b16 %v5002
    %v5740 = vpack.c.b16 %v5311, %v5308
    %v5741 = vpack.c.b16 %v5312, %v5309
    %v5742 = vpack.c.b16 %v5313, %v5310
    %v5743 = vpack.c.b16 %v5317, %v5314
    %v5744 = vpack.c.b16 %v5318, %v5315
    %v5745 = vpack.c.b16 %v5319, %v5316
    %v5746 = vpack.c.b16 %v5323, %v5320
    %v5747 = vpack.c.b16 %v5324, %v5321
    %v5748 = vpack.c.b16 %v5325, %v5322
    %v5749 = vpack.c.b16 %v5329, %v5326
    %v5750 = vpack.c.b16 %v5330, %v5327
    %v5751 = vpack.c.b16 %v5331, %v5328
    %v5752 = vpack.c.b16 %v5335, %v5332
    %v5753 = vpack.c.b16 %v5336, %v5333
    %v5754 = vpack.c.b16 %v5337, %v5334
    %v5755 = vpack.c.b16 %v5341, %v5338
    %v5756 = vpack.c.b16 %v5342, %v5339
    %v5757 = vpack.c.b16 %v5343, %v5340
    %v5758 = vpack.c.b16 %v5347, %v5344
    %v5759 = vpack.c.b16 %v5348, %v5345
    %v5760 = vpack.c.b16 %v5349, %v5346
    %v5761 = vpack.c.b16 %v5353, %v5350
    %v5762 = vpack.c.b16 %v5354, %v5351
    %v5763 = vpack.c.b16 %v5355, %v5352
    %v5764 = vpack.c.b16 %v5359, %v5356
    %v5765 = vpack.c.b16 %v5360, %v5357
    %v5766 = vpack.c.b16 %v5361, %v5358
    %v5767 = vpack.c.b16 %v5365, %v5362
    %v5768 = vpack.c.b16 %v5366, %v5363
    %v5769 = vpack.c.b16 %v5367, %v5364
    %v5770 = vpack.c.b16 %v5371, %v5368
    %v5771 = vpack.c.b16 %v5372, %v5369
    %v5772 = vpack.c.b16 %v5373, %v5370
    %v5773 = vpack.c.b16 %v5377, %v5374
    %v5774 = vpack.c.b16 %v5378, %v5375
    %v5775 = vpack.c.b16 %v5379, %v5376
    %v5776 = vpack.c.b16 %v5383, %v5380
    %v5777 = vpack.c.b16 %v5384, %v5381
    %v5778 = vpack.c.b16 %v5385, %v5382
    %v5779 = vpack.c.b16 %v5389, %v5386
    %v5780 = vpack.c.b16 %v5390, %v5387
    %v5781 = vpack.c.b16 %v5391, %v5388
    %v5782 = vpack.c.b16 %v5395, %v5392
    %v5783 = vpack.c.b16 %v5396, %v5393
    %v5784 = vpack.c.b16 %v5397, %v5394
    %v5785 = vpack.c.b16 %v5401, %v5398
    %v5786 = vpack.c.b16 %v5402, %v5399
    %v5787 = vpack.c.b16 %v5403, %v5400
    %v5788 = vpack.c.b16 %v5407, %v5404
    %v5789 = vpack.c.b16 %v5408, %v5405
    %v5790 = vpack.c.b16 %v5409, %v5406
    %v5791 = vpack.c.b16 %v5413, %v5410
    %v5792 = vpack.c.b16 %v5414, %v5411
    %v5793 = vpack.c.b16 %v5415, %v5412
    %v5794 = vpack.c.b16 %v5419, %v5416
    %v5795 = vpack.c.b16 %v5420, %v5417
    %v5796 = vpack.c.b16 %v5421, %v5418
    %v5797 = vpack.c.b16 %v5425, %v5422
    %v5798 = vpack.c.b16 %v5426, %v5423
    %v5799 = vpack.c.b16 %v5427, %v5424
    %v5800 = vpack.c.b16 %v5431, %v5428
    %v5801 = vpack.c.b16 %v5432, %v5429
    %v5802 = vpack.c.b16 %v5433, %v5430
    %v5803 = vpack.c.b16 %v5437, %v5434
    %v5804 = vpack.c.b16 %v5438, %v5435
    %v5805 = vpack.c.b16 %v5439, %v5436
    %v5806 = vpack.c.b16 %v5443, %v5440
    %v5807 = vpack.c.b16 %v5444, %v5441
    %v5808 = vpack.c.b16 %v5445, %v5442
    %v5809 = vpack.c.b16 %v5449, %v5446
    %v5810 = vpack.c.b16 %v5450, %v5447
    %v5811 = vpack.c.b16 %v5451, %v5448
    %v5812 = vpack.c.b16 %v5455, %v5452
    %v5813 = vpack.c.b16 %v5456, %v5453
    %v5814 = vpack.c.b16 %v5457, %v5454
    %v5815 = vpack.c.b16 %v5461, %v5458
    %v5816 = vpack.c.b16 %v5462, %v5459
    %v5817 = vpack.c.b16 %v5463, %v5460
    %v5818 = vpack.c.b16 %v5467, %v5464
    %v5819 = vpack.c.b16 %v5468, %v5465
    %v5820 = vpack.c.b16 %v5469, %v5466
    %v5821 = vpack.c.b16 %v5473, %v5470
    %v5822 = vpack.c.b16 %v5474, %v5471
    %v5823 = vpack.c.b16 %v5475, %v5472
    %v5824 = vpack.c.b16 %v5479, %v5476
    %v5825 = vpack.c.b16 %v5480, %v5477
    %v5826 = vpack.c.b16 %v5481, %v5478
    %v5827 = vpack.c.b16 %v5485, %v5482
    %v5828 = vpack.c.b16 %v5486, %v5483
    %v5829 = vpack.c.b16 %v5487, %v5484
    %v5830 = vpack.c.b16 %v5491, %v5488
    %v5831 = vpack.c.b16 %v5492, %v5489
    %v5832 = vpack.c.b16 %v5493, %v5490
    %v5833 = vpack.c.b16 %v5497, %v5494
    %v5834 = vpack.c.b16 %v5498, %v5495
    %v5835 = vpack.c.b16 %v5499, %v5496
    %v5836 = vpack.c.b16 %v5503, %v5500
    %v5837 = vpack.c.b16 %v5504, %v5501
    %v5838 = vpack.c.b16 %v5505, %v5502
    %v5839 = vpack.c.b16 %v5509, %v5506
    %v5840 = vpack.c.b16 %v5510, %v5507
    %v5841 = vpack.c.b16 %v5511, %v5508
    %v5842 = vpack.c.b16 %v5515, %v5512
    %v5843 = vpack.c.b16 %v5516, %v5513
    %v5844 = vpack.c.b16 %v5517, %v5514
    %v5845 = vpack.c.b16 %v5521, %v5518
    %v5846 = vpack.c.b16 %v5522, %v5519
    %v5847 = vpack.c.b16 %v5523, %v5520
    %v5848 = vpack.c.b16 %v5527, %v5524
    %v5849 = vpack.c.b16 %v5528, %v5525
    %v5850 = vpack.c.b16 %v5529, %v5526
    %v5851 = vpack.c.b16 %v5533, %v5530
    %v5852 = vpack.c.b16 %v5534, %v5531
    %v5853 = vpack.c.b16 %v5535, %v5532
    %v5854 = vpack.c.b16 %v5539, %v5536
    %v5855 = vpack.c.b16 %v5540, %v5537
    %v5856 = vpack.c.b16 %v5541, %v5538
    %v5857 = vpack.c.b16 %v5545, %v5542
    %v5858 = vpack.c.b16 %v5546, %v5543
    %v5859 = vpack.c.b16 %v5547, %v5544
    %v5860 = vpack.c.b16 %v5551, %v5548
    %v5861 = vpack.c.b16 %v5552, %v5549
    %v5862 = vpack.c.b16 %v5553, %v5550
    %v5863 = vpack.c.b16 %v5557, %v5554
    %v5864 = vpack.c.b16 %v5558, %v5555
    %v5865 = vpack.c.b16 %v5559, %v5556
    %v5866 = vpack.c.b16 %v5563, %v5560
    %v5867 = vpack.c.b16 %v5564, %v5561
    %v5868 = vpack.c.b16 %v5565, %v5562
    %v5869 = vpack.c.b16 %v5569, %v5566
    %v5870 = vpack.c.b16 %v5570, %v5567
    %v5871 = vpack.c.b16 %v5571, %v5568
    %v5872 = vpack.c.b16 %v5575, %v5572
    %v5873 = vpack.c.b16 %v5576, %v5573
    %v5874 = vpack.c.b16 %v5577, %v5574
    %v5875 = vpack.c.b16 %v5581, %v5578
    %v5876 = vpack.c.b16 %v5582, %v5579
    %v5877 = vpack.c.b16 %v5583, %v5580
    %v5878 = vpack.c.b16 %v5587, %v5584
    %v5879 = vpack.c.b16 %v5588, %v5585
    %v5880 = vpack.c.b16 %v5589, %v5586
    %v5881 = vpack.c.b16 %v5593, %v5590
    %v5882 = vpack.c.b16 %v5594, %v5591
    %v5883 = vpack.c.b16 %v5595, %v5592
    %v5884 = vpack.c.b16 %v5599, %v5596
    %v5885 = vpack.c.b16 %v5600, %v5597
    %v5886 = vpack.c.b16 %v5601, %v5598
    %v5887 = vpack.c.b16 %v5605, %v5602
    %v5888 = vpack.c.b16 %v5606, %v5603
    %v5889 = vpack.c.b16 %v5607, %v5604
    %v5890 = vpack.c.b16 %v5611, %v5608
    %v5891 = vpack.c.b16 %v5612, %v5609
    %v5892 = vpack.c.b16 %v5613, %v5610
    %v5893 = vpack.c.b16 %v5617, %v5614
    %v5894 = vpack.c.b16 %v5618, %v5615
    %v5895 = vpack.c.b16 %v5619, %v5616
    %v5896 = vpack.c.b16 %v5623, %v5620
    %v5897 = vpack.c.b16 %v5624, %v5621
    %v5898 = vpack.c.b16 %v5625, %v5622
    %v5899 = vpack.c.b16 %v5629, %v5626
    %v5900 = vpack.c.b16 %v5630, %v5627
    %v5901 = vpack.c.b16 %v5631, %v5628
    %v5902 = vpack.c.b16 %v5635, %v5632
    %v5903 = vpack.c.b16 %v5636, %v5633
    %v5904 = vpack.c.b16 %v5637, %v5634
    %v5905 = vpack.c.b16 %v5641, %v5638
    %v5906 = vpack.c.b16 %v5642, %v5639
    %v5907 = vpack.c.b16 %v5643, %v5640
    %v5908 = vpack.c.b16 %v5647, %v5644
    %v5909 = vpack.c.b16 %v5648, %v5645
    %v5910 = vpack.c.b16 %v5649, %v5646
    %v5911 = vpack.c.b16 %v5653, %v5650
    %v5912 = vpack.c.b16 %v5654, %v5651
    %v5913 = vpack.c.b16 %v5655, %v5652
    %v5914 = vpack.c.b16 %v5659, %v5656
    %v5915 = vpack.c.b16 %v5660, %v5657
    %v5916 = vpack.c.b16 %v5661, %v5658
    %v5917 = vpack.c.b16 %v5665, %v5662
    %v5918 = vpack.c.b16 %v5666, %v5663
    %v5919 = vpack.c.b16 %v5667, %v5664
    %v5920 = vpack.c.b16 %v5671, %v5668
    %v5921 = vpack.c.b16 %v5672, %v5669
    %v5922 = vpack.c.b16 %v5673, %v5670
    %v5923 = vpack.c.b16 %v5677, %v5674
    %v5924 = vpack.c.b16 %v5678, %v5675
    %v5925 = vpack.c.b16 %v5679, %v5676
    %v5926 = vpack.c.b16 %v5683, %v5680
    %v5927 = vpack.c.b16 %v5684, %v5681
    %v5928 = vpack.c.b16 %v5685, %v5682
    %v5929 = vpack.c.b16 %v5689, %v5686
    %v5930 = vpack.c.b16 %v5690, %v5687
    %v5931 = vpack.c.b16 %v5691, %v5688
    %v5932 = vpack.c.b16 %v5695, %v5692
    %v5933 = vpack.c.b16 %v5696, %v5693
    %v5934 = vpack.c.b16 %v5697, %v5694
    %v5935 = vpack.c.b16 %v5701, %v5698
    %v5936 = vpack.c.b16 %v5702, %v5699
    %v5937 = vpack.c.b16 %v5703, %v5700
    %v5938 = vpack.c.b16 %v5707, %v5704
    %v5939 = vpack.c.b16 %v5708, %v5705
    %v5940 = vpack.c.b16 %v5709, %v5706
    %v5941 = vpack.c.b16 %v5713, %v5710
    %v5942 = vpack.c.b16 %v5714, %v5711
    %v5943 = vpack.c.b16 %v5715, %v5712
    %v5944 = vpack.c.b16 %v5719, %v5716
    %v5945 = vpack.c.b16 %v5720, %v5717
    %v5946 = vpack.c.b16 %v5721, %v5718
    %v5947 = vpack.c.b16 %v5725, %v5722
    %v5948 = vpack.c.b16 %v5726, %v5723
    %v5949 = vpack.c.b16 %v5727, %v5724
    %v5950 = vpack.c.b16 %v5731, %v5728
    %v5951 = vpack.c.b16 %v5732, %v5729
    %v5952 = vpack.c.b16 %v5733, %v5730
    %v5953 = vpack.c.b16 %v5737, %v5734
    %v5954 = vpack.c.b16 %v5738, %v5735
    %v5955 = vpack.c.b16 %v5739, %v5736
    %6172 = vmatprep.subr.bf16.mxu0 %v5762
    %6173 = vmatpush1.bf16.msra.mxu0 %v5761
    %6174 = vmatprep.subr.bf16.mxu0 %v5759
    %6175 = vmatpush1.bf16.msra.mxu0 %v5758
    %6176 = vmatprep.subr.bf16.mxu0 %v5756
    %6177 = vmatpush1.bf16.msra.mxu0 %v5755
    %6178 = vmatprep.subr.bf16.mxu0 %v5753
    %6179 = vmatpush1.bf16.msra.mxu0 %v5752
    %6180 = vmatprep.subr.bf16.mxu0 %v5750
    %6181 = vmatpush1.bf16.msra.mxu0 %v5749
    %6182 = vmatprep.subr.bf16.mxu0 %v5747
    %6183 = vmatpush1.bf16.msra.mxu0 %v5746
    %6184 = vmatprep.subr.bf16.mxu0 %v5744
    %6185 = vmatpush1.bf16.msra.mxu0 %v5743
    %6186 = vmatprep.subr.bf16.mxu0 %v5741
    %6187 = vmatpush1.bf16.msra.mxu0 %v5740
    %6188 = vmatprep.subr.bf16.mxu0 %v5786
    %6189 = vmatpush2.bf16.msra.mxu0 %v5785
    %6190 = vmatprep.subr.bf16.mxu0 %v5783
    %6191 = vmatpush2.bf16.msra.mxu0 %v5782
    %6192 = vmatprep.subr.bf16.mxu0 %v5780
    %6193 = vmatpush2.bf16.msra.mxu0 %v5779
    %6194 = vmatprep.subr.bf16.mxu0 %v5777
    %6195 = vmatpush2.bf16.msra.mxu0 %v5776
    %6196 = vmatprep.subr.bf16.mxu0 %v5774
    %6197 = vmatpush2.bf16.msra.mxu0 %v5773
    %6198 = vmatprep.subr.bf16.mxu0 %v5771
    %6199 = vmatpush2.bf16.msra.mxu0 %v5770
    %6200 = vmatprep.subr.bf16.mxu0 %v5768
    %6201 = vmatpush2.bf16.msra.mxu0 %v5767
    %6202 = vmatprep.subr.bf16.mxu0 %v5765
    %6203 = vmatpush2.bf16.msra.mxu0 %v5764
    %6204 = vmatprep.mubr.bf16.mxu0 %v4689
    %6205 = vmatmul.mubr.bf16.gmra.mxu0 %v4688
    %v6206 = vpop.f32.mrf.mxu0
    %v6207 = vadd.f32 %v5008, %v6206
    %v6208 = vpop.f32.mrf.mxu0
    %v6209 = vadd.f32 %v5012, %v6208
    %v6210 = vpop.f32.mrf.mxu0
    %v6211 = vadd.f32 %v5008, %v6210
    %v6212 = vpop.f32.mrf.mxu0
    %v6213 = vadd.f32 %v5012, %v6212
    %6214 = vmatprep.mubr.bf16.mxu0 %v4698
    %6215 = vmatmul.mubr.bf16.gmra.mxu0 %v4697
    %v6216 = vpop.f32.mrf.mxu0
    %v6217 = vadd.f32 %v5008, %v6216
    %v6218 = vpop.f32.mrf.mxu0
    %v6219 = vadd.f32 %v5012, %v6218
    %v6220 = vpop.f32.mrf.mxu0
    %v6221 = vadd.f32 %v5008, %v6220
    %v6222 = vpop.f32.mrf.mxu0
    %v6223 = vadd.f32 %v5012, %v6222
    %6224 = vmatprep.mubr.bf16.mxu0 %v4707
    %6225 = vmatmul.mubr.bf16.gmra.mxu0 %v4706
    %v6226 = vpop.f32.mrf.mxu0
    %v6227 = vadd.f32 %v5008, %v6226
    %v6228 = vpop.f32.mrf.mxu0
    %v6229 = vadd.f32 %v5012, %v6228
    %v6230 = vpop.f32.mrf.mxu0
    %v6231 = vadd.f32 %v5008, %v6230
    %v6232 = vpop.f32.mrf.mxu0
    %v6233 = vadd.f32 %v5012, %v6232
    %6234 = vdwg.mxu0
    %6235 = vmatprep.subr.bf16.mxu0 %v5810
    %6236 = vmatpush1.bf16.msra.mxu0 %v5809
    %6237 = vmatprep.subr.bf16.mxu0 %v5807
    %6238 = vmatpush1.bf16.msra.mxu0 %v5806
    %6239 = vmatprep.subr.bf16.mxu0 %v5804
    %6240 = vmatpush1.bf16.msra.mxu0 %v5803
    %6241 = vmatprep.subr.bf16.mxu0 %v5801
    %6242 = vmatpush1.bf16.msra.mxu0 %v5800
    %6243 = vmatprep.subr.bf16.mxu0 %v5798
    %6244 = vmatpush1.bf16.msra.mxu0 %v5797
    %6245 = vmatprep.subr.bf16.mxu0 %v5795
    %6246 = vmatpush1.bf16.msra.mxu0 %v5794
    %6247 = vmatprep.subr.bf16.mxu0 %v5792
    %6248 = vmatpush1.bf16.msra.mxu0 %v5791
    %6249 = vmatprep.subr.bf16.mxu0 %v5789
    %6250 = vmatpush1.bf16.msra.mxu0 %v5788
    %6251 = vmatprep.subr.bf16.mxu0 %v5834
    %6252 = vmatpush2.bf16.msra.mxu0 %v5833
    %6253 = vmatprep.subr.bf16.mxu0 %v5831
    %6254 = vmatpush2.bf16.msra.mxu0 %v5830
    %6255 = vmatprep.subr.bf16.mxu0 %v5828
    %6256 = vmatpush2.bf16.msra.mxu0 %v5827
    %6257 = vmatprep.subr.bf16.mxu0 %v5825
    %6258 = vmatpush2.bf16.msra.mxu0 %v5824
    %6259 = vmatprep.subr.bf16.mxu0 %v5822
    %6260 = vmatpush2.bf16.msra.mxu0 %v5821
    %6261 = vmatprep.subr.bf16.mxu0 %v5819
    %6262 = vmatpush2.bf16.msra.mxu0 %v5818
    %6263 = vmatprep.subr.bf16.mxu0 %v5816
    %6264 = vmatpush2.bf16.msra.mxu0 %v5815
    %6265 = vmatprep.subr.bf16.mxu0 %v5813
    %6266 = vmatpush2.bf16.msra.mxu0 %v5812
    %6267 = vmatprep.mubr.bf16.mxu0 %v4691
    %6268 = vmatmul.mubr.bf16.gmra.mxu0 %v4690
    %v6269 = vpop.f32.mrf.mxu0
    %v6270 = vadd.f32 %v6207, %v6269
    %v6271 = vpop.f32.mrf.mxu0
    %v6272 = vadd.f32 %v6209, %v6271
    %v6273 = vpop.f32.mrf.mxu0
    %v6274 = vadd.f32 %v6211, %v6273
    %v6275 = vpop.f32.mrf.mxu0
    %v6276 = vadd.f32 %v6213, %v6275
    %6277 = vmatprep.mubr.bf16.mxu0 %v4700
    %6278 = vmatmul.mubr.bf16.gmra.mxu0 %v4699
    %v6279 = vpop.f32.mrf.mxu0
    %v6280 = vadd.f32 %v6217, %v6279
    %v6281 = vpop.f32.mrf.mxu0
    %v6282 = vadd.f32 %v6219, %v6281
    %v6283 = vpop.f32.mrf.mxu0
    %v6284 = vadd.f32 %v6221, %v6283
    %v6285 = vpop.f32.mrf.mxu0
    %v6286 = vadd.f32 %v6223, %v6285
    %6287 = vmatprep.mubr.bf16.mxu0 %v4709
    %6288 = vmatmul.mubr.bf16.gmra.mxu0 %v4708
    %v6289 = vpop.f32.mrf.mxu0
    %v6290 = vadd.f32 %v6227, %v6289
    %v6291 = vpop.f32.mrf.mxu0
    %v6292 = vadd.f32 %v6229, %v6291
    %v6293 = vpop.f32.mrf.mxu0
    %v6294 = vadd.f32 %v6231, %v6293
    %v6295 = vpop.f32.mrf.mxu0
    %v6296 = vadd.f32 %v6233, %v6295
    %6297 = vdwg.mxu0
    %6298 = vmatprep.subr.bf16.mxu0 %v5858
    %6299 = vmatpush1.bf16.msra.mxu0 %v5857
    %6300 = vmatprep.subr.bf16.mxu0 %v5855
    %6301 = vmatpush1.bf16.msra.mxu0 %v5854
    %6302 = vmatprep.subr.bf16.mxu0 %v5852
    %6303 = vmatpush1.bf16.msra.mxu0 %v5851
    %6304 = vmatprep.subr.bf16.mxu0 %v5849
    %6305 = vmatpush1.bf16.msra.mxu0 %v5848
    %6306 = vmatprep.subr.bf16.mxu0 %v5846
    %6307 = vmatpush1.bf16.msra.mxu0 %v5845
    %6308 = vmatprep.subr.bf16.mxu0 %v5843
    %6309 = vmatpush1.bf16.msra.mxu0 %v5842
    %6310 = vmatprep.subr.bf16.mxu0 %v5840
    %6311 = vmatpush1.bf16.msra.mxu0 %v5839
    %6312 = vmatprep.subr.bf16.mxu0 %v5837
    %6313 = vmatpush1.bf16.msra.mxu0 %v5836
    %6314 = vmatprep.subr.bf16.mxu0 %v5882
    %6315 = vmatpush2.bf16.msra.mxu0 %v5881
    %6316 = vmatprep.subr.bf16.mxu0 %v5879
    %6317 = vmatpush2.bf16.msra.mxu0 %v5878
    %6318 = vmatprep.subr.bf16.mxu0 %v5876
    %6319 = vmatpush2.bf16.msra.mxu0 %v5875
    %6320 = vmatprep.subr.bf16.mxu0 %v5873
    %6321 = vmatpush2.bf16.msra.mxu0 %v5872
    %6322 = vmatprep.subr.bf16.mxu0 %v5870
    %6323 = vmatpush2.bf16.msra.mxu0 %v5869
    %6324 = vmatprep.subr.bf16.mxu0 %v5867
    %6325 = vmatpush2.bf16.msra.mxu0 %v5866
    %6326 = vmatprep.subr.bf16.mxu0 %v5864
    %6327 = vmatpush2.bf16.msra.mxu0 %v5863
    %6328 = vmatprep.subr.bf16.mxu0 %v5861
    %6329 = vmatpush2.bf16.msra.mxu0 %v5860
    %6330 = vmatprep.mubr.bf16.mxu0 %v4693
    %6331 = vmatmul.mubr.bf16.gmra.mxu0 %v4692
    %v6332 = vpop.f32.mrf.mxu0
    %v6333 = vadd.f32 %v6270, %v6332
    %v6334 = vpop.f32.mrf.mxu0
    %v6335 = vadd.f32 %v6272, %v6334
    %v6336 = vpop.f32.mrf.mxu0
    %v6337 = vadd.f32 %v6274, %v6336
    %v6338 = vpop.f32.mrf.mxu0
    %v6339 = vadd.f32 %v6276, %v6338
    %6340 = vmatprep.mubr.bf16.mxu0 %v4702
    %6341 = vmatmul.mubr.bf16.gmra.mxu0 %v4701
    %v6342 = vpop.f32.mrf.mxu0
    %v6343 = vadd.f32 %v6280, %v6342
    %v6344 = vpop.f32.mrf.mxu0
    %v6345 = vadd.f32 %v6282, %v6344
    %v6346 = vpop.f32.mrf.mxu0
    %v6347 = vadd.f32 %v6284, %v6346
    %v6348 = vpop.f32.mrf.mxu0
    %v6349 = vadd.f32 %v6286, %v6348
    %6350 = vmatprep.mubr.bf16.mxu0 %v4711
    %6351 = vmatmul.mubr.bf16.gmra.mxu0 %v4710
    %v6352 = vpop.f32.mrf.mxu0
    %v6353 = vadd.f32 %v6290, %v6352
    %v6354 = vpop.f32.mrf.mxu0
    %v6355 = vadd.f32 %v6292, %v6354
    %v6356 = vpop.f32.mrf.mxu0
    %v6357 = vadd.f32 %v6294, %v6356
    %v6358 = vpop.f32.mrf.mxu0
    %v6359 = vadd.f32 %v6296, %v6358
    %6360 = vdwg.mxu0
    %6361 = vmatprep.subr.bf16.mxu0 %v5906
    %6362 = vmatpush1.bf16.msra.mxu0 %v5905
    %6363 = vmatprep.subr.bf16.mxu0 %v5903
    %6364 = vmatpush1.bf16.msra.mxu0 %v5902
    %6365 = vmatprep.subr.bf16.mxu0 %v5900
    %6366 = vmatpush1.bf16.msra.mxu0 %v5899
    %6367 = vmatprep.subr.bf16.mxu0 %v5897
    %6368 = vmatpush1.bf16.msra.mxu0 %v5896
    %6369 = vmatprep.subr.bf16.mxu0 %v5894
    %6370 = vmatpush1.bf16.msra.mxu0 %v5893
    %6371 = vmatprep.subr.bf16.mxu0 %v5891
    %6372 = vmatpush1.bf16.msra.mxu0 %v5890
    %6373 = vmatprep.subr.bf16.mxu0 %v5888
    %6374 = vmatpush1.bf16.msra.mxu0 %v5887
    %6375 = vmatprep.subr.bf16.mxu0 %v5885
    %6376 = vmatpush1.bf16.msra.mxu0 %v5884
    %6377 = vmatprep.subr.bf16.mxu0 %v5930
    %6378 = vmatpush2.bf16.msra.mxu0 %v5929
    %6379 = vmatprep.subr.bf16.mxu0 %v5927
    %6380 = vmatpush2.bf16.msra.mxu0 %v5926
    %6381 = vmatprep.subr.bf16.mxu0 %v5924
    %6382 = vmatpush2.bf16.msra.mxu0 %v5923
    %6383 = vmatprep.subr.bf16.mxu0 %v5921
    %6384 = vmatpush2.bf16.msra.mxu0 %v5920
    %6385 = vmatprep.subr.bf16.mxu0 %v5918
    %6386 = vmatpush2.bf16.msra.mxu0 %v5917
    %6387 = vmatprep.subr.bf16.mxu0 %v5915
    %6388 = vmatpush2.bf16.msra.mxu0 %v5914
    %6389 = vmatprep.subr.bf16.mxu0 %v5912
    %6390 = vmatpush2.bf16.msra.mxu0 %v5911
    %6391 = vmatprep.subr.bf16.mxu0 %v5909
    %6392 = vmatpush2.bf16.msra.mxu0 %v5908
    %6393 = vmatprep.mubr.bf16.mxu0 %v4695
    %6394 = vmatmul.mubr.bf16.gmra.mxu0 %v4694
    %v6395 = vpop.f32.mrf.mxu0
    %v6396 = vadd.f32 %v6333, %v6395
    %v6397 = vpop.f32.mrf.mxu0
    %v6398 = vadd.f32 %v6335, %v6397
    %v6399 = vpop.f32.mrf.mxu0
    %v6400 = vadd.f32 %v6337, %v6399
    %v6401 = vpop.f32.mrf.mxu0
    %v6402 = vadd.f32 %v6339, %v6401
    %6403 = vmatprep.mubr.bf16.mxu0 %v4704
    %6404 = vmatmul.mubr.bf16.gmra.mxu0 %v4703
    %v6405 = vpop.f32.mrf.mxu0
    %v6406 = vadd.f32 %v6343, %v6405
    %v6407 = vpop.f32.mrf.mxu0
    %v6408 = vadd.f32 %v6345, %v6407
    %v6409 = vpop.f32.mrf.mxu0
    %v6410 = vadd.f32 %v6347, %v6409
    %v6411 = vpop.f32.mrf.mxu0
    %v6412 = vadd.f32 %v6349, %v6411
    %6413 = vmatprep.mubr.bf16.mxu0 %v4713
    %6414 = vmatmul.mubr.bf16.gmra.mxu0 %v4712
    %v6415 = vpop.f32.mrf.mxu0
    %v6416 = vadd.f32 %v6353, %v6415
    %v6417 = vpop.f32.mrf.mxu0
    %v6418 = vadd.f32 %v6355, %v6417
    %v6419 = vpop.f32.mrf.mxu0
    %v6420 = vadd.f32 %v6357, %v6419
    %v6421 = vpop.f32.mrf.mxu0
    %v6422 = vadd.f32 %v6359, %v6421
    %6423 = vdwg.mxu0
    %6424 = vmatprep.subr.bf16.mxu0 %v5954
    %6425 = vmatpush1.bf16.msra.mxu0 %v5953
    %6426 = vmatprep.subr.bf16.mxu0 %v5951
    %6427 = vmatpush1.bf16.msra.mxu0 %v5950
    %6428 = vmatprep.subr.bf16.mxu0 %v5948
    %6429 = vmatpush1.bf16.msra.mxu0 %v5947
    %6430 = vmatprep.subr.bf16.mxu0 %v5945
    %6431 = vmatpush1.bf16.msra.mxu0 %v5944
    %6432 = vmatprep.subr.bf16.mxu0 %v5942
    %6433 = vmatpush1.bf16.msra.mxu0 %v5941
    %6434 = vmatprep.subr.bf16.mxu0 %v5939
    %6435 = vmatpush1.bf16.msra.mxu0 %v5938
    %6436 = vmatprep.subr.bf16.mxu0 %v5936
    %6437 = vmatpush1.bf16.msra.mxu0 %v5935
    %6438 = vmatprep.subr.bf16.mxu0 %v5933
    %6439 = vmatpush1.bf16.msra.mxu0 %v5932
    %6440 = vmatprep.subr.bf16.mxu0 0
    %6441 = vmatpush2.bf16.msra.mxu0 0
    %6442 = vmatprep.subr.bf16.mxu0 0
    %6443 = vmatpush2.bf16.msra.mxu0 0
    %6444 = vmatprep.subr.bf16.mxu0 0
    %6445 = vmatpush2.bf16.msra.mxu0 0
    %6446 = vmatprep.subr.bf16.mxu0 0
    %6447 = vmatpush2.bf16.msra.mxu0 0
    %6448 = vmatprep.subr.bf16.mxu0 0
    %6449 = vmatpush2.bf16.msra.mxu0 0
    %6450 = vmatprep.subr.bf16.mxu0 0
    %6451 = vmatpush2.bf16.msra.mxu0 0
    %6452 = vmatprep.subr.bf16.mxu0 0
    %6453 = vmatpush2.bf16.msra.mxu0 0
    %6454 = vmatprep.subr.bf16.mxu0 0
    %6455 = vmatpush2.bf16.msra.mxu0 0
    %6456 = vmatprep.mubr.bf16.mxu0 0
    %6457 = vmatmul.mubr.bf16.gmra.mxu0 %v4696
    %v6458 = vpop.f32.mrf.mxu0
    %v6459 = vadd.f32 %v6396, %v6458
    %v6460 = vpop.f32.mrf.mxu0
    %v6461 = vadd.f32 %v6398, %v6460
    %v6462 = vpop.f32.mrf.mxu0
    %v6463 = vadd.f32 %v6400, %v6462
    %v6464 = vpop.f32.mrf.mxu0
    %v6465 = vadd.f32 %v6402, %v6464
    %6466 = vmatprep.mubr.bf16.mxu0 0
    %6467 = vmatmul.mubr.bf16.gmra.mxu0 %v4705
    %v6468 = vpop.f32.mrf.mxu0
    %v6469 = vadd.f32 %v6406, %v6468
    %v6470 = vpop.f32.mrf.mxu0
    %v6471 = vadd.f32 %v6408, %v6470
    %v6472 = vpop.f32.mrf.mxu0
    %v6473 = vadd.f32 %v6410, %v6472
    %v6474 = vpop.f32.mrf.mxu0
    %v6475 = vadd.f32 %v6412, %v6474
    %6476 = vmatprep.mubr.bf16.mxu0 0
    %6477 = vmatmul.mubr.bf16.gmra.mxu0 %v4714
    %v6478 = vpop.f32.mrf.mxu0
    %v6479 = vadd.f32 %v6416, %v6478
    %v6480 = vpop.f32.mrf.mxu0
    %v6481 = vadd.f32 %v6418, %v6480
    %v6482 = vpop.f32.mrf.mxu0
    %v6483 = vadd.f32 %v6420, %v6482
    %v6484 = vpop.f32.mrf.mxu0
    %v6485 = vadd.f32 %v6422, %v6484
    %6486 = vdwg.mxu0
    %6487 = vmatprep.subr.bf16.mxu0 0
    %6488 = vmatpush1.bf16.msra.mxu0 %v5763
    %6489 = vmatprep.subr.bf16.mxu0 0
    %6490 = vmatpush1.bf16.msra.mxu0 %v5760
    %6491 = vmatprep.subr.bf16.mxu0 0
    %6492 = vmatpush1.bf16.msra.mxu0 %v5757
    %6493 = vmatprep.subr.bf16.mxu0 0
    %6494 = vmatpush1.bf16.msra.mxu0 %v5754
    %6495 = vmatprep.subr.bf16.mxu0 0
    %6496 = vmatpush1.bf16.msra.mxu0 %v5751
    %6497 = vmatprep.subr.bf16.mxu0 0
    %6498 = vmatpush1.bf16.msra.mxu0 %v5748
    %6499 = vmatprep.subr.bf16.mxu0 0
    %6500 = vmatpush1.bf16.msra.mxu0 %v5745
    %6501 = vmatprep.subr.bf16.mxu0 0
    %6502 = vmatpush1.bf16.msra.mxu0 %v5742
    %6503 = vmatprep.subr.bf16.mxu0 0
    %6504 = vmatpush2.bf16.msra.mxu0 %v5787
    %6505 = vmatprep.subr.bf16.mxu0 0
    %6506 = vmatpush2.bf16.msra.mxu0 %v5784
    %6507 = vmatprep.subr.bf16.mxu0 0
    %6508 = vmatpush2.bf16.msra.mxu0 %v5781
    %6509 = vmatprep.subr.bf16.mxu0 0
    %6510 = vmatpush2.bf16.msra.mxu0 %v5778
    %6511 = vmatprep.subr.bf16.mxu0 0
    %6512 = vmatpush2.bf16.msra.mxu0 %v5775
    %6513 = vmatprep.subr.bf16.mxu0 0
    %6514 = vmatpush2.bf16.msra.mxu0 %v5772
    %6515 = vmatprep.subr.bf16.mxu0 0
    %6516 = vmatpush2.bf16.msra.mxu0 %v5769
    %6517 = vmatprep.subr.bf16.mxu0 0
    %6518 = vmatpush2.bf16.msra.mxu0 %v5766
    %6519 = vmatprep.mubr.bf16.mxu0 %v4689
    %6520 = vmatmul.mubr.bf16.gmra.mxu0 %v4688
    %v6521 = vpop.f32.mrf.mxu0
    %v6522 = vadd.f32 %v5016, %v6521
    %v6523 = vpop.f32.mrf.mxu0
    %v6524 = vpop.f32.mrf.mxu0
    %v6525 = vadd.f32 %v5016, %v6524
    %v6526 = vpop.f32.mrf.mxu0
    %6527 = vmatprep.mubr.bf16.mxu0 %v4698
    %6528 = vmatmul.mubr.bf16.gmra.mxu0 %v4697
    %v6529 = vpop.f32.mrf.mxu0
    %v6530 = vadd.f32 %v5016, %v6529
    %v6531 = vpop.f32.mrf.mxu0
    %v6532 = vpop.f32.mrf.mxu0
    %v6533 = vadd.f32 %v5016, %v6532
    %v6534 = vpop.f32.mrf.mxu0
    %6535 = vmatprep.mubr.bf16.mxu0 %v4707
    %6536 = vmatmul.mubr.bf16.gmra.mxu0 %v4706
    %v6537 = vpop.f32.mrf.mxu0
    %v6538 = vadd.f32 %v5016, %v6537
    %v6539 = vpop.f32.mrf.mxu0
    %v6540 = vpop.f32.mrf.mxu0
    %v6541 = vadd.f32 %v5016, %v6540
    %v6542 = vpop.f32.mrf.mxu0
    %6543 = vdwg.mxu0
    %6544 = vmatprep.subr.bf16.mxu0 0
    %6545 = vmatpush1.bf16.msra.mxu0 %v5811
    %6546 = vmatprep.subr.bf16.mxu0 0
    %6547 = vmatpush1.bf16.msra.mxu0 %v5808
    %6548 = vmatprep.subr.bf16.mxu0 0
    %6549 = vmatpush1.bf16.msra.mxu0 %v5805
    %6550 = vmatprep.subr.bf16.mxu0 0
    %6551 = vmatpush1.bf16.msra.mxu0 %v5802
    %6552 = vmatprep.subr.bf16.mxu0 0
    %6553 = vmatpush1.bf16.msra.mxu0 %v5799
    %6554 = vmatprep.subr.bf16.mxu0 0
    %6555 = vmatpush1.bf16.msra.mxu0 %v5796
    %6556 = vmatprep.subr.bf16.mxu0 0
    %6557 = vmatpush1.bf16.msra.mxu0 %v5793
    %6558 = vmatprep.subr.bf16.mxu0 0
    %6559 = vmatpush1.bf16.msra.mxu0 %v5790
    %6560 = vmatprep.subr.bf16.mxu0 0
    %6561 = vmatpush2.bf16.msra.mxu0 %v5835
    %6562 = vmatprep.subr.bf16.mxu0 0
    %6563 = vmatpush2.bf16.msra.mxu0 %v5832
    %6564 = vmatprep.subr.bf16.mxu0 0
    %6565 = vmatpush2.bf16.msra.mxu0 %v5829
    %6566 = vmatprep.subr.bf16.mxu0 0
    %6567 = vmatpush2.bf16.msra.mxu0 %v5826
    %6568 = vmatprep.subr.bf16.mxu0 0
    %6569 = vmatpush2.bf16.msra.mxu0 %v5823
    %6570 = vmatprep.subr.bf16.mxu0 0
    %6571 = vmatpush2.bf16.msra.mxu0 %v5820
    %6572 = vmatprep.subr.bf16.mxu0 0
    %6573 = vmatpush2.bf16.msra.mxu0 %v5817
    %6574 = vmatprep.subr.bf16.mxu0 0
    %6575 = vmatpush2.bf16.msra.mxu0 %v5814
    %6576 = vmatprep.mubr.bf16.mxu0 %v4691
    %6577 = vmatmul.mubr.bf16.gmra.mxu0 %v4690
    %v6578 = vpop.f32.mrf.mxu0
    %v6579 = vadd.f32 %v6522, %v6578
    %v6580 = vpop.f32.mrf.mxu0
    %v6581 = vpop.f32.mrf.mxu0
    %v6582 = vadd.f32 %v6525, %v6581
    %v6583 = vpop.f32.mrf.mxu0
    %6584 = vmatprep.mubr.bf16.mxu0 %v4700
    %6585 = vmatmul.mubr.bf16.gmra.mxu0 %v4699
    %v6586 = vpop.f32.mrf.mxu0
    %v6587 = vadd.f32 %v6530, %v6586
    %v6588 = vpop.f32.mrf.mxu0
    %v6589 = vpop.f32.mrf.mxu0
    %v6590 = vadd.f32 %v6533, %v6589
    %v6591 = vpop.f32.mrf.mxu0
    %6592 = vmatprep.mubr.bf16.mxu0 %v4709
    %6593 = vmatmul.mubr.bf16.gmra.mxu0 %v4708
    %v6594 = vpop.f32.mrf.mxu0
    %v6595 = vadd.f32 %v6538, %v6594
    %v6596 = vpop.f32.mrf.mxu0
    %v6597 = vpop.f32.mrf.mxu0
    %v6598 = vadd.f32 %v6541, %v6597
    %v6599 = vpop.f32.mrf.mxu0
    %6600 = vdwg.mxu0
    %6601 = vmatprep.subr.bf16.mxu0 0
    %6602 = vmatpush1.bf16.msra.mxu0 %v5859
    %6603 = vmatprep.subr.bf16.mxu0 0
    %6604 = vmatpush1.bf16.msra.mxu0 %v5856
    %6605 = vmatprep.subr.bf16.mxu0 0
    %6606 = vmatpush1.bf16.msra.mxu0 %v5853
    %6607 = vmatprep.subr.bf16.mxu0 0
    %6608 = vmatpush1.bf16.msra.mxu0 %v5850
    %6609 = vmatprep.subr.bf16.mxu0 0
    %6610 = vmatpush1.bf16.msra.mxu0 %v5847
    %6611 = vmatprep.subr.bf16.mxu0 0
    %6612 = vmatpush1.bf16.msra.mxu0 %v5844
    %6613 = vmatprep.subr.bf16.mxu0 0
    %6614 = vmatpush1.bf16.msra.mxu0 %v5841
    %6615 = vmatprep.subr.bf16.mxu0 0
    %6616 = vmatpush1.bf16.msra.mxu0 %v5838
    %6617 = vmatprep.subr.bf16.mxu0 0
    %6618 = vmatpush2.bf16.msra.mxu0 %v5883
    %6619 = vmatprep.subr.bf16.mxu0 0
    %6620 = vmatpush2.bf16.msra.mxu0 %v5880
    %6621 = vmatprep.subr.bf16.mxu0 0
    %6622 = vmatpush2.bf16.msra.mxu0 %v5877
    %6623 = vmatprep.subr.bf16.mxu0 0
    %6624 = vmatpush2.bf16.msra.mxu0 %v5874
    %6625 = vmatprep.subr.bf16.mxu0 0
    %6626 = vmatpush2.bf16.msra.mxu0 %v5871
    %6627 = vmatprep.subr.bf16.mxu0 0
    %6628 = vmatpush2.bf16.msra.mxu0 %v5868
    %6629 = vmatprep.subr.bf16.mxu0 0
    %6630 = vmatpush2.bf16.msra.mxu0 %v5865
    %6631 = vmatprep.subr.bf16.mxu0 0
    %6632 = vmatpush2.bf16.msra.mxu0 %v5862
    %6633 = vmatprep.mubr.bf16.mxu0 %v4693
    %6634 = vmatmul.mubr.bf16.gmra.mxu0 %v4692
    %v6635 = vpop.f32.mrf.mxu0
    %v6636 = vadd.f32 %v6579, %v6635
    %v6637 = vpop.f32.mrf.mxu0
    %v6638 = vpop.f32.mrf.mxu0
    %v6639 = vadd.f32 %v6582, %v6638
    %v6640 = vpop.f32.mrf.mxu0
    %6641 = vmatprep.mubr.bf16.mxu0 %v4702
    %6642 = vmatmul.mubr.bf16.gmra.mxu0 %v4701
    %v6643 = vpop.f32.mrf.mxu0
    %v6644 = vadd.f32 %v6587, %v6643
    %v6645 = vpop.f32.mrf.mxu0
    %v6646 = vpop.f32.mrf.mxu0
    %v6647 = vadd.f32 %v6590, %v6646
    %v6648 = vpop.f32.mrf.mxu0
    %6649 = vmatprep.mubr.bf16.mxu0 %v4711
    %6650 = vmatmul.mubr.bf16.gmra.mxu0 %v4710
    %v6651 = vpop.f32.mrf.mxu0
    %v6652 = vadd.f32 %v6595, %v6651
    %v6653 = vpop.f32.mrf.mxu0
    %v6654 = vpop.f32.mrf.mxu0
    %v6655 = vadd.f32 %v6598, %v6654
    %v6656 = vpop.f32.mrf.mxu0
    %6657 = vdwg.mxu0
    %6658 = vmatprep.subr.bf16.mxu0 0
    %6659 = vmatpush1.bf16.msra.mxu0 %v5907
    %6660 = vmatprep.subr.bf16.mxu0 0
    %6661 = vmatpush1.bf16.msra.mxu0 %v5904
    %6662 = vmatprep.subr.bf16.mxu0 0
    %6663 = vmatpush1.bf16.msra.mxu0 %v5901
    %6664 = vmatprep.subr.bf16.mxu0 0
    %6665 = vmatpush1.bf16.msra.mxu0 %v5898
    %6666 = vmatprep.subr.bf16.mxu0 0
    %6667 = vmatpush1.bf16.msra.mxu0 %v5895
    %6668 = vmatprep.subr.bf16.mxu0 0
    %6669 = vmatpush1.bf16.msra.mxu0 %v5892
    %6670 = vmatprep.subr.bf16.mxu0 0
    %6671 = vmatpush1.bf16.msra.mxu0 %v5889
    %6672 = vmatprep.subr.bf16.mxu0 0
    %6673 = vmatpush1.bf16.msra.mxu0 %v5886
    %6674 = vmatprep.subr.bf16.mxu0 0
    %6675 = vmatpush2.bf16.msra.mxu0 %v5931
    %6676 = vmatprep.subr.bf16.mxu0 0
    %6677 = vmatpush2.bf16.msra.mxu0 %v5928
    %6678 = vmatprep.subr.bf16.mxu0 0
    %6679 = vmatpush2.bf16.msra.mxu0 %v5925
    %6680 = vmatprep.subr.bf16.mxu0 0
    %6681 = vmatpush2.bf16.msra.mxu0 %v5922
    %6682 = vmatprep.subr.bf16.mxu0 0
    %6683 = vmatpush2.bf16.msra.mxu0 %v5919
    %6684 = vmatprep.subr.bf16.mxu0 0
    %6685 = vmatpush2.bf16.msra.mxu0 %v5916
    %6686 = vmatprep.subr.bf16.mxu0 0
    %6687 = vmatpush2.bf16.msra.mxu0 %v5913
    %6688 = vmatprep.subr.bf16.mxu0 0
    %6689 = vmatpush2.bf16.msra.mxu0 %v5910
    %6690 = vmatprep.mubr.bf16.mxu0 %v4695
    %6691 = vmatmul.mubr.bf16.gmra.mxu0 %v4694
    %v6692 = vpop.f32.mrf.mxu0
    %v6693 = vadd.f32 %v6636, %v6692
    %v6694 = vpop.f32.mrf.mxu0
    %v6695 = vpop.f32.mrf.mxu0
    %v6696 = vadd.f32 %v6639, %v6695
    %v6697 = vpop.f32.mrf.mxu0
    %6698 = vmatprep.mubr.bf16.mxu0 %v4704
    %6699 = vmatmul.mubr.bf16.gmra.mxu0 %v4703
    %v6700 = vpop.f32.mrf.mxu0
    %v6701 = vadd.f32 %v6644, %v6700
    %v6702 = vpop.f32.mrf.mxu0
    %v6703 = vpop.f32.mrf.mxu0
    %v6704 = vadd.f32 %v6647, %v6703
    %v6705 = vpop.f32.mrf.mxu0
    %6706 = vmatprep.mubr.bf16.mxu0 %v4713
    %6707 = vmatmul.mubr.bf16.gmra.mxu0 %v4712
    %v6708 = vpop.f32.mrf.mxu0
    %v6709 = vadd.f32 %v6652, %v6708
    %v6710 = vpop.f32.mrf.mxu0
    %v6711 = vpop.f32.mrf.mxu0
    %v6712 = vadd.f32 %v6655, %v6711
    %v6713 = vpop.f32.mrf.mxu0
    %6714 = vdwg.mxu0
    %6715 = vmatprep.subr.bf16.mxu0 0
    %6716 = vmatpush1.bf16.msra.mxu0 %v5955
    %6717 = vmatprep.subr.bf16.mxu0 0
    %6718 = vmatpush1.bf16.msra.mxu0 %v5952
    %6719 = vmatprep.subr.bf16.mxu0 0
    %6720 = vmatpush1.bf16.msra.mxu0 %v5949
    %6721 = vmatprep.subr.bf16.mxu0 0
    %6722 = vmatpush1.bf16.msra.mxu0 %v5946
    %6723 = vmatprep.subr.bf16.mxu0 0
    %6724 = vmatpush1.bf16.msra.mxu0 %v5943
    %6725 = vmatprep.subr.bf16.mxu0 0
    %6726 = vmatpush1.bf16.msra.mxu0 %v5940
    %6727 = vmatprep.subr.bf16.mxu0 0
    %6728 = vmatpush1.bf16.msra.mxu0 %v5937
    %6729 = vmatprep.subr.bf16.mxu0 0
    %6730 = vmatpush1.bf16.msra.mxu0 %v5934
    %6731 = vmatprep.subr.bf16.mxu0 0
    %6732 = vmatpush2.bf16.msra.mxu0 0
    %6733 = vmatprep.subr.bf16.mxu0 0
    %6734 = vmatpush2.bf16.msra.mxu0 0
    %6735 = vmatprep.subr.bf16.mxu0 0
    %6736 = vmatpush2.bf16.msra.mxu0 0
    %6737 = vmatprep.subr.bf16.mxu0 0
    %6738 = vmatpush2.bf16.msra.mxu0 0
    %6739 = vmatprep.subr.bf16.mxu0 0
    %6740 = vmatpush2.bf16.msra.mxu0 0
    %6741 = vmatprep.subr.bf16.mxu0 0
    %6742 = vmatpush2.bf16.msra.mxu0 0
    %6743 = vmatprep.subr.bf16.mxu0 0
    %6744 = vmatpush2.bf16.msra.mxu0 0
    %6745 = vmatprep.subr.bf16.mxu0 0
    %6746 = vmatpush2.bf16.msra.mxu0 0
    %6747 = vmatprep.mubr.bf16.mxu0 0
    %6748 = vmatmul.mubr.bf16.gmra.mxu0 %v4696
    %v6749 = vpop.f32.mrf.mxu0
    %v6750 = vadd.f32 %v6693, %v6749
    %v6751 = vpop.f32.mrf.mxu0
    %v6752 = vpop.f32.mrf.mxu0
    %v6753 = vadd.f32 %v6696, %v6752
    %v6754 = vpop.f32.mrf.mxu0
    %6755 = vmatprep.mubr.bf16.mxu0 0
    %6756 = vmatmul.mubr.bf16.gmra.mxu0 %v4705
    %v6757 = vpop.f32.mrf.mxu0
    %v6758 = vadd.f32 %v6701, %v6757
    %v6759 = vpop.f32.mrf.mxu0
    %v6760 = vpop.f32.mrf.mxu0
    %v6761 = vadd.f32 %v6704, %v6760
    %v6762 = vpop.f32.mrf.mxu0
    %6763 = vmatprep.mubr.bf16.mxu0 0
    %6764 = vmatmul.mubr.bf16.gmra.mxu0 %v4714
    %v6765 = vpop.f32.mrf.mxu0
    %v6766 = vadd.f32 %v6709, %v6765
    %v6767 = vpop.f32.mrf.mxu0
    %v6768 = vpop.f32.mrf.mxu0
    %v6769 = vadd.f32 %v6712, %v6768
    %v6770 = vpop.f32.mrf.mxu0
    %6771 = vdwg.mxu0
    %v6772 = vmax.f32 %v6459, 0.0
    %v6773 = vmax.f32 %v6461, 0.0
    %v6774 = vmax.f32 %v6750, 0.0
    %v6775 = vmax.f32 %v6463, 0.0
    %v6776 = vmax.f32 %v6465, 0.0
    %v6777 = vmax.f32 %v6753, 0.0
    %v6778 = vmax.f32 %v6469, 0.0
    %v6779 = vmax.f32 %v6471, 0.0
    %v6780 = vmax.f32 %v6758, 0.0
    %v6781 = vmax.f32 %v6473, 0.0
    %v6782 = vmax.f32 %v6475, 0.0
    %v6783 = vmax.f32 %v6761, 0.0
    %v6784 = vmax.f32 %v6479, 0.0
    %v6785 = vmax.f32 %v6481, 0.0
    %v6786 = vmax.f32 %v6766, 0.0
    %v6787 = vmax.f32 %v6483, 0.0
    %v6788 = vmax.f32 %v6485, 0.0
    %v6789 = vmax.f32 %v6769, 0.0
    %s6790 = sshll.u32 %s4547, 4
    %6791 = dma.done %s401, %s6790
    %6792 = vst [vmem:[#allocation2 + $0x18] sm:$0xff] %v6772
    %6793 = vst [vmem:[#allocation2 + $0x20] sm:$0xff] %v6773
    %6794 = vst [vmem:[#allocation2 + $0x28] sm:$0xff] %v6774
    %6795 = vst [vmem:[#allocation2 + $0x60] sm:$0xff] %v6775
    %6796 = vst [vmem:[#allocation2 + $0x68] sm:$0xff] %v6776
    %6797 = vst [vmem:[#allocation2 + $0x70] sm:$0xff] %v6777
    %6798 = vst [vmem:[#allocation2 + $0xa8] sm:$0xff] %v6778
    %6799 = vst [vmem:[#allocation2 + $0xb0] sm:$0xff] %v6779
    %6800 = vst [vmem:[#allocation2 + $0xb8] sm:$0xff] %v6780
    %6801 = vst [vmem:[#allocation2 + $0xf0] sm:$0xff] %v6781
    %6802 = vst [vmem:[#allocation2 + $0xf8] sm:$0xff] %v6782
    %6803 = vst [vmem:[#allocation2 + $0x100] sm:$0xff] %v6783
    %6804 = vst [vmem:[#allocation2 + $0x138] sm:$0xff] %v6784
    %6805 = vst [vmem:[#allocation2 + $0x140] sm:$0xff] %v6785
    %6806 = vst [vmem:[#allocation2 + $0x148] sm:$0xff] %v6786
    %6807 = vst [vmem:[#allocation2 + $0x180] sm:$0xff] %v6787
    %6808 = vst [vmem:[#allocation2 + $0x188] sm:$0xff] %v6788
    %6809 = vst [vmem:[#allocation2 + $0x190] sm:$0xff] %v6789
    %v6810 = vld [vmem:[#allocation2 + $0x18] sm:$0xff]
    %v6811 = vld [vmem:[#allocation2 + $0x20] sm:$0xff]
    %v6812 = vld [vmem:[#allocation2 + $0x28] sm:$0xff]
    %v6813 = vld [vmem:[#allocation2 + $0x60] sm:$0xff]
    %v6814 = vld [vmem:[#allocation2 + $0x68] sm:$0xff]
    %v6815 = vld [vmem:[#allocation2 + $0x70] sm:$0xff]
    %v6816 = vld [vmem:[#allocation2 + $0xa8] sm:$0xff]
    %v6817 = vld [vmem:[#allocation2 + $0xb0] sm:$0xff]
    %v6818 = vld [vmem:[#allocation2 + $0xb8] sm:$0xff]
    %v6819 = vld [vmem:[#allocation2 + $0xf0] sm:$0xff]
    %v6820 = vld [vmem:[#allocation2 + $0xf8] sm:$0xff]
    %v6821 = vld [vmem:[#allocation2 + $0x100] sm:$0xff]
    %v6822 = vld [vmem:[#allocation2 + $0x138] sm:$0xff]
    %v6823 = vld [vmem:[#allocation2 + $0x140] sm:$0xff]
    %v6824 = vld [vmem:[#allocation2 + $0x148] sm:$0xff]
    %6825 = vst [vmem:[#allocation2 + $0x48] sm:$0xff] %v6810
    %6826 = vst [vmem:[#allocation2 + $0x50] sm:$0xff] %v6811
    %6827 = vst [vmem:[#allocation2 + $0x58] sm:$0xff] %v6812
    %6828 = vst [vmem:[#allocation2 + $0x90] sm:$0xff] %v6813
    %6829 = vst [vmem:[#allocation2 + $0x98] sm:$0xff] %v6814
    %6830 = vst [vmem:[#allocation2 + $0xa0] sm:$0xff] %v6815
    %6831 = vst [vmem:[#allocation2 + $0xd8] sm:$0xff] %v6816
    %6832 = vst [vmem:[#allocation2 + $0xe0] sm:$0xff] %v6817
    %6833 = vst [vmem:[#allocation2 + $0xe8] sm:$0xff] %v6818
    %6834 = vst [vmem:[#allocation2 + $0x120] sm:$0xff] %v6819
    %6835 = vst [vmem:[#allocation2 + $0x128] sm:$0xff] %v6820
    %6836 = vst [vmem:[#allocation2 + $0x130] sm:$0xff] %v6821
    %6837 = vst [vmem:[#allocation2 + $0x168] sm:$0xff] %v6822
    %6838 = vst [vmem:[#allocation2 + $0x170] sm:$0xff] %v6823
    %6839 = vst [vmem:[#allocation2 + $0x178] sm:$0xff] %v6824
    %v6840 = vld [vmem:[#allocation2 + $0x60] sm:$0xff]
    %v6841 = vld [vmem:[#allocation2 + $0x68] sm:$0xff]
    %v6842 = vld [vmem:[#allocation2 + $0x70] sm:$0xff]
    %v6843 = vld [vmem:[#allocation2 + $0xa8] sm:$0xff]
    %v6844 = vld [vmem:[#allocation2 + $0xb0] sm:$0xff]
    %v6845 = vld [vmem:[#allocation2 + $0xb8] sm:$0xff]
    %v6846 = vld [vmem:[#allocation2 + $0xf0] sm:$0xff]
    %v6847 = vld [vmem:[#allocation2 + $0xf8] sm:$0xff]
    %v6848 = vld [vmem:[#allocation2 + $0x100] sm:$0xff]
    %v6849 = vld [vmem:[#allocation2 + $0x138] sm:$0xff]
    %v6850 = vld [vmem:[#allocation2 + $0x140] sm:$0xff]
    %v6851 = vld [vmem:[#allocation2 + $0x148] sm:$0xff]
    %v6852 = vld [vmem:[#allocation2 + $0x180] sm:$0xff]
    %v6853 = vld [vmem:[#allocation2 + $0x188] sm:$0xff]
    %v6854 = vld [vmem:[#allocation2 + $0x190] sm:$0xff]
    %6855 = vst [vmem:[#allocation2 + $0x30] sm:$0xff] %v6840
    %6856 = vst [vmem:[#allocation2 + $0x38] sm:$0xff] %v6841
    %6857 = vst [vmem:[#allocation2 + $0x40] sm:$0xff] %v6842
    %6858 = vst [vmem:[#allocation2 + $0x78] sm:$0xff] %v6843
    %6859 = vst [vmem:[#allocation2 + $0x80] sm:$0xff] %v6844
    %6860 = vst [vmem:[#allocation2 + $0x88] sm:$0xff] %v6845
    %6861 = vst [vmem:[#allocation2 + $0xc0] sm:$0xff] %v6846
    %6862 = vst [vmem:[#allocation2 + $0xc8] sm:$0xff] %v6847
    %6863 = vst [vmem:[#allocation2 + $0xd0] sm:$0xff] %v6848
    %6864 = vst [vmem:[#allocation2 + $0x108] sm:$0xff] %v6849
    %6865 = vst [vmem:[#allocation2 + $0x110] sm:$0xff] %v6850
    %6866 = vst [vmem:[#allocation2 + $0x118] sm:$0xff] %v6851
    %6867 = vst [vmem:[#allocation2 + $0x150] sm:$0xff] %v6852
    %6868 = vst [vmem:[#allocation2 + $0x158] sm:$0xff] %v6853
    %6869 = vst [vmem:[#allocation2 + $0x160] sm:$0xff] %v6854
    %6870 = vst [vmem:[#allocation2] sm:$0xff] 0.0
    %6871 = vst [vmem:[#allocation2 + $0x8] sm:$0xff] 0.0
    %6872 = vst [vmem:[#allocation2 + $0x10] sm:$0xff] 0.0
    %6873 = vst [vmem:[#allocation2 + $0x198] sm:$0xff] 0.0
    %6874 = vst [vmem:[#allocation2 + $0x1a0] sm:$0xff] 0.0
    %6875 = vst [vmem:[#allocation2 + $0x1a8] sm:$0xff] 0.0
    %v6876 = vld [vmem:[#allocation2] sm:$0xff]
    %v6877 = vld [vmem:[#allocation2 + $0x8] sm:$0xff]
    %v6878 = vld [vmem:[#allocation2 + $0x10] sm:$0xff]
    %v6879 = vld [vmem:[#allocation2 + $0x18] sm:$0xff]
    %v6880 = vld [vmem:[#allocation2 + $0x20] sm:$0xff]
    %v6881 = vld [vmem:[#allocation2 + $0x28] sm:$0xff]
    %v6882 = vld [vmem:[#allocation2 + $0x30] sm:$0xff]
    %v6883 = vld [vmem:[#allocation2 + $0x38] sm:$0xff]
    %v6884 = vld [vmem:[#allocation2 + $0x40] sm:$0xff]
    %v6885 = vld [vmem:[#allocation2 + $0x48] sm:$0xff]
    %v6886 = vld [vmem:[#allocation2 + $0x50] sm:$0xff]
    %v6887 = vld [vmem:[#allocation2 + $0x58] sm:$0xff]
    %v6888 = vld [vmem:[#allocation2 + $0x60] sm:$0xff]
    %v6889 = vld [vmem:[#allocation2 + $0x68] sm:$0xff]
    %v6890 = vld [vmem:[#allocation2 + $0x70] sm:$0xff]
    %v6891 = vld [vmem:[#allocation2 + $0x78] sm:$0xff]
    %v6892 = vld [vmem:[#allocation2 + $0x80] sm:$0xff]
    %v6893 = vld [vmem:[#allocation2 + $0x88] sm:$0xff]
    %v6894 = vld [vmem:[#allocation2 + $0x90] sm:$0xff]
    %v6895 = vld [vmem:[#allocation2 + $0x98] sm:$0xff]
    %v6896 = vld [vmem:[#allocation2 + $0xa0] sm:$0xff]
    %v6897 = vld [vmem:[#allocation2 + $0xa8] sm:$0xff]
    %v6898 = vld [vmem:[#allocation2 + $0xb0] sm:$0xff]
    %v6899 = vld [vmem:[#allocation2 + $0xb8] sm:$0xff]
    %v6900 = vld [vmem:[#allocation2 + $0xc0] sm:$0xff]
    %v6901 = vld [vmem:[#allocation2 + $0xc8] sm:$0xff]
    %v6902 = vld [vmem:[#allocation2 + $0xd0] sm:$0xff]
    %v6903 = vld [vmem:[#allocation2 + $0xd8] sm:$0xff]
    %v6904 = vld [vmem:[#allocation2 + $0xe0] sm:$0xff]
    %v6905 = vld [vmem:[#allocation2 + $0xe8] sm:$0xff]
    %v6906 = vld [vmem:[#allocation2 + $0xf0] sm:$0xff]
    %v6907 = vld [vmem:[#allocation2 + $0xf8] sm:$0xff]
    %v6908 = vld [vmem:[#allocation2 + $0x100] sm:$0xff]
    %v6909 = vld [vmem:[#allocation2 + $0x108] sm:$0xff]
    %v6910 = vld [vmem:[#allocation2 + $0x110] sm:$0xff]
    %v6911 = vld [vmem:[#allocation2 + $0x118] sm:$0xff]
    %v6912 = vld [vmem:[#allocation2 + $0x120] sm:$0xff]
    %v6913 = vld [vmem:[#allocation2 + $0x128] sm:$0xff]
    %v6914 = vld [vmem:[#allocation2 + $0x130] sm:$0xff]
    %v6915 = vld [vmem:[#allocation2 + $0x138] sm:$0xff]
    %v6916 = vld [vmem:[#allocation2 + $0x140] sm:$0xff]
    %v6917 = vld [vmem:[#allocation2 + $0x148] sm:$0xff]
    %v6918 = vld [vmem:[#allocation2 + $0x150] sm:$0xff]
    %v6919 = vld [vmem:[#allocation2 + $0x158] sm:$0xff]
    %v6920 = vld [vmem:[#allocation2 + $0x160] sm:$0xff]
    %v6921 = vld [vmem:[#allocation2 + $0x168] sm:$0xff]
    %v6922 = vld [vmem:[#allocation2 + $0x170] sm:$0xff]
    %v6923 = vld [vmem:[#allocation2 + $0x178] sm:$0xff]
    %v6924 = vld [vmem:[#allocation2 + $0x180] sm:$0xff]
    %v6925 = vld [vmem:[#allocation2 + $0x188] sm:$0xff]
    %v6926 = vld [vmem:[#allocation2 + $0x190] sm:$0xff]
    %v6927 = vld [vmem:[#allocation2 + $0x198] sm:$0xff]
    %v6928 = vld [vmem:[#allocation2 + $0x1a0] sm:$0xff]
    %v6929 = vld [vmem:[#allocation2 + $0x1a8] sm:$0xff]
    %v6930 = vpack.c.bf16 %v6885, %v6876
    %v6931 = vpack.c.bf16 %v6886, %v6877
    %v6932 = vpack.c.bf16 %v6887, %v6878
    %v6933 = vpack.c.bf16 %v6888, %v6879
    %v6934 = vpack.c.bf16 %v6889, %v6880
    %v6935 = vpack.c.bf16 %v6890, %v6881
    %v6936 = vpack.c.bf16 %v6891, %v6882
    %v6937 = vpack.c.bf16 %v6892, %v6883
    %v6938 = vpack.c.bf16 %v6893, %v6884
    %v6939 = vpack.c.bf16 %v6903, %v6894
    %v6940 = vpack.c.bf16 %v6904, %v6895
    %v6941 = vpack.c.bf16 %v6905, %v6896
    %v6942 = vpack.c.bf16 %v6906, %v6897
    %v6943 = vpack.c.bf16 %v6907, %v6898
    %v6944 = vpack.c.bf16 %v6908, %v6899
    %v6945 = vpack.c.bf16 %v6909, %v6900
    %v6946 = vpack.c.bf16 %v6910, %v6901
    %v6947 = vpack.c.bf16 %v6911, %v6902
    %v6948 = vpack.c.bf16 %v6921, %v6912
    %v6949 = vpack.c.bf16 %v6922, %v6913
    %v6950 = vpack.c.bf16 %v6923, %v6914
    %v6951 = vpack.c.bf16 %v6924, %v6915
    %v6952 = vpack.c.bf16 %v6925, %v6916
    %v6953 = vpack.c.bf16 %v6926, %v6917
    %v6954 = vpack.c.bf16 %v6927, %v6918
    %v6955 = vpack.c.bf16 %v6928, %v6919
    %v6956 = vpack.c.bf16 %v6929, %v6920
    %v6957 = vld [vmem:[#allocation6] sm:$0xff]
    %v6958 = vld [vmem:[#allocation6 + $0x8] sm:$0xf]
    %v6959 = vld [vmem:[#allocation6 + $0xc] sm:$0xff]
    %v6960 = vld [vmem:[#allocation6 + $0x14] sm:$0xf]
    %v6961 = vld [vmem:[#allocation6 + $0x18] sm:$0xff]
    %v6962 = vld [vmem:[#allocation6 + $0x20] sm:$0xf]
    %v6963 = vld [vmem:[#allocation6 + $0x24] sm:$0xff]
    %v6964 = vld [vmem:[#allocation6 + $0x2c] sm:$0xf]
    %v6965 = vld [vmem:[#allocation6 + $0x30] sm:$0xff]
    %v6966 = vld [vmem:[#allocation6 + $0x38] sm:$0xf]
    %v6967 = vld [vmem:[#allocation6 + $0x3c] sm:$0xff]
    %v6968 = vld [vmem:[#allocation6 + $0x44] sm:$0xf]
    %v6969 = vld [vmem:[#allocation6 + $0x48] sm:$0xff]
    %v6970 = vld [vmem:[#allocation6 + $0x50] sm:$0xf]
    %v6971 = vld [vmem:[#allocation6 + $0x54] sm:$0xff]
    %v6972 = vld [vmem:[#allocation6 + $0x5c] sm:$0xf]
    %v6973 = vld [vmem:[#allocation6 + $0x60] sm:$0xff]
    %v6974 = vld [vmem:[#allocation6 + $0x68] sm:$0xf]
    %v6975 = vld [vmem:[#allocation6 + $0x6c] sm:$0xff]
    %v6976 = vld [vmem:[#allocation6 + $0x74] sm:$0xf]
    %v6977 = vld [vmem:[#allocation6 + $0x78] sm:$0xff]
    %v6978 = vld [vmem:[#allocation6 + $0x80] sm:$0xf]
    %v6979 = vld [vmem:[#allocation6 + $0x84] sm:$0xff]
    %v6980 = vld [vmem:[#allocation6 + $0x8c] sm:$0xf]
    %v6981 = vld [vmem:[#allocation6 + $0x90] sm:$0xff]
    %v6982 = vld [vmem:[#allocation6 + $0x98] sm:$0xf]
    %v6983 = vld [vmem:[#allocation6 + $0x9c] sm:$0xff]
    %v6984 = vld [vmem:[#allocation6 + $0xa4] sm:$0xf]
    %v6985 = vld [vmem:[#allocation6 + $0xa8] sm:$0xff]
    %v6986 = vld [vmem:[#allocation6 + $0xb0] sm:$0xf]
    %v6987 = vld [vmem:[#allocation6 + $0xb4] sm:$0xff]
    %v6988 = vld [vmem:[#allocation6 + $0xbc] sm:$0xf]
    %v6989 = vld [vmem:[#allocation6 + $0xc0] sm:$0xff]
    %v6990 = vld [vmem:[#allocation6 + $0xc8] sm:$0xf]
    %v6991 = vld [vmem:[#allocation6 + $0xcc] sm:$0xff]
    %v6992 = vld [vmem:[#allocation6 + $0xd4] sm:$0xf]
    %v6993 = vld [vmem:[#allocation6 + $0xd8] sm:$0xff]
    %v6994 = vld [vmem:[#allocation6 + $0xe0] sm:$0xf]
    %v6995 = vld [vmem:[#allocation6 + $0xe4] sm:$0xff]
    %v6996 = vld [vmem:[#allocation6 + $0xec] sm:$0xf]
    %v6997 = vld [vmem:[#allocation6 + $0xf0] sm:$0xff]
    %v6998 = vld [vmem:[#allocation6 + $0xf8] sm:$0xf]
    %v6999 = vld [vmem:[#allocation6 + $0xfc] sm:$0xff]
    %v7000 = vld [vmem:[#allocation6 + $0x104] sm:$0xf]
    %v7001 = vld [vmem:[#allocation6 + $0x108] sm:$0xff]
    %v7002 = vld [vmem:[#allocation6 + $0x110] sm:$0xf]
    %v7003 = vld [vmem:[#allocation6 + $0x114] sm:$0xff]
    %v7004 = vld [vmem:[#allocation6 + $0x11c] sm:$0xf]
    %v7005 = vld [vmem:[#allocation6 + $0x120] sm:$0xff]
    %v7006 = vld [vmem:[#allocation6 + $0x128] sm:$0xf]
    %v7007 = vld [vmem:[#allocation6 + $0x12c] sm:$0xff]
    %v7008 = vld [vmem:[#allocation6 + $0x134] sm:$0xf]
    %v7009 = vld [vmem:[#allocation6 + $0x138] sm:$0xff]
    %v7010 = vld [vmem:[#allocation6 + $0x140] sm:$0xf]
    %v7011 = vld [vmem:[#allocation6 + $0x144] sm:$0xff]
    %v7012 = vld [vmem:[#allocation6 + $0x14c] sm:$0xf]
    %v7013 = vld [vmem:[#allocation6 + $0x150] sm:$0xff]
    %v7014 = vld [vmem:[#allocation6 + $0x158] sm:$0xf]
    %v7015 = vld [vmem:[#allocation6 + $0x15c] sm:$0xff]
    %v7016 = vld [vmem:[#allocation6 + $0x164] sm:$0xf]
    %v7017 = vld [vmem:[#allocation6 + $0x168] sm:$0xff]
    %v7018 = vld [vmem:[#allocation6 + $0x170] sm:$0xf]
    %v7019 = vld [vmem:[#allocation6 + $0x174] sm:$0xff]
    %v7020 = vld [vmem:[#allocation6 + $0x17c] sm:$0xf]
    %v7021 = vld [vmem:[#allocation6 + $0x180] sm:$0xff]
    %v7022 = vld [vmem:[#allocation6 + $0x188] sm:$0xf]
    %v7023 = vld [vmem:[#allocation6 + $0x18c] sm:$0xff]
    %v7024 = vld [vmem:[#allocation6 + $0x194] sm:$0xf]
    %v7025 = vld [vmem:[#allocation6 + $0x198] sm:$0xff]
    %v7026 = vld [vmem:[#allocation6 + $0x1a0] sm:$0xf]
    %v7027 = vld [vmem:[#allocation6 + $0x1a4] sm:$0xff]
    %v7028 = vld [vmem:[#allocation6 + $0x1ac] sm:$0xf]
    %v7029 = vld [vmem:[#allocation6 + $0x1b0] sm:$0xff]
    %v7030 = vld [vmem:[#allocation6 + $0x1b8] sm:$0xf]
    %v7031 = vld [vmem:[#allocation6 + $0x1bc] sm:$0xff]
    %v7032 = vld [vmem:[#allocation6 + $0x1c4] sm:$0xf]
    %v7033 = vld [vmem:[#allocation6 + $0x1c8] sm:$0xff]
    %v7034 = vld [vmem:[#allocation6 + $0x1d0] sm:$0xf]
    %v7035 = vld [vmem:[#allocation6 + $0x1d4] sm:$0xff]
    %v7036 = vld [vmem:[#allocation6 + $0x1dc] sm:$0xf]
    %v7037 = vld [vmem:[#allocation6 + $0x1e0] sm:$0xff]
    %v7038 = vld [vmem:[#allocation6 + $0x1e8] sm:$0xf]
    %v7039 = vld [vmem:[#allocation6 + $0x1ec] sm:$0xff]
    %v7040 = vld [vmem:[#allocation6 + $0x1f4] sm:$0xf]
    %v7041 = vld [vmem:[#allocation6 + $0x1f8] sm:$0xff]
    %v7042 = vld [vmem:[#allocation6 + $0x200] sm:$0xf]
    %v7043 = vld [vmem:[#allocation6 + $0x204] sm:$0xff]
    %v7044 = vld [vmem:[#allocation6 + $0x20c] sm:$0xf]
    %v7045 = vld [vmem:[#allocation6 + $0x210] sm:$0xff]
    %v7046 = vld [vmem:[#allocation6 + $0x218] sm:$0xf]
    %v7047 = vld [vmem:[#allocation6 + $0x21c] sm:$0xff]
    %v7048 = vld [vmem:[#allocation6 + $0x224] sm:$0xf]
    %v7049 = vld [vmem:[#allocation6 + $0x228] sm:$0xff]
    %v7050 = vld [vmem:[#allocation6 + $0x230] sm:$0xf]
    %v7051 = vld [vmem:[#allocation6 + $0x234] sm:$0xff]
    %v7052 = vld [vmem:[#allocation6 + $0x23c] sm:$0xf]
    %v7053 = vld [vmem:[#allocation6 + $0x240] sm:$0xff]
    %v7054 = vld [vmem:[#allocation6 + $0x248] sm:$0xf]
    %v7055 = vld [vmem:[#allocation6 + $0x24c] sm:$0xff]
    %v7056 = vld [vmem:[#allocation6 + $0x254] sm:$0xf]
    %v7057 = vld [vmem:[#allocation6 + $0x258] sm:$0xff]
    %v7058 = vld [vmem:[#allocation6 + $0x260] sm:$0xf]
    %v7059 = vld [vmem:[#allocation6 + $0x264] sm:$0xff]
    %v7060 = vld [vmem:[#allocation6 + $0x26c] sm:$0xf]
    %v7061 = vld [vmem:[#allocation6 + $0x270] sm:$0xff]
    %v7062 = vld [vmem:[#allocation6 + $0x278] sm:$0xf]
    %v7063 = vld [vmem:[#allocation6 + $0x27c] sm:$0xff]
    %v7064 = vld [vmem:[#allocation6 + $0x284] sm:$0xf]
    %v7065 = vld [vmem:[#allocation6 + $0x288] sm:$0xff]
    %v7066 = vld [vmem:[#allocation6 + $0x290] sm:$0xf]
    %v7067 = vld [vmem:[#allocation6 + $0x294] sm:$0xff]
    %v7068 = vld [vmem:[#allocation6 + $0x29c] sm:$0xf]
    %v7069 = vld [vmem:[#allocation6 + $0x2a0] sm:$0xff]
    %v7070 = vld [vmem:[#allocation6 + $0x2a8] sm:$0xf]
    %v7071 = vld [vmem:[#allocation6 + $0x2ac] sm:$0xff]
    %v7072 = vld [vmem:[#allocation6 + $0x2b4] sm:$0xf]
    %v7073 = vld [vmem:[#allocation6 + $0x2b8] sm:$0xff]
    %v7074 = vld [vmem:[#allocation6 + $0x2c0] sm:$0xf]
    %v7075 = vld [vmem:[#allocation6 + $0x2c4] sm:$0xff]
    %v7076 = vld [vmem:[#allocation6 + $0x2cc] sm:$0xf]
    %v7077 = vld [vmem:[#allocation6 + $0x2d0] sm:$0xff]
    %v7078 = vld [vmem:[#allocation6 + $0x2d8] sm:$0xf]
    %v7079 = vld [vmem:[#allocation6 + $0x2dc] sm:$0xff]
    %v7080 = vld [vmem:[#allocation6 + $0x2e4] sm:$0xf]
    %v7081 = vld [vmem:[#allocation6 + $0x2e8] sm:$0xff]
    %v7082 = vld [vmem:[#allocation6 + $0x2f0] sm:$0xf]
    %v7083 = vld [vmem:[#allocation6 + $0x2f4] sm:$0xff]
    %v7084 = vld [vmem:[#allocation6 + $0x2fc] sm:$0xf]
    %v7085 = vld [vmem:[#allocation6 + $0x300] sm:$0xff]
    %v7086 = vld [vmem:[#allocation6 + $0x308] sm:$0xf]
    %v7087 = vld [vmem:[#allocation6 + $0x30c] sm:$0xff]
    %v7088 = vld [vmem:[#allocation6 + $0x314] sm:$0xf]
    %v7089 = vld [vmem:[#allocation6 + $0x318] sm:$0xff]
    %v7090 = vld [vmem:[#allocation6 + $0x320] sm:$0xf]
    %v7091 = vld [vmem:[#allocation6 + $0x324] sm:$0xff]
    %v7092 = vld [vmem:[#allocation6 + $0x32c] sm:$0xf]
    %v7093 = vld [vmem:[#allocation6 + $0x330] sm:$0xff]
    %v7094 = vld [vmem:[#allocation6 + $0x338] sm:$0xf]
    %v7095 = vld [vmem:[#allocation6 + $0x33c] sm:$0xff]
    %v7096 = vld [vmem:[#allocation6 + $0x344] sm:$0xf]
    %v7097 = vld [vmem:[#allocation6 + $0x348] sm:$0xff]
    %v7098 = vld [vmem:[#allocation6 + $0x350] sm:$0xf]
    %v7099 = vld [vmem:[#allocation6 + $0x354] sm:$0xff]
    %v7100 = vld [vmem:[#allocation6 + $0x35c] sm:$0xf]
    %v7101 = vld [vmem:[#allocation6 + $0x360] sm:$0xff]
    %v7102 = vld [vmem:[#allocation6 + $0x368] sm:$0xf]
    %v7103 = vld [vmem:[#allocation6 + $0x36c] sm:$0xff]
    %v7104 = vld [vmem:[#allocation6 + $0x374] sm:$0xf]
    %v7105 = vld [vmem:[#allocation6 + $0x378] sm:$0xff]
    %v7106 = vld [vmem:[#allocation6 + $0x380] sm:$0xf]
    %v7107 = vld [vmem:[#allocation6 + $0x384] sm:$0xff]
    %v7108 = vld [vmem:[#allocation6 + $0x38c] sm:$0xf]
    %v7109 = vld [vmem:[#allocation6 + $0x390] sm:$0xff]
    %v7110 = vld [vmem:[#allocation6 + $0x398] sm:$0xf]
    %v7111 = vld [vmem:[#allocation6 + $0x39c] sm:$0xff]
    %v7112 = vld [vmem:[#allocation6 + $0x3a4] sm:$0xf]
    %v7113 = vld [vmem:[#allocation6 + $0x3a8] sm:$0xff]
    %v7114 = vld [vmem:[#allocation6 + $0x3b0] sm:$0xf]
    %v7115 = vld [vmem:[#allocation6 + $0x3b4] sm:$0xff]
    %v7116 = vld [vmem:[#allocation6 + $0x3bc] sm:$0xf]
    %v7117 = vld [vmem:[#allocation6 + $0x3c0] sm:$0xff]
    %v7118 = vld [vmem:[#allocation6 + $0x3c8] sm:$0xf]
    %v7119 = vld [vmem:[#allocation6 + $0x3cc] sm:$0xff]
    %v7120 = vld [vmem:[#allocation6 + $0x3d4] sm:$0xf]
    %v7121 = vld [vmem:[#allocation6 + $0x3d8] sm:$0xff]
    %v7122 = vld [vmem:[#allocation6 + $0x3e0] sm:$0xf]
    %v7123 = vld [vmem:[#allocation6 + $0x3e4] sm:$0xff]
    %v7124 = vld [vmem:[#allocation6 + $0x3ec] sm:$0xf]
    %v7125 = vld [vmem:[#allocation6 + $0x3f0] sm:$0xff]
    %v7126 = vld [vmem:[#allocation6 + $0x3f8] sm:$0xf]
    %v7127 = vld [vmem:[#allocation6 + $0x3fc] sm:$0xff]
    %v7128 = vld [vmem:[#allocation6 + $0x404] sm:$0xf]
    %v7129 = vld [vmem:[#allocation6 + $0x408] sm:$0xff]
    %v7130 = vld [vmem:[#allocation6 + $0x410] sm:$0xf]
    %v7131 = vld [vmem:[#allocation6 + $0x414] sm:$0xff]
    %v7132 = vld [vmem:[#allocation6 + $0x41c] sm:$0xf]
    %v7133 = vld [vmem:[#allocation6 + $0x420] sm:$0xff]
    %v7134 = vld [vmem:[#allocation6 + $0x428] sm:$0xf]
    %v7135 = vld [vmem:[#allocation6 + $0x42c] sm:$0xff]
    %v7136 = vld [vmem:[#allocation6 + $0x434] sm:$0xf]
    %v7137 = vld [vmem:[#allocation6 + $0x438] sm:$0xff]
    %v7138 = vld [vmem:[#allocation6 + $0x440] sm:$0xf]
    %v7139 = vld [vmem:[#allocation6 + $0x444] sm:$0xff]
    %v7140 = vld [vmem:[#allocation6 + $0x44c] sm:$0xf]
    %v7141 = vld [vmem:[#allocation6 + $0x450] sm:$0xff]
    %v7142 = vld [vmem:[#allocation6 + $0x458] sm:$0xf]
    %v7143 = vld [vmem:[#allocation6 + $0x45c] sm:$0xff]
    %v7144 = vld [vmem:[#allocation6 + $0x464] sm:$0xf]
    %v7145 = vld [vmem:[#allocation6 + $0x468] sm:$0xff]
    %v7146 = vld [vmem:[#allocation6 + $0x470] sm:$0xf]
    %v7147 = vld [vmem:[#allocation6 + $0x474] sm:$0xff]
    %v7148 = vld [vmem:[#allocation6 + $0x47c] sm:$0xf]
    %v7149 = vld [vmem:[#allocation6 + $0x480] sm:$0xff]
    %v7150 = vld [vmem:[#allocation6 + $0x488] sm:$0xf]
    %v7151 = vld [vmem:[#allocation6 + $0x48c] sm:$0xff]
    %v7152 = vld [vmem:[#allocation6 + $0x494] sm:$0xf]
    %v7153 = vld [vmem:[#allocation6 + $0x498] sm:$0xff]
    %v7154 = vld [vmem:[#allocation6 + $0x4a0] sm:$0xf]
    %v7155 = vld [vmem:[#allocation6 + $0x4a4] sm:$0xff]
    %v7156 = vld [vmem:[#allocation6 + $0x4ac] sm:$0xf]
    %v7157 = vld [vmem:[#allocation6 + $0x4b0] sm:$0xff]
    %v7158 = vld [vmem:[#allocation6 + $0x4b8] sm:$0xf]
    %v7159 = vld [vmem:[#allocation6 + $0x4bc] sm:$0xff]
    %v7160 = vld [vmem:[#allocation6 + $0x4c4] sm:$0xf]
    %v7161 = vld [vmem:[#allocation6 + $0x4c8] sm:$0xff]
    %v7162 = vld [vmem:[#allocation6 + $0x4d0] sm:$0xf]
    %v7163 = vld [vmem:[#allocation6 + $0x4d4] sm:$0xff]
    %v7164 = vld [vmem:[#allocation6 + $0x4dc] sm:$0xf]
    %v7165 = vld [vmem:[#allocation6 + $0x4e0] sm:$0xff]
    %v7166 = vld [vmem:[#allocation6 + $0x4e8] sm:$0xf]
    %v7167 = vld [vmem:[#allocation6 + $0x4ec] sm:$0xff]
    %v7168 = vld [vmem:[#allocation6 + $0x4f4] sm:$0xf]
    %v7169 = vld [vmem:[#allocation6 + $0x4f8] sm:$0xff]
    %v7170 = vld [vmem:[#allocation6 + $0x500] sm:$0xf]
    %v7171 = vld [vmem:[#allocation6 + $0x504] sm:$0xff]
    %v7172 = vld [vmem:[#allocation6 + $0x50c] sm:$0xf]
    %v7173 = vld [vmem:[#allocation6 + $0x510] sm:$0xff]
    %v7174 = vld [vmem:[#allocation6 + $0x518] sm:$0xf]
    %v7175 = vld [vmem:[#allocation6 + $0x51c] sm:$0xff]
    %v7176 = vld [vmem:[#allocation6 + $0x524] sm:$0xf]
    %v7177 = vld [vmem:[#allocation6 + $0x528] sm:$0xff]
    %v7178 = vld [vmem:[#allocation6 + $0x530] sm:$0xf]
    %v7179 = vld [vmem:[#allocation6 + $0x534] sm:$0xff]
    %v7180 = vld [vmem:[#allocation6 + $0x53c] sm:$0xf]
    %v7181 = vld [vmem:[#allocation6 + $0x540] sm:$0xff]
    %v7182 = vld [vmem:[#allocation6 + $0x548] sm:$0xf]
    %v7183 = vld [vmem:[#allocation6 + $0x54c] sm:$0xff]
    %v7184 = vld [vmem:[#allocation6 + $0x554] sm:$0xf]
    %v7185 = vld [vmem:[#allocation6 + $0x558] sm:$0xff]
    %v7186 = vld [vmem:[#allocation6 + $0x560] sm:$0xf]
    %v7187 = vld [vmem:[#allocation6 + $0x564] sm:$0xff]
    %v7188 = vld [vmem:[#allocation6 + $0x56c] sm:$0xf]
    %v7189 = vld [vmem:[#allocation6 + $0x570] sm:$0xff]
    %v7190 = vld [vmem:[#allocation6 + $0x578] sm:$0xf]
    %v7191 = vld [vmem:[#allocation6 + $0x57c] sm:$0xff]
    %v7192 = vld [vmem:[#allocation6 + $0x584] sm:$0xf]
    %v7193 = vld [vmem:[#allocation6 + $0x588] sm:$0xff]
    %v7194 = vld [vmem:[#allocation6 + $0x590] sm:$0xf]
    %v7195 = vld [vmem:[#allocation6 + $0x594] sm:$0xff]
    %v7196 = vld [vmem:[#allocation6 + $0x59c] sm:$0xf]
    %v7197 = vld [vmem:[#allocation6 + $0x5a0] sm:$0xff]
    %v7198 = vld [vmem:[#allocation6 + $0x5a8] sm:$0xf]
    %v7199 = vld [vmem:[#allocation6 + $0x5ac] sm:$0xff]
    %v7200 = vld [vmem:[#allocation6 + $0x5b4] sm:$0xf]
    %v7201 = vld [vmem:[#allocation6 + $0x5b8] sm:$0xff]
    %v7202 = vld [vmem:[#allocation6 + $0x5c0] sm:$0xf]
    %v7203 = vld [vmem:[#allocation6 + $0x5c4] sm:$0xff]
    %v7204 = vld [vmem:[#allocation6 + $0x5cc] sm:$0xf]
    %v7205 = vld [vmem:[#allocation6 + $0x5d0] sm:$0xff]
    %v7206 = vld [vmem:[#allocation6 + $0x5d8] sm:$0xf]
    %v7207 = vld [vmem:[#allocation6 + $0x5dc] sm:$0xff]
    %v7208 = vld [vmem:[#allocation6 + $0x5e4] sm:$0xf]
    %v7209 = vld [vmem:[#allocation6 + $0x5e8] sm:$0xff]
    %v7210 = vld [vmem:[#allocation6 + $0x5f0] sm:$0xf]
    %v7211 = vld [vmem:[#allocation6 + $0x5f4] sm:$0xff]
    %v7212 = vld [vmem:[#allocation6 + $0x5fc] sm:$0xf]
    %v7213 = vld [vmem:[#allocation6 + $0x600] sm:$0xff]
    %v7214 = vld [vmem:[#allocation6 + $0x608] sm:$0xf]
    %v7215 = vld [vmem:[#allocation6 + $0x60c] sm:$0xff]
    %v7216 = vld [vmem:[#allocation6 + $0x614] sm:$0xf]
    %v7217 = vld [vmem:[#allocation6 + $0x618] sm:$0xff]
    %v7218 = vld [vmem:[#allocation6 + $0x620] sm:$0xf]
    %v7219 = vld [vmem:[#allocation6 + $0x624] sm:$0xff]
    %v7220 = vld [vmem:[#allocation6 + $0x62c] sm:$0xf]
    %v7221 = vld [vmem:[#allocation6 + $0x630] sm:$0xff]
    %v7222 = vld [vmem:[#allocation6 + $0x638] sm:$0xf]
    %v7223 = vld [vmem:[#allocation6 + $0x63c] sm:$0xff]
    %v7224 = vld [vmem:[#allocation6 + $0x644] sm:$0xf]
    %v7225 = vld [vmem:[#allocation6 + $0x648] sm:$0xff]
    %v7226 = vld [vmem:[#allocation6 + $0x650] sm:$0xf]
    %v7227 = vld [vmem:[#allocation6 + $0x654] sm:$0xff]
    %v7228 = vld [vmem:[#allocation6 + $0x65c] sm:$0xf]
    %v7229 = vld [vmem:[#allocation6 + $0x660] sm:$0xff]
    %v7230 = vld [vmem:[#allocation6 + $0x668] sm:$0xf]
    %v7231 = vld [vmem:[#allocation6 + $0x66c] sm:$0xff]
    %v7232 = vld [vmem:[#allocation6 + $0x674] sm:$0xf]
    %v7233 = vld [vmem:[#allocation6 + $0x678] sm:$0xff]
    %v7234 = vld [vmem:[#allocation6 + $0x680] sm:$0xf]
    %v7235 = vld [vmem:[#allocation6 + $0x684] sm:$0xff]
    %v7236 = vld [vmem:[#allocation6 + $0x68c] sm:$0xf]
    %v7237 = vld [vmem:[#allocation6 + $0x690] sm:$0xff]
    %v7238 = vld [vmem:[#allocation6 + $0x698] sm:$0xf]
    %v7239 = vld [vmem:[#allocation6 + $0x69c] sm:$0xff]
    %v7240 = vld [vmem:[#allocation6 + $0x6a4] sm:$0xf]
    %v7241 = vld [vmem:[#allocation6 + $0x6a8] sm:$0xff]
    %v7242 = vld [vmem:[#allocation6 + $0x6b0] sm:$0xf]
    %v7243 = vld [vmem:[#allocation6 + $0x6b4] sm:$0xff]
    %v7244 = vld [vmem:[#allocation6 + $0x6bc] sm:$0xf]
    %v7245 = vld [vmem:[#allocation16] sm:$0x7]
    %v7247 = vlaneseq
    %v7248 = vshrl.u32 %v7247, 7
    %v7249 = vsub.s32 0, %v7248
    %v7250 = vrot.slane %v7245, %v7249
    %v7251 = vlaneseq
    %v7252 = vshrl.u32 %v7251, 7
    %v7253 = vsub.s32 1, %v7252
    %v7254 = vrot.slane %v7245, %v7253
    %v7255 = vlaneseq
    %v7256 = vshrl.u32 %v7255, 7
    %v7257 = vsub.s32 2, %v7256
    %v7258 = vrot.slane %v7245, %v7257
    %v7550 = vunpack.c.l.b16 %v6957
    %v7551 = vunpack.c.h.b16 %v6957
    %v7552 = vunpack.c.l.b16 %v6958
    %v7553 = vunpack.c.l.b16 %v6959
    %v7554 = vunpack.c.h.b16 %v6959
    %v7555 = vunpack.c.l.b16 %v6960
    %v7556 = vunpack.c.l.b16 %v6961
    %v7557 = vunpack.c.h.b16 %v6961
    %v7558 = vunpack.c.l.b16 %v6962
    %v7559 = vunpack.c.l.b16 %v6963
    %v7560 = vunpack.c.h.b16 %v6963
    %v7561 = vunpack.c.l.b16 %v6964
    %v7562 = vunpack.c.l.b16 %v6965
    %v7563 = vunpack.c.h.b16 %v6965
    %v7564 = vunpack.c.l.b16 %v6966
    %v7565 = vunpack.c.l.b16 %v6967
    %v7566 = vunpack.c.h.b16 %v6967
    %v7567 = vunpack.c.l.b16 %v6968
    %v7568 = vunpack.c.l.b16 %v6969
    %v7569 = vunpack.c.h.b16 %v6969
    %v7570 = vunpack.c.l.b16 %v6970
    %v7571 = vunpack.c.l.b16 %v6971
    %v7572 = vunpack.c.h.b16 %v6971
    %v7573 = vunpack.c.l.b16 %v6972
    %v7574 = vunpack.c.l.b16 %v6973
    %v7575 = vunpack.c.h.b16 %v6973
    %v7576 = vunpack.c.l.b16 %v6974
    %v7577 = vunpack.c.l.b16 %v6975
    %v7578 = vunpack.c.h.b16 %v6975
    %v7579 = vunpack.c.l.b16 %v6976
    %v7580 = vunpack.c.l.b16 %v6977
    %v7581 = vunpack.c.h.b16 %v6977
    %v7582 = vunpack.c.l.b16 %v6978
    %v7583 = vunpack.c.l.b16 %v6979
    %v7584 = vunpack.c.h.b16 %v6979
    %v7585 = vunpack.c.l.b16 %v6980
    %v7586 = vunpack.c.l.b16 %v6981
    %v7587 = vunpack.c.h.b16 %v6981
    %v7588 = vunpack.c.l.b16 %v6982
    %v7589 = vunpack.c.l.b16 %v6983
    %v7590 = vunpack.c.h.b16 %v6983
    %v7591 = vunpack.c.l.b16 %v6984
    %v7592 = vunpack.c.l.b16 %v6985
    %v7593 = vunpack.c.h.b16 %v6985
    %v7594 = vunpack.c.l.b16 %v6986
    %v7595 = vunpack.c.l.b16 %v6987
    %v7596 = vunpack.c.h.b16 %v6987
    %v7597 = vunpack.c.l.b16 %v6988
    %v7598 = vunpack.c.l.b16 %v6989
    %v7599 = vunpack.c.h.b16 %v6989
    %v7600 = vunpack.c.l.b16 %v6990
    %v7601 = vunpack.c.l.b16 %v6991
    %v7602 = vunpack.c.h.b16 %v6991
    %v7603 = vunpack.c.l.b16 %v6992
    %v7604 = vunpack.c.l.b16 %v6993
    %v7605 = vunpack.c.h.b16 %v6993
    %v7606 = vunpack.c.l.b16 %v6994
    %v7607 = vunpack.c.l.b16 %v6995
    %v7608 = vunpack.c.h.b16 %v6995
    %v7609 = vunpack.c.l.b16 %v6996
    %v7610 = vunpack.c.l.b16 %v6997
    %v7611 = vunpack.c.h.b16 %v6997
    %v7612 = vunpack.c.l.b16 %v6998
    %v7613 = vunpack.c.l.b16 %v6999
    %v7614 = vunpack.c.h.b16 %v6999
    %v7615 = vunpack.c.l.b16 %v7000
    %v7616 = vunpack.c.l.b16 %v7001
    %v7617 = vunpack.c.h.b16 %v7001
    %v7618 = vunpack.c.l.b16 %v7002
    %v7619 = vunpack.c.l.b16 %v7003
    %v7620 = vunpack.c.h.b16 %v7003
    %v7621 = vunpack.c.l.b16 %v7004
    %v7622 = vunpack.c.l.b16 %v7005
    %v7623 = vunpack.c.h.b16 %v7005
    %v7624 = vunpack.c.l.b16 %v7006
    %v7625 = vunpack.c.l.b16 %v7007
    %v7626 = vunpack.c.h.b16 %v7007
    %v7627 = vunpack.c.l.b16 %v7008
    %v7628 = vunpack.c.l.b16 %v7009
    %v7629 = vunpack.c.h.b16 %v7009
    %v7630 = vunpack.c.l.b16 %v7010
    %v7631 = vunpack.c.l.b16 %v7011
    %v7632 = vunpack.c.h.b16 %v7011
    %v7633 = vunpack.c.l.b16 %v7012
    %v7634 = vunpack.c.l.b16 %v7013
    %v7635 = vunpack.c.h.b16 %v7013
    %v7636 = vunpack.c.l.b16 %v7014
    %v7637 = vunpack.c.l.b16 %v7015
    %v7638 = vunpack.c.h.b16 %v7015
    %v7639 = vunpack.c.l.b16 %v7016
    %v7640 = vunpack.c.l.b16 %v7017
    %v7641 = vunpack.c.h.b16 %v7017
    %v7642 = vunpack.c.l.b16 %v7018
    %v7643 = vunpack.c.l.b16 %v7019
    %v7644 = vunpack.c.h.b16 %v7019
    %v7645 = vunpack.c.l.b16 %v7020
    %v7646 = vunpack.c.l.b16 %v7021
    %v7647 = vunpack.c.h.b16 %v7021
    %v7648 = vunpack.c.l.b16 %v7022
    %v7649 = vunpack.c.l.b16 %v7023
    %v7650 = vunpack.c.h.b16 %v7023
    %v7651 = vunpack.c.l.b16 %v7024
    %v7652 = vunpack.c.l.b16 %v7025
    %v7653 = vunpack.c.h.b16 %v7025
    %v7654 = vunpack.c.l.b16 %v7026
    %v7655 = vunpack.c.l.b16 %v7027
    %v7656 = vunpack.c.h.b16 %v7027
    %v7657 = vunpack.c.l.b16 %v7028
    %v7658 = vunpack.c.l.b16 %v7029
    %v7659 = vunpack.c.h.b16 %v7029
    %v7660 = vunpack.c.l.b16 %v7030
    %v7661 = vunpack.c.l.b16 %v7031
    %v7662 = vunpack.c.h.b16 %v7031
    %v7663 = vunpack.c.l.b16 %v7032
    %v7664 = vunpack.c.l.b16 %v7033
    %v7665 = vunpack.c.h.b16 %v7033
    %v7666 = vunpack.c.l.b16 %v7034
    %v7667 = vunpack.c.l.b16 %v7035
    %v7668 = vunpack.c.h.b16 %v7035
    %v7669 = vunpack.c.l.b16 %v7036
    %v7670 = vunpack.c.l.b16 %v7037
    %v7671 = vunpack.c.h.b16 %v7037
    %v7672 = vunpack.c.l.b16 %v7038
    %v7673 = vunpack.c.l.b16 %v7039
    %v7674 = vunpack.c.h.b16 %v7039
    %v7675 = vunpack.c.l.b16 %v7040
    %v7676 = vunpack.c.l.b16 %v7041
    %v7677 = vunpack.c.h.b16 %v7041
    %v7678 = vunpack.c.l.b16 %v7042
    %v7679 = vunpack.c.l.b16 %v7043
    %v7680 = vunpack.c.h.b16 %v7043
    %v7681 = vunpack.c.l.b16 %v7044
    %v7682 = vunpack.c.l.b16 %v7045
    %v7683 = vunpack.c.h.b16 %v7045
    %v7684 = vunpack.c.l.b16 %v7046
    %v7685 = vunpack.c.l.b16 %v7047
    %v7686 = vunpack.c.h.b16 %v7047
    %v7687 = vunpack.c.l.b16 %v7048
    %v7688 = vunpack.c.l.b16 %v7049
    %v7689 = vunpack.c.h.b16 %v7049
    %v7690 = vunpack.c.l.b16 %v7050
    %v7691 = vunpack.c.l.b16 %v7051
    %v7692 = vunpack.c.h.b16 %v7051
    %v7693 = vunpack.c.l.b16 %v7052
    %v7694 = vunpack.c.l.b16 %v7053
    %v7695 = vunpack.c.h.b16 %v7053
    %v7696 = vunpack.c.l.b16 %v7054
    %v7697 = vunpack.c.l.b16 %v7055
    %v7698 = vunpack.c.h.b16 %v7055
    %v7699 = vunpack.c.l.b16 %v7056
    %v7700 = vunpack.c.l.b16 %v7057
    %v7701 = vunpack.c.h.b16 %v7057
    %v7702 = vunpack.c.l.b16 %v7058
    %v7703 = vunpack.c.l.b16 %v7059
    %v7704 = vunpack.c.h.b16 %v7059
    %v7705 = vunpack.c.l.b16 %v7060
    %v7706 = vunpack.c.l.b16 %v7061
    %v7707 = vunpack.c.h.b16 %v7061
    %v7708 = vunpack.c.l.b16 %v7062
    %v7709 = vunpack.c.l.b16 %v7063
    %v7710 = vunpack.c.h.b16 %v7063
    %v7711 = vunpack.c.l.b16 %v7064
    %v7712 = vunpack.c.l.b16 %v7065
    %v7713 = vunpack.c.h.b16 %v7065
    %v7714 = vunpack.c.l.b16 %v7066
    %v7715 = vunpack.c.l.b16 %v7067
    %v7716 = vunpack.c.h.b16 %v7067
    %v7717 = vunpack.c.l.b16 %v7068
    %v7718 = vunpack.c.l.b16 %v7069
    %v7719 = vunpack.c.h.b16 %v7069
    %v7720 = vunpack.c.l.b16 %v7070
    %v7721 = vunpack.c.l.b16 %v7071
    %v7722 = vunpack.c.h.b16 %v7071
    %v7723 = vunpack.c.l.b16 %v7072
    %v7724 = vunpack.c.l.b16 %v7073
    %v7725 = vunpack.c.h.b16 %v7073
    %v7726 = vunpack.c.l.b16 %v7074
    %v7727 = vunpack.c.l.b16 %v7075
    %v7728 = vunpack.c.h.b16 %v7075
    %v7729 = vunpack.c.l.b16 %v7076
    %v7730 = vunpack.c.l.b16 %v7077
    %v7731 = vunpack.c.h.b16 %v7077
    %v7732 = vunpack.c.l.b16 %v7078
    %v7733 = vunpack.c.l.b16 %v7079
    %v7734 = vunpack.c.h.b16 %v7079
    %v7735 = vunpack.c.l.b16 %v7080
    %v7736 = vunpack.c.l.b16 %v7081
    %v7737 = vunpack.c.h.b16 %v7081
    %v7738 = vunpack.c.l.b16 %v7082
    %v7739 = vunpack.c.l.b16 %v7083
    %v7740 = vunpack.c.h.b16 %v7083
    %v7741 = vunpack.c.l.b16 %v7084
    %v7742 = vunpack.c.l.b16 %v7085
    %v7743 = vunpack.c.h.b16 %v7085
    %v7744 = vunpack.c.l.b16 %v7086
    %v7745 = vunpack.c.l.b16 %v7087
    %v7746 = vunpack.c.h.b16 %v7087
    %v7747 = vunpack.c.l.b16 %v7088
    %v7748 = vunpack.c.l.b16 %v7089
    %v7749 = vunpack.c.h.b16 %v7089
    %v7750 = vunpack.c.l.b16 %v7090
    %v7751 = vunpack.c.l.b16 %v7091
    %v7752 = vunpack.c.h.b16 %v7091
    %v7753 = vunpack.c.l.b16 %v7092
    %v7754 = vunpack.c.l.b16 %v7093
    %v7755 = vunpack.c.h.b16 %v7093
    %v7756 = vunpack.c.l.b16 %v7094
    %v7757 = vunpack.c.l.b16 %v7095
    %v7758 = vunpack.c.h.b16 %v7095
    %v7759 = vunpack.c.l.b16 %v7096
    %v7760 = vunpack.c.l.b16 %v7097
    %v7761 = vunpack.c.h.b16 %v7097
    %v7762 = vunpack.c.l.b16 %v7098
    %v7763 = vunpack.c.l.b16 %v7099
    %v7764 = vunpack.c.h.b16 %v7099
    %v7765 = vunpack.c.l.b16 %v7100
    %v7766 = vunpack.c.l.b16 %v7101
    %v7767 = vunpack.c.h.b16 %v7101
    %v7768 = vunpack.c.l.b16 %v7102
    %v7769 = vunpack.c.l.b16 %v7103
    %v7770 = vunpack.c.h.b16 %v7103
    %v7771 = vunpack.c.l.b16 %v7104
    %v7772 = vunpack.c.l.b16 %v7105
    %v7773 = vunpack.c.h.b16 %v7105
    %v7774 = vunpack.c.l.b16 %v7106
    %v7775 = vunpack.c.l.b16 %v7107
    %v7776 = vunpack.c.h.b16 %v7107
    %v7777 = vunpack.c.l.b16 %v7108
    %v7778 = vunpack.c.l.b16 %v7109
    %v7779 = vunpack.c.h.b16 %v7109
    %v7780 = vunpack.c.l.b16 %v7110
    %v7781 = vunpack.c.l.b16 %v7111
    %v7782 = vunpack.c.h.b16 %v7111
    %v7783 = vunpack.c.l.b16 %v7112
    %v7784 = vunpack.c.l.b16 %v7113
    %v7785 = vunpack.c.h.b16 %v7113
    %v7786 = vunpack.c.l.b16 %v7114
    %v7787 = vunpack.c.l.b16 %v7115
    %v7788 = vunpack.c.h.b16 %v7115
    %v7789 = vunpack.c.l.b16 %v7116
    %v7790 = vunpack.c.l.b16 %v7117
    %v7791 = vunpack.c.h.b16 %v7117
    %v7792 = vunpack.c.l.b16 %v7118
    %v7793 = vunpack.c.l.b16 %v7119
    %v7794 = vunpack.c.h.b16 %v7119
    %v7795 = vunpack.c.l.b16 %v7120
    %v7796 = vunpack.c.l.b16 %v7121
    %v7797 = vunpack.c.h.b16 %v7121
    %v7798 = vunpack.c.l.b16 %v7122
    %v7799 = vunpack.c.l.b16 %v7123
    %v7800 = vunpack.c.h.b16 %v7123
    %v7801 = vunpack.c.l.b16 %v7124
    %v7802 = vunpack.c.l.b16 %v7125
    %v7803 = vunpack.c.h.b16 %v7125
    %v7804 = vunpack.c.l.b16 %v7126
    %v7805 = vunpack.c.l.b16 %v7127
    %v7806 = vunpack.c.h.b16 %v7127
    %v7807 = vunpack.c.l.b16 %v7128
    %v7808 = vunpack.c.l.b16 %v7129
    %v7809 = vunpack.c.h.b16 %v7129
    %v7810 = vunpack.c.l.b16 %v7130
    %v7811 = vunpack.c.l.b16 %v7131
    %v7812 = vunpack.c.h.b16 %v7131
    %v7813 = vunpack.c.l.b16 %v7132
    %v7814 = vunpack.c.l.b16 %v7133
    %v7815 = vunpack.c.h.b16 %v7133
    %v7816 = vunpack.c.l.b16 %v7134
    %v7817 = vunpack.c.l.b16 %v7135
    %v7818 = vunpack.c.h.b16 %v7135
    %v7819 = vunpack.c.l.b16 %v7136
    %v7820 = vunpack.c.l.b16 %v7137
    %v7821 = vunpack.c.h.b16 %v7137
    %v7822 = vunpack.c.l.b16 %v7138
    %v7823 = vunpack.c.l.b16 %v7139
    %v7824 = vunpack.c.h.b16 %v7139
    %v7825 = vunpack.c.l.b16 %v7140
    %v7826 = vunpack.c.l.b16 %v7141
    %v7827 = vunpack.c.h.b16 %v7141
    %v7828 = vunpack.c.l.b16 %v7142
    %v7829 = vunpack.c.l.b16 %v7143
    %v7830 = vunpack.c.h.b16 %v7143
    %v7831 = vunpack.c.l.b16 %v7144
    %v7832 = vunpack.c.l.b16 %v7145
    %v7833 = vunpack.c.h.b16 %v7145
    %v7834 = vunpack.c.l.b16 %v7146
    %v7835 = vunpack.c.l.b16 %v7147
    %v7836 = vunpack.c.h.b16 %v7147
    %v7837 = vunpack.c.l.b16 %v7148
    %v7838 = vunpack.c.l.b16 %v7149
    %v7839 = vunpack.c.h.b16 %v7149
    %v7840 = vunpack.c.l.b16 %v7150
    %v7841 = vunpack.c.l.b16 %v7151
    %v7842 = vunpack.c.h.b16 %v7151
    %v7843 = vunpack.c.l.b16 %v7152
    %v7844 = vunpack.c.l.b16 %v7153
    %v7845 = vunpack.c.h.b16 %v7153
    %v7846 = vunpack.c.l.b16 %v7154
    %v7847 = vunpack.c.l.b16 %v7155
    %v7848 = vunpack.c.h.b16 %v7155
    %v7849 = vunpack.c.l.b16 %v7156
    %v7850 = vunpack.c.l.b16 %v7157
    %v7851 = vunpack.c.h.b16 %v7157
    %v7852 = vunpack.c.l.b16 %v7158
    %v7853 = vunpack.c.l.b16 %v7159
    %v7854 = vunpack.c.h.b16 %v7159
    %v7855 = vunpack.c.l.b16 %v7160
    %v7856 = vunpack.c.l.b16 %v7161
    %v7857 = vunpack.c.h.b16 %v7161
    %v7858 = vunpack.c.l.b16 %v7162
    %v7859 = vunpack.c.l.b16 %v7163
    %v7860 = vunpack.c.h.b16 %v7163
    %v7861 = vunpack.c.l.b16 %v7164
    %v7862 = vunpack.c.l.b16 %v7165
    %v7863 = vunpack.c.h.b16 %v7165
    %v7864 = vunpack.c.l.b16 %v7166
    %v7865 = vunpack.c.l.b16 %v7167
    %v7866 = vunpack.c.h.b16 %v7167
    %v7867 = vunpack.c.l.b16 %v7168
    %v7868 = vunpack.c.l.b16 %v7169
    %v7869 = vunpack.c.h.b16 %v7169
    %v7870 = vunpack.c.l.b16 %v7170
    %v7871 = vunpack.c.l.b16 %v7171
    %v7872 = vunpack.c.h.b16 %v7171
    %v7873 = vunpack.c.l.b16 %v7172
    %v7874 = vunpack.c.l.b16 %v7173
    %v7875 = vunpack.c.h.b16 %v7173
    %v7876 = vunpack.c.l.b16 %v7174
    %v7877 = vunpack.c.l.b16 %v7175
    %v7878 = vunpack.c.h.b16 %v7175
    %v7879 = vunpack.c.l.b16 %v7176
    %v7880 = vunpack.c.l.b16 %v7177
    %v7881 = vunpack.c.h.b16 %v7177
    %v7882 = vunpack.c.l.b16 %v7178
    %v7883 = vunpack.c.l.b16 %v7179
    %v7884 = vunpack.c.h.b16 %v7179
    %v7885 = vunpack.c.l.b16 %v7180
    %v7886 = vunpack.c.l.b16 %v7181
    %v7887 = vunpack.c.h.b16 %v7181
    %v7888 = vunpack.c.l.b16 %v7182
    %v7889 = vunpack.c.l.b16 %v7183
    %v7890 = vunpack.c.h.b16 %v7183
    %v7891 = vunpack.c.l.b16 %v7184
    %v7892 = vunpack.c.l.b16 %v7185
    %v7893 = vunpack.c.h.b16 %v7185
    %v7894 = vunpack.c.l.b16 %v7186
    %v7895 = vunpack.c.l.b16 %v7187
    %v7896 = vunpack.c.h.b16 %v7187
    %v7897 = vunpack.c.l.b16 %v7188
    %v7898 = vunpack.c.l.b16 %v7189
    %v7899 = vunpack.c.h.b16 %v7189
    %v7900 = vunpack.c.l.b16 %v7190
    %v7901 = vunpack.c.l.b16 %v7191
    %v7902 = vunpack.c.h.b16 %v7191
    %v7903 = vunpack.c.l.b16 %v7192
    %v7904 = vunpack.c.l.b16 %v7193
    %v7905 = vunpack.c.h.b16 %v7193
    %v7906 = vunpack.c.l.b16 %v7194
    %v7907 = vunpack.c.l.b16 %v7195
    %v7908 = vunpack.c.h.b16 %v7195
    %v7909 = vunpack.c.l.b16 %v7196
    %v7910 = vunpack.c.l.b16 %v7197
    %v7911 = vunpack.c.h.b16 %v7197
    %v7912 = vunpack.c.l.b16 %v7198
    %v7913 = vunpack.c.l.b16 %v7199
    %v7914 = vunpack.c.h.b16 %v7199
    %v7915 = vunpack.c.l.b16 %v7200
    %v7916 = vunpack.c.l.b16 %v7201
    %v7917 = vunpack.c.h.b16 %v7201
    %v7918 = vunpack.c.l.b16 %v7202
    %v7919 = vunpack.c.l.b16 %v7203
    %v7920 = vunpack.c.h.b16 %v7203
    %v7921 = vunpack.c.l.b16 %v7204
    %v7922 = vunpack.c.l.b16 %v7205
    %v7923 = vunpack.c.h.b16 %v7205
    %v7924 = vunpack.c.l.b16 %v7206
    %v7925 = vunpack.c.l.b16 %v7207
    %v7926 = vunpack.c.h.b16 %v7207
    %v7927 = vunpack.c.l.b16 %v7208
    %v7928 = vunpack.c.l.b16 %v7209
    %v7929 = vunpack.c.h.b16 %v7209
    %v7930 = vunpack.c.l.b16 %v7210
    %v7931 = vunpack.c.l.b16 %v7211
    %v7932 = vunpack.c.h.b16 %v7211
    %v7933 = vunpack.c.l.b16 %v7212
    %v7934 = vunpack.c.l.b16 %v7213
    %v7935 = vunpack.c.h.b16 %v7213
    %v7936 = vunpack.c.l.b16 %v7214
    %v7937 = vunpack.c.l.b16 %v7215
    %v7938 = vunpack.c.h.b16 %v7215
    %v7939 = vunpack.c.l.b16 %v7216
    %v7940 = vunpack.c.l.b16 %v7217
    %v7941 = vunpack.c.h.b16 %v7217
    %v7942 = vunpack.c.l.b16 %v7218
    %v7943 = vunpack.c.l.b16 %v7219
    %v7944 = vunpack.c.h.b16 %v7219
    %v7945 = vunpack.c.l.b16 %v7220
    %v7946 = vunpack.c.l.b16 %v7221
    %v7947 = vunpack.c.h.b16 %v7221
    %v7948 = vunpack.c.l.b16 %v7222
    %v7949 = vunpack.c.l.b16 %v7223
    %v7950 = vunpack.c.h.b16 %v7223
    %v7951 = vunpack.c.l.b16 %v7224
    %v7952 = vunpack.c.l.b16 %v7225
    %v7953 = vunpack.c.h.b16 %v7225
    %v7954 = vunpack.c.l.b16 %v7226
    %v7955 = vunpack.c.l.b16 %v7227
    %v7956 = vunpack.c.h.b16 %v7227
    %v7957 = vunpack.c.l.b16 %v7228
    %v7958 = vunpack.c.l.b16 %v7229
    %v7959 = vunpack.c.h.b16 %v7229
    %v7960 = vunpack.c.l.b16 %v7230
    %v7961 = vunpack.c.l.b16 %v7231
    %v7962 = vunpack.c.h.b16 %v7231
    %v7963 = vunpack.c.l.b16 %v7232
    %v7964 = vunpack.c.l.b16 %v7233
    %v7965 = vunpack.c.h.b16 %v7233
    %v7966 = vunpack.c.l.b16 %v7234
    %v7967 = vunpack.c.l.b16 %v7235
    %v7968 = vunpack.c.h.b16 %v7235
    %v7969 = vunpack.c.l.b16 %v7236
    %v7970 = vunpack.c.l.b16 %v7237
    %v7971 = vunpack.c.h.b16 %v7237
    %v7972 = vunpack.c.l.b16 %v7238
    %v7973 = vunpack.c.l.b16 %v7239
    %v7974 = vunpack.c.h.b16 %v7239
    %v7975 = vunpack.c.l.b16 %v7240
    %v7976 = vunpack.c.l.b16 %v7241
    %v7977 = vunpack.c.h.b16 %v7241
    %v7978 = vunpack.c.l.b16 %v7242
    %v7979 = vunpack.c.l.b16 %v7243
    %v7980 = vunpack.c.h.b16 %v7243
    %v7981 = vunpack.c.l.b16 %v7244
    %v7982 = vpack.c.b16 %v7553, %v7550
    %v7983 = vpack.c.b16 %v7554, %v7551
    %v7984 = vpack.c.b16 %v7555, %v7552
    %v7985 = vpack.c.b16 %v7559, %v7556
    %v7986 = vpack.c.b16 %v7560, %v7557
    %v7987 = vpack.c.b16 %v7561, %v7558
    %v7988 = vpack.c.b16 %v7565, %v7562
    %v7989 = vpack.c.b16 %v7566, %v7563
    %v7990 = vpack.c.b16 %v7567, %v7564
    %v7991 = vpack.c.b16 %v7571, %v7568
    %v7992 = vpack.c.b16 %v7572, %v7569
    %v7993 = vpack.c.b16 %v7573, %v7570
    %v7994 = vpack.c.b16 %v7577, %v7574
    %v7995 = vpack.c.b16 %v7578, %v7575
    %v7996 = vpack.c.b16 %v7579, %v7576
    %v7997 = vpack.c.b16 %v7583, %v7580
    %v7998 = vpack.c.b16 %v7584, %v7581
    %v7999 = vpack.c.b16 %v7585, %v7582
    %v8000 = vpack.c.b16 %v7589, %v7586
    %v8001 = vpack.c.b16 %v7590, %v7587
    %v8002 = vpack.c.b16 %v7591, %v7588
    %v8003 = vpack.c.b16 %v7595, %v7592
    %v8004 = vpack.c.b16 %v7596, %v7593
    %v8005 = vpack.c.b16 %v7597, %v7594
    %v8006 = vpack.c.b16 %v7601, %v7598
    %v8007 = vpack.c.b16 %v7602, %v7599
    %v8008 = vpack.c.b16 %v7603, %v7600
    %v8009 = vpack.c.b16 %v7607, %v7604
    %v8010 = vpack.c.b16 %v7608, %v7605
    %v8011 = vpack.c.b16 %v7609, %v7606
    %v8012 = vpack.c.b16 %v7613, %v7610
    %v8013 = vpack.c.b16 %v7614, %v7611
    %v8014 = vpack.c.b16 %v7615, %v7612
    %v8015 = vpack.c.b16 %v7619, %v7616
    %v8016 = vpack.c.b16 %v7620, %v7617
    %v8017 = vpack.c.b16 %v7621, %v7618
    %v8018 = vpack.c.b16 %v7625, %v7622
    %v8019 = vpack.c.b16 %v7626, %v7623
    %v8020 = vpack.c.b16 %v7627, %v7624
    %v8021 = vpack.c.b16 %v7631, %v7628
    %v8022 = vpack.c.b16 %v7632, %v7629
    %v8023 = vpack.c.b16 %v7633, %v7630
    %v8024 = vpack.c.b16 %v7637, %v7634
    %v8025 = vpack.c.b16 %v7638, %v7635
    %v8026 = vpack.c.b16 %v7639, %v7636
    %v8027 = vpack.c.b16 %v7643, %v7640
    %v8028 = vpack.c.b16 %v7644, %v7641
    %v8029 = vpack.c.b16 %v7645, %v7642
    %v8030 = vpack.c.b16 %v7649, %v7646
    %v8031 = vpack.c.b16 %v7650, %v7647
    %v8032 = vpack.c.b16 %v7651, %v7648
    %v8033 = vpack.c.b16 %v7655, %v7652
    %v8034 = vpack.c.b16 %v7656, %v7653
    %v8035 = vpack.c.b16 %v7657, %v7654
    %v8036 = vpack.c.b16 %v7661, %v7658
    %v8037 = vpack.c.b16 %v7662, %v7659
    %v8038 = vpack.c.b16 %v7663, %v7660
    %v8039 = vpack.c.b16 %v7667, %v7664
    %v8040 = vpack.c.b16 %v7668, %v7665
    %v8041 = vpack.c.b16 %v7669, %v7666
    %v8042 = vpack.c.b16 %v7673, %v7670
    %v8043 = vpack.c.b16 %v7674, %v7671
    %v8044 = vpack.c.b16 %v7675, %v7672
    %v8045 = vpack.c.b16 %v7679, %v7676
    %v8046 = vpack.c.b16 %v7680, %v7677
    %v8047 = vpack.c.b16 %v7681, %v7678
    %v8048 = vpack.c.b16 %v7685, %v7682
    %v8049 = vpack.c.b16 %v7686, %v7683
    %v8050 = vpack.c.b16 %v7687, %v7684
    %v8051 = vpack.c.b16 %v7691, %v7688
    %v8052 = vpack.c.b16 %v7692, %v7689
    %v8053 = vpack.c.b16 %v7693, %v7690
    %v8054 = vpack.c.b16 %v7697, %v7694
    %v8055 = vpack.c.b16 %v7698, %v7695
    %v8056 = vpack.c.b16 %v7699, %v7696
    %v8057 = vpack.c.b16 %v7703, %v7700
    %v8058 = vpack.c.b16 %v7704, %v7701
    %v8059 = vpack.c.b16 %v7705, %v7702
    %v8060 = vpack.c.b16 %v7709, %v7706
    %v8061 = vpack.c.b16 %v7710, %v7707
    %v8062 = vpack.c.b16 %v7711, %v7708
    %v8063 = vpack.c.b16 %v7715, %v7712
    %v8064 = vpack.c.b16 %v7716, %v7713
    %v8065 = vpack.c.b16 %v7717, %v7714
    %v8066 = vpack.c.b16 %v7721, %v7718
    %v8067 = vpack.c.b16 %v7722, %v7719
    %v8068 = vpack.c.b16 %v7723, %v7720
    %v8069 = vpack.c.b16 %v7727, %v7724
    %v8070 = vpack.c.b16 %v7728, %v7725
    %v8071 = vpack.c.b16 %v7729, %v7726
    %v8072 = vpack.c.b16 %v7733, %v7730
    %v8073 = vpack.c.b16 %v7734, %v7731
    %v8074 = vpack.c.b16 %v7735, %v7732
    %v8075 = vpack.c.b16 %v7739, %v7736
    %v8076 = vpack.c.b16 %v7740, %v7737
    %v8077 = vpack.c.b16 %v7741, %v7738
    %v8078 = vpack.c.b16 %v7745, %v7742
    %v8079 = vpack.c.b16 %v7746, %v7743
    %v8080 = vpack.c.b16 %v7747, %v7744
    %v8081 = vpack.c.b16 %v7751, %v7748
    %v8082 = vpack.c.b16 %v7752, %v7749
    %v8083 = vpack.c.b16 %v7753, %v7750
    %v8084 = vpack.c.b16 %v7757, %v7754
    %v8085 = vpack.c.b16 %v7758, %v7755
    %v8086 = vpack.c.b16 %v7759, %v7756
    %v8087 = vpack.c.b16 %v7763, %v7760
    %v8088 = vpack.c.b16 %v7764, %v7761
    %v8089 = vpack.c.b16 %v7765, %v7762
    %v8090 = vpack.c.b16 %v7769, %v7766
    %v8091 = vpack.c.b16 %v7770, %v7767
    %v8092 = vpack.c.b16 %v7771, %v7768
    %v8093 = vpack.c.b16 %v7775, %v7772
    %v8094 = vpack.c.b16 %v7776, %v7773
    %v8095 = vpack.c.b16 %v7777, %v7774
    %v8096 = vpack.c.b16 %v7781, %v7778
    %v8097 = vpack.c.b16 %v7782, %v7779
    %v8098 = vpack.c.b16 %v7783, %v7780
    %v8099 = vpack.c.b16 %v7787, %v7784
    %v8100 = vpack.c.b16 %v7788, %v7785
    %v8101 = vpack.c.b16 %v7789, %v7786
    %v8102 = vpack.c.b16 %v7793, %v7790
    %v8103 = vpack.c.b16 %v7794, %v7791
    %v8104 = vpack.c.b16 %v7795, %v7792
    %v8105 = vpack.c.b16 %v7799, %v7796
    %v8106 = vpack.c.b16 %v7800, %v7797
    %v8107 = vpack.c.b16 %v7801, %v7798
    %v8108 = vpack.c.b16 %v7805, %v7802
    %v8109 = vpack.c.b16 %v7806, %v7803
    %v8110 = vpack.c.b16 %v7807, %v7804
    %v8111 = vpack.c.b16 %v7811, %v7808
    %v8112 = vpack.c.b16 %v7812, %v7809
    %v8113 = vpack.c.b16 %v7813, %v7810
    %v8114 = vpack.c.b16 %v7817, %v7814
    %v8115 = vpack.c.b16 %v7818, %v7815
    %v8116 = vpack.c.b16 %v7819, %v7816
    %v8117 = vpack.c.b16 %v7823, %v7820
    %v8118 = vpack.c.b16 %v7824, %v7821
    %v8119 = vpack.c.b16 %v7825, %v7822
    %v8120 = vpack.c.b16 %v7829, %v7826
    %v8121 = vpack.c.b16 %v7830, %v7827
    %v8122 = vpack.c.b16 %v7831, %v7828
    %v8123 = vpack.c.b16 %v7835, %v7832
    %v8124 = vpack.c.b16 %v7836, %v7833
    %v8125 = vpack.c.b16 %v7837, %v7834
    %v8126 = vpack.c.b16 %v7841, %v7838
    %v8127 = vpack.c.b16 %v7842, %v7839
    %v8128 = vpack.c.b16 %v7843, %v7840
    %v8129 = vpack.c.b16 %v7847, %v7844
    %v8130 = vpack.c.b16 %v7848, %v7845
    %v8131 = vpack.c.b16 %v7849, %v7846
    %v8132 = vpack.c.b16 %v7853, %v7850
    %v8133 = vpack.c.b16 %v7854, %v7851
    %v8134 = vpack.c.b16 %v7855, %v7852
    %v8135 = vpack.c.b16 %v7859, %v7856
    %v8136 = vpack.c.b16 %v7860, %v7857
    %v8137 = vpack.c.b16 %v7861, %v7858
    %v8138 = vpack.c.b16 %v7865, %v7862
    %v8139 = vpack.c.b16 %v7866, %v7863
    %v8140 = vpack.c.b16 %v7867, %v7864
    %v8141 = vpack.c.b16 %v7871, %v7868
    %v8142 = vpack.c.b16 %v7872, %v7869
    %v8143 = vpack.c.b16 %v7873, %v7870
    %v8144 = vpack.c.b16 %v7877, %v7874
    %v8145 = vpack.c.b16 %v7878, %v7875
    %v8146 = vpack.c.b16 %v7879, %v7876
    %v8147 = vpack.c.b16 %v7883, %v7880
    %v8148 = vpack.c.b16 %v7884, %v7881
    %v8149 = vpack.c.b16 %v7885, %v7882
    %v8150 = vpack.c.b16 %v7889, %v7886
    %v8151 = vpack.c.b16 %v7890, %v7887
    %v8152 = vpack.c.b16 %v7891, %v7888
    %v8153 = vpack.c.b16 %v7895, %v7892
    %v8154 = vpack.c.b16 %v7896, %v7893
    %v8155 = vpack.c.b16 %v7897, %v7894
    %v8156 = vpack.c.b16 %v7901, %v7898
    %v8157 = vpack.c.b16 %v7902, %v7899
    %v8158 = vpack.c.b16 %v7903, %v7900
    %v8159 = vpack.c.b16 %v7907, %v7904
    %v8160 = vpack.c.b16 %v7908, %v7905
    %v8161 = vpack.c.b16 %v7909, %v7906
    %v8162 = vpack.c.b16 %v7913, %v7910
    %v8163 = vpack.c.b16 %v7914, %v7911
    %v8164 = vpack.c.b16 %v7915, %v7912
    %v8165 = vpack.c.b16 %v7919, %v7916
    %v8166 = vpack.c.b16 %v7920, %v7917
    %v8167 = vpack.c.b16 %v7921, %v7918
    %v8168 = vpack.c.b16 %v7925, %v7922
    %v8169 = vpack.c.b16 %v7926, %v7923
    %v8170 = vpack.c.b16 %v7927, %v7924
    %v8171 = vpack.c.b16 %v7931, %v7928
    %v8172 = vpack.c.b16 %v7932, %v7929
    %v8173 = vpack.c.b16 %v7933, %v7930
    %v8174 = vpack.c.b16 %v7937, %v7934
    %v8175 = vpack.c.b16 %v7938, %v7935
    %v8176 = vpack.c.b16 %v7939, %v7936
    %v8177 = vpack.c.b16 %v7943, %v7940
    %v8178 = vpack.c.b16 %v7944, %v7941
    %v8179 = vpack.c.b16 %v7945, %v7942
    %v8180 = vpack.c.b16 %v7949, %v7946
    %v8181 = vpack.c.b16 %v7950, %v7947
    %v8182 = vpack.c.b16 %v7951, %v7948
    %v8183 = vpack.c.b16 %v7955, %v7952
    %v8184 = vpack.c.b16 %v7956, %v7953
    %v8185 = vpack.c.b16 %v7957, %v7954
    %v8186 = vpack.c.b16 %v7961, %v7958
    %v8187 = vpack.c.b16 %v7962, %v7959
    %v8188 = vpack.c.b16 %v7963, %v7960
    %v8189 = vpack.c.b16 %v7967, %v7964
    %v8190 = vpack.c.b16 %v7968, %v7965
    %v8191 = vpack.c.b16 %v7969, %v7966
    %v8192 = vpack.c.b16 %v7973, %v7970
    %v8193 = vpack.c.b16 %v7974, %v7971
    %v8194 = vpack.c.b16 %v7975, %v7972
    %v8195 = vpack.c.b16 %v7979, %v7976
    %v8196 = vpack.c.b16 %v7980, %v7977
    %v8197 = vpack.c.b16 %v7981, %v7978
    %8414 = vmatprep.subr.bf16.mxu0 %v8004
    %8415 = vmatpush1.bf16.msra.mxu0 %v8003
    %8416 = vmatprep.subr.bf16.mxu0 %v8001
    %8417 = vmatpush1.bf16.msra.mxu0 %v8000
    %8418 = vmatprep.subr.bf16.mxu0 %v7998
    %8419 = vmatpush1.bf16.msra.mxu0 %v7997
    %8420 = vmatprep.subr.bf16.mxu0 %v7995
    %8421 = vmatpush1.bf16.msra.mxu0 %v7994
    %8422 = vmatprep.subr.bf16.mxu0 %v7992
    %8423 = vmatpush1.bf16.msra.mxu0 %v7991
    %8424 = vmatprep.subr.bf16.mxu0 %v7989
    %8425 = vmatpush1.bf16.msra.mxu0 %v7988
    %8426 = vmatprep.subr.bf16.mxu0 %v7986
    %8427 = vmatpush1.bf16.msra.mxu0 %v7985
    %8428 = vmatprep.subr.bf16.mxu0 %v7983
    %8429 = vmatpush1.bf16.msra.mxu0 %v7982
    %8430 = vmatprep.subr.bf16.mxu0 %v8028
    %8431 = vmatpush2.bf16.msra.mxu0 %v8027
    %8432 = vmatprep.subr.bf16.mxu0 %v8025
    %8433 = vmatpush2.bf16.msra.mxu0 %v8024
    %8434 = vmatprep.subr.bf16.mxu0 %v8022
    %8435 = vmatpush2.bf16.msra.mxu0 %v8021
    %8436 = vmatprep.subr.bf16.mxu0 %v8019
    %8437 = vmatpush2.bf16.msra.mxu0 %v8018
    %8438 = vmatprep.subr.bf16.mxu0 %v8016
    %8439 = vmatpush2.bf16.msra.mxu0 %v8015
    %8440 = vmatprep.subr.bf16.mxu0 %v8013
    %8441 = vmatpush2.bf16.msra.mxu0 %v8012
    %8442 = vmatprep.subr.bf16.mxu0 %v8010
    %8443 = vmatpush2.bf16.msra.mxu0 %v8009
    %8444 = vmatprep.subr.bf16.mxu0 %v8007
    %8445 = vmatpush2.bf16.msra.mxu0 %v8006
    %8446 = vmatprep.mubr.bf16.mxu0 %v6931
    %8447 = vmatmul.mubr.bf16.gmra.mxu0 %v6930
    %v8448 = vpop.f32.mrf.mxu0
    %v8449 = vadd.f32 %v7250, %v8448
    %v8450 = vpop.f32.mrf.mxu0
    %v8451 = vadd.f32 %v7254, %v8450
    %v8452 = vpop.f32.mrf.mxu0
    %v8453 = vadd.f32 %v7250, %v8452
    %v8454 = vpop.f32.mrf.mxu0
    %v8455 = vadd.f32 %v7254, %v8454
    %8456 = vmatprep.mubr.bf16.mxu0 %v6940
    %8457 = vmatmul.mubr.bf16.gmra.mxu0 %v6939
    %v8458 = vpop.f32.mrf.mxu0
    %v8459 = vadd.f32 %v7250, %v8458
    %v8460 = vpop.f32.mrf.mxu0
    %v8461 = vadd.f32 %v7254, %v8460
    %v8462 = vpop.f32.mrf.mxu0
    %v8463 = vadd.f32 %v7250, %v8462
    %v8464 = vpop.f32.mrf.mxu0
    %v8465 = vadd.f32 %v7254, %v8464
    %8466 = vmatprep.mubr.bf16.mxu0 %v6949
    %8467 = vmatmul.mubr.bf16.gmra.mxu0 %v6948
    %v8468 = vpop.f32.mrf.mxu0
    %v8469 = vadd.f32 %v7250, %v8468
    %v8470 = vpop.f32.mrf.mxu0
    %v8471 = vadd.f32 %v7254, %v8470
    %v8472 = vpop.f32.mrf.mxu0
    %v8473 = vadd.f32 %v7250, %v8472
    %v8474 = vpop.f32.mrf.mxu0
    %v8475 = vadd.f32 %v7254, %v8474
    %8476 = vdwg.mxu0
    %8477 = vmatprep.subr.bf16.mxu0 %v8052
    %8478 = vmatpush1.bf16.msra.mxu0 %v8051
    %8479 = vmatprep.subr.bf16.mxu0 %v8049
    %8480 = vmatpush1.bf16.msra.mxu0 %v8048
    %8481 = vmatprep.subr.bf16.mxu0 %v8046
    %8482 = vmatpush1.bf16.msra.mxu0 %v8045
    %8483 = vmatprep.subr.bf16.mxu0 %v8043
    %8484 = vmatpush1.bf16.msra.mxu0 %v8042
    %8485 = vmatprep.subr.bf16.mxu0 %v8040
    %8486 = vmatpush1.bf16.msra.mxu0 %v8039
    %8487 = vmatprep.subr.bf16.mxu0 %v8037
    %8488 = vmatpush1.bf16.msra.mxu0 %v8036
    %8489 = vmatprep.subr.bf16.mxu0 %v8034
    %8490 = vmatpush1.bf16.msra.mxu0 %v8033
    %8491 = vmatprep.subr.bf16.mxu0 %v8031
    %8492 = vmatpush1.bf16.msra.mxu0 %v8030
    %8493 = vmatprep.subr.bf16.mxu0 %v8076
    %8494 = vmatpush2.bf16.msra.mxu0 %v8075
    %8495 = vmatprep.subr.bf16.mxu0 %v8073
    %8496 = vmatpush2.bf16.msra.mxu0 %v8072
    %8497 = vmatprep.subr.bf16.mxu0 %v8070
    %8498 = vmatpush2.bf16.msra.mxu0 %v8069
    %8499 = vmatprep.subr.bf16.mxu0 %v8067
    %8500 = vmatpush2.bf16.msra.mxu0 %v8066
    %8501 = vmatprep.subr.bf16.mxu0 %v8064
    %8502 = vmatpush2.bf16.msra.mxu0 %v8063
    %8503 = vmatprep.subr.bf16.mxu0 %v8061
    %8504 = vmatpush2.bf16.msra.mxu0 %v8060
    %8505 = vmatprep.subr.bf16.mxu0 %v8058
    %8506 = vmatpush2.bf16.msra.mxu0 %v8057
    %8507 = vmatprep.subr.bf16.mxu0 %v8055
    %8508 = vmatpush2.bf16.msra.mxu0 %v8054
    %8509 = vmatprep.mubr.bf16.mxu0 %v6933
    %8510 = vmatmul.mubr.bf16.gmra.mxu0 %v6932
    %v8511 = vpop.f32.mrf.mxu0
    %v8512 = vadd.f32 %v8449, %v8511
    %v8513 = vpop.f32.mrf.mxu0
    %v8514 = vadd.f32 %v8451, %v8513
    %v8515 = vpop.f32.mrf.mxu0
    %v8516 = vadd.f32 %v8453, %v8515
    %v8517 = vpop.f32.mrf.mxu0
    %v8518 = vadd.f32 %v8455, %v8517
    %8519 = vmatprep.mubr.bf16.mxu0 %v6942
    %8520 = vmatmul.mubr.bf16.gmra.mxu0 %v6941
    %v8521 = vpop.f32.mrf.mxu0
    %v8522 = vadd.f32 %v8459, %v8521
    %v8523 = vpop.f32.mrf.mxu0
    %v8524 = vadd.f32 %v8461, %v8523
    %v8525 = vpop.f32.mrf.mxu0
    %v8526 = vadd.f32 %v8463, %v8525
    %v8527 = vpop.f32.mrf.mxu0
    %v8528 = vadd.f32 %v8465, %v8527
    %8529 = vmatprep.mubr.bf16.mxu0 %v6951
    %8530 = vmatmul.mubr.bf16.gmra.mxu0 %v6950
    %v8531 = vpop.f32.mrf.mxu0
    %v8532 = vadd.f32 %v8469, %v8531
    %v8533 = vpop.f32.mrf.mxu0
    %v8534 = vadd.f32 %v8471, %v8533
    %v8535 = vpop.f32.mrf.mxu0
    %v8536 = vadd.f32 %v8473, %v8535
    %v8537 = vpop.f32.mrf.mxu0
    %v8538 = vadd.f32 %v8475, %v8537
    %8539 = vdwg.mxu0
    %8540 = vmatprep.subr.bf16.mxu0 %v8100
    %8541 = vmatpush1.bf16.msra.mxu0 %v8099
    %8542 = vmatprep.subr.bf16.mxu0 %v8097
    %8543 = vmatpush1.bf16.msra.mxu0 %v8096
    %8544 = vmatprep.subr.bf16.mxu0 %v8094
    %8545 = vmatpush1.bf16.msra.mxu0 %v8093
    %8546 = vmatprep.subr.bf16.mxu0 %v8091
    %8547 = vmatpush1.bf16.msra.mxu0 %v8090
    %8548 = vmatprep.subr.bf16.mxu0 %v8088
    %8549 = vmatpush1.bf16.msra.mxu0 %v8087
    %8550 = vmatprep.subr.bf16.mxu0 %v8085
    %8551 = vmatpush1.bf16.msra.mxu0 %v8084
    %8552 = vmatprep.subr.bf16.mxu0 %v8082
    %8553 = vmatpush1.bf16.msra.mxu0 %v8081
    %8554 = vmatprep.subr.bf16.mxu0 %v8079
    %8555 = vmatpush1.bf16.msra.mxu0 %v8078
    %8556 = vmatprep.subr.bf16.mxu0 %v8124
    %8557 = vmatpush2.bf16.msra.mxu0 %v8123
    %8558 = vmatprep.subr.bf16.mxu0 %v8121
    %8559 = vmatpush2.bf16.msra.mxu0 %v8120
    %8560 = vmatprep.subr.bf16.mxu0 %v8118
    %8561 = vmatpush2.bf16.msra.mxu0 %v8117
    %8562 = vmatprep.subr.bf16.mxu0 %v8115
    %8563 = vmatpush2.bf16.msra.mxu0 %v8114
    %8564 = vmatprep.subr.bf16.mxu0 %v8112
    %8565 = vmatpush2.bf16.msra.mxu0 %v8111
    %8566 = vmatprep.subr.bf16.mxu0 %v8109
    %8567 = vmatpush2.bf16.msra.mxu0 %v8108
    %8568 = vmatprep.subr.bf16.mxu0 %v8106
    %8569 = vmatpush2.bf16.msra.mxu0 %v8105
    %8570 = vmatprep.subr.bf16.mxu0 %v8103
    %8571 = vmatpush2.bf16.msra.mxu0 %v8102
    %8572 = vmatprep.mubr.bf16.mxu0 %v6935
    %8573 = vmatmul.mubr.bf16.gmra.mxu0 %v6934
    %v8574 = vpop.f32.mrf.mxu0
    %v8575 = vadd.f32 %v8512, %v8574
    %v8576 = vpop.f32.mrf.mxu0
    %v8577 = vadd.f32 %v8514, %v8576
    %v8578 = vpop.f32.mrf.mxu0
    %v8579 = vadd.f32 %v8516, %v8578
    %v8580 = vpop.f32.mrf.mxu0
    %v8581 = vadd.f32 %v8518, %v8580
    %8582 = vmatprep.mubr.bf16.mxu0 %v6944
    %8583 = vmatmul.mubr.bf16.gmra.mxu0 %v6943
    %v8584 = vpop.f32.mrf.mxu0
    %v8585 = vadd.f32 %v8522, %v8584
    %v8586 = vpop.f32.mrf.mxu0
    %v8587 = vadd.f32 %v8524, %v8586
    %v8588 = vpop.f32.mrf.mxu0
    %v8589 = vadd.f32 %v8526, %v8588
    %v8590 = vpop.f32.mrf.mxu0
    %v8591 = vadd.f32 %v8528, %v8590
    %8592 = vmatprep.mubr.bf16.mxu0 %v6953
    %8593 = vmatmul.mubr.bf16.gmra.mxu0 %v6952
    %v8594 = vpop.f32.mrf.mxu0
    %v8595 = vadd.f32 %v8532, %v8594
    %v8596 = vpop.f32.mrf.mxu0
    %v8597 = vadd.f32 %v8534, %v8596
    %v8598 = vpop.f32.mrf.mxu0
    %v8599 = vadd.f32 %v8536, %v8598
    %v8600 = vpop.f32.mrf.mxu0
    %v8601 = vadd.f32 %v8538, %v8600
    %8602 = vdwg.mxu0
    %8603 = vmatprep.subr.bf16.mxu0 %v8148
    %8604 = vmatpush1.bf16.msra.mxu0 %v8147
    %8605 = vmatprep.subr.bf16.mxu0 %v8145
    %8606 = vmatpush1.bf16.msra.mxu0 %v8144
    %8607 = vmatprep.subr.bf16.mxu0 %v8142
    %8608 = vmatpush1.bf16.msra.mxu0 %v8141
    %8609 = vmatprep.subr.bf16.mxu0 %v8139
    %8610 = vmatpush1.bf16.msra.mxu0 %v8138
    %8611 = vmatprep.subr.bf16.mxu0 %v8136
    %8612 = vmatpush1.bf16.msra.mxu0 %v8135
    %8613 = vmatprep.subr.bf16.mxu0 %v8133
    %8614 = vmatpush1.bf16.msra.mxu0 %v8132
    %8615 = vmatprep.subr.bf16.mxu0 %v8130
    %8616 = vmatpush1.bf16.msra.mxu0 %v8129
    %8617 = vmatprep.subr.bf16.mxu0 %v8127
    %8618 = vmatpush1.bf16.msra.mxu0 %v8126
    %8619 = vmatprep.subr.bf16.mxu0 %v8172
    %8620 = vmatpush2.bf16.msra.mxu0 %v8171
    %8621 = vmatprep.subr.bf16.mxu0 %v8169
    %8622 = vmatpush2.bf16.msra.mxu0 %v8168
    %8623 = vmatprep.subr.bf16.mxu0 %v8166
    %8624 = vmatpush2.bf16.msra.mxu0 %v8165
    %8625 = vmatprep.subr.bf16.mxu0 %v8163
    %8626 = vmatpush2.bf16.msra.mxu0 %v8162
    %8627 = vmatprep.subr.bf16.mxu0 %v8160
    %8628 = vmatpush2.bf16.msra.mxu0 %v8159
    %8629 = vmatprep.subr.bf16.mxu0 %v8157
    %8630 = vmatpush2.bf16.msra.mxu0 %v8156
    %8631 = vmatprep.subr.bf16.mxu0 %v8154
    %8632 = vmatpush2.bf16.msra.mxu0 %v8153
    %8633 = vmatprep.subr.bf16.mxu0 %v8151
    %8634 = vmatpush2.bf16.msra.mxu0 %v8150
    %8635 = vmatprep.mubr.bf16.mxu0 %v6937
    %8636 = vmatmul.mubr.bf16.gmra.mxu0 %v6936
    %v8637 = vpop.f32.mrf.mxu0
    %v8638 = vadd.f32 %v8575, %v8637
    %v8639 = vpop.f32.mrf.mxu0
    %v8640 = vadd.f32 %v8577, %v8639
    %v8641 = vpop.f32.mrf.mxu0
    %v8642 = vadd.f32 %v8579, %v8641
    %v8643 = vpop.f32.mrf.mxu0
    %v8644 = vadd.f32 %v8581, %v8643
    %8645 = vmatprep.mubr.bf16.mxu0 %v6946
    %8646 = vmatmul.mubr.bf16.gmra.mxu0 %v6945
    %v8647 = vpop.f32.mrf.mxu0
    %v8648 = vadd.f32 %v8585, %v8647
    %v8649 = vpop.f32.mrf.mxu0
    %v8650 = vadd.f32 %v8587, %v8649
    %v8651 = vpop.f32.mrf.mxu0
    %v8652 = vadd.f32 %v8589, %v8651
    %v8653 = vpop.f32.mrf.mxu0
    %v8654 = vadd.f32 %v8591, %v8653
    %8655 = vmatprep.mubr.bf16.mxu0 %v6955
    %8656 = vmatmul.mubr.bf16.gmra.mxu0 %v6954
    %v8657 = vpop.f32.mrf.mxu0
    %v8658 = vadd.f32 %v8595, %v8657
    %v8659 = vpop.f32.mrf.mxu0
    %v8660 = vadd.f32 %v8597, %v8659
    %v8661 = vpop.f32.mrf.mxu0
    %v8662 = vadd.f32 %v8599, %v8661
    %v8663 = vpop.f32.mrf.mxu0
    %v8664 = vadd.f32 %v8601, %v8663
    %8665 = vdwg.mxu0
    %8666 = vmatprep.subr.bf16.mxu0 %v8196
    %8667 = vmatpush1.bf16.msra.mxu0 %v8195
    %8668 = vmatprep.subr.bf16.mxu0 %v8193
    %8669 = vmatpush1.bf16.msra.mxu0 %v8192
    %8670 = vmatprep.subr.bf16.mxu0 %v8190
    %8671 = vmatpush1.bf16.msra.mxu0 %v8189
    %8672 = vmatprep.subr.bf16.mxu0 %v8187
    %8673 = vmatpush1.bf16.msra.mxu0 %v8186
    %8674 = vmatprep.subr.bf16.mxu0 %v8184
    %8675 = vmatpush1.bf16.msra.mxu0 %v8183
    %8676 = vmatprep.subr.bf16.mxu0 %v8181
    %8677 = vmatpush1.bf16.msra.mxu0 %v8180
    %8678 = vmatprep.subr.bf16.mxu0 %v8178
    %8679 = vmatpush1.bf16.msra.mxu0 %v8177
    %8680 = vmatprep.subr.bf16.mxu0 %v8175
    %8681 = vmatpush1.bf16.msra.mxu0 %v8174
    %8682 = vmatprep.subr.bf16.mxu0 0
    %8683 = vmatpush2.bf16.msra.mxu0 0
    %8684 = vmatprep.subr.bf16.mxu0 0
    %8685 = vmatpush2.bf16.msra.mxu0 0
    %8686 = vmatprep.subr.bf16.mxu0 0
    %8687 = vmatpush2.bf16.msra.mxu0 0
    %8688 = vmatprep.subr.bf16.mxu0 0
    %8689 = vmatpush2.bf16.msra.mxu0 0
    %8690 = vmatprep.subr.bf16.mxu0 0
    %8691 = vmatpush2.bf16.msra.mxu0 0
    %8692 = vmatprep.subr.bf16.mxu0 0
    %8693 = vmatpush2.bf16.msra.mxu0 0
    %8694 = vmatprep.subr.bf16.mxu0 0
    %8695 = vmatpush2.bf16.msra.mxu0 0
    %8696 = vmatprep.subr.bf16.mxu0 0
    %8697 = vmatpush2.bf16.msra.mxu0 0
    %8698 = vmatprep.mubr.bf16.mxu0 0
    %8699 = vmatmul.mubr.bf16.gmra.mxu0 %v6938
    %v8700 = vpop.f32.mrf.mxu0
    %v8701 = vadd.f32 %v8638, %v8700
    %v8702 = vpop.f32.mrf.mxu0
    %v8703 = vadd.f32 %v8640, %v8702
    %v8704 = vpop.f32.mrf.mxu0
    %v8705 = vadd.f32 %v8642, %v8704
    %v8706 = vpop.f32.mrf.mxu0
    %v8707 = vadd.f32 %v8644, %v8706
    %8708 = vmatprep.mubr.bf16.mxu0 0
    %8709 = vmatmul.mubr.bf16.gmra.mxu0 %v6947
    %v8710 = vpop.f32.mrf.mxu0
    %v8711 = vadd.f32 %v8648, %v8710
    %v8712 = vpop.f32.mrf.mxu0
    %v8713 = vadd.f32 %v8650, %v8712
    %v8714 = vpop.f32.mrf.mxu0
    %v8715 = vadd.f32 %v8652, %v8714
    %v8716 = vpop.f32.mrf.mxu0
    %v8717 = vadd.f32 %v8654, %v8716
    %8718 = vmatprep.mubr.bf16.mxu0 0
    %8719 = vmatmul.mubr.bf16.gmra.mxu0 %v6956
    %v8720 = vpop.f32.mrf.mxu0
    %v8721 = vadd.f32 %v8658, %v8720
    %v8722 = vpop.f32.mrf.mxu0
    %v8723 = vadd.f32 %v8660, %v8722
    %v8724 = vpop.f32.mrf.mxu0
    %v8725 = vadd.f32 %v8662, %v8724
    %v8726 = vpop.f32.mrf.mxu0
    %v8727 = vadd.f32 %v8664, %v8726
    %8728 = vdwg.mxu0
    %8729 = vmatprep.subr.bf16.mxu0 0
    %8730 = vmatpush1.bf16.msra.mxu0 %v8005
    %8731 = vmatprep.subr.bf16.mxu0 0
    %8732 = vmatpush1.bf16.msra.mxu0 %v8002
    %8733 = vmatprep.subr.bf16.mxu0 0
    %8734 = vmatpush1.bf16.msra.mxu0 %v7999
    %8735 = vmatprep.subr.bf16.mxu0 0
    %8736 = vmatpush1.bf16.msra.mxu0 %v7996
    %8737 = vmatprep.subr.bf16.mxu0 0
    %8738 = vmatpush1.bf16.msra.mxu0 %v7993
    %8739 = vmatprep.subr.bf16.mxu0 0
    %8740 = vmatpush1.bf16.msra.mxu0 %v7990
    %8741 = vmatprep.subr.bf16.mxu0 0
    %8742 = vmatpush1.bf16.msra.mxu0 %v7987
    %8743 = vmatprep.subr.bf16.mxu0 0
    %8744 = vmatpush1.bf16.msra.mxu0 %v7984
    %8745 = vmatprep.subr.bf16.mxu0 0
    %8746 = vmatpush2.bf16.msra.mxu0 %v8029
    %8747 = vmatprep.subr.bf16.mxu0 0
    %8748 = vmatpush2.bf16.msra.mxu0 %v8026
    %8749 = vmatprep.subr.bf16.mxu0 0
    %8750 = vmatpush2.bf16.msra.mxu0 %v8023
    %8751 = vmatprep.subr.bf16.mxu0 0
    %8752 = vmatpush2.bf16.msra.mxu0 %v8020
    %8753 = vmatprep.subr.bf16.mxu0 0
    %8754 = vmatpush2.bf16.msra.mxu0 %v8017
    %8755 = vmatprep.subr.bf16.mxu0 0
    %8756 = vmatpush2.bf16.msra.mxu0 %v8014
    %8757 = vmatprep.subr.bf16.mxu0 0
    %8758 = vmatpush2.bf16.msra.mxu0 %v8011
    %8759 = vmatprep.subr.bf16.mxu0 0
    %8760 = vmatpush2.bf16.msra.mxu0 %v8008
    %8761 = vmatprep.mubr.bf16.mxu0 %v6931
    %8762 = vmatmul.mubr.bf16.gmra.mxu0 %v6930
    %v8763 = vpop.f32.mrf.mxu0
    %v8764 = vadd.f32 %v7258, %v8763
    %v8765 = vpop.f32.mrf.mxu0
    %v8766 = vpop.f32.mrf.mxu0
    %v8767 = vadd.f32 %v7258, %v8766
    %v8768 = vpop.f32.mrf.mxu0
    %8769 = vmatprep.mubr.bf16.mxu0 %v6940
    %8770 = vmatmul.mubr.bf16.gmra.mxu0 %v6939
    %v8771 = vpop.f32.mrf.mxu0
    %v8772 = vadd.f32 %v7258, %v8771
    %v8773 = vpop.f32.mrf.mxu0
    %v8774 = vpop.f32.mrf.mxu0
    %v8775 = vadd.f32 %v7258, %v8774
    %v8776 = vpop.f32.mrf.mxu0
    %8777 = vmatprep.mubr.bf16.mxu0 %v6949
    %8778 = vmatmul.mubr.bf16.gmra.mxu0 %v6948
    %v8779 = vpop.f32.mrf.mxu0
    %v8780 = vadd.f32 %v7258, %v8779
    %v8781 = vpop.f32.mrf.mxu0
    %v8782 = vpop.f32.mrf.mxu0
    %v8783 = vadd.f32 %v7258, %v8782
    %v8784 = vpop.f32.mrf.mxu0
    %8785 = vdwg.mxu0
    %8786 = vmatprep.subr.bf16.mxu0 0
    %8787 = vmatpush1.bf16.msra.mxu0 %v8053
    %8788 = vmatprep.subr.bf16.mxu0 0
    %8789 = vmatpush1.bf16.msra.mxu0 %v8050
    %8790 = vmatprep.subr.bf16.mxu0 0
    %8791 = vmatpush1.bf16.msra.mxu0 %v8047
    %8792 = vmatprep.subr.bf16.mxu0 0
    %8793 = vmatpush1.bf16.msra.mxu0 %v8044
    %8794 = vmatprep.subr.bf16.mxu0 0
    %8795 = vmatpush1.bf16.msra.mxu0 %v8041
    %8796 = vmatprep.subr.bf16.mxu0 0
    %8797 = vmatpush1.bf16.msra.mxu0 %v8038
    %8798 = vmatprep.subr.bf16.mxu0 0
    %8799 = vmatpush1.bf16.msra.mxu0 %v8035
    %8800 = vmatprep.subr.bf16.mxu0 0
    %8801 = vmatpush1.bf16.msra.mxu0 %v8032
    %8802 = vmatprep.subr.bf16.mxu0 0
    %8803 = vmatpush2.bf16.msra.mxu0 %v8077
    %8804 = vmatprep.subr.bf16.mxu0 0
    %8805 = vmatpush2.bf16.msra.mxu0 %v8074
    %8806 = vmatprep.subr.bf16.mxu0 0
    %8807 = vmatpush2.bf16.msra.mxu0 %v8071
    %8808 = vmatprep.subr.bf16.mxu0 0
    %8809 = vmatpush2.bf16.msra.mxu0 %v8068
    %8810 = vmatprep.subr.bf16.mxu0 0
    %8811 = vmatpush2.bf16.msra.mxu0 %v8065
    %8812 = vmatprep.subr.bf16.mxu0 0
    %8813 = vmatpush2.bf16.msra.mxu0 %v8062
    %8814 = vmatprep.subr.bf16.mxu0 0
    %8815 = vmatpush2.bf16.msra.mxu0 %v8059
    %8816 = vmatprep.subr.bf16.mxu0 0
    %8817 = vmatpush2.bf16.msra.mxu0 %v8056
    %8818 = vmatprep.mubr.bf16.mxu0 %v6933
    %8819 = vmatmul.mubr.bf16.gmra.mxu0 %v6932
    %v8820 = vpop.f32.mrf.mxu0
    %v8821 = vadd.f32 %v8764, %v8820
    %v8822 = vpop.f32.mrf.mxu0
    %v8823 = vpop.f32.mrf.mxu0
    %v8824 = vadd.f32 %v8767, %v8823
    %v8825 = vpop.f32.mrf.mxu0
    %8826 = vmatprep.mubr.bf16.mxu0 %v6942
    %8827 = vmatmul.mubr.bf16.gmra.mxu0 %v6941
    %v8828 = vpop.f32.mrf.mxu0
    %v8829 = vadd.f32 %v8772, %v8828
    %v8830 = vpop.f32.mrf.mxu0
    %v8831 = vpop.f32.mrf.mxu0
    %v8832 = vadd.f32 %v8775, %v8831
    %v8833 = vpop.f32.mrf.mxu0
    %8834 = vmatprep.mubr.bf16.mxu0 %v6951
    %8835 = vmatmul.mubr.bf16.gmra.mxu0 %v6950
    %v8836 = vpop.f32.mrf.mxu0
    %v8837 = vadd.f32 %v8780, %v8836
    %v8838 = vpop.f32.mrf.mxu0
    %v8839 = vpop.f32.mrf.mxu0
    %v8840 = vadd.f32 %v8783, %v8839
    %v8841 = vpop.f32.mrf.mxu0
    %8842 = vdwg.mxu0
    %8843 = vmatprep.subr.bf16.mxu0 0
    %8844 = vmatpush1.bf16.msra.mxu0 %v8101
    %8845 = vmatprep.subr.bf16.mxu0 0
    %8846 = vmatpush1.bf16.msra.mxu0 %v8098
    %8847 = vmatprep.subr.bf16.mxu0 0
    %8848 = vmatpush1.bf16.msra.mxu0 %v8095
    %8849 = vmatprep.subr.bf16.mxu0 0
    %8850 = vmatpush1.bf16.msra.mxu0 %v8092
    %8851 = vmatprep.subr.bf16.mxu0 0
    %8852 = vmatpush1.bf16.msra.mxu0 %v8089
    %8853 = vmatprep.subr.bf16.mxu0 0
    %8854 = vmatpush1.bf16.msra.mxu0 %v8086
    %8855 = vmatprep.subr.bf16.mxu0 0
    %8856 = vmatpush1.bf16.msra.mxu0 %v8083
    %8857 = vmatprep.subr.bf16.mxu0 0
    %8858 = vmatpush1.bf16.msra.mxu0 %v8080
    %8859 = vmatprep.subr.bf16.mxu0 0
    %8860 = vmatpush2.bf16.msra.mxu0 %v8125
    %8861 = vmatprep.subr.bf16.mxu0 0
    %8862 = vmatpush2.bf16.msra.mxu0 %v8122
    %8863 = vmatprep.subr.bf16.mxu0 0
    %8864 = vmatpush2.bf16.msra.mxu0 %v8119
    %8865 = vmatprep.subr.bf16.mxu0 0
    %8866 = vmatpush2.bf16.msra.mxu0 %v8116
    %8867 = vmatprep.subr.bf16.mxu0 0
    %8868 = vmatpush2.bf16.msra.mxu0 %v8113
    %8869 = vmatprep.subr.bf16.mxu0 0
    %8870 = vmatpush2.bf16.msra.mxu0 %v8110
    %8871 = vmatprep.subr.bf16.mxu0 0
    %8872 = vmatpush2.bf16.msra.mxu0 %v8107
    %8873 = vmatprep.subr.bf16.mxu0 0
    %8874 = vmatpush2.bf16.msra.mxu0 %v8104
    %8875 = vmatprep.mubr.bf16.mxu0 %v6935
    %8876 = vmatmul.mubr.bf16.gmra.mxu0 %v6934
    %v8877 = vpop.f32.mrf.mxu0
    %v8878 = vadd.f32 %v8821, %v8877
    %v8879 = vpop.f32.mrf.mxu0
    %v8880 = vpop.f32.mrf.mxu0
    %v8881 = vadd.f32 %v8824, %v8880
    %v8882 = vpop.f32.mrf.mxu0
    %8883 = vmatprep.mubr.bf16.mxu0 %v6944
    %8884 = vmatmul.mubr.bf16.gmra.mxu0 %v6943
    %v8885 = vpop.f32.mrf.mxu0
    %v8886 = vadd.f32 %v8829, %v8885
    %v8887 = vpop.f32.mrf.mxu0
    %v8888 = vpop.f32.mrf.mxu0
    %v8889 = vadd.f32 %v8832, %v8888
    %v8890 = vpop.f32.mrf.mxu0
    %8891 = vmatprep.mubr.bf16.mxu0 %v6953
    %8892 = vmatmul.mubr.bf16.gmra.mxu0 %v6952
    %v8893 = vpop.f32.mrf.mxu0
    %v8894 = vadd.f32 %v8837, %v8893
    %v8895 = vpop.f32.mrf.mxu0
    %v8896 = vpop.f32.mrf.mxu0
    %v8897 = vadd.f32 %v8840, %v8896
    %v8898 = vpop.f32.mrf.mxu0
    %8899 = vdwg.mxu0
    %8900 = vmatprep.subr.bf16.mxu0 0
    %8901 = vmatpush1.bf16.msra.mxu0 %v8149
    %8902 = vmatprep.subr.bf16.mxu0 0
    %8903 = vmatpush1.bf16.msra.mxu0 %v8146
    %8904 = vmatprep.subr.bf16.mxu0 0
    %8905 = vmatpush1.bf16.msra.mxu0 %v8143
    %8906 = vmatprep.subr.bf16.mxu0 0
    %8907 = vmatpush1.bf16.msra.mxu0 %v8140
    %8908 = vmatprep.subr.bf16.mxu0 0
    %8909 = vmatpush1.bf16.msra.mxu0 %v8137
    %8910 = vmatprep.subr.bf16.mxu0 0
    %8911 = vmatpush1.bf16.msra.mxu0 %v8134
    %8912 = vmatprep.subr.bf16.mxu0 0
    %8913 = vmatpush1.bf16.msra.mxu0 %v8131
    %8914 = vmatprep.subr.bf16.mxu0 0
    %8915 = vmatpush1.bf16.msra.mxu0 %v8128
    %8916 = vmatprep.subr.bf16.mxu0 0
    %8917 = vmatpush2.bf16.msra.mxu0 %v8173
    %8918 = vmatprep.subr.bf16.mxu0 0
    %8919 = vmatpush2.bf16.msra.mxu0 %v8170
    %8920 = vmatprep.subr.bf16.mxu0 0
    %8921 = vmatpush2.bf16.msra.mxu0 %v8167
    %8922 = vmatprep.subr.bf16.mxu0 0
    %8923 = vmatpush2.bf16.msra.mxu0 %v8164
    %8924 = vmatprep.subr.bf16.mxu0 0
    %8925 = vmatpush2.bf16.msra.mxu0 %v8161
    %8926 = vmatprep.subr.bf16.mxu0 0
    %8927 = vmatpush2.bf16.msra.mxu0 %v8158
    %8928 = vmatprep.subr.bf16.mxu0 0
    %8929 = vmatpush2.bf16.msra.mxu0 %v8155
    %8930 = vmatprep.subr.bf16.mxu0 0
    %8931 = vmatpush2.bf16.msra.mxu0 %v8152
    %8932 = vmatprep.mubr.bf16.mxu0 %v6937
    %8933 = vmatmul.mubr.bf16.gmra.mxu0 %v6936
    %v8934 = vpop.f32.mrf.mxu0
    %v8935 = vadd.f32 %v8878, %v8934
    %v8936 = vpop.f32.mrf.mxu0
    %v8937 = vpop.f32.mrf.mxu0
    %v8938 = vadd.f32 %v8881, %v8937
    %v8939 = vpop.f32.mrf.mxu0
    %8940 = vmatprep.mubr.bf16.mxu0 %v6946
    %8941 = vmatmul.mubr.bf16.gmra.mxu0 %v6945
    %v8942 = vpop.f32.mrf.mxu0
    %v8943 = vadd.f32 %v8886, %v8942
    %v8944 = vpop.f32.mrf.mxu0
    %v8945 = vpop.f32.mrf.mxu0
    %v8946 = vadd.f32 %v8889, %v8945
    %v8947 = vpop.f32.mrf.mxu0
    %8948 = vmatprep.mubr.bf16.mxu0 %v6955
    %8949 = vmatmul.mubr.bf16.gmra.mxu0 %v6954
    %v8950 = vpop.f32.mrf.mxu0
    %v8951 = vadd.f32 %v8894, %v8950
    %v8952 = vpop.f32.mrf.mxu0
    %v8953 = vpop.f32.mrf.mxu0
    %v8954 = vadd.f32 %v8897, %v8953
    %v8955 = vpop.f32.mrf.mxu0
    %8956 = vdwg.mxu0
    %8957 = vmatprep.subr.bf16.mxu0 0
    %8958 = vmatpush1.bf16.msra.mxu0 %v8197
    %8959 = vmatprep.subr.bf16.mxu0 0
    %8960 = vmatpush1.bf16.msra.mxu0 %v8194
    %8961 = vmatprep.subr.bf16.mxu0 0
    %8962 = vmatpush1.bf16.msra.mxu0 %v8191
    %8963 = vmatprep.subr.bf16.mxu0 0
    %8964 = vmatpush1.bf16.msra.mxu0 %v8188
    %8965 = vmatprep.subr.bf16.mxu0 0
    %8966 = vmatpush1.bf16.msra.mxu0 %v8185
    %8967 = vmatprep.subr.bf16.mxu0 0
    %8968 = vmatpush1.bf16.msra.mxu0 %v8182
    %8969 = vmatprep.subr.bf16.mxu0 0
    %8970 = vmatpush1.bf16.msra.mxu0 %v8179
    %8971 = vmatprep.subr.bf16.mxu0 0
    %8972 = vmatpush1.bf16.msra.mxu0 %v8176
    %8973 = vmatprep.subr.bf16.mxu0 0
    %8974 = vmatpush2.bf16.msra.mxu0 0
    %8975 = vmatprep.subr.bf16.mxu0 0
    %8976 = vmatpush2.bf16.msra.mxu0 0
    %8977 = vmatprep.subr.bf16.mxu0 0
    %8978 = vmatpush2.bf16.msra.mxu0 0
    %8979 = vmatprep.subr.bf16.mxu0 0
    %8980 = vmatpush2.bf16.msra.mxu0 0
    %8981 = vmatprep.subr.bf16.mxu0 0
    %8982 = vmatpush2.bf16.msra.mxu0 0
    %8983 = vmatprep.subr.bf16.mxu0 0
    %8984 = vmatpush2.bf16.msra.mxu0 0
    %8985 = vmatprep.subr.bf16.mxu0 0
    %8986 = vmatpush2.bf16.msra.mxu0 0
    %8987 = vmatprep.subr.bf16.mxu0 0
    %8988 = vmatpush2.bf16.msra.mxu0 0
    %8989 = vmatprep.mubr.bf16.mxu0 0
    %8990 = vmatmul.mubr.bf16.gmra.mxu0 %v6938
    %v8991 = vpop.f32.mrf.mxu0
    %v8992 = vadd.f32 %v8935, %v8991
    %v8993 = vpop.f32.mrf.mxu0
    %v8994 = vpop.f32.mrf.mxu0
    %v8995 = vadd.f32 %v8938, %v8994
    %v8996 = vpop.f32.mrf.mxu0
    %8997 = vmatprep.mubr.bf16.mxu0 0
    %8998 = vmatmul.mubr.bf16.gmra.mxu0 %v6947
    %v8999 = vpop.f32.mrf.mxu0
    %v9000 = vadd.f32 %v8943, %v8999
    %v9001 = vpop.f32.mrf.mxu0
    %v9002 = vpop.f32.mrf.mxu0
    %v9003 = vadd.f32 %v8946, %v9002
    %v9004 = vpop.f32.mrf.mxu0
    %9005 = vmatprep.mubr.bf16.mxu0 0
    %9006 = vmatmul.mubr.bf16.gmra.mxu0 %v6956
    %v9007 = vpop.f32.mrf.mxu0
    %v9008 = vadd.f32 %v8951, %v9007
    %v9009 = vpop.f32.mrf.mxu0
    %v9010 = vpop.f32.mrf.mxu0
    %v9011 = vadd.f32 %v8954, %v9010
    %v9012 = vpop.f32.mrf.mxu0
    %9013 = vdwg.mxu0
    %v9014 = vadd.f32 %v8701, %v4528
    %v9015 = vadd.f32 %v8703, %v4529
    %v9016 = vadd.f32 %v8992, %v4530
    %v9017 = vadd.f32 %v8705, %v4531
    %v9018 = vadd.f32 %v8707, %v4532
    %v9019 = vadd.f32 %v8995, %v4533
    %v9020 = vadd.f32 %v8711, %v4534
    %v9021 = vadd.f32 %v8713, %v4535
    %v9022 = vadd.f32 %v9000, %v4536
    %v9023 = vadd.f32 %v8715, %v4537
    %v9024 = vadd.f32 %v8717, %v4538
    %v9025 = vadd.f32 %v9003, %v4539
    %v9026 = vadd.f32 %v8721, %v4540
    %v9027 = vadd.f32 %v8723, %v4541
    %v9028 = vadd.f32 %v9008, %v4542
    %v9029 = vadd.f32 %v8725, %v4543
    %v9030 = vadd.f32 %v8727, %v4544
    %v9031 = vadd.f32 %v9011, %v4545
    %v9032 = vmax.f32 %v9014, 0.0
    %v9033 = vmax.f32 %v9015, 0.0
    %v9034 = vmax.f32 %v9016, 0.0
    %v9035 = vmax.f32 %v9017, 0.0
    %v9036 = vmax.f32 %v9018, 0.0
    %v9037 = vmax.f32 %v9019, 0.0
    %v9038 = vmax.f32 %v9020, 0.0
    %v9039 = vmax.f32 %v9021, 0.0
    %v9040 = vmax.f32 %v9022, 0.0
    %v9041 = vmax.f32 %v9023, 0.0
    %v9042 = vmax.f32 %v9024, 0.0
    %v9043 = vmax.f32 %v9025, 0.0
    %v9044 = vmax.f32 %v9026, 0.0
    %v9045 = vmax.f32 %v9027, 0.0
    %v9046 = vmax.f32 %v9028, 0.0
    %v9047 = vmax.f32 %v9029, 0.0
    %v9048 = vmax.f32 %v9030, 0.0
    %v9049 = vmax.f32 %v9031, 0.0
    %9050 = vst [vmem:[#allocation2] sm:$0xff] %v9032
    %9051 = vst [vmem:[#allocation2 + $0x8] sm:$0xff] %v9033
    %9052 = vst [vmem:[#allocation2 + $0x10] sm:$0xff] %v9034
    %9053 = vst [vmem:[#allocation2 + $0x48] sm:$0xff] %v9035
    %9054 = vst [vmem:[#allocation2 + $0x50] sm:$0xff] %v9036
    %9055 = vst [vmem:[#allocation2 + $0x58] sm:$0xff] %v9037
    %9056 = vst [vmem:[#allocation2 + $0x90] sm:$0xff] %v9038
    %9057 = vst [vmem:[#allocation2 + $0x98] sm:$0xff] %v9039
    %9058 = vst [vmem:[#allocation2 + $0xa0] sm:$0xff] %v9040
    %9059 = vst [vmem:[#allocation2 + $0xd8] sm:$0xff] %v9041
    %9060 = vst [vmem:[#allocation2 + $0xe0] sm:$0xff] %v9042
    %9061 = vst [vmem:[#allocation2 + $0xe8] sm:$0xff] %v9043
    %9062 = vst [vmem:[#allocation2 + $0x120] sm:$0xff] %v9044
    %9063 = vst [vmem:[#allocation2 + $0x128] sm:$0xff] %v9045
    %9064 = vst [vmem:[#allocation2 + $0x130] sm:$0xff] %v9046
    %9065 = vst [vmem:[#allocation2 + $0x168] sm:$0xff] %v9047
    %9066 = vst [vmem:[#allocation2 + $0x170] sm:$0xff] %v9048
    %9067 = vst [vmem:[#allocation2 + $0x178] sm:$0xff] %v9049
    %v9068 = vld [vmem:[#allocation2] sm:$0xff]
    %v9069 = vld [vmem:[#allocation2 + $0x8] sm:$0xff]
    %v9070 = vld [vmem:[#allocation2 + $0x10] sm:$0xff]
    %9071 = vst [vmem:[#allocation3] sm:$0xff] %v9068
    %9072 = vst [vmem:[#allocation3 + $0x8] sm:$0xff] %v9069
    %9073 = vst [vmem:[#allocation3 + $0x10] sm:$0xff] %v9070
    %v9074 = vld [vmem:[#allocation2 + $0x48] sm:$0xff]
    %v9075 = vld [vmem:[#allocation2 + $0x50] sm:$0xff]
    %v9076 = vld [vmem:[#allocation2 + $0x58] sm:$0xff]
    %9077 = vst [vmem:[#allocation3 + $0x18] sm:$0xff] %v9074
    %9078 = vst [vmem:[#allocation3 + $0x20] sm:$0xff] %v9075
    %9079 = vst [vmem:[#allocation3 + $0x28] sm:$0xff] %v9076
    %v9080 = vld [vmem:[#allocation2 + $0x90] sm:$0xff]
    %v9081 = vld [vmem:[#allocation2 + $0x98] sm:$0xff]
    %v9082 = vld [vmem:[#allocation2 + $0xa0] sm:$0xff]
    %9083 = vst [vmem:[#allocation3 + $0x30] sm:$0xff] %v9080
    %9084 = vst [vmem:[#allocation3 + $0x38] sm:$0xff] %v9081
    %9085 = vst [vmem:[#allocation3 + $0x40] sm:$0xff] %v9082
    %v9086 = vld [vmem:[#allocation2 + $0xd8] sm:$0xff]
    %v9087 = vld [vmem:[#allocation2 + $0xe0] sm:$0xff]
    %v9088 = vld [vmem:[#allocation2 + $0xe8] sm:$0xff]
    %9089 = vst [vmem:[#allocation3 + $0x48] sm:$0xff] %v9086
    %9090 = vst [vmem:[#allocation3 + $0x50] sm:$0xff] %v9087
    %9091 = vst [vmem:[#allocation3 + $0x58] sm:$0xff] %v9088
    %v9092 = vld [vmem:[#allocation2 + $0x120] sm:$0xff]
    %v9093 = vld [vmem:[#allocation2 + $0x128] sm:$0xff]
    %v9094 = vld [vmem:[#allocation2 + $0x130] sm:$0xff]
    %9095 = vst [vmem:[#allocation3 + $0x60] sm:$0xff] %v9092
    %9096 = vst [vmem:[#allocation3 + $0x68] sm:$0xff] %v9093
    %9097 = vst [vmem:[#allocation3 + $0x70] sm:$0xff] %v9094
    %v9098 = vld [vmem:[#allocation2 + $0x168] sm:$0xff]
    %v9099 = vld [vmem:[#allocation2 + $0x170] sm:$0xff]
    %v9100 = vld [vmem:[#allocation2 + $0x178] sm:$0xff]
    %9101 = vst [vmem:[#allocation3 + $0x78] sm:$0xff] %v9098
    %9102 = vst [vmem:[#allocation3 + $0x80] sm:$0xff] %v9099
    %9103 = vst [vmem:[#allocation3 + $0x88] sm:$0xff] %v9100
    %s9104 = smul.u32 4, 288
    %s9105 = smul.u32 %s9104, 2
    %s9106 = sshll.u32 %s9105, 4
    %9107 = dma.done %s413, %s9106
    %v9108 = vld [vmem:[#allocation3] sm:$0xff]
    %v9109 = vld [vmem:[#allocation3 + $0x8] sm:$0xff]
    %v9110 = vld [vmem:[#allocation3 + $0x10] sm:$0xff]
    %v9111 = vld [vmem:[#allocation3 + $0x18] sm:$0xff]
    %v9112 = vld [vmem:[#allocation3 + $0x20] sm:$0xff]
    %v9113 = vld [vmem:[#allocation3 + $0x28] sm:$0xff]
    %v9114 = vld [vmem:[#allocation3 + $0x30] sm:$0xff]
    %v9115 = vld [vmem:[#allocation3 + $0x38] sm:$0xff]
    %v9116 = vld [vmem:[#allocation3 + $0x40] sm:$0xff]
    %v9117 = vld [vmem:[#allocation3 + $0x48] sm:$0xff]
    %v9118 = vld [vmem:[#allocation3 + $0x50] sm:$0xff]
    %v9119 = vld [vmem:[#allocation3 + $0x58] sm:$0xff]
    %v9120 = vld [vmem:[#allocation3 + $0x60] sm:$0xff]
    %v9121 = vld [vmem:[#allocation3 + $0x68] sm:$0xff]
    %v9122 = vld [vmem:[#allocation3 + $0x70] sm:$0xff]
    %v9123 = vld [vmem:[#allocation3 + $0x78] sm:$0xff]
    %v9124 = vld [vmem:[#allocation3 + $0x80] sm:$0xff]
    %v9125 = vld [vmem:[#allocation3 + $0x88] sm:$0xff]
    %v9126 = vpack.c.bf16 %v9108, %v9108
    %v9127 = vpack.c.bf16 %v9109, %v9109
    %v9128 = vpack.c.bf16 %v9110, %v9110
    %v9129 = vpack.c.bf16 %v9111, %v9111
    %v9130 = vpack.c.bf16 %v9112, %v9112
    %v9131 = vpack.c.bf16 %v9113, %v9113
    %v9132 = vpack.c.bf16 %v9114, %v9114
    %v9133 = vpack.c.bf16 %v9115, %v9115
    %v9134 = vpack.c.bf16 %v9116, %v9116
    %v9135 = vpack.c.bf16 %v9117, %v9117
    %v9136 = vpack.c.bf16 %v9118, %v9118
    %v9137 = vpack.c.bf16 %v9119, %v9119
    %v9138 = vpack.c.bf16 %v9120, %v9120
    %v9139 = vpack.c.bf16 %v9121, %v9121
    %v9140 = vpack.c.bf16 %v9122, %v9122
    %v9141 = vpack.c.bf16 %v9123, %v9123
    %v9142 = vpack.c.bf16 %v9124, %v9124
    %v9143 = vpack.c.bf16 %v9125, %v9125
    %v9144 = vld [vmem:[#allocation7] sm:$0xff]
    %v9145 = vld [vmem:[#allocation7 + $0x8] sm:$0xff]
    %v9146 = vld [vmem:[#allocation7 + $0x10] sm:$0xff]
    %v9147 = vld [vmem:[#allocation7 + $0x18] sm:$0xff]
    %v9148 = vld [vmem:[#allocation7 + $0x20] sm:$0xff]
    %v9149 = vld [vmem:[#allocation7 + $0x28] sm:$0xff]
    %v9150 = vld [vmem:[#allocation7 + $0x30] sm:$0xff]
    %v9151 = vld [vmem:[#allocation7 + $0x38] sm:$0xff]
    %v9152 = vld [vmem:[#allocation7 + $0x40] sm:$0xff]
    %v9153 = vld [vmem:[#allocation7 + $0x48] sm:$0xff]
    %v9154 = vld [vmem:[#allocation7 + $0x50] sm:$0xff]
    %v9155 = vld [vmem:[#allocation7 + $0x58] sm:$0xff]
    %v9156 = vld [vmem:[#allocation7 + $0x60] sm:$0xff]
    %v9157 = vld [vmem:[#allocation7 + $0x68] sm:$0xff]
    %v9158 = vld [vmem:[#allocation7 + $0x70] sm:$0xff]
    %v9159 = vld [vmem:[#allocation7 + $0x78] sm:$0xff]
    %v9160 = vld [vmem:[#allocation7 + $0x80] sm:$0xff]
    %v9161 = vld [vmem:[#allocation7 + $0x88] sm:$0xff]
    %v9162 = vld [vmem:[#allocation7 + $0x90] sm:$0xff]
    %v9163 = vld [vmem:[#allocation7 + $0x98] sm:$0xff]
    %v9164 = vld [vmem:[#allocation7 + $0xa0] sm:$0xff]
    %v9165 = vld [vmem:[#allocation7 + $0xa8] sm:$0xff]
    %v9166 = vld [vmem:[#allocation7 + $0xb0] sm:$0xff]
    %v9167 = vld [vmem:[#allocation7 + $0xb8] sm:$0xff]
    %v9168 = vld [vmem:[#allocation7 + $0xc0] sm:$0xff]
    %v9169 = vld [vmem:[#allocation7 + $0xc8] sm:$0xff]
    %v9170 = vld [vmem:[#allocation7 + $0xd0] sm:$0xff]
    %v9171 = vld [vmem:[#allocation7 + $0xd8] sm:$0xff]
    %v9172 = vld [vmem:[#allocation7 + $0xe0] sm:$0xff]
    %v9173 = vld [vmem:[#allocation7 + $0xe8] sm:$0xff]
    %v9174 = vld [vmem:[#allocation7 + $0xf0] sm:$0xff]
    %v9175 = vld [vmem:[#allocation7 + $0xf8] sm:$0xff]
    %v9176 = vld [vmem:[#allocation7 + $0x100] sm:$0xff]
    %v9177 = vld [vmem:[#allocation7 + $0x108] sm:$0xff]
    %v9178 = vld [vmem:[#allocation7 + $0x110] sm:$0xff]
    %v9179 = vld [vmem:[#allocation7 + $0x118] sm:$0xff]
    %v9180 = vld [vmem:[#allocation7 + $0x120] sm:$0xff]
    %v9181 = vld [vmem:[#allocation7 + $0x128] sm:$0xff]
    %v9182 = vld [vmem:[#allocation7 + $0x130] sm:$0xff]
    %v9183 = vld [vmem:[#allocation7 + $0x138] sm:$0xff]
    %v9184 = vld [vmem:[#allocation7 + $0x140] sm:$0xff]
    %v9185 = vld [vmem:[#allocation7 + $0x148] sm:$0xff]
    %v9186 = vld [vmem:[#allocation7 + $0x150] sm:$0xff]
    %v9187 = vld [vmem:[#allocation7 + $0x158] sm:$0xff]
    %v9188 = vld [vmem:[#allocation7 + $0x160] sm:$0xff]
    %v9189 = vld [vmem:[#allocation7 + $0x168] sm:$0xff]
    %v9190 = vld [vmem:[#allocation7 + $0x170] sm:$0xff]
    %v9191 = vld [vmem:[#allocation7 + $0x178] sm:$0xff]
    %v9192 = vld [vmem:[#allocation7 + $0x180] sm:$0xff]
    %v9193 = vld [vmem:[#allocation7 + $0x188] sm:$0xff]
    %v9194 = vld [vmem:[#allocation7 + $0x190] sm:$0xff]
    %v9195 = vld [vmem:[#allocation7 + $0x198] sm:$0xff]
    %v9196 = vld [vmem:[#allocation7 + $0x1a0] sm:$0xff]
    %v9197 = vld [vmem:[#allocation7 + $0x1a8] sm:$0xff]
    %v9198 = vld [vmem:[#allocation7 + $0x1b0] sm:$0xff]
    %v9199 = vld [vmem:[#allocation7 + $0x1b8] sm:$0xff]
    %v9200 = vld [vmem:[#allocation7 + $0x1c0] sm:$0xff]
    %v9201 = vld [vmem:[#allocation7 + $0x1c8] sm:$0xff]
    %v9202 = vld [vmem:[#allocation7 + $0x1d0] sm:$0xff]
    %v9203 = vld [vmem:[#allocation7 + $0x1d8] sm:$0xff]
    %v9204 = vld [vmem:[#allocation7 + $0x1e0] sm:$0xff]
    %v9205 = vld [vmem:[#allocation7 + $0x1e8] sm:$0xff]
    %v9206 = vld [vmem:[#allocation7 + $0x1f0] sm:$0xff]
    %v9207 = vld [vmem:[#allocation7 + $0x1f8] sm:$0xff]
    %v9208 = vld [vmem:[#allocation7 + $0x200] sm:$0xff]
    %v9209 = vld [vmem:[#allocation7 + $0x208] sm:$0xff]
    %v9210 = vld [vmem:[#allocation7 + $0x210] sm:$0xff]
    %v9211 = vld [vmem:[#allocation7 + $0x218] sm:$0xff]
    %v9212 = vld [vmem:[#allocation7 + $0x220] sm:$0xff]
    %v9213 = vld [vmem:[#allocation7 + $0x228] sm:$0xff]
    %v9214 = vld [vmem:[#allocation7 + $0x230] sm:$0xff]
    %v9215 = vld [vmem:[#allocation7 + $0x238] sm:$0xff]
    %v9216 = vld [vmem:[#allocation7 + $0x240] sm:$0xff]
    %v9217 = vld [vmem:[#allocation7 + $0x248] sm:$0xff]
    %v9218 = vld [vmem:[#allocation7 + $0x250] sm:$0xff]
    %v9219 = vld [vmem:[#allocation7 + $0x258] sm:$0xff]
    %v9220 = vld [vmem:[#allocation7 + $0x260] sm:$0xff]
    %v9221 = vld [vmem:[#allocation7 + $0x268] sm:$0xff]
    %v9222 = vld [vmem:[#allocation7 + $0x270] sm:$0xff]
    %v9223 = vld [vmem:[#allocation7 + $0x278] sm:$0xff]
    %v9224 = vld [vmem:[#allocation7 + $0x280] sm:$0xff]
    %v9225 = vld [vmem:[#allocation7 + $0x288] sm:$0xff]
    %v9226 = vld [vmem:[#allocation7 + $0x290] sm:$0xff]
    %v9227 = vld [vmem:[#allocation7 + $0x298] sm:$0xff]
    %v9228 = vld [vmem:[#allocation7 + $0x2a0] sm:$0xff]
    %v9229 = vld [vmem:[#allocation7 + $0x2a8] sm:$0xff]
    %v9230 = vld [vmem:[#allocation7 + $0x2b0] sm:$0xff]
    %v9231 = vld [vmem:[#allocation7 + $0x2b8] sm:$0xff]
    %v9232 = vld [vmem:[#allocation7 + $0x2c0] sm:$0xff]
    %v9233 = vld [vmem:[#allocation7 + $0x2c8] sm:$0xff]
    %v9234 = vld [vmem:[#allocation7 + $0x2d0] sm:$0xff]
    %v9235 = vld [vmem:[#allocation7 + $0x2d8] sm:$0xff]
    %v9236 = vld [vmem:[#allocation7 + $0x2e0] sm:$0xff]
    %v9237 = vld [vmem:[#allocation7 + $0x2e8] sm:$0xff]
    %v9238 = vld [vmem:[#allocation7 + $0x2f0] sm:$0xff]
    %v9239 = vld [vmem:[#allocation7 + $0x2f8] sm:$0xff]
    %v9240 = vld [vmem:[#allocation7 + $0x300] sm:$0xff]
    %v9241 = vld [vmem:[#allocation7 + $0x308] sm:$0xff]
    %v9242 = vld [vmem:[#allocation7 + $0x310] sm:$0xff]
    %v9243 = vld [vmem:[#allocation7 + $0x318] sm:$0xff]
    %v9244 = vld [vmem:[#allocation7 + $0x320] sm:$0xff]
    %v9245 = vld [vmem:[#allocation7 + $0x328] sm:$0xff]
    %v9246 = vld [vmem:[#allocation7 + $0x330] sm:$0xff]
    %v9247 = vld [vmem:[#allocation7 + $0x338] sm:$0xff]
    %v9248 = vld [vmem:[#allocation7 + $0x340] sm:$0xff]
    %v9249 = vld [vmem:[#allocation7 + $0x348] sm:$0xff]
    %v9250 = vld [vmem:[#allocation7 + $0x350] sm:$0xff]
    %v9251 = vld [vmem:[#allocation7 + $0x358] sm:$0xff]
    %v9252 = vld [vmem:[#allocation7 + $0x360] sm:$0xff]
    %v9253 = vld [vmem:[#allocation7 + $0x368] sm:$0xff]
    %v9254 = vld [vmem:[#allocation7 + $0x370] sm:$0xff]
    %v9255 = vld [vmem:[#allocation7 + $0x378] sm:$0xff]
    %v9256 = vld [vmem:[#allocation7 + $0x380] sm:$0xff]
    %v9257 = vld [vmem:[#allocation7 + $0x388] sm:$0xff]
    %v9258 = vld [vmem:[#allocation7 + $0x390] sm:$0xff]
    %v9259 = vld [vmem:[#allocation7 + $0x398] sm:$0xff]
    %v9260 = vld [vmem:[#allocation7 + $0x3a0] sm:$0xff]
    %v9261 = vld [vmem:[#allocation7 + $0x3a8] sm:$0xff]
    %v9262 = vld [vmem:[#allocation7 + $0x3b0] sm:$0xff]
    %v9263 = vld [vmem:[#allocation7 + $0x3b8] sm:$0xff]
    %v9264 = vld [vmem:[#allocation7 + $0x3c0] sm:$0xff]
    %v9265 = vld [vmem:[#allocation7 + $0x3c8] sm:$0xff]
    %v9266 = vld [vmem:[#allocation7 + $0x3d0] sm:$0xff]
    %v9267 = vld [vmem:[#allocation7 + $0x3d8] sm:$0xff]
    %v9268 = vld [vmem:[#allocation7 + $0x3e0] sm:$0xff]
    %v9269 = vld [vmem:[#allocation7 + $0x3e8] sm:$0xff]
    %v9270 = vld [vmem:[#allocation7 + $0x3f0] sm:$0xff]
    %v9271 = vld [vmem:[#allocation7 + $0x3f8] sm:$0xff]
    %v9272 = vld [vmem:[#allocation7 + $0x400] sm:$0xff]
    %v9273 = vld [vmem:[#allocation7 + $0x408] sm:$0xff]
    %v9274 = vld [vmem:[#allocation7 + $0x410] sm:$0xff]
    %v9275 = vld [vmem:[#allocation7 + $0x418] sm:$0xff]
    %v9276 = vld [vmem:[#allocation7 + $0x420] sm:$0xff]
    %v9277 = vld [vmem:[#allocation7 + $0x428] sm:$0xff]
    %v9278 = vld [vmem:[#allocation7 + $0x430] sm:$0xff]
    %v9279 = vld [vmem:[#allocation7 + $0x438] sm:$0xff]
    %v9280 = vld [vmem:[#allocation7 + $0x440] sm:$0xff]
    %v9281 = vld [vmem:[#allocation7 + $0x448] sm:$0xff]
    %v9282 = vld [vmem:[#allocation7 + $0x450] sm:$0xff]
    %v9283 = vld [vmem:[#allocation7 + $0x458] sm:$0xff]
    %v9284 = vld [vmem:[#allocation7 + $0x460] sm:$0xff]
    %v9285 = vld [vmem:[#allocation7 + $0x468] sm:$0xff]
    %v9286 = vld [vmem:[#allocation7 + $0x470] sm:$0xff]
    %v9287 = vld [vmem:[#allocation7 + $0x478] sm:$0xff]
    %v9288 = vld [vmem:[#allocation7 + $0x480] sm:$0xff]
    %v9289 = vld [vmem:[#allocation7 + $0x488] sm:$0xff]
    %v9290 = vld [vmem:[#allocation7 + $0x490] sm:$0xff]
    %v9291 = vld [vmem:[#allocation7 + $0x498] sm:$0xff]
    %v9292 = vld [vmem:[#allocation7 + $0x4a0] sm:$0xff]
    %v9293 = vld [vmem:[#allocation7 + $0x4a8] sm:$0xff]
    %v9294 = vld [vmem:[#allocation7 + $0x4b0] sm:$0xff]
    %v9295 = vld [vmem:[#allocation7 + $0x4b8] sm:$0xff]
    %v9296 = vld [vmem:[#allocation7 + $0x4c0] sm:$0xff]
    %v9297 = vld [vmem:[#allocation7 + $0x4c8] sm:$0xff]
    %v9298 = vld [vmem:[#allocation7 + $0x4d0] sm:$0xff]
    %v9299 = vld [vmem:[#allocation7 + $0x4d8] sm:$0xff]
    %v9300 = vld [vmem:[#allocation7 + $0x4e0] sm:$0xff]
    %v9301 = vld [vmem:[#allocation7 + $0x4e8] sm:$0xff]
    %v9302 = vld [vmem:[#allocation7 + $0x4f0] sm:$0xff]
    %v9303 = vld [vmem:[#allocation7 + $0x4f8] sm:$0xff]
    %v9304 = vld [vmem:[#allocation7 + $0x500] sm:$0xff]
    %v9305 = vld [vmem:[#allocation7 + $0x508] sm:$0xff]
    %v9306 = vld [vmem:[#allocation7 + $0x510] sm:$0xff]
    %v9307 = vld [vmem:[#allocation7 + $0x518] sm:$0xff]
    %v9308 = vld [vmem:[#allocation7 + $0x520] sm:$0xff]
    %v9309 = vld [vmem:[#allocation7 + $0x528] sm:$0xff]
    %v9310 = vld [vmem:[#allocation7 + $0x530] sm:$0xff]
    %v9311 = vld [vmem:[#allocation7 + $0x538] sm:$0xff]
    %v9312 = vld [vmem:[#allocation7 + $0x540] sm:$0xff]
    %v9313 = vld [vmem:[#allocation7 + $0x548] sm:$0xff]
    %v9314 = vld [vmem:[#allocation7 + $0x550] sm:$0xff]
    %v9315 = vld [vmem:[#allocation7 + $0x558] sm:$0xff]
    %v9316 = vld [vmem:[#allocation7 + $0x560] sm:$0xff]
    %v9317 = vld [vmem:[#allocation7 + $0x568] sm:$0xff]
    %v9318 = vld [vmem:[#allocation7 + $0x570] sm:$0xff]
    %v9319 = vld [vmem:[#allocation7 + $0x578] sm:$0xff]
    %v9320 = vld [vmem:[#allocation7 + $0x580] sm:$0xff]
    %v9321 = vld [vmem:[#allocation7 + $0x588] sm:$0xff]
    %v9322 = vld [vmem:[#allocation7 + $0x590] sm:$0xff]
    %v9323 = vld [vmem:[#allocation7 + $0x598] sm:$0xff]
    %v9324 = vld [vmem:[#allocation7 + $0x5a0] sm:$0xff]
    %v9325 = vld [vmem:[#allocation7 + $0x5a8] sm:$0xff]
    %v9326 = vld [vmem:[#allocation7 + $0x5b0] sm:$0xff]
    %v9327 = vld [vmem:[#allocation7 + $0x5b8] sm:$0xff]
    %v9328 = vld [vmem:[#allocation7 + $0x5c0] sm:$0xff]
    %v9329 = vld [vmem:[#allocation7 + $0x5c8] sm:$0xff]
    %v9330 = vld [vmem:[#allocation7 + $0x5d0] sm:$0xff]
    %v9331 = vld [vmem:[#allocation7 + $0x5d8] sm:$0xff]
    %v9332 = vld [vmem:[#allocation7 + $0x5e0] sm:$0xff]
    %v9333 = vld [vmem:[#allocation7 + $0x5e8] sm:$0xff]
    %v9334 = vld [vmem:[#allocation7 + $0x5f0] sm:$0xff]
    %v9335 = vld [vmem:[#allocation7 + $0x5f8] sm:$0xff]
    %v9336 = vld [vmem:[#allocation7 + $0x600] sm:$0xff]
    %v9337 = vld [vmem:[#allocation7 + $0x608] sm:$0xff]
    %v9338 = vld [vmem:[#allocation7 + $0x610] sm:$0xff]
    %v9339 = vld [vmem:[#allocation7 + $0x618] sm:$0xff]
    %v9340 = vld [vmem:[#allocation7 + $0x620] sm:$0xff]
    %v9341 = vld [vmem:[#allocation7 + $0x628] sm:$0xff]
    %v9342 = vld [vmem:[#allocation7 + $0x630] sm:$0xff]
    %v9343 = vld [vmem:[#allocation7 + $0x638] sm:$0xff]
    %v9344 = vld [vmem:[#allocation7 + $0x640] sm:$0xff]
    %v9345 = vld [vmem:[#allocation7 + $0x648] sm:$0xff]
    %v9346 = vld [vmem:[#allocation7 + $0x650] sm:$0xff]
    %v9347 = vld [vmem:[#allocation7 + $0x658] sm:$0xff]
    %v9348 = vld [vmem:[#allocation7 + $0x660] sm:$0xff]
    %v9349 = vld [vmem:[#allocation7 + $0x668] sm:$0xff]
    %v9350 = vld [vmem:[#allocation7 + $0x670] sm:$0xff]
    %v9351 = vld [vmem:[#allocation7 + $0x678] sm:$0xff]
    %v9352 = vld [vmem:[#allocation7 + $0x680] sm:$0xff]
    %v9353 = vld [vmem:[#allocation7 + $0x688] sm:$0xff]
    %v9354 = vld [vmem:[#allocation7 + $0x690] sm:$0xff]
    %v9355 = vld [vmem:[#allocation7 + $0x698] sm:$0xff]
    %v9356 = vld [vmem:[#allocation7 + $0x6a0] sm:$0xff]
    %v9357 = vld [vmem:[#allocation7 + $0x6a8] sm:$0xff]
    %v9358 = vld [vmem:[#allocation7 + $0x6b0] sm:$0xff]
    %v9359 = vld [vmem:[#allocation7 + $0x6b8] sm:$0xff]
    %v9360 = vld [vmem:[#allocation7 + $0x6c0] sm:$0xff]
    %v9361 = vld [vmem:[#allocation7 + $0x6c8] sm:$0xff]
    %v9362 = vld [vmem:[#allocation7 + $0x6d0] sm:$0xff]
    %v9363 = vld [vmem:[#allocation7 + $0x6d8] sm:$0xff]
    %v9364 = vld [vmem:[#allocation7 + $0x6e0] sm:$0xff]
    %v9365 = vld [vmem:[#allocation7 + $0x6e8] sm:$0xff]
    %v9366 = vld [vmem:[#allocation7 + $0x6f0] sm:$0xff]
    %v9367 = vld [vmem:[#allocation7 + $0x6f8] sm:$0xff]
    %v9368 = vld [vmem:[#allocation7 + $0x700] sm:$0xff]
    %v9369 = vld [vmem:[#allocation7 + $0x708] sm:$0xff]
    %v9370 = vld [vmem:[#allocation7 + $0x710] sm:$0xff]
    %v9371 = vld [vmem:[#allocation7 + $0x718] sm:$0xff]
    %v9372 = vld [vmem:[#allocation7 + $0x720] sm:$0xff]
    %v9373 = vld [vmem:[#allocation7 + $0x728] sm:$0xff]
    %v9374 = vld [vmem:[#allocation7 + $0x730] sm:$0xff]
    %v9375 = vld [vmem:[#allocation7 + $0x738] sm:$0xff]
    %v9376 = vld [vmem:[#allocation7 + $0x740] sm:$0xff]
    %v9377 = vld [vmem:[#allocation7 + $0x748] sm:$0xff]
    %v9378 = vld [vmem:[#allocation7 + $0x750] sm:$0xff]
    %v9379 = vld [vmem:[#allocation7 + $0x758] sm:$0xff]
    %v9380 = vld [vmem:[#allocation7 + $0x760] sm:$0xff]
    %v9381 = vld [vmem:[#allocation7 + $0x768] sm:$0xff]
    %v9382 = vld [vmem:[#allocation7 + $0x770] sm:$0xff]
    %v9383 = vld [vmem:[#allocation7 + $0x778] sm:$0xff]
    %v9384 = vld [vmem:[#allocation7 + $0x780] sm:$0xff]
    %v9385 = vld [vmem:[#allocation7 + $0x788] sm:$0xff]
    %v9386 = vld [vmem:[#allocation7 + $0x790] sm:$0xff]
    %v9387 = vld [vmem:[#allocation7 + $0x798] sm:$0xff]
    %v9388 = vld [vmem:[#allocation7 + $0x7a0] sm:$0xff]
    %v9389 = vld [vmem:[#allocation7 + $0x7a8] sm:$0xff]
    %v9390 = vld [vmem:[#allocation7 + $0x7b0] sm:$0xff]
    %v9391 = vld [vmem:[#allocation7 + $0x7b8] sm:$0xff]
    %v9392 = vld [vmem:[#allocation7 + $0x7c0] sm:$0xff]
    %v9393 = vld [vmem:[#allocation7 + $0x7c8] sm:$0xff]
    %v9394 = vld [vmem:[#allocation7 + $0x7d0] sm:$0xff]
    %v9395 = vld [vmem:[#allocation7 + $0x7d8] sm:$0xff]
    %v9396 = vld [vmem:[#allocation7 + $0x7e0] sm:$0xff]
    %v9397 = vld [vmem:[#allocation7 + $0x7e8] sm:$0xff]
    %v9398 = vld [vmem:[#allocation7 + $0x7f0] sm:$0xff]
    %v9399 = vld [vmem:[#allocation7 + $0x7f8] sm:$0xff]
    %v9400 = vld [vmem:[#allocation7 + $0x800] sm:$0xff]
    %v9401 = vld [vmem:[#allocation7 + $0x808] sm:$0xff]
    %v9402 = vld [vmem:[#allocation7 + $0x810] sm:$0xff]
    %v9403 = vld [vmem:[#allocation7 + $0x818] sm:$0xff]
    %v9404 = vld [vmem:[#allocation7 + $0x820] sm:$0xff]
    %v9405 = vld [vmem:[#allocation7 + $0x828] sm:$0xff]
    %v9406 = vld [vmem:[#allocation7 + $0x830] sm:$0xff]
    %v9407 = vld [vmem:[#allocation7 + $0x838] sm:$0xff]
    %v9408 = vld [vmem:[#allocation7 + $0x840] sm:$0xff]
    %v9409 = vld [vmem:[#allocation7 + $0x848] sm:$0xff]
    %v9410 = vld [vmem:[#allocation7 + $0x850] sm:$0xff]
    %v9411 = vld [vmem:[#allocation7 + $0x858] sm:$0xff]
    %v9412 = vld [vmem:[#allocation7 + $0x860] sm:$0xff]
    %v9413 = vld [vmem:[#allocation7 + $0x868] sm:$0xff]
    %v9414 = vld [vmem:[#allocation7 + $0x870] sm:$0xff]
    %v9415 = vld [vmem:[#allocation7 + $0x878] sm:$0xff]
    %v9416 = vld [vmem:[#allocation7 + $0x880] sm:$0xff]
    %v9417 = vld [vmem:[#allocation7 + $0x888] sm:$0xff]
    %v9418 = vld [vmem:[#allocation7 + $0x890] sm:$0xff]
    %v9419 = vld [vmem:[#allocation7 + $0x898] sm:$0xff]
    %v9420 = vld [vmem:[#allocation7 + $0x8a0] sm:$0xff]
    %v9421 = vld [vmem:[#allocation7 + $0x8a8] sm:$0xff]
    %v9422 = vld [vmem:[#allocation7 + $0x8b0] sm:$0xff]
    %v9423 = vld [vmem:[#allocation7 + $0x8b8] sm:$0xff]
    %v9424 = vld [vmem:[#allocation7 + $0x8c0] sm:$0xff]
    %v9425 = vld [vmem:[#allocation7 + $0x8c8] sm:$0xff]
    %v9426 = vld [vmem:[#allocation7 + $0x8d0] sm:$0xff]
    %v9427 = vld [vmem:[#allocation7 + $0x8d8] sm:$0xff]
    %v9428 = vld [vmem:[#allocation7 + $0x8e0] sm:$0xff]
    %v9429 = vld [vmem:[#allocation7 + $0x8e8] sm:$0xff]
    %v9430 = vld [vmem:[#allocation7 + $0x8f0] sm:$0xff]
    %v9431 = vld [vmem:[#allocation7 + $0x8f8] sm:$0xff]
    %v9432 = vld [vmem:[#allocation17] sm:$0x3]
    %v9434 = vlaneseq
    %v9435 = vshrl.u32 %v9434, 7
    %v9436 = vsub.s32 0, %v9435
    %v9437 = vrot.slane %v9432, %v9436
    %v9438 = vlaneseq
    %v9439 = vshrl.u32 %v9438, 7
    %v9440 = vsub.s32 1, %v9439
    %v9441 = vrot.slane %v9432, %v9440
    %v9732 = vunpack.c.l.b16 %v9144
    %v9733 = vunpack.c.h.b16 %v9144
    %v9734 = vunpack.c.l.b16 %v9145
    %v9735 = vunpack.c.h.b16 %v9145
    %v9736 = vunpack.c.l.b16 %v9146
    %v9737 = vunpack.c.h.b16 %v9146
    %v9738 = vunpack.c.l.b16 %v9147
    %v9739 = vunpack.c.h.b16 %v9147
    %v9740 = vunpack.c.l.b16 %v9148
    %v9741 = vunpack.c.h.b16 %v9148
    %v9742 = vunpack.c.l.b16 %v9149
    %v9743 = vunpack.c.h.b16 %v9149
    %v9744 = vunpack.c.l.b16 %v9150
    %v9745 = vunpack.c.h.b16 %v9150
    %v9746 = vunpack.c.l.b16 %v9151
    %v9747 = vunpack.c.h.b16 %v9151
    %v9748 = vunpack.c.l.b16 %v9152
    %v9749 = vunpack.c.h.b16 %v9152
    %v9750 = vunpack.c.l.b16 %v9153
    %v9751 = vunpack.c.h.b16 %v9153
    %v9752 = vunpack.c.l.b16 %v9154
    %v9753 = vunpack.c.h.b16 %v9154
    %v9754 = vunpack.c.l.b16 %v9155
    %v9755 = vunpack.c.h.b16 %v9155
    %v9756 = vunpack.c.l.b16 %v9156
    %v9757 = vunpack.c.h.b16 %v9156
    %v9758 = vunpack.c.l.b16 %v9157
    %v9759 = vunpack.c.h.b16 %v9157
    %v9760 = vunpack.c.l.b16 %v9158
    %v9761 = vunpack.c.h.b16 %v9158
    %v9762 = vunpack.c.l.b16 %v9159
    %v9763 = vunpack.c.h.b16 %v9159
    %v9764 = vunpack.c.l.b16 %v9160
    %v9765 = vunpack.c.h.b16 %v9160
    %v9766 = vunpack.c.l.b16 %v9161
    %v9767 = vunpack.c.h.b16 %v9161
    %v9768 = vunpack.c.l.b16 %v9162
    %v9769 = vunpack.c.h.b16 %v9162
    %v9770 = vunpack.c.l.b16 %v9163
    %v9771 = vunpack.c.h.b16 %v9163
    %v9772 = vunpack.c.l.b16 %v9164
    %v9773 = vunpack.c.h.b16 %v9164
    %v9774 = vunpack.c.l.b16 %v9165
    %v9775 = vunpack.c.h.b16 %v9165
    %v9776 = vunpack.c.l.b16 %v9166
    %v9777 = vunpack.c.h.b16 %v9166
    %v9778 = vunpack.c.l.b16 %v9167
    %v9779 = vunpack.c.h.b16 %v9167
    %v9780 = vunpack.c.l.b16 %v9168
    %v9781 = vunpack.c.h.b16 %v9168
    %v9782 = vunpack.c.l.b16 %v9169
    %v9783 = vunpack.c.h.b16 %v9169
    %v9784 = vunpack.c.l.b16 %v9170
    %v9785 = vunpack.c.h.b16 %v9170
    %v9786 = vunpack.c.l.b16 %v9171
    %v9787 = vunpack.c.h.b16 %v9171
    %v9788 = vunpack.c.l.b16 %v9172
    %v9789 = vunpack.c.h.b16 %v9172
    %v9790 = vunpack.c.l.b16 %v9173
    %v9791 = vunpack.c.h.b16 %v9173
    %v9792 = vunpack.c.l.b16 %v9174
    %v9793 = vunpack.c.h.b16 %v9174
    %v9794 = vunpack.c.l.b16 %v9175
    %v9795 = vunpack.c.h.b16 %v9175
    %v9796 = vunpack.c.l.b16 %v9176
    %v9797 = vunpack.c.h.b16 %v9176
    %v9798 = vunpack.c.l.b16 %v9177
    %v9799 = vunpack.c.h.b16 %v9177
    %v9800 = vunpack.c.l.b16 %v9178
    %v9801 = vunpack.c.h.b16 %v9178
    %v9802 = vunpack.c.l.b16 %v9179
    %v9803 = vunpack.c.h.b16 %v9179
    %v9804 = vunpack.c.l.b16 %v9180
    %v9805 = vunpack.c.h.b16 %v9180
    %v9806 = vunpack.c.l.b16 %v9181
    %v9807 = vunpack.c.h.b16 %v9181
    %v9808 = vunpack.c.l.b16 %v9182
    %v9809 = vunpack.c.h.b16 %v9182
    %v9810 = vunpack.c.l.b16 %v9183
    %v9811 = vunpack.c.h.b16 %v9183
    %v9812 = vunpack.c.l.b16 %v9184
    %v9813 = vunpack.c.h.b16 %v9184
    %v9814 = vunpack.c.l.b16 %v9185
    %v9815 = vunpack.c.h.b16 %v9185
    %v9816 = vunpack.c.l.b16 %v9186
    %v9817 = vunpack.c.h.b16 %v9186
    %v9818 = vunpack.c.l.b16 %v9187
    %v9819 = vunpack.c.h.b16 %v9187
    %v9820 = vunpack.c.l.b16 %v9188
    %v9821 = vunpack.c.h.b16 %v9188
    %v9822 = vunpack.c.l.b16 %v9189
    %v9823 = vunpack.c.h.b16 %v9189
    %v9824 = vunpack.c.l.b16 %v9190
    %v9825 = vunpack.c.h.b16 %v9190
    %v9826 = vunpack.c.l.b16 %v9191
    %v9827 = vunpack.c.h.b16 %v9191
    %v9828 = vunpack.c.l.b16 %v9192
    %v9829 = vunpack.c.h.b16 %v9192
    %v9830 = vunpack.c.l.b16 %v9193
    %v9831 = vunpack.c.h.b16 %v9193
    %v9832 = vunpack.c.l.b16 %v9194
    %v9833 = vunpack.c.h.b16 %v9194
    %v9834 = vunpack.c.l.b16 %v9195
    %v9835 = vunpack.c.h.b16 %v9195
    %v9836 = vunpack.c.l.b16 %v9196
    %v9837 = vunpack.c.h.b16 %v9196
    %v9838 = vunpack.c.l.b16 %v9197
    %v9839 = vunpack.c.h.b16 %v9197
    %v9840 = vunpack.c.l.b16 %v9198
    %v9841 = vunpack.c.h.b16 %v9198
    %v9842 = vunpack.c.l.b16 %v9199
    %v9843 = vunpack.c.h.b16 %v9199
    %v9844 = vunpack.c.l.b16 %v9200
    %v9845 = vunpack.c.h.b16 %v9200
    %v9846 = vunpack.c.l.b16 %v9201
    %v9847 = vunpack.c.h.b16 %v9201
    %v9848 = vunpack.c.l.b16 %v9202
    %v9849 = vunpack.c.h.b16 %v9202
    %v9850 = vunpack.c.l.b16 %v9203
    %v9851 = vunpack.c.h.b16 %v9203
    %v9852 = vunpack.c.l.b16 %v9204
    %v9853 = vunpack.c.h.b16 %v9204
    %v9854 = vunpack.c.l.b16 %v9205
    %v9855 = vunpack.c.h.b16 %v9205
    %v9856 = vunpack.c.l.b16 %v9206
    %v9857 = vunpack.c.h.b16 %v9206
    %v9858 = vunpack.c.l.b16 %v9207
    %v9859 = vunpack.c.h.b16 %v9207
    %v9860 = vunpack.c.l.b16 %v9208
    %v9861 = vunpack.c.h.b16 %v9208
    %v9862 = vunpack.c.l.b16 %v9209
    %v9863 = vunpack.c.h.b16 %v9209
    %v9864 = vunpack.c.l.b16 %v9210
    %v9865 = vunpack.c.h.b16 %v9210
    %v9866 = vunpack.c.l.b16 %v9211
    %v9867 = vunpack.c.h.b16 %v9211
    %v9868 = vunpack.c.l.b16 %v9212
    %v9869 = vunpack.c.h.b16 %v9212
    %v9870 = vunpack.c.l.b16 %v9213
    %v9871 = vunpack.c.h.b16 %v9213
    %v9872 = vunpack.c.l.b16 %v9214
    %v9873 = vunpack.c.h.b16 %v9214
    %v9874 = vunpack.c.l.b16 %v9215
    %v9875 = vunpack.c.h.b16 %v9215
    %v9876 = vunpack.c.l.b16 %v9216
    %v9877 = vunpack.c.h.b16 %v9216
    %v9878 = vunpack.c.l.b16 %v9217
    %v9879 = vunpack.c.h.b16 %v9217
    %v9880 = vunpack.c.l.b16 %v9218
    %v9881 = vunpack.c.h.b16 %v9218
    %v9882 = vunpack.c.l.b16 %v9219
    %v9883 = vunpack.c.h.b16 %v9219
    %v9884 = vunpack.c.l.b16 %v9220
    %v9885 = vunpack.c.h.b16 %v9220
    %v9886 = vunpack.c.l.b16 %v9221
    %v9887 = vunpack.c.h.b16 %v9221
    %v9888 = vunpack.c.l.b16 %v9222
    %v9889 = vunpack.c.h.b16 %v9222
    %v9890 = vunpack.c.l.b16 %v9223
    %v9891 = vunpack.c.h.b16 %v9223
    %v9892 = vunpack.c.l.b16 %v9224
    %v9893 = vunpack.c.h.b16 %v9224
    %v9894 = vunpack.c.l.b16 %v9225
    %v9895 = vunpack.c.h.b16 %v9225
    %v9896 = vunpack.c.l.b16 %v9226
    %v9897 = vunpack.c.h.b16 %v9226
    %v9898 = vunpack.c.l.b16 %v9227
    %v9899 = vunpack.c.h.b16 %v9227
    %v9900 = vunpack.c.l.b16 %v9228
    %v9901 = vunpack.c.h.b16 %v9228
    %v9902 = vunpack.c.l.b16 %v9229
    %v9903 = vunpack.c.h.b16 %v9229
    %v9904 = vunpack.c.l.b16 %v9230
    %v9905 = vunpack.c.h.b16 %v9230
    %v9906 = vunpack.c.l.b16 %v9231
    %v9907 = vunpack.c.h.b16 %v9231
    %v9908 = vunpack.c.l.b16 %v9232
    %v9909 = vunpack.c.h.b16 %v9232
    %v9910 = vunpack.c.l.b16 %v9233
    %v9911 = vunpack.c.h.b16 %v9233
    %v9912 = vunpack.c.l.b16 %v9234
    %v9913 = vunpack.c.h.b16 %v9234
    %v9914 = vunpack.c.l.b16 %v9235
    %v9915 = vunpack.c.h.b16 %v9235
    %v9916 = vunpack.c.l.b16 %v9236
    %v9917 = vunpack.c.h.b16 %v9236
    %v9918 = vunpack.c.l.b16 %v9237
    %v9919 = vunpack.c.h.b16 %v9237
    %v9920 = vunpack.c.l.b16 %v9238
    %v9921 = vunpack.c.h.b16 %v9238
    %v9922 = vunpack.c.l.b16 %v9239
    %v9923 = vunpack.c.h.b16 %v9239
    %v9924 = vunpack.c.l.b16 %v9240
    %v9925 = vunpack.c.h.b16 %v9240
    %v9926 = vunpack.c.l.b16 %v9241
    %v9927 = vunpack.c.h.b16 %v9241
    %v9928 = vunpack.c.l.b16 %v9242
    %v9929 = vunpack.c.h.b16 %v9242
    %v9930 = vunpack.c.l.b16 %v9243
    %v9931 = vunpack.c.h.b16 %v9243
    %v9932 = vunpack.c.l.b16 %v9244
    %v9933 = vunpack.c.h.b16 %v9244
    %v9934 = vunpack.c.l.b16 %v9245
    %v9935 = vunpack.c.h.b16 %v9245
    %v9936 = vunpack.c.l.b16 %v9246
    %v9937 = vunpack.c.h.b16 %v9246
    %v9938 = vunpack.c.l.b16 %v9247
    %v9939 = vunpack.c.h.b16 %v9247
    %v9940 = vunpack.c.l.b16 %v9248
    %v9941 = vunpack.c.h.b16 %v9248
    %v9942 = vunpack.c.l.b16 %v9249
    %v9943 = vunpack.c.h.b16 %v9249
    %v9944 = vunpack.c.l.b16 %v9250
    %v9945 = vunpack.c.h.b16 %v9250
    %v9946 = vunpack.c.l.b16 %v9251
    %v9947 = vunpack.c.h.b16 %v9251
    %v9948 = vunpack.c.l.b16 %v9252
    %v9949 = vunpack.c.h.b16 %v9252
    %v9950 = vunpack.c.l.b16 %v9253
    %v9951 = vunpack.c.h.b16 %v9253
    %v9952 = vunpack.c.l.b16 %v9254
    %v9953 = vunpack.c.h.b16 %v9254
    %v9954 = vunpack.c.l.b16 %v9255
    %v9955 = vunpack.c.h.b16 %v9255
    %v9956 = vunpack.c.l.b16 %v9256
    %v9957 = vunpack.c.h.b16 %v9256
    %v9958 = vunpack.c.l.b16 %v9257
    %v9959 = vunpack.c.h.b16 %v9257
    %v9960 = vunpack.c.l.b16 %v9258
    %v9961 = vunpack.c.h.b16 %v9258
    %v9962 = vunpack.c.l.b16 %v9259
    %v9963 = vunpack.c.h.b16 %v9259
    %v9964 = vunpack.c.l.b16 %v9260
    %v9965 = vunpack.c.h.b16 %v9260
    %v9966 = vunpack.c.l.b16 %v9261
    %v9967 = vunpack.c.h.b16 %v9261
    %v9968 = vunpack.c.l.b16 %v9262
    %v9969 = vunpack.c.h.b16 %v9262
    %v9970 = vunpack.c.l.b16 %v9263
    %v9971 = vunpack.c.h.b16 %v9263
    %v9972 = vunpack.c.l.b16 %v9264
    %v9973 = vunpack.c.h.b16 %v9264
    %v9974 = vunpack.c.l.b16 %v9265
    %v9975 = vunpack.c.h.b16 %v9265
    %v9976 = vunpack.c.l.b16 %v9266
    %v9977 = vunpack.c.h.b16 %v9266
    %v9978 = vunpack.c.l.b16 %v9267
    %v9979 = vunpack.c.h.b16 %v9267
    %v9980 = vunpack.c.l.b16 %v9268
    %v9981 = vunpack.c.h.b16 %v9268
    %v9982 = vunpack.c.l.b16 %v9269
    %v9983 = vunpack.c.h.b16 %v9269
    %v9984 = vunpack.c.l.b16 %v9270
    %v9985 = vunpack.c.h.b16 %v9270
    %v9986 = vunpack.c.l.b16 %v9271
    %v9987 = vunpack.c.h.b16 %v9271
    %v9988 = vunpack.c.l.b16 %v9272
    %v9989 = vunpack.c.h.b16 %v9272
    %v9990 = vunpack.c.l.b16 %v9273
    %v9991 = vunpack.c.h.b16 %v9273
    %v9992 = vunpack.c.l.b16 %v9274
    %v9993 = vunpack.c.h.b16 %v9274
    %v9994 = vunpack.c.l.b16 %v9275
    %v9995 = vunpack.c.h.b16 %v9275
    %v9996 = vunpack.c.l.b16 %v9276
    %v9997 = vunpack.c.h.b16 %v9276
    %v9998 = vunpack.c.l.b16 %v9277
    %v9999 = vunpack.c.h.b16 %v9277
    %v10000 = vunpack.c.l.b16 %v9278
    %v10001 = vunpack.c.h.b16 %v9278
    %v10002 = vunpack.c.l.b16 %v9279
    %v10003 = vunpack.c.h.b16 %v9279
    %v10004 = vunpack.c.l.b16 %v9280
    %v10005 = vunpack.c.h.b16 %v9280
    %v10006 = vunpack.c.l.b16 %v9281
    %v10007 = vunpack.c.h.b16 %v9281
    %v10008 = vunpack.c.l.b16 %v9282
    %v10009 = vunpack.c.h.b16 %v9282
    %v10010 = vunpack.c.l.b16 %v9283
    %v10011 = vunpack.c.h.b16 %v9283
    %v10012 = vunpack.c.l.b16 %v9284
    %v10013 = vunpack.c.h.b16 %v9284
    %v10014 = vunpack.c.l.b16 %v9285
    %v10015 = vunpack.c.h.b16 %v9285
    %v10016 = vunpack.c.l.b16 %v9286
    %v10017 = vunpack.c.h.b16 %v9286
    %v10018 = vunpack.c.l.b16 %v9287
    %v10019 = vunpack.c.h.b16 %v9287
    %v10020 = vunpack.c.l.b16 %v9288
    %v10021 = vunpack.c.h.b16 %v9288
    %v10022 = vunpack.c.l.b16 %v9289
    %v10023 = vunpack.c.h.b16 %v9289
    %v10024 = vunpack.c.l.b16 %v9290
    %v10025 = vunpack.c.h.b16 %v9290
    %v10026 = vunpack.c.l.b16 %v9291
    %v10027 = vunpack.c.h.b16 %v9291
    %v10028 = vunpack.c.l.b16 %v9292
    %v10029 = vunpack.c.h.b16 %v9292
    %v10030 = vunpack.c.l.b16 %v9293
    %v10031 = vunpack.c.h.b16 %v9293
    %v10032 = vunpack.c.l.b16 %v9294
    %v10033 = vunpack.c.h.b16 %v9294
    %v10034 = vunpack.c.l.b16 %v9295
    %v10035 = vunpack.c.h.b16 %v9295
    %v10036 = vunpack.c.l.b16 %v9296
    %v10037 = vunpack.c.h.b16 %v9296
    %v10038 = vunpack.c.l.b16 %v9297
    %v10039 = vunpack.c.h.b16 %v9297
    %v10040 = vunpack.c.l.b16 %v9298
    %v10041 = vunpack.c.h.b16 %v9298
    %v10042 = vunpack.c.l.b16 %v9299
    %v10043 = vunpack.c.h.b16 %v9299
    %v10044 = vunpack.c.l.b16 %v9300
    %v10045 = vunpack.c.h.b16 %v9300
    %v10046 = vunpack.c.l.b16 %v9301
    %v10047 = vunpack.c.h.b16 %v9301
    %v10048 = vunpack.c.l.b16 %v9302
    %v10049 = vunpack.c.h.b16 %v9302
    %v10050 = vunpack.c.l.b16 %v9303
    %v10051 = vunpack.c.h.b16 %v9303
    %v10052 = vunpack.c.l.b16 %v9304
    %v10053 = vunpack.c.h.b16 %v9304
    %v10054 = vunpack.c.l.b16 %v9305
    %v10055 = vunpack.c.h.b16 %v9305
    %v10056 = vunpack.c.l.b16 %v9306
    %v10057 = vunpack.c.h.b16 %v9306
    %v10058 = vunpack.c.l.b16 %v9307
    %v10059 = vunpack.c.h.b16 %v9307
    %v10060 = vunpack.c.l.b16 %v9308
    %v10061 = vunpack.c.h.b16 %v9308
    %v10062 = vunpack.c.l.b16 %v9309
    %v10063 = vunpack.c.h.b16 %v9309
    %v10064 = vunpack.c.l.b16 %v9310
    %v10065 = vunpack.c.h.b16 %v9310
    %v10066 = vunpack.c.l.b16 %v9311
    %v10067 = vunpack.c.h.b16 %v9311
    %v10068 = vunpack.c.l.b16 %v9312
    %v10069 = vunpack.c.h.b16 %v9312
    %v10070 = vunpack.c.l.b16 %v9313
    %v10071 = vunpack.c.h.b16 %v9313
    %v10072 = vunpack.c.l.b16 %v9314
    %v10073 = vunpack.c.h.b16 %v9314
    %v10074 = vunpack.c.l.b16 %v9315
    %v10075 = vunpack.c.h.b16 %v9315
    %v10076 = vunpack.c.l.b16 %v9316
    %v10077 = vunpack.c.h.b16 %v9316
    %v10078 = vunpack.c.l.b16 %v9317
    %v10079 = vunpack.c.h.b16 %v9317
    %v10080 = vunpack.c.l.b16 %v9318
    %v10081 = vunpack.c.h.b16 %v9318
    %v10082 = vunpack.c.l.b16 %v9319
    %v10083 = vunpack.c.h.b16 %v9319
    %v10084 = vunpack.c.l.b16 %v9320
    %v10085 = vunpack.c.h.b16 %v9320
    %v10086 = vunpack.c.l.b16 %v9321
    %v10087 = vunpack.c.h.b16 %v9321
    %v10088 = vunpack.c.l.b16 %v9322
    %v10089 = vunpack.c.h.b16 %v9322
    %v10090 = vunpack.c.l.b16 %v9323
    %v10091 = vunpack.c.h.b16 %v9323
    %v10092 = vunpack.c.l.b16 %v9324
    %v10093 = vunpack.c.h.b16 %v9324
    %v10094 = vunpack.c.l.b16 %v9325
    %v10095 = vunpack.c.h.b16 %v9325
    %v10096 = vunpack.c.l.b16 %v9326
    %v10097 = vunpack.c.h.b16 %v9326
    %v10098 = vunpack.c.l.b16 %v9327
    %v10099 = vunpack.c.h.b16 %v9327
    %v10100 = vunpack.c.l.b16 %v9328
    %v10101 = vunpack.c.h.b16 %v9328
    %v10102 = vunpack.c.l.b16 %v9329
    %v10103 = vunpack.c.h.b16 %v9329
    %v10104 = vunpack.c.l.b16 %v9330
    %v10105 = vunpack.c.h.b16 %v9330
    %v10106 = vunpack.c.l.b16 %v9331
    %v10107 = vunpack.c.h.b16 %v9331
    %v10108 = vunpack.c.l.b16 %v9332
    %v10109 = vunpack.c.h.b16 %v9332
    %v10110 = vunpack.c.l.b16 %v9333
    %v10111 = vunpack.c.h.b16 %v9333
    %v10112 = vunpack.c.l.b16 %v9334
    %v10113 = vunpack.c.h.b16 %v9334
    %v10114 = vunpack.c.l.b16 %v9335
    %v10115 = vunpack.c.h.b16 %v9335
    %v10116 = vunpack.c.l.b16 %v9336
    %v10117 = vunpack.c.h.b16 %v9336
    %v10118 = vunpack.c.l.b16 %v9337
    %v10119 = vunpack.c.h.b16 %v9337
    %v10120 = vunpack.c.l.b16 %v9338
    %v10121 = vunpack.c.h.b16 %v9338
    %v10122 = vunpack.c.l.b16 %v9339
    %v10123 = vunpack.c.h.b16 %v9339
    %v10124 = vunpack.c.l.b16 %v9340
    %v10125 = vunpack.c.h.b16 %v9340
    %v10126 = vunpack.c.l.b16 %v9341
    %v10127 = vunpack.c.h.b16 %v9341
    %v10128 = vunpack.c.l.b16 %v9342
    %v10129 = vunpack.c.h.b16 %v9342
    %v10130 = vunpack.c.l.b16 %v9343
    %v10131 = vunpack.c.h.b16 %v9343
    %v10132 = vunpack.c.l.b16 %v9344
    %v10133 = vunpack.c.h.b16 %v9344
    %v10134 = vunpack.c.l.b16 %v9345
    %v10135 = vunpack.c.h.b16 %v9345
    %v10136 = vunpack.c.l.b16 %v9346
    %v10137 = vunpack.c.h.b16 %v9346
    %v10138 = vunpack.c.l.b16 %v9347
    %v10139 = vunpack.c.h.b16 %v9347
    %v10140 = vunpack.c.l.b16 %v9348
    %v10141 = vunpack.c.h.b16 %v9348
    %v10142 = vunpack.c.l.b16 %v9349
    %v10143 = vunpack.c.h.b16 %v9349
    %v10144 = vunpack.c.l.b16 %v9350
    %v10145 = vunpack.c.h.b16 %v9350
    %v10146 = vunpack.c.l.b16 %v9351
    %v10147 = vunpack.c.h.b16 %v9351
    %v10148 = vunpack.c.l.b16 %v9352
    %v10149 = vunpack.c.h.b16 %v9352
    %v10150 = vunpack.c.l.b16 %v9353
    %v10151 = vunpack.c.h.b16 %v9353
    %v10152 = vunpack.c.l.b16 %v9354
    %v10153 = vunpack.c.h.b16 %v9354
    %v10154 = vunpack.c.l.b16 %v9355
    %v10155 = vunpack.c.h.b16 %v9355
    %v10156 = vunpack.c.l.b16 %v9356
    %v10157 = vunpack.c.h.b16 %v9356
    %v10158 = vunpack.c.l.b16 %v9357
    %v10159 = vunpack.c.h.b16 %v9357
    %v10160 = vunpack.c.l.b16 %v9358
    %v10161 = vunpack.c.h.b16 %v9358
    %v10162 = vunpack.c.l.b16 %v9359
    %v10163 = vunpack.c.h.b16 %v9359
    %v10164 = vunpack.c.l.b16 %v9360
    %v10165 = vunpack.c.h.b16 %v9360
    %v10166 = vunpack.c.l.b16 %v9361
    %v10167 = vunpack.c.h.b16 %v9361
    %v10168 = vunpack.c.l.b16 %v9362
    %v10169 = vunpack.c.h.b16 %v9362
    %v10170 = vunpack.c.l.b16 %v9363
    %v10171 = vunpack.c.h.b16 %v9363
    %v10172 = vunpack.c.l.b16 %v9364
    %v10173 = vunpack.c.h.b16 %v9364
    %v10174 = vunpack.c.l.b16 %v9365
    %v10175 = vunpack.c.h.b16 %v9365
    %v10176 = vunpack.c.l.b16 %v9366
    %v10177 = vunpack.c.h.b16 %v9366
    %v10178 = vunpack.c.l.b16 %v9367
    %v10179 = vunpack.c.h.b16 %v9367
    %v10180 = vunpack.c.l.b16 %v9368
    %v10181 = vunpack.c.h.b16 %v9368
    %v10182 = vunpack.c.l.b16 %v9369
    %v10183 = vunpack.c.h.b16 %v9369
    %v10184 = vunpack.c.l.b16 %v9370
    %v10185 = vunpack.c.h.b16 %v9370
    %v10186 = vunpack.c.l.b16 %v9371
    %v10187 = vunpack.c.h.b16 %v9371
    %v10188 = vunpack.c.l.b16 %v9372
    %v10189 = vunpack.c.h.b16 %v9372
    %v10190 = vunpack.c.l.b16 %v9373
    %v10191 = vunpack.c.h.b16 %v9373
    %v10192 = vunpack.c.l.b16 %v9374
    %v10193 = vunpack.c.h.b16 %v9374
    %v10194 = vunpack.c.l.b16 %v9375
    %v10195 = vunpack.c.h.b16 %v9375
    %v10196 = vunpack.c.l.b16 %v9376
    %v10197 = vunpack.c.h.b16 %v9376
    %v10198 = vunpack.c.l.b16 %v9377
    %v10199 = vunpack.c.h.b16 %v9377
    %v10200 = vunpack.c.l.b16 %v9378
    %v10201 = vunpack.c.h.b16 %v9378
    %v10202 = vunpack.c.l.b16 %v9379
    %v10203 = vunpack.c.h.b16 %v9379
    %v10204 = vunpack.c.l.b16 %v9380
    %v10205 = vunpack.c.h.b16 %v9380
    %v10206 = vunpack.c.l.b16 %v9381
    %v10207 = vunpack.c.h.b16 %v9381
    %v10208 = vunpack.c.l.b16 %v9382
    %v10209 = vunpack.c.h.b16 %v9382
    %v10210 = vunpack.c.l.b16 %v9383
    %v10211 = vunpack.c.h.b16 %v9383
    %v10212 = vunpack.c.l.b16 %v9384
    %v10213 = vunpack.c.h.b16 %v9384
    %v10214 = vunpack.c.l.b16 %v9385
    %v10215 = vunpack.c.h.b16 %v9385
    %v10216 = vunpack.c.l.b16 %v9386
    %v10217 = vunpack.c.h.b16 %v9386
    %v10218 = vunpack.c.l.b16 %v9387
    %v10219 = vunpack.c.h.b16 %v9387
    %v10220 = vunpack.c.l.b16 %v9388
    %v10221 = vunpack.c.h.b16 %v9388
    %v10222 = vunpack.c.l.b16 %v9389
    %v10223 = vunpack.c.h.b16 %v9389
    %v10224 = vunpack.c.l.b16 %v9390
    %v10225 = vunpack.c.h.b16 %v9390
    %v10226 = vunpack.c.l.b16 %v9391
    %v10227 = vunpack.c.h.b16 %v9391
    %v10228 = vunpack.c.l.b16 %v9392
    %v10229 = vunpack.c.h.b16 %v9392
    %v10230 = vunpack.c.l.b16 %v9393
    %v10231 = vunpack.c.h.b16 %v9393
    %v10232 = vunpack.c.l.b16 %v9394
    %v10233 = vunpack.c.h.b16 %v9394
    %v10234 = vunpack.c.l.b16 %v9395
    %v10235 = vunpack.c.h.b16 %v9395
    %v10236 = vunpack.c.l.b16 %v9396
    %v10237 = vunpack.c.h.b16 %v9396
    %v10238 = vunpack.c.l.b16 %v9397
    %v10239 = vunpack.c.h.b16 %v9397
    %v10240 = vunpack.c.l.b16 %v9398
    %v10241 = vunpack.c.h.b16 %v9398
    %v10242 = vunpack.c.l.b16 %v9399
    %v10243 = vunpack.c.h.b16 %v9399
    %v10244 = vunpack.c.l.b16 %v9400
    %v10245 = vunpack.c.h.b16 %v9400
    %v10246 = vunpack.c.l.b16 %v9401
    %v10247 = vunpack.c.h.b16 %v9401
    %v10248 = vunpack.c.l.b16 %v9402
    %v10249 = vunpack.c.h.b16 %v9402
    %v10250 = vunpack.c.l.b16 %v9403
    %v10251 = vunpack.c.h.b16 %v9403
    %v10252 = vunpack.c.l.b16 %v9404
    %v10253 = vunpack.c.h.b16 %v9404
    %v10254 = vunpack.c.l.b16 %v9405
    %v10255 = vunpack.c.h.b16 %v9405
    %v10256 = vunpack.c.l.b16 %v9406
    %v10257 = vunpack.c.h.b16 %v9406
    %v10258 = vunpack.c.l.b16 %v9407
    %v10259 = vunpack.c.h.b16 %v9407
    %v10260 = vunpack.c.l.b16 %v9408
    %v10261 = vunpack.c.h.b16 %v9408
    %v10262 = vunpack.c.l.b16 %v9409
    %v10263 = vunpack.c.h.b16 %v9409
    %v10264 = vunpack.c.l.b16 %v9410
    %v10265 = vunpack.c.h.b16 %v9410
    %v10266 = vunpack.c.l.b16 %v9411
    %v10267 = vunpack.c.h.b16 %v9411
    %v10268 = vunpack.c.l.b16 %v9412
    %v10269 = vunpack.c.h.b16 %v9412
    %v10270 = vunpack.c.l.b16 %v9413
    %v10271 = vunpack.c.h.b16 %v9413
    %v10272 = vunpack.c.l.b16 %v9414
    %v10273 = vunpack.c.h.b16 %v9414
    %v10274 = vunpack.c.l.b16 %v9415
    %v10275 = vunpack.c.h.b16 %v9415
    %v10276 = vunpack.c.l.b16 %v9416
    %v10277 = vunpack.c.h.b16 %v9416
    %v10278 = vunpack.c.l.b16 %v9417
    %v10279 = vunpack.c.h.b16 %v9417
    %v10280 = vunpack.c.l.b16 %v9418
    %v10281 = vunpack.c.h.b16 %v9418
    %v10282 = vunpack.c.l.b16 %v9419
    %v10283 = vunpack.c.h.b16 %v9419
    %v10284 = vunpack.c.l.b16 %v9420
    %v10285 = vunpack.c.h.b16 %v9420
    %v10286 = vunpack.c.l.b16 %v9421
    %v10287 = vunpack.c.h.b16 %v9421
    %v10288 = vunpack.c.l.b16 %v9422
    %v10289 = vunpack.c.h.b16 %v9422
    %v10290 = vunpack.c.l.b16 %v9423
    %v10291 = vunpack.c.h.b16 %v9423
    %v10292 = vunpack.c.l.b16 %v9424
    %v10293 = vunpack.c.h.b16 %v9424
    %v10294 = vunpack.c.l.b16 %v9425
    %v10295 = vunpack.c.h.b16 %v9425
    %v10296 = vunpack.c.l.b16 %v9426
    %v10297 = vunpack.c.h.b16 %v9426
    %v10298 = vunpack.c.l.b16 %v9427
    %v10299 = vunpack.c.h.b16 %v9427
    %v10300 = vunpack.c.l.b16 %v9428
    %v10301 = vunpack.c.h.b16 %v9428
    %v10302 = vunpack.c.l.b16 %v9429
    %v10303 = vunpack.c.h.b16 %v9429
    %v10304 = vunpack.c.l.b16 %v9430
    %v10305 = vunpack.c.h.b16 %v9430
    %v10306 = vunpack.c.l.b16 %v9431
    %v10307 = vunpack.c.h.b16 %v9431
    %v10308 = vpack.c.b16 %v9734, %v9732
    %v10309 = vpack.c.b16 %v9735, %v9733
    %v10310 = vpack.c.b16 %v9738, %v9736
    %v10311 = vpack.c.b16 %v9739, %v9737
    %v10312 = vpack.c.b16 %v9742, %v9740
    %v10313 = vpack.c.b16 %v9743, %v9741
    %v10314 = vpack.c.b16 %v9746, %v9744
    %v10315 = vpack.c.b16 %v9747, %v9745
    %v10316 = vpack.c.b16 %v9750, %v9748
    %v10317 = vpack.c.b16 %v9751, %v9749
    %v10318 = vpack.c.b16 %v9754, %v9752
    %v10319 = vpack.c.b16 %v9755, %v9753
    %v10320 = vpack.c.b16 %v9758, %v9756
    %v10321 = vpack.c.b16 %v9759, %v9757
    %v10322 = vpack.c.b16 %v9762, %v9760
    %v10323 = vpack.c.b16 %v9763, %v9761
    %v10324 = vpack.c.b16 %v9766, %v9764
    %v10325 = vpack.c.b16 %v9767, %v9765
    %v10326 = vpack.c.b16 %v9770, %v9768
    %v10327 = vpack.c.b16 %v9771, %v9769
    %v10328 = vpack.c.b16 %v9774, %v9772
    %v10329 = vpack.c.b16 %v9775, %v9773
    %v10330 = vpack.c.b16 %v9778, %v9776
    %v10331 = vpack.c.b16 %v9779, %v9777
    %v10332 = vpack.c.b16 %v9782, %v9780
    %v10333 = vpack.c.b16 %v9783, %v9781
    %v10334 = vpack.c.b16 %v9786, %v9784
    %v10335 = vpack.c.b16 %v9787, %v9785
    %v10336 = vpack.c.b16 %v9790, %v9788
    %v10337 = vpack.c.b16 %v9791, %v9789
    %v10338 = vpack.c.b16 %v9794, %v9792
    %v10339 = vpack.c.b16 %v9795, %v9793
    %v10340 = vpack.c.b16 %v9798, %v9796
    %v10341 = vpack.c.b16 %v9799, %v9797
    %v10342 = vpack.c.b16 %v9802, %v9800
    %v10343 = vpack.c.b16 %v9803, %v9801
    %v10344 = vpack.c.b16 %v9806, %v9804
    %v10345 = vpack.c.b16 %v9807, %v9805
    %v10346 = vpack.c.b16 %v9810, %v9808
    %v10347 = vpack.c.b16 %v9811, %v9809
    %v10348 = vpack.c.b16 %v9814, %v9812
    %v10349 = vpack.c.b16 %v9815, %v9813
    %v10350 = vpack.c.b16 %v9818, %v9816
    %v10351 = vpack.c.b16 %v9819, %v9817
    %v10352 = vpack.c.b16 %v9822, %v9820
    %v10353 = vpack.c.b16 %v9823, %v9821
    %v10354 = vpack.c.b16 %v9826, %v9824
    %v10355 = vpack.c.b16 %v9827, %v9825
    %v10356 = vpack.c.b16 %v9830, %v9828
    %v10357 = vpack.c.b16 %v9831, %v9829
    %v10358 = vpack.c.b16 %v9834, %v9832
    %v10359 = vpack.c.b16 %v9835, %v9833
    %v10360 = vpack.c.b16 %v9838, %v9836
    %v10361 = vpack.c.b16 %v9839, %v9837
    %v10362 = vpack.c.b16 %v9842, %v9840
    %v10363 = vpack.c.b16 %v9843, %v9841
    %v10364 = vpack.c.b16 %v9846, %v9844
    %v10365 = vpack.c.b16 %v9847, %v9845
    %v10366 = vpack.c.b16 %v9850, %v9848
    %v10367 = vpack.c.b16 %v9851, %v9849
    %v10368 = vpack.c.b16 %v9854, %v9852
    %v10369 = vpack.c.b16 %v9855, %v9853
    %v10370 = vpack.c.b16 %v9858, %v9856
    %v10371 = vpack.c.b16 %v9859, %v9857
    %v10372 = vpack.c.b16 %v9862, %v9860
    %v10373 = vpack.c.b16 %v9863, %v9861
    %v10374 = vpack.c.b16 %v9866, %v9864
    %v10375 = vpack.c.b16 %v9867, %v9865
    %v10376 = vpack.c.b16 %v9870, %v9868
    %v10377 = vpack.c.b16 %v9871, %v9869
    %v10378 = vpack.c.b16 %v9874, %v9872
    %v10379 = vpack.c.b16 %v9875, %v9873
    %v10380 = vpack.c.b16 %v9878, %v9876
    %v10381 = vpack.c.b16 %v9879, %v9877
    %v10382 = vpack.c.b16 %v9882, %v9880
    %v10383 = vpack.c.b16 %v9883, %v9881
    %v10384 = vpack.c.b16 %v9886, %v9884
    %v10385 = vpack.c.b16 %v9887, %v9885
    %v10386 = vpack.c.b16 %v9890, %v9888
    %v10387 = vpack.c.b16 %v9891, %v9889
    %v10388 = vpack.c.b16 %v9894, %v9892
    %v10389 = vpack.c.b16 %v9895, %v9893
    %v10390 = vpack.c.b16 %v9898, %v9896
    %v10391 = vpack.c.b16 %v9899, %v9897
    %v10392 = vpack.c.b16 %v9902, %v9900
    %v10393 = vpack.c.b16 %v9903, %v9901
    %v10394 = vpack.c.b16 %v9906, %v9904
    %v10395 = vpack.c.b16 %v9907, %v9905
    %v10396 = vpack.c.b16 %v9910, %v9908
    %v10397 = vpack.c.b16 %v9911, %v9909
    %v10398 = vpack.c.b16 %v9914, %v9912
    %v10399 = vpack.c.b16 %v9915, %v9913
    %v10400 = vpack.c.b16 %v9918, %v9916
    %v10401 = vpack.c.b16 %v9919, %v9917
    %v10402 = vpack.c.b16 %v9922, %v9920
    %v10403 = vpack.c.b16 %v9923, %v9921
    %v10404 = vpack.c.b16 %v9926, %v9924
    %v10405 = vpack.c.b16 %v9927, %v9925
    %v10406 = vpack.c.b16 %v9930, %v9928
    %v10407 = vpack.c.b16 %v9931, %v9929
    %v10408 = vpack.c.b16 %v9934, %v9932
    %v10409 = vpack.c.b16 %v9935, %v9933
    %v10410 = vpack.c.b16 %v9938, %v9936
    %v10411 = vpack.c.b16 %v9939, %v9937
    %v10412 = vpack.c.b16 %v9942, %v9940
    %v10413 = vpack.c.b16 %v9943, %v9941
    %v10414 = vpack.c.b16 %v9946, %v9944
    %v10415 = vpack.c.b16 %v9947, %v9945
    %v10416 = vpack.c.b16 %v9950, %v9948
    %v10417 = vpack.c.b16 %v9951, %v9949
    %v10418 = vpack.c.b16 %v9954, %v9952
    %v10419 = vpack.c.b16 %v9955, %v9953
    %v10420 = vpack.c.b16 %v9958, %v9956
    %v10421 = vpack.c.b16 %v9959, %v9957
    %v10422 = vpack.c.b16 %v9962, %v9960
    %v10423 = vpack.c.b16 %v9963, %v9961
    %v10424 = vpack.c.b16 %v9966, %v9964
    %v10425 = vpack.c.b16 %v9967, %v9965
    %v10426 = vpack.c.b16 %v9970, %v9968
    %v10427 = vpack.c.b16 %v9971, %v9969
    %v10428 = vpack.c.b16 %v9974, %v9972
    %v10429 = vpack.c.b16 %v9975, %v9973
    %v10430 = vpack.c.b16 %v9978, %v9976
    %v10431 = vpack.c.b16 %v9979, %v9977
    %v10432 = vpack.c.b16 %v9982, %v9980
    %v10433 = vpack.c.b16 %v9983, %v9981
    %v10434 = vpack.c.b16 %v9986, %v9984
    %v10435 = vpack.c.b16 %v9987, %v9985
    %v10436 = vpack.c.b16 %v9990, %v9988
    %v10437 = vpack.c.b16 %v9991, %v9989
    %v10438 = vpack.c.b16 %v9994, %v9992
    %v10439 = vpack.c.b16 %v9995, %v9993
    %v10440 = vpack.c.b16 %v9998, %v9996
    %v10441 = vpack.c.b16 %v9999, %v9997
    %v10442 = vpack.c.b16 %v10002, %v10000
    %v10443 = vpack.c.b16 %v10003, %v10001
    %v10444 = vpack.c.b16 %v10006, %v10004
    %v10445 = vpack.c.b16 %v10007, %v10005
    %v10446 = vpack.c.b16 %v10010, %v10008
    %v10447 = vpack.c.b16 %v10011, %v10009
    %v10448 = vpack.c.b16 %v10014, %v10012
    %v10449 = vpack.c.b16 %v10015, %v10013
    %v10450 = vpack.c.b16 %v10018, %v10016
    %v10451 = vpack.c.b16 %v10019, %v10017
    %v10452 = vpack.c.b16 %v10022, %v10020
    %v10453 = vpack.c.b16 %v10023, %v10021
    %v10454 = vpack.c.b16 %v10026, %v10024
    %v10455 = vpack.c.b16 %v10027, %v10025
    %v10456 = vpack.c.b16 %v10030, %v10028
    %v10457 = vpack.c.b16 %v10031, %v10029
    %v10458 = vpack.c.b16 %v10034, %v10032
    %v10459 = vpack.c.b16 %v10035, %v10033
    %v10460 = vpack.c.b16 %v10038, %v10036
    %v10461 = vpack.c.b16 %v10039, %v10037
    %v10462 = vpack.c.b16 %v10042, %v10040
    %v10463 = vpack.c.b16 %v10043, %v10041
    %v10464 = vpack.c.b16 %v10046, %v10044
    %v10465 = vpack.c.b16 %v10047, %v10045
    %v10466 = vpack.c.b16 %v10050, %v10048
    %v10467 = vpack.c.b16 %v10051, %v10049
    %v10468 = vpack.c.b16 %v10054, %v10052
    %v10469 = vpack.c.b16 %v10055, %v10053
    %v10470 = vpack.c.b16 %v10058, %v10056
    %v10471 = vpack.c.b16 %v10059, %v10057
    %v10472 = vpack.c.b16 %v10062, %v10060
    %v10473 = vpack.c.b16 %v10063, %v10061
    %v10474 = vpack.c.b16 %v10066, %v10064
    %v10475 = vpack.c.b16 %v10067, %v10065
    %v10476 = vpack.c.b16 %v10070, %v10068
    %v10477 = vpack.c.b16 %v10071, %v10069
    %v10478 = vpack.c.b16 %v10074, %v10072
    %v10479 = vpack.c.b16 %v10075, %v10073
    %v10480 = vpack.c.b16 %v10078, %v10076
    %v10481 = vpack.c.b16 %v10079, %v10077
    %v10482 = vpack.c.b16 %v10082, %v10080
    %v10483 = vpack.c.b16 %v10083, %v10081
    %v10484 = vpack.c.b16 %v10086, %v10084
    %v10485 = vpack.c.b16 %v10087, %v10085
    %v10486 = vpack.c.b16 %v10090, %v10088
    %v10487 = vpack.c.b16 %v10091, %v10089
    %v10488 = vpack.c.b16 %v10094, %v10092
    %v10489 = vpack.c.b16 %v10095, %v10093
    %v10490 = vpack.c.b16 %v10098, %v10096
    %v10491 = vpack.c.b16 %v10099, %v10097
    %v10492 = vpack.c.b16 %v10102, %v10100
    %v10493 = vpack.c.b16 %v10103, %v10101
    %v10494 = vpack.c.b16 %v10106, %v10104
    %v10495 = vpack.c.b16 %v10107, %v10105
    %v10496 = vpack.c.b16 %v10110, %v10108
    %v10497 = vpack.c.b16 %v10111, %v10109
    %v10498 = vpack.c.b16 %v10114, %v10112
    %v10499 = vpack.c.b16 %v10115, %v10113
    %v10500 = vpack.c.b16 %v10118, %v10116
    %v10501 = vpack.c.b16 %v10119, %v10117
    %v10502 = vpack.c.b16 %v10122, %v10120
    %v10503 = vpack.c.b16 %v10123, %v10121
    %v10504 = vpack.c.b16 %v10126, %v10124
    %v10505 = vpack.c.b16 %v10127, %v10125
    %v10506 = vpack.c.b16 %v10130, %v10128
    %v10507 = vpack.c.b16 %v10131, %v10129
    %v10508 = vpack.c.b16 %v10134, %v10132
    %v10509 = vpack.c.b16 %v10135, %v10133
    %v10510 = vpack.c.b16 %v10138, %v10136
    %v10511 = vpack.c.b16 %v10139, %v10137
    %v10512 = vpack.c.b16 %v10142, %v10140
    %v10513 = vpack.c.b16 %v10143, %v10141
    %v10514 = vpack.c.b16 %v10146, %v10144
    %v10515 = vpack.c.b16 %v10147, %v10145
    %v10516 = vpack.c.b16 %v10150, %v10148
    %v10517 = vpack.c.b16 %v10151, %v10149
    %v10518 = vpack.c.b16 %v10154, %v10152
    %v10519 = vpack.c.b16 %v10155, %v10153
    %v10520 = vpack.c.b16 %v10158, %v10156
    %v10521 = vpack.c.b16 %v10159, %v10157
    %v10522 = vpack.c.b16 %v10162, %v10160
    %v10523 = vpack.c.b16 %v10163, %v10161
    %v10524 = vpack.c.b16 %v10166, %v10164
    %v10525 = vpack.c.b16 %v10167, %v10165
    %v10526 = vpack.c.b16 %v10170, %v10168
    %v10527 = vpack.c.b16 %v10171, %v10169
    %v10528 = vpack.c.b16 %v10174, %v10172
    %v10529 = vpack.c.b16 %v10175, %v10173
    %v10530 = vpack.c.b16 %v10178, %v10176
    %v10531 = vpack.c.b16 %v10179, %v10177
    %v10532 = vpack.c.b16 %v10182, %v10180
    %v10533 = vpack.c.b16 %v10183, %v10181
    %v10534 = vpack.c.b16 %v10186, %v10184
    %v10535 = vpack.c.b16 %v10187, %v10185
    %v10536 = vpack.c.b16 %v10190, %v10188
    %v10537 = vpack.c.b16 %v10191, %v10189
    %v10538 = vpack.c.b16 %v10194, %v10192
    %v10539 = vpack.c.b16 %v10195, %v10193
    %v10540 = vpack.c.b16 %v10198, %v10196
    %v10541 = vpack.c.b16 %v10199, %v10197
    %v10542 = vpack.c.b16 %v10202, %v10200
    %v10543 = vpack.c.b16 %v10203, %v10201
    %v10544 = vpack.c.b16 %v10206, %v10204
    %v10545 = vpack.c.b16 %v10207, %v10205
    %v10546 = vpack.c.b16 %v10210, %v10208
    %v10547 = vpack.c.b16 %v10211, %v10209
    %v10548 = vpack.c.b16 %v10214, %v10212
    %v10549 = vpack.c.b16 %v10215, %v10213
    %v10550 = vpack.c.b16 %v10218, %v10216
    %v10551 = vpack.c.b16 %v10219, %v10217
    %v10552 = vpack.c.b16 %v10222, %v10220
    %v10553 = vpack.c.b16 %v10223, %v10221
    %v10554 = vpack.c.b16 %v10226, %v10224
    %v10555 = vpack.c.b16 %v10227, %v10225
    %v10556 = vpack.c.b16 %v10230, %v10228
    %v10557 = vpack.c.b16 %v10231, %v10229
    %v10558 = vpack.c.b16 %v10234, %v10232
    %v10559 = vpack.c.b16 %v10235, %v10233
    %v10560 = vpack.c.b16 %v10238, %v10236
    %v10561 = vpack.c.b16 %v10239, %v10237
    %v10562 = vpack.c.b16 %v10242, %v10240
    %v10563 = vpack.c.b16 %v10243, %v10241
    %v10564 = vpack.c.b16 %v10246, %v10244
    %v10565 = vpack.c.b16 %v10247, %v10245
    %v10566 = vpack.c.b16 %v10250, %v10248
    %v10567 = vpack.c.b16 %v10251, %v10249
    %v10568 = vpack.c.b16 %v10254, %v10252
    %v10569 = vpack.c.b16 %v10255, %v10253
    %v10570 = vpack.c.b16 %v10258, %v10256
    %v10571 = vpack.c.b16 %v10259, %v10257
    %v10572 = vpack.c.b16 %v10262, %v10260
    %v10573 = vpack.c.b16 %v10263, %v10261
    %v10574 = vpack.c.b16 %v10266, %v10264
    %v10575 = vpack.c.b16 %v10267, %v10265
    %v10576 = vpack.c.b16 %v10270, %v10268
    %v10577 = vpack.c.b16 %v10271, %v10269
    %v10578 = vpack.c.b16 %v10274, %v10272
    %v10579 = vpack.c.b16 %v10275, %v10273
    %v10580 = vpack.c.b16 %v10278, %v10276
    %v10581 = vpack.c.b16 %v10279, %v10277
    %v10582 = vpack.c.b16 %v10282, %v10280
    %v10583 = vpack.c.b16 %v10283, %v10281
    %v10584 = vpack.c.b16 %v10286, %v10284
    %v10585 = vpack.c.b16 %v10287, %v10285
    %v10586 = vpack.c.b16 %v10290, %v10288
    %v10587 = vpack.c.b16 %v10291, %v10289
    %v10588 = vpack.c.b16 %v10294, %v10292
    %v10589 = vpack.c.b16 %v10295, %v10293
    %v10590 = vpack.c.b16 %v10298, %v10296
    %v10591 = vpack.c.b16 %v10299, %v10297
    %v10592 = vpack.c.b16 %v10302, %v10300
    %v10593 = vpack.c.b16 %v10303, %v10301
    %v10594 = vpack.c.b16 %v10306, %v10304
    %v10595 = vpack.c.b16 %v10307, %v10305
    %10884 = vmatprep.subr.bf16.mxu0 %v10323
    %10885 = vmatpush1.bf16.msra.mxu0 %v10322
    %10886 = vmatprep.subr.bf16.mxu0 %v10321
    %10887 = vmatpush1.bf16.msra.mxu0 %v10320
    %10888 = vmatprep.subr.bf16.mxu0 %v10319
    %10889 = vmatpush1.bf16.msra.mxu0 %v10318
    %10890 = vmatprep.subr.bf16.mxu0 %v10317
    %10891 = vmatpush1.bf16.msra.mxu0 %v10316
    %10892 = vmatprep.subr.bf16.mxu0 %v10315
    %10893 = vmatpush1.bf16.msra.mxu0 %v10314
    %10894 = vmatprep.subr.bf16.mxu0 %v10313
    %10895 = vmatpush1.bf16.msra.mxu0 %v10312
    %10896 = vmatprep.subr.bf16.mxu0 %v10311
    %10897 = vmatpush1.bf16.msra.mxu0 %v10310
    %10898 = vmatprep.subr.bf16.mxu0 %v10309
    %10899 = vmatpush1.bf16.msra.mxu0 %v10308
    %10900 = vmatprep.subr.bf16.mxu0 %v10339
    %10901 = vmatpush2.bf16.msra.mxu0 %v10338
    %10902 = vmatprep.subr.bf16.mxu0 %v10337
    %10903 = vmatpush2.bf16.msra.mxu0 %v10336
    %10904 = vmatprep.subr.bf16.mxu0 %v10335
    %10905 = vmatpush2.bf16.msra.mxu0 %v10334
    %10906 = vmatprep.subr.bf16.mxu0 %v10333
    %10907 = vmatpush2.bf16.msra.mxu0 %v10332
    %10908 = vmatprep.subr.bf16.mxu0 %v10331
    %10909 = vmatpush2.bf16.msra.mxu0 %v10330
    %10910 = vmatprep.subr.bf16.mxu0 %v10329
    %10911 = vmatpush2.bf16.msra.mxu0 %v10328
    %10912 = vmatprep.subr.bf16.mxu0 %v10327
    %10913 = vmatpush2.bf16.msra.mxu0 %v10326
    %10914 = vmatprep.subr.bf16.mxu0 %v10325
    %10915 = vmatpush2.bf16.msra.mxu0 %v10324
    %10916 = vmatprep.mubr.bf16.mxu0 %v9127
    %10917 = vmatmul.mubr.bf16.gmra.mxu0 %v9126
    %v10918 = vpop.f32.mrf.mxu0
    %v10919 = vadd.f32 %v9437, %v10918
    %v10920 = vpop.f32.mrf.mxu0
    %v10921 = vadd.f32 %v9441, %v10920
    %v10922 = vpop.f32.mrf.mxu0
    %v10923 = vpop.f32.mrf.mxu0
    %10924 = vdwg.mxu0
    %10925 = vmatprep.subr.bf16.mxu0 %v10355
    %10926 = vmatpush1.bf16.msra.mxu0 %v10354
    %10927 = vmatprep.subr.bf16.mxu0 %v10353
    %10928 = vmatpush1.bf16.msra.mxu0 %v10352
    %10929 = vmatprep.subr.bf16.mxu0 %v10351
    %10930 = vmatpush1.bf16.msra.mxu0 %v10350
    %10931 = vmatprep.subr.bf16.mxu0 %v10349
    %10932 = vmatpush1.bf16.msra.mxu0 %v10348
    %10933 = vmatprep.subr.bf16.mxu0 %v10347
    %10934 = vmatpush1.bf16.msra.mxu0 %v10346
    %10935 = vmatprep.subr.bf16.mxu0 %v10345
    %10936 = vmatpush1.bf16.msra.mxu0 %v10344
    %10937 = vmatprep.subr.bf16.mxu0 %v10343
    %10938 = vmatpush1.bf16.msra.mxu0 %v10342
    %10939 = vmatprep.subr.bf16.mxu0 %v10341
    %10940 = vmatpush1.bf16.msra.mxu0 %v10340
    %10941 = vmatprep.subr.bf16.mxu0 %v10371
    %10942 = vmatpush2.bf16.msra.mxu0 %v10370
    %10943 = vmatprep.subr.bf16.mxu0 %v10369
    %10944 = vmatpush2.bf16.msra.mxu0 %v10368
    %10945 = vmatprep.subr.bf16.mxu0 %v10367
    %10946 = vmatpush2.bf16.msra.mxu0 %v10366
    %10947 = vmatprep.subr.bf16.mxu0 %v10365
    %10948 = vmatpush2.bf16.msra.mxu0 %v10364
    %10949 = vmatprep.subr.bf16.mxu0 %v10363
    %10950 = vmatpush2.bf16.msra.mxu0 %v10362
    %10951 = vmatprep.subr.bf16.mxu0 %v10361
    %10952 = vmatpush2.bf16.msra.mxu0 %v10360
    %10953 = vmatprep.subr.bf16.mxu0 %v10359
    %10954 = vmatpush2.bf16.msra.mxu0 %v10358
    %10955 = vmatprep.subr.bf16.mxu0 %v10357
    %10956 = vmatpush2.bf16.msra.mxu0 %v10356
    %10957 = vmatprep.mubr.bf16.mxu0 %v9129
    %10958 = vmatmul.mubr.bf16.gmra.mxu0 %v9128
    %v10959 = vpop.f32.mrf.mxu0
    %v10960 = vadd.f32 %v10919, %v10959
    %v10961 = vpop.f32.mrf.mxu0
    %v10962 = vadd.f32 %v10921, %v10961
    %v10963 = vpop.f32.mrf.mxu0
    %v10964 = vpop.f32.mrf.mxu0
    %10965 = vdwg.mxu0
    %10966 = vmatprep.subr.bf16.mxu0 %v10387
    %10967 = vmatpush1.bf16.msra.mxu0 %v10386
    %10968 = vmatprep.subr.bf16.mxu0 %v10385
    %10969 = vmatpush1.bf16.msra.mxu0 %v10384
    %10970 = vmatprep.subr.bf16.mxu0 %v10383
    %10971 = vmatpush1.bf16.msra.mxu0 %v10382
    %10972 = vmatprep.subr.bf16.mxu0 %v10381
    %10973 = vmatpush1.bf16.msra.mxu0 %v10380
    %10974 = vmatprep.subr.bf16.mxu0 %v10379
    %10975 = vmatpush1.bf16.msra.mxu0 %v10378
    %10976 = vmatprep.subr.bf16.mxu0 %v10377
    %10977 = vmatpush1.bf16.msra.mxu0 %v10376
    %10978 = vmatprep.subr.bf16.mxu0 %v10375
    %10979 = vmatpush1.bf16.msra.mxu0 %v10374
    %10980 = vmatprep.subr.bf16.mxu0 %v10373
    %10981 = vmatpush1.bf16.msra.mxu0 %v10372
    %10982 = vmatprep.subr.bf16.mxu0 %v10403
    %10983 = vmatpush2.bf16.msra.mxu0 %v10402
    %10984 = vmatprep.subr.bf16.mxu0 %v10401
    %10985 = vmatpush2.bf16.msra.mxu0 %v10400
    %10986 = vmatprep.subr.bf16.mxu0 %v10399
    %10987 = vmatpush2.bf16.msra.mxu0 %v10398
    %10988 = vmatprep.subr.bf16.mxu0 %v10397
    %10989 = vmatpush2.bf16.msra.mxu0 %v10396
    %10990 = vmatprep.subr.bf16.mxu0 %v10395
    %10991 = vmatpush2.bf16.msra.mxu0 %v10394
    %10992 = vmatprep.subr.bf16.mxu0 %v10393
    %10993 = vmatpush2.bf16.msra.mxu0 %v10392
    %10994 = vmatprep.subr.bf16.mxu0 %v10391
    %10995 = vmatpush2.bf16.msra.mxu0 %v10390
    %10996 = vmatprep.subr.bf16.mxu0 %v10389
    %10997 = vmatpush2.bf16.msra.mxu0 %v10388
    %10998 = vmatprep.mubr.bf16.mxu0 %v9131
    %10999 = vmatmul.mubr.bf16.gmra.mxu0 %v9130
    %v11000 = vpop.f32.mrf.mxu0
    %v11001 = vadd.f32 %v10960, %v11000
    %v11002 = vpop.f32.mrf.mxu0
    %v11003 = vadd.f32 %v10962, %v11002
    %v11004 = vpop.f32.mrf.mxu0
    %v11005 = vpop.f32.mrf.mxu0
    %11006 = vdwg.mxu0
    %11007 = vmatprep.subr.bf16.mxu0 %v10419
    %11008 = vmatpush1.bf16.msra.mxu0 %v10418
    %11009 = vmatprep.subr.bf16.mxu0 %v10417
    %11010 = vmatpush1.bf16.msra.mxu0 %v10416
    %11011 = vmatprep.subr.bf16.mxu0 %v10415
    %11012 = vmatpush1.bf16.msra.mxu0 %v10414
    %11013 = vmatprep.subr.bf16.mxu0 %v10413
    %11014 = vmatpush1.bf16.msra.mxu0 %v10412
    %11015 = vmatprep.subr.bf16.mxu0 %v10411
    %11016 = vmatpush1.bf16.msra.mxu0 %v10410
    %11017 = vmatprep.subr.bf16.mxu0 %v10409
    %11018 = vmatpush1.bf16.msra.mxu0 %v10408
    %11019 = vmatprep.subr.bf16.mxu0 %v10407
    %11020 = vmatpush1.bf16.msra.mxu0 %v10406
    %11021 = vmatprep.subr.bf16.mxu0 %v10405
    %11022 = vmatpush1.bf16.msra.mxu0 %v10404
    %11023 = vmatprep.subr.bf16.mxu0 %v10435
    %11024 = vmatpush2.bf16.msra.mxu0 %v10434
    %11025 = vmatprep.subr.bf16.mxu0 %v10433
    %11026 = vmatpush2.bf16.msra.mxu0 %v10432
    %11027 = vmatprep.subr.bf16.mxu0 %v10431
    %11028 = vmatpush2.bf16.msra.mxu0 %v10430
    %11029 = vmatprep.subr.bf16.mxu0 %v10429
    %11030 = vmatpush2.bf16.msra.mxu0 %v10428
    %11031 = vmatprep.subr.bf16.mxu0 %v10427
    %11032 = vmatpush2.bf16.msra.mxu0 %v10426
    %11033 = vmatprep.subr.bf16.mxu0 %v10425
    %11034 = vmatpush2.bf16.msra.mxu0 %v10424
    %11035 = vmatprep.subr.bf16.mxu0 %v10423
    %11036 = vmatpush2.bf16.msra.mxu0 %v10422
    %11037 = vmatprep.subr.bf16.mxu0 %v10421
    %11038 = vmatpush2.bf16.msra.mxu0 %v10420
    %11039 = vmatprep.mubr.bf16.mxu0 %v9133
    %11040 = vmatmul.mubr.bf16.gmra.mxu0 %v9132
    %v11041 = vpop.f32.mrf.mxu0
    %v11042 = vadd.f32 %v11001, %v11041
    %v11043 = vpop.f32.mrf.mxu0
    %v11044 = vadd.f32 %v11003, %v11043
    %v11045 = vpop.f32.mrf.mxu0
    %v11046 = vpop.f32.mrf.mxu0
    %11047 = vdwg.mxu0
    %11048 = vmatprep.subr.bf16.mxu0 %v10451
    %11049 = vmatpush1.bf16.msra.mxu0 %v10450
    %11050 = vmatprep.subr.bf16.mxu0 %v10449
    %11051 = vmatpush1.bf16.msra.mxu0 %v10448
    %11052 = vmatprep.subr.bf16.mxu0 %v10447
    %11053 = vmatpush1.bf16.msra.mxu0 %v10446
    %11054 = vmatprep.subr.bf16.mxu0 %v10445
    %11055 = vmatpush1.bf16.msra.mxu0 %v10444
    %11056 = vmatprep.subr.bf16.mxu0 %v10443
    %11057 = vmatpush1.bf16.msra.mxu0 %v10442
    %11058 = vmatprep.subr.bf16.mxu0 %v10441
    %11059 = vmatpush1.bf16.msra.mxu0 %v10440
    %11060 = vmatprep.subr.bf16.mxu0 %v10439
    %11061 = vmatpush1.bf16.msra.mxu0 %v10438
    %11062 = vmatprep.subr.bf16.mxu0 %v10437
    %11063 = vmatpush1.bf16.msra.mxu0 %v10436
    %11064 = vmatprep.subr.bf16.mxu0 %v10467
    %11065 = vmatpush2.bf16.msra.mxu0 %v10466
    %11066 = vmatprep.subr.bf16.mxu0 %v10465
    %11067 = vmatpush2.bf16.msra.mxu0 %v10464
    %11068 = vmatprep.subr.bf16.mxu0 %v10463
    %11069 = vmatpush2.bf16.msra.mxu0 %v10462
    %11070 = vmatprep.subr.bf16.mxu0 %v10461
    %11071 = vmatpush2.bf16.msra.mxu0 %v10460
    %11072 = vmatprep.subr.bf16.mxu0 %v10459
    %11073 = vmatpush2.bf16.msra.mxu0 %v10458
    %11074 = vmatprep.subr.bf16.mxu0 %v10457
    %11075 = vmatpush2.bf16.msra.mxu0 %v10456
    %11076 = vmatprep.subr.bf16.mxu0 %v10455
    %11077 = vmatpush2.bf16.msra.mxu0 %v10454
    %11078 = vmatprep.subr.bf16.mxu0 %v10453
    %11079 = vmatpush2.bf16.msra.mxu0 %v10452
    %11080 = vmatprep.mubr.bf16.mxu0 %v9135
    %11081 = vmatmul.mubr.bf16.gmra.mxu0 %v9134
    %v11082 = vpop.f32.mrf.mxu0
    %v11083 = vadd.f32 %v11042, %v11082
    %v11084 = vpop.f32.mrf.mxu0
    %v11085 = vadd.f32 %v11044, %v11084
    %v11086 = vpop.f32.mrf.mxu0
    %v11087 = vpop.f32.mrf.mxu0
    %11088 = vdwg.mxu0
    %11089 = vmatprep.subr.bf16.mxu0 %v10483
    %11090 = vmatpush1.bf16.msra.mxu0 %v10482
    %11091 = vmatprep.subr.bf16.mxu0 %v10481
    %11092 = vmatpush1.bf16.msra.mxu0 %v10480
    %11093 = vmatprep.subr.bf16.mxu0 %v10479
    %11094 = vmatpush1.bf16.msra.mxu0 %v10478
    %11095 = vmatprep.subr.bf16.mxu0 %v10477
    %11096 = vmatpush1.bf16.msra.mxu0 %v10476
    %11097 = vmatprep.subr.bf16.mxu0 %v10475
    %11098 = vmatpush1.bf16.msra.mxu0 %v10474
    %11099 = vmatprep.subr.bf16.mxu0 %v10473
    %11100 = vmatpush1.bf16.msra.mxu0 %v10472
    %11101 = vmatprep.subr.bf16.mxu0 %v10471
    %11102 = vmatpush1.bf16.msra.mxu0 %v10470
    %11103 = vmatprep.subr.bf16.mxu0 %v10469
    %11104 = vmatpush1.bf16.msra.mxu0 %v10468
    %11105 = vmatprep.subr.bf16.mxu0 %v10499
    %11106 = vmatpush2.bf16.msra.mxu0 %v10498
    %11107 = vmatprep.subr.bf16.mxu0 %v10497
    %11108 = vmatpush2.bf16.msra.mxu0 %v10496
    %11109 = vmatprep.subr.bf16.mxu0 %v10495
    %11110 = vmatpush2.bf16.msra.mxu0 %v10494
    %11111 = vmatprep.subr.bf16.mxu0 %v10493
    %11112 = vmatpush2.bf16.msra.mxu0 %v10492
    %11113 = vmatprep.subr.bf16.mxu0 %v10491
    %11114 = vmatpush2.bf16.msra.mxu0 %v10490
    %11115 = vmatprep.subr.bf16.mxu0 %v10489
    %11116 = vmatpush2.bf16.msra.mxu0 %v10488
    %11117 = vmatprep.subr.bf16.mxu0 %v10487
    %11118 = vmatpush2.bf16.msra.mxu0 %v10486
    %11119 = vmatprep.subr.bf16.mxu0 %v10485
    %11120 = vmatpush2.bf16.msra.mxu0 %v10484
    %11121 = vmatprep.mubr.bf16.mxu0 %v9137
    %11122 = vmatmul.mubr.bf16.gmra.mxu0 %v9136
    %v11123 = vpop.f32.mrf.mxu0
    %v11124 = vadd.f32 %v11083, %v11123
    %v11125 = vpop.f32.mrf.mxu0
    %v11126 = vadd.f32 %v11085, %v11125
    %v11127 = vpop.f32.mrf.mxu0
    %v11128 = vpop.f32.mrf.mxu0
    %11129 = vdwg.mxu0
    %11130 = vmatprep.subr.bf16.mxu0 %v10515
    %11131 = vmatpush1.bf16.msra.mxu0 %v10514
    %11132 = vmatprep.subr.bf16.mxu0 %v10513
    %11133 = vmatpush1.bf16.msra.mxu0 %v10512
    %11134 = vmatprep.subr.bf16.mxu0 %v10511
    %11135 = vmatpush1.bf16.msra.mxu0 %v10510
    %11136 = vmatprep.subr.bf16.mxu0 %v10509
    %11137 = vmatpush1.bf16.msra.mxu0 %v10508
    %11138 = vmatprep.subr.bf16.mxu0 %v10507
    %11139 = vmatpush1.bf16.msra.mxu0 %v10506
    %11140 = vmatprep.subr.bf16.mxu0 %v10505
    %11141 = vmatpush1.bf16.msra.mxu0 %v10504
    %11142 = vmatprep.subr.bf16.mxu0 %v10503
    %11143 = vmatpush1.bf16.msra.mxu0 %v10502
    %11144 = vmatprep.subr.bf16.mxu0 %v10501
    %11145 = vmatpush1.bf16.msra.mxu0 %v10500
    %11146 = vmatprep.subr.bf16.mxu0 %v10531
    %11147 = vmatpush2.bf16.msra.mxu0 %v10530
    %11148 = vmatprep.subr.bf16.mxu0 %v10529
    %11149 = vmatpush2.bf16.msra.mxu0 %v10528
    %11150 = vmatprep.subr.bf16.mxu0 %v10527
    %11151 = vmatpush2.bf16.msra.mxu0 %v10526
    %11152 = vmatprep.subr.bf16.mxu0 %v10525
    %11153 = vmatpush2.bf16.msra.mxu0 %v10524
    %11154 = vmatprep.subr.bf16.mxu0 %v10523
    %11155 = vmatpush2.bf16.msra.mxu0 %v10522
    %11156 = vmatprep.subr.bf16.mxu0 %v10521
    %11157 = vmatpush2.bf16.msra.mxu0 %v10520
    %11158 = vmatprep.subr.bf16.mxu0 %v10519
    %11159 = vmatpush2.bf16.msra.mxu0 %v10518
    %11160 = vmatprep.subr.bf16.mxu0 %v10517
    %11161 = vmatpush2.bf16.msra.mxu0 %v10516
    %11162 = vmatprep.mubr.bf16.mxu0 %v9139
    %11163 = vmatmul.mubr.bf16.gmra.mxu0 %v9138
    %v11164 = vpop.f32.mrf.mxu0
    %v11165 = vadd.f32 %v11124, %v11164
    %v11166 = vpop.f32.mrf.mxu0
    %v11167 = vadd.f32 %v11126, %v11166
    %v11168 = vpop.f32.mrf.mxu0
    %v11169 = vpop.f32.mrf.mxu0
    %11170 = vdwg.mxu0
    %11171 = vmatprep.subr.bf16.mxu0 %v10547
    %11172 = vmatpush1.bf16.msra.mxu0 %v10546
    %11173 = vmatprep.subr.bf16.mxu0 %v10545
    %11174 = vmatpush1.bf16.msra.mxu0 %v10544
    %11175 = vmatprep.subr.bf16.mxu0 %v10543
    %11176 = vmatpush1.bf16.msra.mxu0 %v10542
    %11177 = vmatprep.subr.bf16.mxu0 %v10541
    %11178 = vmatpush1.bf16.msra.mxu0 %v10540
    %11179 = vmatprep.subr.bf16.mxu0 %v10539
    %11180 = vmatpush1.bf16.msra.mxu0 %v10538
    %11181 = vmatprep.subr.bf16.mxu0 %v10537
    %11182 = vmatpush1.bf16.msra.mxu0 %v10536
    %11183 = vmatprep.subr.bf16.mxu0 %v10535
    %11184 = vmatpush1.bf16.msra.mxu0 %v10534
    %11185 = vmatprep.subr.bf16.mxu0 %v10533
    %11186 = vmatpush1.bf16.msra.mxu0 %v10532
    %11187 = vmatprep.subr.bf16.mxu0 %v10563
    %11188 = vmatpush2.bf16.msra.mxu0 %v10562
    %11189 = vmatprep.subr.bf16.mxu0 %v10561
    %11190 = vmatpush2.bf16.msra.mxu0 %v10560
    %11191 = vmatprep.subr.bf16.mxu0 %v10559
    %11192 = vmatpush2.bf16.msra.mxu0 %v10558
    %11193 = vmatprep.subr.bf16.mxu0 %v10557
    %11194 = vmatpush2.bf16.msra.mxu0 %v10556
    %11195 = vmatprep.subr.bf16.mxu0 %v10555
    %11196 = vmatpush2.bf16.msra.mxu0 %v10554
    %11197 = vmatprep.subr.bf16.mxu0 %v10553
    %11198 = vmatpush2.bf16.msra.mxu0 %v10552
    %11199 = vmatprep.subr.bf16.mxu0 %v10551
    %11200 = vmatpush2.bf16.msra.mxu0 %v10550
    %11201 = vmatprep.subr.bf16.mxu0 %v10549
    %11202 = vmatpush2.bf16.msra.mxu0 %v10548
    %11203 = vmatprep.mubr.bf16.mxu0 %v9141
    %11204 = vmatmul.mubr.bf16.gmra.mxu0 %v9140
    %v11205 = vpop.f32.mrf.mxu0
    %v11206 = vadd.f32 %v11165, %v11205
    %v11207 = vpop.f32.mrf.mxu0
    %v11208 = vadd.f32 %v11167, %v11207
    %v11209 = vpop.f32.mrf.mxu0
    %v11210 = vpop.f32.mrf.mxu0
    %11211 = vdwg.mxu0
    %11212 = vmatprep.subr.bf16.mxu0 %v10579
    %11213 = vmatpush1.bf16.msra.mxu0 %v10578
    %11214 = vmatprep.subr.bf16.mxu0 %v10577
    %11215 = vmatpush1.bf16.msra.mxu0 %v10576
    %11216 = vmatprep.subr.bf16.mxu0 %v10575
    %11217 = vmatpush1.bf16.msra.mxu0 %v10574
    %11218 = vmatprep.subr.bf16.mxu0 %v10573
    %11219 = vmatpush1.bf16.msra.mxu0 %v10572
    %11220 = vmatprep.subr.bf16.mxu0 %v10571
    %11221 = vmatpush1.bf16.msra.mxu0 %v10570
    %11222 = vmatprep.subr.bf16.mxu0 %v10569
    %11223 = vmatpush1.bf16.msra.mxu0 %v10568
    %11224 = vmatprep.subr.bf16.mxu0 %v10567
    %11225 = vmatpush1.bf16.msra.mxu0 %v10566
    %11226 = vmatprep.subr.bf16.mxu0 %v10565
    %11227 = vmatpush1.bf16.msra.mxu0 %v10564
    %11228 = vmatprep.subr.bf16.mxu0 %v10595
    %11229 = vmatpush2.bf16.msra.mxu0 %v10594
    %11230 = vmatprep.subr.bf16.mxu0 %v10593
    %11231 = vmatpush2.bf16.msra.mxu0 %v10592
    %11232 = vmatprep.subr.bf16.mxu0 %v10591
    %11233 = vmatpush2.bf16.msra.mxu0 %v10590
    %11234 = vmatprep.subr.bf16.mxu0 %v10589
    %11235 = vmatpush2.bf16.msra.mxu0 %v10588
    %11236 = vmatprep.subr.bf16.mxu0 %v10587
    %11237 = vmatpush2.bf16.msra.mxu0 %v10586
    %11238 = vmatprep.subr.bf16.mxu0 %v10585
    %11239 = vmatpush2.bf16.msra.mxu0 %v10584
    %11240 = vmatprep.subr.bf16.mxu0 %v10583
    %11241 = vmatpush2.bf16.msra.mxu0 %v10582
    %11242 = vmatprep.subr.bf16.mxu0 %v10581
    %11243 = vmatpush2.bf16.msra.mxu0 %v10580
    %11244 = vmatprep.mubr.bf16.mxu0 %v9143
    %11245 = vmatmul.mubr.bf16.gmra.mxu0 %v9142
    %v11246 = vpop.f32.mrf.mxu0
    %v11247 = vadd.f32 %v11206, %v11246
    %v11248 = vpop.f32.mrf.mxu0
    %v11249 = vadd.f32 %v11208, %v11248
    %v11250 = vpop.f32.mrf.mxu0
    %v11251 = vpop.f32.mrf.mxu0
    %11252 = vdwg.mxu0
    %v11253 = vmax.f32 %v11247, 0.0
    %v11254 = vmax.f32 %v11249, 0.0
    %v11255 = vpack.c.bf16 %v11253, %v11253
    %v11256 = vpack.c.bf16 %v11254, %v11254
    %v11257 = vld [vmem:[%s15] sm:$0xf]
    %v11258 = vld [vmem:[%s15 + $0x4] sm:$0xf]
    %v11259 = vld [vmem:[%s15 + $0x8] sm:$0xf]
    %v11260 = vld [vmem:[%s15 + $0xc] sm:$0xf]
    %v11261 = vld [vmem:[%s15 + $0x10] sm:$0xf]
    %v11262 = vld [vmem:[%s15 + $0x14] sm:$0xf]
    %v11263 = vld [vmem:[%s15 + $0x18] sm:$0xf]
    %v11264 = vld [vmem:[%s15 + $0x1c] sm:$0xf]
    %v11265 = vld [vmem:[%s15 + $0x20] sm:$0xf]
    %v11266 = vld [vmem:[%s15 + $0x24] sm:$0xf]
    %v11267 = vld [vmem:[%s15 + $0x28] sm:$0xf]
    %v11268 = vld [vmem:[%s15 + $0x2c] sm:$0xf]
    %v11269 = vld [vmem:[%s15 + $0x30] sm:$0xf]
    %v11270 = vld [vmem:[%s15 + $0x34] sm:$0xf]
    %v11271 = vld [vmem:[%s15 + $0x38] sm:$0xf]
    %v11272 = vld [vmem:[%s15 + $0x3c] sm:$0xf]
    %v11273 = vld [vmem:[%s15 + $0x40] sm:$0xf]
    %v11274 = vld [vmem:[%s15 + $0x44] sm:$0xf]
    %v11275 = vld [vmem:[%s15 + $0x48] sm:$0xf]
    %v11276 = vld [vmem:[%s15 + $0x4c] sm:$0xf]
    %v11277 = vld [vmem:[%s15 + $0x50] sm:$0xf]
    %v11278 = vld [vmem:[%s15 + $0x54] sm:$0xf]
    %v11279 = vld [vmem:[%s15 + $0x58] sm:$0xf]
    %v11280 = vld [vmem:[%s15 + $0x5c] sm:$0xf]
    %v11281 = vld [vmem:[%s15 + $0x60] sm:$0xf]
    %v11282 = vld [vmem:[%s15 + $0x64] sm:$0xf]
    %v11283 = vld [vmem:[%s15 + $0x68] sm:$0xf]
    %v11284 = vld [vmem:[%s15 + $0x6c] sm:$0xf]
    %v11285 = vld [vmem:[%s15 + $0x70] sm:$0xf]
    %v11286 = vld [vmem:[%s15 + $0x74] sm:$0xf]
    %v11287 = vld [vmem:[%s15 + $0x78] sm:$0xf]
    %v11288 = vld [vmem:[%s15 + $0x7c] sm:$0xf]
    %v11289 = vld [vmem:[#allocation19] sm:$0x1]
    %v11291 = vlaneseq
    %v11292 = vshrl.u32 %v11291, 7
    %v11293 = vsub.s32 0, %v11292
    %v11294 = vrot.slane %v11289, %v11293
    %v11328 = vunpack.c.l.b16 %v11257
    %v11329 = vunpack.c.l.b16 %v11258
    %v11330 = vunpack.c.l.b16 %v11259
    %v11331 = vunpack.c.l.b16 %v11260
    %v11332 = vunpack.c.l.b16 %v11261
    %v11333 = vunpack.c.l.b16 %v11262
    %v11334 = vunpack.c.l.b16 %v11263
    %v11335 = vunpack.c.l.b16 %v11264
    %v11336 = vunpack.c.l.b16 %v11265
    %v11337 = vunpack.c.l.b16 %v11266
    %v11338 = vunpack.c.l.b16 %v11267
    %v11339 = vunpack.c.l.b16 %v11268
    %v11340 = vunpack.c.l.b16 %v11269
    %v11341 = vunpack.c.l.b16 %v11270
    %v11342 = vunpack.c.l.b16 %v11271
    %v11343 = vunpack.c.l.b16 %v11272
    %v11344 = vunpack.c.l.b16 %v11273
    %v11345 = vunpack.c.l.b16 %v11274
    %v11346 = vunpack.c.l.b16 %v11275
    %v11347 = vunpack.c.l.b16 %v11276
    %v11348 = vunpack.c.l.b16 %v11277
    %v11349 = vunpack.c.l.b16 %v11278
    %v11350 = vunpack.c.l.b16 %v11279
    %v11351 = vunpack.c.l.b16 %v11280
    %v11352 = vunpack.c.l.b16 %v11281
    %v11353 = vunpack.c.l.b16 %v11282
    %v11354 = vunpack.c.l.b16 %v11283
    %v11355 = vunpack.c.l.b16 %v11284
    %v11356 = vunpack.c.l.b16 %v11285
    %v11357 = vunpack.c.l.b16 %v11286
    %v11358 = vunpack.c.l.b16 %v11287
    %v11359 = vunpack.c.l.b16 %v11288
    %v11360 = vpack.c.b16 %v11329, %v11328
    %v11361 = vpack.c.b16 %v11331, %v11330
    %v11362 = vpack.c.b16 %v11333, %v11332
    %v11363 = vpack.c.b16 %v11335, %v11334
    %v11364 = vpack.c.b16 %v11337, %v11336
    %v11365 = vpack.c.b16 %v11339, %v11338
    %v11366 = vpack.c.b16 %v11341, %v11340
    %v11367 = vpack.c.b16 %v11343, %v11342
    %v11368 = vpack.c.b16 %v11345, %v11344
    %v11369 = vpack.c.b16 %v11347, %v11346
    %v11370 = vpack.c.b16 %v11349, %v11348
    %v11371 = vpack.c.b16 %v11351, %v11350
    %v11372 = vpack.c.b16 %v11353, %v11352
    %v11373 = vpack.c.b16 %v11355, %v11354
    %v11374 = vpack.c.b16 %v11357, %v11356
    %v11375 = vpack.c.b16 %v11359, %v11358
    %11392 = vmatprep.subr.bf16.mxu0 0
    %11393 = vmatpush1.bf16.msra.mxu0 %v11367
    %11394 = vmatprep.subr.bf16.mxu0 0
    %11395 = vmatpush1.bf16.msra.mxu0 %v11366
    %11396 = vmatprep.subr.bf16.mxu0 0
    %11397 = vmatpush1.bf16.msra.mxu0 %v11365
    %11398 = vmatprep.subr.bf16.mxu0 0
    %11399 = vmatpush1.bf16.msra.mxu0 %v11364
    %11400 = vmatprep.subr.bf16.mxu0 0
    %11401 = vmatpush1.bf16.msra.mxu0 %v11363
    %11402 = vmatprep.subr.bf16.mxu0 0
    %11403 = vmatpush1.bf16.msra.mxu0 %v11362
    %11404 = vmatprep.subr.bf16.mxu0 0
    %11405 = vmatpush1.bf16.msra.mxu0 %v11361
    %11406 = vmatprep.subr.bf16.mxu0 0
    %11407 = vmatpush1.bf16.msra.mxu0 %v11360
    %11408 = vmatprep.subr.bf16.mxu0 0
    %11409 = vmatpush2.bf16.msra.mxu0 %v11375
    %11410 = vmatprep.subr.bf16.mxu0 0
    %11411 = vmatpush2.bf16.msra.mxu0 %v11374
    %11412 = vmatprep.subr.bf16.mxu0 0
    %11413 = vmatpush2.bf16.msra.mxu0 %v11373
    %11414 = vmatprep.subr.bf16.mxu0 0
    %11415 = vmatpush2.bf16.msra.mxu0 %v11372
    %11416 = vmatprep.subr.bf16.mxu0 0
    %11417 = vmatpush2.bf16.msra.mxu0 %v11371
    %11418 = vmatprep.subr.bf16.mxu0 0
    %11419 = vmatpush2.bf16.msra.mxu0 %v11370
    %11420 = vmatprep.subr.bf16.mxu0 0
    %11421 = vmatpush2.bf16.msra.mxu0 %v11369
    %11422 = vmatprep.subr.bf16.mxu0 0
    %11423 = vmatpush2.bf16.msra.mxu0 %v11368
    %11424 = vmatprep.mubr.bf16.mxu0 %v11256
    %11425 = vmatmul.mubr.bf16.gmra.mxu0 %v11255
    %v11426 = vpop.f32.mrf.mxu0
    %v11427 = vadd.f32 %v11294, %v11426
    %v11428 = vpop.f32.mrf.mxu0
    %v11429 = vpop.f32.mrf.mxu0
    %v11430 = vpop.f32.mrf.mxu0
    %11431 = vdwg.mxu0
    %11432 = vst [vmem:[%s17] sm:$0xff] %v11427
    // Predicated region
    $region158: #{deep_q_forward.1} parent=1 // pred_check
      _
    $region159: #{deep_q_forward.1} parent=1 // pred_check_branch
      %11434 = sbr.rel (0) target = $region161
    $region160: #{deep_q_forward.1} parent=1 // pred_region
      _
    $region161: #{deep_q_forward.1} parent=1 // pred_fallthru
      _
    // Predicated region
    $region162: #{deep_q_forward.1} parent=1 // pred_check
      _
    $region163: #{deep_q_forward.1} parent=1 // pred_check_branch
      %11436 = sbr.rel (0) target = $region165
    $region164: #{deep_q_forward.1} parent=1 // pred_region
      _
    $region165: #{deep_q_forward.1} parent=1 // pred_fallthru
      _
    %11437 = vsyncpa [#allocation10], 1
    %11438 = vsyncpa [#allocation12], 1
    %11439 = vsyncpa [#allocation15], 1
    %11440 = vsyncpa [#allocation18], 1
  %11441 = vsyncmov [#allocation8]
  %s11442 = vpop.sfrf %11441
  %p11443 = scmp.eq.s32.totalorder %s11442, 0
  %p11444 = pneg %p11443
  %11446 = shalt.err (%p11444)
  %s11447 = scalar_lea.sflag [#allocation8], 1
  %11448 = vsyncmov %s11447
  %s11449 = vpop.sfrf %11448
  %p11450 = scmp.eq.s32.totalorder %s11449, 0
  %p11451 = pneg %p11450
  %11453 = shalt.err (%p11451)
  %s11454 = scalar_lea.sflag [#allocation8], 2
  %11455 = vsyncmov %s11454
  %s11456 = vpop.sfrf %11455
  %p11457 = scmp.eq.s32.totalorder %s11456, 0
  %p11458 = pneg %p11457
  %11460 = shalt.err (%p11458)
  %s11461 = scalar_lea.sflag [#allocation8], 3
  %11462 = vsyncmov %s11461
  %s11463 = vpop.sfrf %11462
  %p11464 = scmp.eq.s32.totalorder %s11463, 0
  %p11465 = pneg %p11464
  %11467 = shalt.err (%p11465)

</llo_original>
